<compile_context>
chip_gen: v7x
topology: tpu7x:2x2x1
jax: 0.10.0
libtpu: 0.0.40
codegen_flags: <defaults>
</compile_context>

<pallas_src>
import functools

import jax
import jax.numpy as jnp
from jax.experimental import pallas as pl
from jax.experimental.pallas import tpu as pltpu

EPS = 1e-5            # PyTorch InstanceNorm2d default eps
NEG_SLOPE = 0.2
MAX_DIM = 64 * 16
LANE = 128
CIN0_PAD = 32         # first conv layer Cin padded 3 -> 32 so 4*Cin = 128 (lane-dense MXU K)


# ---------------------------------------------------------------------------
# Hardware-aware configuration
# ---------------------------------------------------------------------------

def _tpu_config():
    """Returns (vmem_limit_bytes, num_tensorcores_per_chip)."""
    try:
        kind = jax.devices()[0].device_kind.lower()
    except Exception:
        kind = ""
    is_v7 = ("v7" in kind) or ("7x" in kind)
    try:
        cap = int(pltpu.get_tpu_info().vmem_capacity_bytes)
        if cap <= 0:
            raise ValueError
    except Exception:
        cap = (64 if is_v7 else 128) * 1024 * 1024
    if is_v7:
        cap = min(cap, 64 * 1024 * 1024)          # per-TensorCore VMEM on v7x
    limit = max(32 * 1024 * 1024, int(cap * 0.7))  # ~0.7x physical, headroom for Mosaic scratch
    return limit, (2 if is_v7 else 1)


VMEM_LIMIT_BYTES, NUM_TC = _tpu_config()


# ---------------------------------------------------------------------------
# Small helpers
# ---------------------------------------------------------------------------

def _round_up(n, m):
    return ((n + m - 1) // m) * m


def _pick_tile(n, candidates):
    for c in candidates:
        if c <= n and n % c == 0:
            return c
    return n


def _choose_conv_tiling(N, Hs, Ws, C4, P, Cout):
    """VMEM-budgeted (batch block, Cout tile) selection."""
    budget = int(VMEM_LIMIT_BYTES * 0.9)

    def usage(nb, tc):
        xs_b = nb * Hs * Ws * C4 * 2 * 2          # bf16 input block, double-buffered
        w_b = 4 * C4 * tc * 2 * 2                 # bf16 weight block, double-buffered
        out_b = nb * P * tc * 2 * 2               # bf16 output block, double-buffered
        acc_b = nb * P * tc * 4                   # f32 scratch accumulator
        tmp_b = 3 * nb * P * tc * 4               # live f32 temporaries of the norm chain
        return xs_b + w_b + out_b + acc_b + tmp_b + (1 << 20)

    tcs = [t for t in (256, 128) if Cout % t == 0] or [Cout]
    nbs = [d for d in range(N, 0, -1) if N % d == 0]
    choice = None
    for tc in tcs:                                # prefer wide Cout tiles (better MAC/byte)
        for nb in nbs:                            # then the largest batch block that fits
            if usage(nb, tc) <= budget:
                choice = (nb, tc)
                break
        if choice is not None:
            break
    if choice is None:
        choice = (1, tcs[-1])                     # spills possible; see spatial-axis TODO above
    nb, tc = choice

    # Megacore (v7x only): make sure both TensorCores get at least one grid block.
    if NUM_TC >= 2 and (N // nb) * (Cout // tc) < 2:
        if N >= 2:
            nb = next(d for d in nbs if d <= max(1, nb // 2))
        elif tc > 128 and Cout % 128 == 0:
            tc = 128
    return nb, tc


# ---------------------------------------------------------------------------
# Pallas kernels
# ---------------------------------------------------------------------------

def _conv_in_lrelu_kernel(xs_ref, w_ref, gamma_ref, beta_ref, out_ref, acc_ref, *, Ho, Wo):
    """Fused 4x4/s2 conv (via 4 shifted space-to-depth windows) -> InstanceNorm(affine) -> LeakyReLU.

    xs_ref:    (Nb, Hs, Ws, 4*Cin) bf16   space-to-depth input (Hs=Ho+1, Ws=Wo+1)
    w_ref:     (4, 4*Cin, tc)      bf16   weight slabs, slab s = 2*bi + bj
    gamma_ref: (1, tc) f32, beta_ref: (1, tc) f32
    out_ref:   (Nb, Ho*Wo, tc)     bf16
    acc_ref:   (Nb*Ho*Wo, tc)      f32    VMEM scratch accumulator
    """
    Nb = xs_ref.shape[0]
    C4 = xs_ref.shape[3]
    tc = w_ref.shape[2]
    P = Ho * Wo

    # Four shifted 2x2-window reads; each shifted window is repacked into a contiguous
    # (M, K) slab to feed the MXU (inherent to the shifted access pattern).
    for s in range(4):
        bi, bj = s // 2, s % 2
        sl = xs_ref[:, bi:bi + Ho, bj:bj + Wo, :].reshape(Nb * P, C4)
        t = jnp.dot(sl, w_ref[s], preferred_element_type=jnp.float32)
        if s == 0:
            acc_ref[...] = t
        else:
            acc_ref[...] += t

    x3 = acc_ref[...].reshape(Nb, P, tc)
    # InstanceNorm: per-(sample, channel) stats over spatial positions, centered two-pass variance.
    mean = jnp.mean(x3, axis=1, keepdims=True)
    xc = x3 - mean
    var = jnp.mean(xc * xc, axis=1, keepdims=True)
    y = xc * jax.lax.rsqrt(var + EPS)
    y = y * gamma_ref[...].reshape(1, 1, tc) + beta_ref[...].reshape(1, 1, tc)
    y = jnp.where(y >= 0, y, NEG_SLOPE * y)
    out_ref[...] = y.astype(out_ref.dtype)


def _fc_heads_kernel(x_ref, w1_ref, b1_ref, w2_ref, out_ref, h_acc):
    """Fused dual FC head: Linear -> LeakyReLU(0.2) -> Linear (block-diagonal, lane-padded w2).

    grid = (F tiles [parallel], K tiles [arbitrary/reduction]).
    x_ref: (N, tk) bf16, w1_ref: (tk, tf) bf16, b1_ref: (1, tf) f32,
    w2_ref: (tf, Op) f32, out_ref: (1, N, Op) f32 partial (per F tile), h_acc: (N, tf) f32.
    """
    k = pl.program_id(1)
    nk = pl.num_programs(1)

    @pl.when(k == 0)
    def _():
        h_acc[...] = jnp.zeros_like(h_acc)

    h_acc[...] += jnp.dot(x_ref[...], w1_ref[...], preferred_element_type=jnp.float32)

    @pl.when(k == nk - 1)
    def _():
        h = h_acc[...] + b1_ref[...]
        h = jnp.where(h >= 0, h, NEG_SLOPE * h)
        out_ref[0] = jnp.dot(h, w2_ref[...], preferred_element_type=jnp.float32)


# ---------------------------------------------------------------------------
# Wrappers
# ---------------------------------------------------------------------------

def _space_to_depth(x, cin_pad, p=1):
    """Zero-pad (spatial p, channels to cin_pad) + space-to-depth(2x2): one XLA relayout pass.

    x: (N, H, W, C) -> (N, Hs, Ws, 4*cin_pad); channel order (hsub, wsub, c)."""
    N, H, W, C = x.shape
    xp = jnp.pad(x, ((0, 0), (p, p), (p, p), (0, cin_pad - C)))
    Hs, Ws = (H + 2 * p) // 2, (W + 2 * p) // 2
    xs = xp.reshape(N, Hs, 2, Ws, 2, cin_pad)
    xs = jnp.transpose(xs, (0, 1, 3, 2, 4, 5)).reshape(N, Hs, Ws, 4 * cin_pad)
    return xs, Hs - 1, Ws - 1


def conv_block(x, w, gamma, beta):
    """x: (N, H, W, Cin) bf16 NHWC -> (N, Ho, Wo, Cout_pad) bf16."""
    cin_pad = w.shape[1] // 4
    xs, Ho, Wo = _space_to_depth(x.astype(jnp.bfloat16), cin_pad)
    N, Hs, Ws, C4 = xs.shape
    Cout = w.shape[-1]
    P = Ho * Wo
    Nb, tc = _choose_conv_tiling(N, Hs, Ws, C4, P, Cout)
    n_blocks, c_blocks = N // Nb, Cout // tc

    # Pick which operand stays resident across the inner grid axis (minimise HBM re-fetch):
    #   n outer / c inner: activations read once, weights re-read n_blocks times.
    #   c outer / n inner: weights read once, activations re-read c_blocks times.
    xs_bytes = xs.size * 2
    w_bytes = w.size * 2
    cost_n_outer = xs_bytes + w_bytes * n_blocks
    cost_c_outer = xs_bytes * c_blocks + w_bytes
    if cost_n_outer <= cost_c_outer:
        grid = (n_blocks, c_blocks)
        xs_map = lambda n, c: (n, 0, 0, 0)
        w_map = lambda n, c: (0, 0, c)
        gb_map = lambda n, c: (0, c)
        out_map = lambda n, c: (n, 0, c)
    else:
        grid = (c_blocks, n_blocks)
        xs_map = lambda c, n: (n, 0, 0, 0)
        w_map = lambda c, n: (0, 0, c)
        gb_map = lambda c, n: (0, c)
        out_map = lambda c, n: (n, 0, c)

    flops = 2 * N * P * (4 * C4) * Cout
    bytes_accessed = (min(cost_n_outer, cost_c_outer)
                      + (gamma.size + beta.size) * 4 + N * P * Cout * 2)

    out = pl.pallas_call(
        functools.partial(_conv_in_lrelu_kernel, Ho=Ho, Wo=Wo),
        out_shape=jax.ShapeDtypeStruct((N, P, Cout), jnp.bfloat16),
        grid=grid,
        in_specs=[
            pl.BlockSpec((Nb, Hs, Ws, C4), xs_map),
            pl.BlockSpec((4, C4, tc), w_map),
            pl.BlockSpec((1, tc), gb_map),
            pl.BlockSpec((1, tc), gb_map),
        ],
        out_specs=pl.BlockSpec((Nb, P, tc), out_map),
        scratch_shapes=[pltpu.VMEM((Nb * P, tc), jnp.float32)],
        compiler_params=pltpu.CompilerParams(
            dimension_semantics=("parallel", "parallel"),
            vmem_limit_bytes=VMEM_LIMIT_BYTES),
        cost_estimate=pl.CostEstimate(flops=int(flops), transcendentals=int(N * Cout),
                                      bytes_accessed=int(bytes_accessed)),
    )(xs, w, gamma, beta)
    return out.reshape(N, Ho, Wo, Cout)


def fc_heads(x, w1, b1, w2, b2, o_real):
    """x: (N, flat_pad) bf16.  Returns (logit_adv (N,1), logit_att (N,attr_dim)), f32."""
    N, flat = x.shape
    F2 = w1.shape[1]
    Op = w2.shape[1]                                  # lane-padded (128) output width
    tk = _pick_tile(flat, (1024, 512, 256, 128))
    tf = _pick_tile(F2, (1024, 512, 256, 128))
    nf, nk = F2 // tf, flat // tk

    w1_map = lambda f, k: (k, f)
    if nk >= 3:                                       # deep K stream: keep the w1 DMA saturated
        w1_spec = pl.BlockSpec((tk, tf), w1_map, pipeline_mode=pl.Buffered(3))
    else:
        w1_spec = pl.BlockSpec((tk, tf), w1_map)

    flops = 2 * N * flat * F2 + 2 * N * F2 * Op
    bytes_accessed = x.size * 2 + w1.size * 2 + b1.size * 4 + w2.size * 4 + nf * N * Op * 4

    partials = pl.pallas_call(
        _fc_heads_kernel,
        out_shape=jax.ShapeDtypeStruct((nf, N, Op), jnp.float32),
        grid=(nf, nk),
        in_specs=[
            pl.BlockSpec((N, tk), lambda f, k: (0, k)),
            w1_spec,
            pl.BlockSpec((1, tf), lambda f, k: (0, f)),
            pl.BlockSpec((tf, Op), lambda f, k: (f, 0)),
        ],
        out_specs=pl.BlockSpec((1, N, Op), lambda f, k: (f, 0, 0)),
        scratch_shapes=[pltpu.VMEM((N, tf), jnp.float32)],
        compiler_params=pltpu.CompilerParams(
            dimension_semantics=("parallel", "arbitrary"),
            vmem_limit_bytes=VMEM_LIMIT_BYTES),
        cost_estimate=pl.CostEstimate(flops=int(flops), transcendentals=0,
                                      bytes_accessed=int(bytes_accessed)),
    )(x, w1, b1, w2)

    out = partials.sum(axis=0)[:, :o_real] + b2       # tiny (N, 1+attr_dim) epilogue in XLA
    return out[:, :1], out[:, 1:]


# ---------------------------------------------------------------------------
# Parameter construction (PyTorch-layout weights -> kernel layout, with channel padding)
# ---------------------------------------------------------------------------

def convert_conv_weight(w_pt, cin_pad, cout_pad):
    """PyTorch (Cout, Cin, 4, 4) -> (4, 4*cin_pad, cout_pad).

    Slab s = 2*bi + bj holds kernel taps (kh, kw) = (2*bi + hsub, 2*bj + wsub) with row order
    (hsub, wsub, cin), matching the space-to-depth channel layout."""
    cout, cin = w_pt.shape[:2]
    w = jnp.transpose(w_pt, (2, 3, 1, 0))                                   # (kh, kw, Cin, Cout)
    w = jnp.pad(w, ((0, 0), (0, 0), (0, cin_pad - cin), (0, cout_pad - cout)))
    w = w.reshape(2, 2, 2, 2, cin_pad, cout_pad)                            # (bi, hsub, bj, wsub, ., .)
    w = jnp.transpose(w, (0, 2, 1, 3, 4, 5))                                # (bi, bj, hsub, wsub, ., .)
    return w.reshape(4, 4 * cin_pad, cout_pad)


def convert_fc1_weight(w1_pt, feat, c_real, c_pad):
    """PyTorch (fc_dim, c_real*feat*feat) [(C,H,W) flatten] -> (feat*feat*c_pad, fc_dim) [(H,W,Cpad)]."""
    fc_dim = w1_pt.shape[0]
    w = w1_pt.reshape(fc_dim, c_real, feat, feat)
    w = jnp.transpose(w, (0, 2, 3, 1))                                      # (fc, H, W, C)
    w = jnp.pad(w, ((0, 0), (0, 0), (0, 0), (0, c_pad - c_real)))
    return jnp.transpose(w.reshape(fc_dim, feat * feat * c_pad), (1, 0))


def init_params(key, dim, attr_dim, n_layers, fc_dim, image_size):
    assert image_size % (2 ** n_layers) == 0
    params = {"conv": []}
    in_real, in_pad = 3, CIN0_PAD
    k = key
    for i in range(n_layers):
        cout_real = min(dim * 2 ** i, MAX_DIM)
        cout_pad = _round_up(cout_real, LANE)
        k, k1, k2, k3 = jax.random.split(k, 4)
        w_pt = 0.1 * jax.random.normal(k1, (cout_real, in_real, 4, 4), jnp.float32)
        g_pt = 1.0 + 0.05 * jax.random.normal(k2, (cout_real,), jnp.float32)
        b_pt = 0.05 * jax.random.normal(k3, (cout_real,), jnp.float32)
        w = convert_conv_weight(w_pt, in_pad, cout_pad).astype(jnp.bfloat16)
        gamma = jnp.pad(g_pt, (0, cout_pad - cout_real), constant_values=1.0).reshape(1, cout_pad)
        beta = jnp.pad(b_pt, (0, cout_pad - cout_real)).reshape(1, cout_pad)
        params["conv"].append((w, gamma, beta))
        in_real, in_pad = cout_real, cout_pad

    feat = image_size // 2 ** n_layers
    flat_real = in_real * feat * feat
    fc2 = 2 * fc_dim
    fc2_pad = _round_up(fc2, LANE)
    o_real = 1 + attr_dim
    o_pad = _round_up(o_real, LANE)

    k, ka1, ka2, ka3, ka4, kb1, kb2, kb3, kb4 = jax.random.split(k, 9)
    w1_adv_pt = 0.1 * jax.random.normal(ka1, (fc_dim, flat_real), jnp.float32)
    b1_adv = 0.05 * jax.random.normal(ka2, (fc_dim,), jnp.float32)
    w2_adv_pt = 0.1 * jax.random.normal(ka3, (1, fc_dim), jnp.float32)
    b2_adv = 0.05 * jax.random.normal(ka4, (1,), jnp.float32)
    w1_att_pt = 0.1 * jax.random.normal(kb1, (fc_dim, flat_real), jnp.float32)
    b1_att = 0.05 * jax.random.normal(kb2, (fc_dim,), jnp.float32)
    w2_att_pt = 0.1 * jax.random.normal(kb3, (attr_dim, fc_dim), jnp.float32)
    b2_att = 0.05 * jax.random.normal(kb4, (attr_dim,), jnp.float32)

    w1 = jnp.concatenate([convert_fc1_weight(w1_adv_pt, feat, in_real, in_pad),
                          convert_fc1_weight(w1_att_pt, feat, in_real, in_pad)],
                         axis=1)                                            # (flat_pad, 2*fc_dim)
    w1 = jnp.pad(w1, ((0, 0), (0, fc2_pad - fc2))).astype(jnp.bfloat16)     # lane-dense hidden dim
    b1 = jnp.pad(jnp.concatenate([b1_adv, b1_att]), (0, fc2_pad - fc2))[None, :]

    # Block-diagonal second layer, zero-padded to a dense 128-lane output and padded hidden rows.
    w2 = jnp.zeros((fc2_pad, o_pad), jnp.float32)
    w2 = w2.at[:fc_dim, :1].set(w2_adv_pt.T)
    w2 = w2.at[fc_dim:fc2, 1:o_real].set(w2_att_pt.T)
    b2 = jnp.concatenate([b2_adv, b2_att])[None, :]

    params["fc"] = dict(w1=w1, b1=b1, w2=w2, b2=b2, o_real=o_real)
    return params


# ---------------------------------------------------------------------------
# Discriminator forward
# ---------------------------------------------------------------------------

def discriminator_forward(params, x_nchw):
    """x_nchw: (N, 3, H, W); returns (logit_adv (N,1), logit_att (N,attr_dim))."""
    y = jnp.transpose(x_nchw, (0, 2, 3, 1)).astype(jnp.bfloat16)   # NCHW -> NHWC once
    for (w, gamma, beta) in params["conv"]:
        y = conv_block(y, w, gamma, beta)
    N = y.shape[0]
    y = y.reshape(N, -1)          # NHWC flatten; w1 rows already permuted to match view(N,-1)
    fc = params["fc"]
    return fc_heads(y, fc["w1"], fc["b1"], fc["w2"], fc["b2"], fc["o_real"])


if __name__ == "__main__":
    # Small config consistent with the module: dim=8, attr_dim=5, n_layers=3,
    # fc_dim=32, imageSize=16, batch=2.  Spatial: 16 -> 8 -> 4 -> 2.
    DIM, ATTR_DIM, N_LAYERS, FC_DIM, IMAGE_SIZE, BATCH = 8, 5, 3, 32, 16, 2

    key = jax.random.PRNGKey(0)
    pkey, xkey = jax.random.split(key)
    params = init_params(pkey, DIM, ATTR_DIM, N_LAYERS, FC_DIM, IMAGE_SIZE)
    x = jax.random.normal(xkey, (BATCH, 3, IMAGE_SIZE, IMAGE_SIZE), jnp.float32)

    fwd = jax.jit(functools.partial(discriminator_forward, params))
    logit_adv, logit_att = fwd(x)
    jax.block_until_ready((logit_adv, logit_att))

    assert logit_adv.shape == (BATCH, 1), logit_adv.shape
    assert logit_att.shape == (BATCH, ATTR_DIM), logit_att.shape
    assert jnp.all(jnp.isfinite(logit_adv)) and jnp.all(jnp.isfinite(logit_att))
    print("KERNEL_OK")
</pallas_src>

<mosaic_0001>
module attributes {stable_mosaic.version = 11 : i64} {
  func.func @_conv_in_lrelu_kernel(%arg0: i32, %arg1: i32, %arg2: memref<2x9x9x128xbf16, #tpu.memory_space<vmem>>, %arg3: memref<4x128x128xbf16, #tpu.memory_space<vmem>>, %arg4: memref<1x128xf32, #tpu.memory_space<vmem>>, %arg5: memref<1x128xf32, #tpu.memory_space<vmem>>, %arg6: memref<2x64x128xbf16, #tpu.memory_space<vmem>>, %arg7: memref<128x128xf32, #tpu.memory_space<vmem>>) attributes {dimension_semantics = [#tpu.dimension_semantics<parallel>, #tpu.dimension_semantics<parallel>], iteration_bounds = array<i64: 1, 1>, scalar_prefetch = 0 : i64, scratch_operands = 1 : i64, tpu.core_type = #tpu.core_type<tc>, window_params = [{transform_indices = @transform_0, window_bounds = array<i64: 2, 9, 9, 128>}, {transform_indices = @transform_1, window_bounds = array<i64: 4, 128, 128>}, {transform_indices = @transform_2, window_bounds = array<i64: 1, 128>}, {transform_indices = @transform_3, window_bounds = array<i64: 1, 128>}, {transform_indices = @transform_4, window_bounds = array<i64: 2, 64, 128>}]} {
    %c0 = arith.constant 0 : index
    %c0_0 = arith.constant 0 : index
    %c0_1 = arith.constant 0 : index
    %c0_2 = arith.constant 0 : index
    %0 = vector.load %arg2[%c0, %c0_0, %c0_1, %c0_2] : memref<2x9x9x128xbf16, #tpu.memory_space<vmem>>, vector<2x8x8x128xbf16>
    %1 = vector.shape_cast %0 : vector<2x8x8x128xbf16> to vector<128x128xbf16>
    %c0_3 = arith.constant 0 : index
    %c0_4 = arith.constant 0 : index
    %c0_5 = arith.constant 0 : index
    %2 = vector.load %arg3[%c0_3, %c0_4, %c0_5] : memref<4x128x128xbf16, #tpu.memory_space<vmem>>, vector<1x128x128xbf16>
    %3 = vector.shape_cast %2 : vector<1x128x128xbf16> to vector<128x128xbf16>
    %cst = arith.constant dense<0.000000e+00> : vector<128x128xf32>
    %4 = tpu.matmul %1, %3, %cst {dimension_numbers = #tpu.dot_dimension_numbers<[1], [0], [0], [1], [0, 0, 1, 1], [], []>} : vector<128x128xbf16>, vector<128x128xbf16>, vector<128x128xf32> -> vector<128x128xf32>
    %c0_6 = arith.constant 0 : index
    %c0_7 = arith.constant 0 : index
    %5 = vector.load %arg7[%c0_6, %c0_7] : memref<128x128xf32, #tpu.memory_space<vmem>>, vector<128x128xf32>
    tpu.vector_store %arg7[%c0_6, %c0_7], %4 {strides = array<i32>} : memref<128x128xf32, #tpu.memory_space<vmem>>, vector<128x128xf32>,
    %c0_8 = arith.constant 0 : index
    %c0_9 = arith.constant 0 : index
    %c1 = arith.constant 1 : index
    %c0_10 = arith.constant 0 : index
    %6 = vector.load %arg2[%c0_8, %c0_9, %c1, %c0_10] : memref<2x9x9x128xbf16, #tpu.memory_space<vmem>>, vector<2x8x8x128xbf16>
    %7 = vector.shape_cast %6 : vector<2x8x8x128xbf16> to vector<128x128xbf16>
    %c1_11 = arith.constant 1 : index
    %c0_12 = arith.constant 0 : index
    %c0_13 = arith.constant 0 : index
    %8 = vector.load %arg3[%c1_11, %c0_12, %c0_13] : memref<4x128x128xbf16, #tpu.memory_space<vmem>>, vector<1x128x128xbf16>
    %9 = vector.shape_cast %8 : vector<1x128x128xbf16> to vector<128x128xbf16>
    %cst_14 = arith.constant dense<0.000000e+00> : vector<128x128xf32>
    %10 = tpu.matmul %7, %9, %cst_14 {dimension_numbers = #tpu.dot_dimension_numbers<[1], [0], [0], [1], [0, 0, 1, 1], [], []>} : vector<128x128xbf16>, vector<128x128xbf16>, vector<128x128xf32> -> vector<128x128xf32>
    %c0_15 = arith.constant 0 : index
    %c0_16 = arith.constant 0 : index
    %11 = vector.load %arg7[%c0_15, %c0_16] : memref<128x128xf32, #tpu.memory_space<vmem>>, vector<128x128xf32>
    %12 = arith.addf %11, %10 : vector<128x128xf32>
    %c0_17 = arith.constant 0 : index
    %c0_18 = arith.constant 0 : index
    %13 = vector.load %arg7[%c0_17, %c0_18] : memref<128x128xf32, #tpu.memory_space<vmem>>, vector<128x128xf32>
    tpu.vector_store %arg7[%c0_17, %c0_18], %12 {strides = array<i32>} : memref<128x128xf32, #tpu.memory_space<vmem>>, vector<128x128xf32>,
    %c0_19 = arith.constant 0 : index
    %c1_20 = arith.constant 1 : index
    %c0_21 = arith.constant 0 : index
    %c0_22 = arith.constant 0 : index
    %14 = vector.load %arg2[%c0_19, %c1_20, %c0_21, %c0_22] : memref<2x9x9x128xbf16, #tpu.memory_space<vmem>>, vector<2x8x8x128xbf16>
    %15 = vector.shape_cast %14 : vector<2x8x8x128xbf16> to vector<128x128xbf16>
    %c2 = arith.constant 2 : index
    %c0_23 = arith.constant 0 : index
    %c0_24 = arith.constant 0 : index
    %16 = vector.load %arg3[%c2, %c0_23, %c0_24] : memref<4x128x128xbf16, #tpu.memory_space<vmem>>, vector<1x128x128xbf16>
    %17 = vector.shape_cast %16 : vector<1x128x128xbf16> to vector<128x128xbf16>
    %cst_25 = arith.constant dense<0.000000e+00> : vector<128x128xf32>
    %18 = tpu.matmul %15, %17, %cst_25 {dimension_numbers = #tpu.dot_dimension_numbers<[1], [0], [0], [1], [0, 0, 1, 1], [], []>} : vector<128x128xbf16>, vector<128x128xbf16>, vector<128x128xf32> -> vector<128x128xf32>
    %c0_26 = arith.constant 0 : index
    %c0_27 = arith.constant 0 : index
    %19 = vector.load %arg7[%c0_26, %c0_27] : memref<128x128xf32, #tpu.memory_space<vmem>>, vector<128x128xf32>
    %20 = arith.addf %19, %18 : vector<128x128xf32>
    %c0_28 = arith.constant 0 : index
    %c0_29 = arith.constant 0 : index
    %21 = vector.load %arg7[%c0_28, %c0_29] : memref<128x128xf32, #tpu.memory_space<vmem>>, vector<128x128xf32>
    tpu.vector_store %arg7[%c0_28, %c0_29], %20 {strides = array<i32>} : memref<128x128xf32, #tpu.memory_space<vmem>>, vector<128x128xf32>,
    %c0_30 = arith.constant 0 : index
    %c1_31 = arith.constant 1 : index
    %c1_32 = arith.constant 1 : index
    %c0_33 = arith.constant 0 : index
    %22 = vector.load %arg2[%c0_30, %c1_31, %c1_32, %c0_33] : memref<2x9x9x128xbf16, #tpu.memory_space<vmem>>, vector<2x8x8x128xbf16>
    %23 = vector.shape_cast %22 : vector<2x8x8x128xbf16> to vector<128x128xbf16>
    %c3 = arith.constant 3 : index
    %c0_34 = arith.constant 0 : index
    %c0_35 = arith.constant 0 : index
    %24 = vector.load %arg3[%c3, %c0_34, %c0_35] : memref<4x128x128xbf16, #tpu.memory_space<vmem>>, vector<1x128x128xbf16>
    %25 = vector.shape_cast %24 : vector<1x128x128xbf16> to vector<128x128xbf16>
    %cst_36 = arith.constant dense<0.000000e+00> : vector<128x128xf32>
    %26 = tpu.matmul %23, %25, %cst_36 {dimension_numbers = #tpu.dot_dimension_numbers<[1], [0], [0], [1], [0, 0, 1, 1], [], []>} : vector<128x128xbf16>, vector<128x128xbf16>, vector<128x128xf32> -> vector<128x128xf32>
    %c0_37 = arith.constant 0 : index
    %c0_38 = arith.constant 0 : index
    %27 = vector.load %arg7[%c0_37, %c0_38] : memref<128x128xf32, #tpu.memory_space<vmem>>, vector<128x128xf32>
    %28 = arith.addf %27, %26 : vector<128x128xf32>
    %c0_39 = arith.constant 0 : index
    %c0_40 = arith.constant 0 : index
    %29 = vector.load %arg7[%c0_39, %c0_40] : memref<128x128xf32, #tpu.memory_space<vmem>>, vector<128x128xf32>
    tpu.vector_store %arg7[%c0_39, %c0_40], %28 {strides = array<i32>} : memref<128x128xf32, #tpu.memory_space<vmem>>, vector<128x128xf32>,
    %c0_41 = arith.constant 0 : index
    %c0_42 = arith.constant 0 : index
    %30 = vector.load %arg7[%c0_41, %c0_42] : memref<128x128xf32, #tpu.memory_space<vmem>>, vector<128x128xf32>
    %31 = vector.shape_cast %30 : vector<128x128xf32> to vector<2x64x128xf32>
    %cst_43 = arith.constant dense<0.000000e+00> : vector<2x128xf32>
    %32 = vector.multi_reduction <add>, %31, %cst_43 [1] : vector<2x64x128xf32> to vector<2x128xf32>
    %33 = vector.shape_cast %32 : vector<2x128xf32> to vector<2x1x128xf32>
    %cst_44 = arith.constant 6.400000e+01 : f32
    %34 = vector.broadcast %cst_44 : f32 to vector<2x1x128xf32>
    %35 = arith.divf %33, %34 : vector<2x1x128xf32>
    %36 = vector.broadcast %35 : vector<2x1x128xf32> to vector<2x64x128xf32>
    %37 = arith.subf %31, %36 : vector<2x64x128xf32>
    %38 = arith.mulf %37, %37 : vector<2x64x128xf32>
    %cst_45 = arith.constant dense<0.000000e+00> : vector<2x128xf32>
    %39 = vector.multi_reduction <add>, %38, %cst_45 [1] : vector<2x64x128xf32> to vector<2x128xf32>
    %40 = vector.shape_cast %39 : vector<2x128xf32> to vector<2x1x128xf32>
    %cst_46 = arith.constant 6.400000e+01 : f32
    %41 = vector.broadcast %cst_46 : f32 to vector<2x1x128xf32>
    %42 = arith.divf %40, %41 : vector<2x1x128xf32>
    %cst_47 = arith.constant 9.99999974E-6 : f32
    %43 = vector.broadcast %cst_47 : f32 to vector<2x1x128xf32>
    %44 = arith.addf %42, %43 : vector<2x1x128xf32>
    %45 = math.rsqrt %44 : vector<2x1x128xf32>
    %46 = vector.broadcast %45 : vector<2x1x128xf32> to vector<2x64x128xf32>
    %47 = arith.mulf %37, %46 : vector<2x64x128xf32>
    %c0_48 = arith.constant 0 : index
    %c0_49 = arith.constant 0 : index
    %48 = vector.load %arg4[%c0_48, %c0_49] : memref<1x128xf32, #tpu.memory_space<vmem>>, vector<1x128xf32>
    %49 = vector.shape_cast %48 : vector<1x128xf32> to vector<1x1x128xf32>
    %50 = vector.broadcast %49 : vector<1x1x128xf32> to vector<2x64x128xf32>
    %51 = arith.mulf %47, %50 : vector<2x64x128xf32>
    %c0_50 = arith.constant 0 : index
    %c0_51 = arith.constant 0 : index
    %52 = vector.load %arg5[%c0_50, %c0_51] : memref<1x128xf32, #tpu.memory_space<vmem>>, vector<1x128xf32>
    %53 = vector.shape_cast %52 : vector<1x128xf32> to vector<1x1x128xf32>
    %54 = vector.broadcast %53 : vector<1x1x128xf32> to vector<2x64x128xf32>
    %55 = arith.addf %51, %54 : vector<2x64x128xf32>
    %cst_52 = arith.constant 0.000000e+00 : f32
    %56 = vector.broadcast %cst_52 : f32 to vector<2x64x128xf32>
    %57 = arith.cmpf oge, %55, %56 : vector<2x64x128xf32>
    %cst_53 = arith.constant 2.000000e-01 : f32
    %58 = vector.broadcast %cst_53 : f32 to vector<2x64x128xf32>
    %59 = arith.mulf %58, %55 : vector<2x64x128xf32>
    %60 = arith.select %57, %55, %59 : vector<2x64x128xi1>, vector<2x64x128xf32>
    %61 = arith.truncf %60 : vector<2x64x128xf32> to vector<2x64x128xbf16>
    %c0_54 = arith.constant 0 : index
    %c0_55 = arith.constant 0 : index
    %c0_56 = arith.constant 0 : index
    %62 = vector.load %arg6[%c0_54, %c0_55, %c0_56] : memref<2x64x128xbf16, #tpu.memory_space<vmem>>, vector<2x64x128xbf16>
    tpu.vector_store %arg6[%c0_54, %c0_55, %c0_56], %61 {strides = array<i32>} : memref<2x64x128xbf16, #tpu.memory_space<vmem>>, vector<2x64x128xbf16>,
    return
  }
  func.func @transform_0(%arg0: i32, %arg1: i32) -> (i32, i32, i32, i32) {
    %c0_i32 = arith.constant 0 : i32
    %c0_i32_0 = arith.constant 0 : i32
    %c0_i32_1 = arith.constant 0 : i32
    %c0_i32_2 = arith.constant 0 : i32
    return %arg0, %c0_i32, %c0_i32_0, %c0_i32_1 : i32, i32, i32, i32
  }
  func.func @transform_1(%arg0: i32, %arg1: i32) -> (i32, i32, i32) {
    %c0_i32 = arith.constant 0 : i32
    %c0_i32_0 = arith.constant 0 : i32
    %c0_i32_1 = arith.constant 0 : i32
    return %c0_i32, %c0_i32_0, %arg1 : i32, i32, i32
  }
  func.func @transform_2(%arg0: i32, %arg1: i32) -> (i32, i32) {
    %c0_i32 = arith.constant 0 : i32
    %c0_i32_0 = arith.constant 0 : i32
    return %c0_i32, %arg1 : i32, i32
  }
  func.func @transform_3(%arg0: i32, %arg1: i32) -> (i32, i32) {
    %c0_i32 = arith.constant 0 : i32
    %c0_i32_0 = arith.constant 0 : i32
    return %c0_i32, %arg1 : i32, i32
  }
  func.func @transform_4(%arg0: i32, %arg1: i32) -> (i32, i32, i32) {
    %c0_i32 = arith.constant 0 : i32
    %c0_i32_0 = arith.constant 0 : i32
    return %arg0, %c0_i32, %arg1 : i32, i32, i32
  }
}

module attributes {stable_mosaic.version = 11 : i64} {
  func.func @_conv_in_lrelu_kernel(%arg0: i32, %arg1: i32, %arg2: memref<2x5x5x512xbf16, #tpu.memory_space<vmem>>, %arg3: memref<4x512x128xbf16, #tpu.memory_space<vmem>>, %arg4: memref<1x128xf32, #tpu.memory_space<vmem>>, %arg5: memref<1x128xf32, #tpu.memory_space<vmem>>, %arg6: memref<2x16x128xbf16, #tpu.memory_space<vmem>>, %arg7: memref<32x128xf32, #tpu.memory_space<vmem>>) attributes {dimension_semantics = [#tpu.dimension_semantics<parallel>, #tpu.dimension_semantics<parallel>], iteration_bounds = array<i64: 1, 1>, scalar_prefetch = 0 : i64, scratch_operands = 1 : i64, tpu.core_type = #tpu.core_type<tc>, window_params = [{transform_indices = @transform_0, window_bounds = array<i64: 2, 5, 5, 512>}, {transform_indices = @transform_1, window_bounds = array<i64: 4, 512, 128>}, {transform_indices = @transform_2, window_bounds = array<i64: 1, 128>}, {transform_indices = @transform_3, window_bounds = array<i64: 1, 128>}, {transform_indices = @transform_4, window_bounds = array<i64: 2, 16, 128>}]} {
    %c0 = arith.constant 0 : index
    %c0_0 = arith.constant 0 : index
    %c0_1 = arith.constant 0 : index
    %c0_2 = arith.constant 0 : index
    %0 = vector.load %arg2[%c0, %c0_0, %c0_1, %c0_2] : memref<2x5x5x512xbf16, #tpu.memory_space<vmem>>, vector<2x4x4x512xbf16>
    %1 = vector.shape_cast %0 : vector<2x4x4x512xbf16> to vector<32x512xbf16>
    %c0_3 = arith.constant 0 : index
    %c0_4 = arith.constant 0 : index
    %c0_5 = arith.constant 0 : index
    %2 = vector.load %arg3[%c0_3, %c0_4, %c0_5] : memref<4x512x128xbf16, #tpu.memory_space<vmem>>, vector<1x512x128xbf16>
    %3 = vector.shape_cast %2 : vector<1x512x128xbf16> to vector<512x128xbf16>
    %cst = arith.constant dense<0.000000e+00> : vector<32x128xf32>
    %4 = tpu.matmul %1, %3, %cst {dimension_numbers = #tpu.dot_dimension_numbers<[1], [0], [0], [1], [0, 0, 1, 1], [], []>} : vector<32x512xbf16>, vector<512x128xbf16>, vector<32x128xf32> -> vector<32x128xf32>
    %c0_6 = arith.constant 0 : index
    %c0_7 = arith.constant 0 : index
    %5 = vector.load %arg7[%c0_6, %c0_7] : memref<32x128xf32, #tpu.memory_space<vmem>>, vector<32x128xf32>
    tpu.vector_store %arg7[%c0_6, %c0_7], %4 {strides = array<i32>} : memref<32x128xf32, #tpu.memory_space<vmem>>, vector<32x128xf32>,
    %c0_8 = arith.constant 0 : index
    %c0_9 = arith.constant 0 : index
    %c1 = arith.constant 1 : index
    %c0_10 = arith.constant 0 : index
    %6 = vector.load %arg2[%c0_8, %c0_9, %c1, %c0_10] : memref<2x5x5x512xbf16, #tpu.memory_space<vmem>>, vector<2x4x4x512xbf16>
    %7 = vector.shape_cast %6 : vector<2x4x4x512xbf16> to vector<32x512xbf16>
    %c1_11 = arith.constant 1 : index
    %c0_12 = arith.constant 0 : index
    %c0_13 = arith.constant 0 : index
    %8 = vector.load %arg3[%c1_11, %c0_12, %c0_13] : memref<4x512x128xbf16, #tpu.memory_space<vmem>>, vector<1x512x128xbf16>
    %9 = vector.shape_cast %8 : vector<1x512x128xbf16> to vector<512x128xbf16>
    %cst_14 = arith.constant dense<0.000000e+00> : vector<32x128xf32>
    %10 = tpu.matmul %7, %9, %cst_14 {dimension_numbers = #tpu.dot_dimension_numbers<[1], [0], [0], [1], [0, 0, 1, 1], [], []>} : vector<32x512xbf16>, vector<512x128xbf16>, vector<32x128xf32> -> vector<32x128xf32>
    %c0_15 = arith.constant 0 : index
    %c0_16 = arith.constant 0 : index
    %11 = vector.load %arg7[%c0_15, %c0_16] : memref<32x128xf32, #tpu.memory_space<vmem>>, vector<32x128xf32>
    %12 = arith.addf %11, %10 : vector<32x128xf32>
    %c0_17 = arith.constant 0 : index
    %c0_18 = arith.constant 0 : index
    %13 = vector.load %arg7[%c0_17, %c0_18] : memref<32x128xf32, #tpu.memory_space<vmem>>, vector<32x128xf32>
    tpu.vector_store %arg7[%c0_17, %c0_18], %12 {strides = array<i32>} : memref<32x128xf32, #tpu.memory_space<vmem>>, vector<32x128xf32>,
    %c0_19 = arith.constant 0 : index
    %c1_20 = arith.constant 1 : index
    %c0_21 = arith.constant 0 : index
    %c0_22 = arith.constant 0 : index
    %14 = vector.load %arg2[%c0_19, %c1_20, %c0_21, %c0_22] : memref<2x5x5x512xbf16, #tpu.memory_space<vmem>>, vector<2x4x4x512xbf16>
    %15 = vector.shape_cast %14 : vector<2x4x4x512xbf16> to vector<32x512xbf16>
    %c2 = arith.constant 2 : index
    %c0_23 = arith.constant 0 : index
    %c0_24 = arith.constant 0 : index
    %16 = vector.load %arg3[%c2, %c0_23, %c0_24] : memref<4x512x128xbf16, #tpu.memory_space<vmem>>, vector<1x512x128xbf16>
    %17 = vector.shape_cast %16 : vector<1x512x128xbf16> to vector<512x128xbf16>
    %cst_25 = arith.constant dense<0.000000e+00> : vector<32x128xf32>
    %18 = tpu.matmul %15, %17, %cst_25 {dimension_numbers = #tpu.dot_dimension_numbers<[1], [0], [0], [1], [0, 0, 1, 1], [], []>} : vector<32x512xbf16>, vector<512x128xbf16>, vector<32x128xf32> -> vector<32x128xf32>
    %c0_26 = arith.constant 0 : index
    %c0_27 = arith.constant 0 : index
    %19 = vector.load %arg7[%c0_26, %c0_27] : memref<32x128xf32, #tpu.memory_space<vmem>>, vector<32x128xf32>
    %20 = arith.addf %19, %18 : vector<32x128xf32>
    %c0_28 = arith.constant 0 : index
    %c0_29 = arith.constant 0 : index
    %21 = vector.load %arg7[%c0_28, %c0_29] : memref<32x128xf32, #tpu.memory_space<vmem>>, vector<32x128xf32>
    tpu.vector_store %arg7[%c0_28, %c0_29], %20 {strides = array<i32>} : memref<32x128xf32, #tpu.memory_space<vmem>>, vector<32x128xf32>,
    %c0_30 = arith.constant 0 : index
    %c1_31 = arith.constant 1 : index
    %c1_32 = arith.constant 1 : index
    %c0_33 = arith.constant 0 : index
    %22 = vector.load %arg2[%c0_30, %c1_31, %c1_32, %c0_33] : memref<2x5x5x512xbf16, #tpu.memory_space<vmem>>, vector<2x4x4x512xbf16>
    %23 = vector.shape_cast %22 : vector<2x4x4x512xbf16> to vector<32x512xbf16>
    %c3 = arith.constant 3 : index
    %c0_34 = arith.constant 0 : index
    %c0_35 = arith.constant 0 : index
    %24 = vector.load %arg3[%c3, %c0_34, %c0_35] : memref<4x512x128xbf16, #tpu.memory_space<vmem>>, vector<1x512x128xbf16>
    %25 = vector.shape_cast %24 : vector<1x512x128xbf16> to vector<512x128xbf16>
    %cst_36 = arith.constant dense<0.000000e+00> : vector<32x128xf32>
    %26 = tpu.matmul %23, %25, %cst_36 {dimension_numbers = #tpu.dot_dimension_numbers<[1], [0], [0], [1], [0, 0, 1, 1], [], []>} : vector<32x512xbf16>, vector<512x128xbf16>, vector<32x128xf32> -> vector<32x128xf32>
    %c0_37 = arith.constant 0 : index
    %c0_38 = arith.constant 0 : index
    %27 = vector.load %arg7[%c0_37, %c0_38] : memref<32x128xf32, #tpu.memory_space<vmem>>, vector<32x128xf32>
    %28 = arith.addf %27, %26 : vector<32x128xf32>
    %c0_39 = arith.constant 0 : index
    %c0_40 = arith.constant 0 : index
    %29 = vector.load %arg7[%c0_39, %c0_40] : memref<32x128xf32, #tpu.memory_space<vmem>>, vector<32x128xf32>
    tpu.vector_store %arg7[%c0_39, %c0_40], %28 {strides = array<i32>} : memref<32x128xf32, #tpu.memory_space<vmem>>, vector<32x128xf32>,
    %c0_41 = arith.constant 0 : index
    %c0_42 = arith.constant 0 : index
    %30 = vector.load %arg7[%c0_41, %c0_42] : memref<32x128xf32, #tpu.memory_space<vmem>>, vector<32x128xf32>
    %31 = vector.shape_cast %30 : vector<32x128xf32> to vector<2x16x128xf32>
    %cst_43 = arith.constant dense<0.000000e+00> : vector<2x128xf32>
    %32 = vector.multi_reduction <add>, %31, %cst_43 [1] : vector<2x16x128xf32> to vector<2x128xf32>
    %33 = vector.shape_cast %32 : vector<2x128xf32> to vector<2x1x128xf32>
    %cst_44 = arith.constant 1.600000e+01 : f32
    %34 = vector.broadcast %cst_44 : f32 to vector<2x1x128xf32>
    %35 = arith.divf %33, %34 : vector<2x1x128xf32>
    %36 = vector.broadcast %35 : vector<2x1x128xf32> to vector<2x16x128xf32>
    %37 = arith.subf %31, %36 : vector<2x16x128xf32>
    %38 = arith.mulf %37, %37 : vector<2x16x128xf32>
    %cst_45 = arith.constant dense<0.000000e+00> : vector<2x128xf32>
    %39 = vector.multi_reduction <add>, %38, %cst_45 [1] : vector<2x16x128xf32> to vector<2x128xf32>
    %40 = vector.shape_cast %39 : vector<2x128xf32> to vector<2x1x128xf32>
    %cst_46 = arith.constant 1.600000e+01 : f32
    %41 = vector.broadcast %cst_46 : f32 to vector<2x1x128xf32>
    %42 = arith.divf %40, %41 : vector<2x1x128xf32>
    %cst_47 = arith.constant 9.99999974E-6 : f32
    %43 = vector.broadcast %cst_47 : f32 to vector<2x1x128xf32>
    %44 = arith.addf %42, %43 : vector<2x1x128xf32>
    %45 = math.rsqrt %44 : vector<2x1x128xf32>
    %46 = vector.broadcast %45 : vector<2x1x128xf32> to vector<2x16x128xf32>
    %47 = arith.mulf %37, %46 : vector<2x16x128xf32>
    %c0_48 = arith.constant 0 : index
    %c0_49 = arith.constant 0 : index
    %48 = vector.load %arg4[%c0_48, %c0_49] : memref<1x128xf32, #tpu.memory_space<vmem>>, vector<1x128xf32>
    %49 = vector.shape_cast %48 : vector<1x128xf32> to vector<1x1x128xf32>
    %50 = vector.broadcast %49 : vector<1x1x128xf32> to vector<2x16x128xf32>
    %51 = arith.mulf %47, %50 : vector<2x16x128xf32>
    %c0_50 = arith.constant 0 : index
    %c0_51 = arith.constant 0 : index
    %52 = vector.load %arg5[%c0_50, %c0_51] : memref<1x128xf32, #tpu.memory_space<vmem>>, vector<1x128xf32>
    %53 = vector.shape_cast %52 : vector<1x128xf32> to vector<1x1x128xf32>
    %54 = vector.broadcast %53 : vector<1x1x128xf32> to vector<2x16x128xf32>
    %55 = arith.addf %51, %54 : vector<2x16x128xf32>
    %cst_52 = arith.constant 0.000000e+00 : f32
    %56 = vector.broadcast %cst_52 : f32 to vector<2x16x128xf32>
    %57 = arith.cmpf oge, %55, %56 : vector<2x16x128xf32>
    %cst_53 = arith.constant 2.000000e-01 : f32
    %58 = vector.broadcast %cst_53 : f32 to vector<2x16x128xf32>
    %59 = arith.mulf %58, %55 : vector<2x16x128xf32>
    %60 = arith.select %57, %55, %59 : vector<2x16x128xi1>, vector<2x16x128xf32>
    %61 = arith.truncf %60 : vector<2x16x128xf32> to vector<2x16x128xbf16>
    %c0_54 = arith.constant 0 : index
    %c0_55 = arith.constant 0 : index
    %c0_56 = arith.constant 0 : index
    %62 = vector.load %arg6[%c0_54, %c0_55, %c0_56] : memref<2x16x128xbf16, #tpu.memory_space<vmem>>, vector<2x16x128xbf16>
    tpu.vector_store %arg6[%c0_54, %c0_55, %c0_56], %61 {strides = array<i32>} : memref<2x16x128xbf16, #tpu.memory_space<vmem>>, vector<2x16x128xbf16>,
    return
  }
  func.func @transform_0(%arg0: i32, %arg1: i32) -> (i32, i32, i32, i32) {
    %c0_i32 = arith.constant 0 : i32
    %c0_i32_0 = arith.constant 0 : i32
    %c0_i32_1 = arith.constant 0 : i32
    %c0_i32_2 = arith.constant 0 : i32
    return %arg0, %c0_i32, %c0_i32_0, %c0_i32_1 : i32, i32, i32, i32
  }
  func.func @transform_1(%arg0: i32, %arg1: i32) -> (i32, i32, i32) {
    %c0_i32 = arith.constant 0 : i32
    %c0_i32_0 = arith.constant 0 : i32
    %c0_i32_1 = arith.constant 0 : i32
    return %c0_i32, %c0_i32_0, %arg1 : i32, i32, i32
  }
  func.func @transform_2(%arg0: i32, %arg1: i32) -> (i32, i32) {
    %c0_i32 = arith.constant 0 : i32
    %c0_i32_0 = arith.constant 0 : i32
    return %c0_i32, %arg1 : i32, i32
  }
  func.func @transform_3(%arg0: i32, %arg1: i32) -> (i32, i32) {
    %c0_i32 = arith.constant 0 : i32
    %c0_i32_0 = arith.constant 0 : i32
    return %c0_i32, %arg1 : i32, i32
  }
  func.func @transform_4(%arg0: i32, %arg1: i32) -> (i32, i32, i32) {
    %c0_i32 = arith.constant 0 : i32
    %c0_i32_0 = arith.constant 0 : i32
    return %arg0, %c0_i32, %arg1 : i32, i32, i32
  }
}

module attributes {stable_mosaic.version = 11 : i64} {
  func.func @_conv_in_lrelu_kernel(%arg0: i32, %arg1: i32, %arg2: memref<2x3x3x512xbf16, #tpu.memory_space<vmem>>, %arg3: memref<4x512x128xbf16, #tpu.memory_space<vmem>>, %arg4: memref<1x128xf32, #tpu.memory_space<vmem>>, %arg5: memref<1x128xf32, #tpu.memory_space<vmem>>, %arg6: memref<2x4x128xbf16, #tpu.memory_space<vmem>>, %arg7: memref<8x128xf32, #tpu.memory_space<vmem>>) attributes {dimension_semantics = [#tpu.dimension_semantics<parallel>, #tpu.dimension_semantics<parallel>], iteration_bounds = array<i64: 1, 1>, scalar_prefetch = 0 : i64, scratch_operands = 1 : i64, tpu.core_type = #tpu.core_type<tc>, window_params = [{transform_indices = @transform_0, window_bounds = array<i64: 2, 3, 3, 512>}, {transform_indices = @transform_1, window_bounds = array<i64: 4, 512, 128>}, {transform_indices = @transform_2, window_bounds = array<i64: 1, 128>}, {transform_indices = @transform_3, window_bounds = array<i64: 1, 128>}, {transform_indices = @transform_4, window_bounds = array<i64: 2, 4, 128>}]} {
    %c0 = arith.constant 0 : index
    %c0_0 = arith.constant 0 : index
    %c0_1 = arith.constant 0 : index
    %c0_2 = arith.constant 0 : index
    %0 = vector.load %arg2[%c0, %c0_0, %c0_1, %c0_2] : memref<2x3x3x512xbf16, #tpu.memory_space<vmem>>, vector<2x2x2x512xbf16>
    %1 = vector.shape_cast %0 : vector<2x2x2x512xbf16> to vector<8x512xbf16>
    %c0_3 = arith.constant 0 : index
    %c0_4 = arith.constant 0 : index
    %c0_5 = arith.constant 0 : index
    %2 = vector.load %arg3[%c0_3, %c0_4, %c0_5] : memref<4x512x128xbf16, #tpu.memory_space<vmem>>, vector<1x512x128xbf16>
    %3 = vector.shape_cast %2 : vector<1x512x128xbf16> to vector<512x128xbf16>
    %cst = arith.constant dense<0.000000e+00> : vector<8x128xf32>
    %4 = tpu.matmul %1, %3, %cst {dimension_numbers = #tpu.dot_dimension_numbers<[1], [0], [0], [1], [0, 0, 1, 1], [], []>} : vector<8x512xbf16>, vector<512x128xbf16>, vector<8x128xf32> -> vector<8x128xf32>
    %c0_6 = arith.constant 0 : index
    %c0_7 = arith.constant 0 : index
    %5 = vector.load %arg7[%c0_6, %c0_7] : memref<8x128xf32, #tpu.memory_space<vmem>>, vector<8x128xf32>
    tpu.vector_store %arg7[%c0_6, %c0_7], %4 {strides = array<i32>} : memref<8x128xf32, #tpu.memory_space<vmem>>, vector<8x128xf32>,
    %c0_8 = arith.constant 0 : index
    %c0_9 = arith.constant 0 : index
    %c1 = arith.constant 1 : index
    %c0_10 = arith.constant 0 : index
    %6 = vector.load %arg2[%c0_8, %c0_9, %c1, %c0_10] : memref<2x3x3x512xbf16, #tpu.memory_space<vmem>>, vector<2x2x2x512xbf16>
    %7 = vector.shape_cast %6 : vector<2x2x2x512xbf16> to vector<8x512xbf16>
    %c1_11 = arith.constant 1 : index
    %c0_12 = arith.constant 0 : index
    %c0_13 = arith.constant 0 : index
    %8 = vector.load %arg3[%c1_11, %c0_12, %c0_13] : memref<4x512x128xbf16, #tpu.memory_space<vmem>>, vector<1x512x128xbf16>
    %9 = vector.shape_cast %8 : vector<1x512x128xbf16> to vector<512x128xbf16>
    %cst_14 = arith.constant dense<0.000000e+00> : vector<8x128xf32>
    %10 = tpu.matmul %7, %9, %cst_14 {dimension_numbers = #tpu.dot_dimension_numbers<[1], [0], [0], [1], [0, 0, 1, 1], [], []>} : vector<8x512xbf16>, vector<512x128xbf16>, vector<8x128xf32> -> vector<8x128xf32>
    %c0_15 = arith.constant 0 : index
    %c0_16 = arith.constant 0 : index
    %11 = vector.load %arg7[%c0_15, %c0_16] : memref<8x128xf32, #tpu.memory_space<vmem>>, vector<8x128xf32>
    %12 = arith.addf %11, %10 : vector<8x128xf32>
    %c0_17 = arith.constant 0 : index
    %c0_18 = arith.constant 0 : index
    %13 = vector.load %arg7[%c0_17, %c0_18] : memref<8x128xf32, #tpu.memory_space<vmem>>, vector<8x128xf32>
    tpu.vector_store %arg7[%c0_17, %c0_18], %12 {strides = array<i32>} : memref<8x128xf32, #tpu.memory_space<vmem>>, vector<8x128xf32>,
    %c0_19 = arith.constant 0 : index
    %c1_20 = arith.constant 1 : index
    %c0_21 = arith.constant 0 : index
    %c0_22 = arith.constant 0 : index
    %14 = vector.load %arg2[%c0_19, %c1_20, %c0_21, %c0_22] : memref<2x3x3x512xbf16, #tpu.memory_space<vmem>>, vector<2x2x2x512xbf16>
    %15 = vector.shape_cast %14 : vector<2x2x2x512xbf16> to vector<8x512xbf16>
    %c2 = arith.constant 2 : index
    %c0_23 = arith.constant 0 : index
    %c0_24 = arith.constant 0 : index
    %16 = vector.load %arg3[%c2, %c0_23, %c0_24] : memref<4x512x128xbf16, #tpu.memory_space<vmem>>, vector<1x512x128xbf16>
    %17 = vector.shape_cast %16 : vector<1x512x128xbf16> to vector<512x128xbf16>
    %cst_25 = arith.constant dense<0.000000e+00> : vector<8x128xf32>
    %18 = tpu.matmul %15, %17, %cst_25 {dimension_numbers = #tpu.dot_dimension_numbers<[1], [0], [0], [1], [0, 0, 1, 1], [], []>} : vector<8x512xbf16>, vector<512x128xbf16>, vector<8x128xf32> -> vector<8x128xf32>
    %c0_26 = arith.constant 0 : index
    %c0_27 = arith.constant 0 : index
    %19 = vector.load %arg7[%c0_26, %c0_27] : memref<8x128xf32, #tpu.memory_space<vmem>>, vector<8x128xf32>
    %20 = arith.addf %19, %18 : vector<8x128xf32>
    %c0_28 = arith.constant 0 : index
    %c0_29 = arith.constant 0 : index
    %21 = vector.load %arg7[%c0_28, %c0_29] : memref<8x128xf32, #tpu.memory_space<vmem>>, vector<8x128xf32>
    tpu.vector_store %arg7[%c0_28, %c0_29], %20 {strides = array<i32>} : memref<8x128xf32, #tpu.memory_space<vmem>>, vector<8x128xf32>,
    %c0_30 = arith.constant 0 : index
    %c1_31 = arith.constant 1 : index
    %c1_32 = arith.constant 1 : index
    %c0_33 = arith.constant 0 : index
    %22 = vector.load %arg2[%c0_30, %c1_31, %c1_32, %c0_33] : memref<2x3x3x512xbf16, #tpu.memory_space<vmem>>, vector<2x2x2x512xbf16>
    %23 = vector.shape_cast %22 : vector<2x2x2x512xbf16> to vector<8x512xbf16>
    %c3 = arith.constant 3 : index
    %c0_34 = arith.constant 0 : index
    %c0_35 = arith.constant 0 : index
    %24 = vector.load %arg3[%c3, %c0_34, %c0_35] : memref<4x512x128xbf16, #tpu.memory_space<vmem>>, vector<1x512x128xbf16>
    %25 = vector.shape_cast %24 : vector<1x512x128xbf16> to vector<512x128xbf16>
    %cst_36 = arith.constant dense<0.000000e+00> : vector<8x128xf32>
    %26 = tpu.matmul %23, %25, %cst_36 {dimension_numbers = #tpu.dot_dimension_numbers<[1], [0], [0], [1], [0, 0, 1, 1], [], []>} : vector<8x512xbf16>, vector<512x128xbf16>, vector<8x128xf32> -> vector<8x128xf32>
    %c0_37 = arith.constant 0 : index
    %c0_38 = arith.constant 0 : index
    %27 = vector.load %arg7[%c0_37, %c0_38] : memref<8x128xf32, #tpu.memory_space<vmem>>, vector<8x128xf32>
    %28 = arith.addf %27, %26 : vector<8x128xf32>
    %c0_39 = arith.constant 0 : index
    %c0_40 = arith.constant 0 : index
    %29 = vector.load %arg7[%c0_39, %c0_40] : memref<8x128xf32, #tpu.memory_space<vmem>>, vector<8x128xf32>
    tpu.vector_store %arg7[%c0_39, %c0_40], %28 {strides = array<i32>} : memref<8x128xf32, #tpu.memory_space<vmem>>, vector<8x128xf32>,
    %c0_41 = arith.constant 0 : index
    %c0_42 = arith.constant 0 : index
    %30 = vector.load %arg7[%c0_41, %c0_42] : memref<8x128xf32, #tpu.memory_space<vmem>>, vector<8x128xf32>
    %31 = vector.shape_cast %30 : vector<8x128xf32> to vector<2x4x128xf32>
    %cst_43 = arith.constant dense<0.000000e+00> : vector<2x128xf32>
    %32 = vector.multi_reduction <add>, %31, %cst_43 [1] : vector<2x4x128xf32> to vector<2x128xf32>
    %33 = vector.shape_cast %32 : vector<2x128xf32> to vector<2x1x128xf32>
    %cst_44 = arith.constant 4.000000e+00 : f32
    %34 = vector.broadcast %cst_44 : f32 to vector<2x1x128xf32>
    %35 = arith.divf %33, %34 : vector<2x1x128xf32>
    %36 = vector.broadcast %35 : vector<2x1x128xf32> to vector<2x4x128xf32>
    %37 = arith.subf %31, %36 : vector<2x4x128xf32>
    %38 = arith.mulf %37, %37 : vector<2x4x128xf32>
    %cst_45 = arith.constant dense<0.000000e+00> : vector<2x128xf32>
    %39 = vector.multi_reduction <add>, %38, %cst_45 [1] : vector<2x4x128xf32> to vector<2x128xf32>
    %40 = vector.shape_cast %39 : vector<2x128xf32> to vector<2x1x128xf32>
    %cst_46 = arith.constant 4.000000e+00 : f32
    %41 = vector.broadcast %cst_46 : f32 to vector<2x1x128xf32>
    %42 = arith.divf %40, %41 : vector<2x1x128xf32>
    %cst_47 = arith.constant 9.99999974E-6 : f32
    %43 = vector.broadcast %cst_47 : f32 to vector<2x1x128xf32>
    %44 = arith.addf %42, %43 : vector<2x1x128xf32>
    %45 = math.rsqrt %44 : vector<2x1x128xf32>
    %46 = vector.broadcast %45 : vector<2x1x128xf32> to vector<2x4x128xf32>
    %47 = arith.mulf %37, %46 : vector<2x4x128xf32>
    %c0_48 = arith.constant 0 : index
    %c0_49 = arith.constant 0 : index
    %48 = vector.load %arg4[%c0_48, %c0_49] : memref<1x128xf32, #tpu.memory_space<vmem>>, vector<1x128xf32>
    %49 = vector.shape_cast %48 : vector<1x128xf32> to vector<1x1x128xf32>
    %50 = vector.broadcast %49 : vector<1x1x128xf32> to vector<2x4x128xf32>
    %51 = arith.mulf %47, %50 : vector<2x4x128xf32>
    %c0_50 = arith.constant 0 : index
    %c0_51 = arith.constant 0 : index
    %52 = vector.load %arg5[%c0_50, %c0_51] : memref<1x128xf32, #tpu.memory_space<vmem>>, vector<1x128xf32>
    %53 = vector.shape_cast %52 : vector<1x128xf32> to vector<1x1x128xf32>
    %54 = vector.broadcast %53 : vector<1x1x128xf32> to vector<2x4x128xf32>
    %55 = arith.addf %51, %54 : vector<2x4x128xf32>
    %cst_52 = arith.constant 0.000000e+00 : f32
    %56 = vector.broadcast %cst_52 : f32 to vector<2x4x128xf32>
    %57 = arith.cmpf oge, %55, %56 : vector<2x4x128xf32>
    %cst_53 = arith.constant 2.000000e-01 : f32
    %58 = vector.broadcast %cst_53 : f32 to vector<2x4x128xf32>
    %59 = arith.mulf %58, %55 : vector<2x4x128xf32>
    %60 = arith.select %57, %55, %59 : vector<2x4x128xi1>, vector<2x4x128xf32>
    %61 = arith.truncf %60 : vector<2x4x128xf32> to vector<2x4x128xbf16>
    %c0_54 = arith.constant 0 : index
    %c0_55 = arith.constant 0 : index
    %c0_56 = arith.constant 0 : index
    %62 = vector.load %arg6[%c0_54, %c0_55, %c0_56] : memref<2x4x128xbf16, #tpu.memory_space<vmem>>, vector<2x4x128xbf16>
    tpu.vector_store %arg6[%c0_54, %c0_55, %c0_56], %61 {strides = array<i32>} : memref<2x4x128xbf16, #tpu.memory_space<vmem>>, vector<2x4x128xbf16>,
    return
  }
  func.func @transform_0(%arg0: i32, %arg1: i32) -> (i32, i32, i32, i32) {
    %c0_i32 = arith.constant 0 : i32
    %c0_i32_0 = arith.constant 0 : i32
    %c0_i32_1 = arith.constant 0 : i32
    %c0_i32_2 = arith.constant 0 : i32
    return %arg0, %c0_i32, %c0_i32_0, %c0_i32_1 : i32, i32, i32, i32
  }
  func.func @transform_1(%arg0: i32, %arg1: i32) -> (i32, i32, i32) {
    %c0_i32 = arith.constant 0 : i32
    %c0_i32_0 = arith.constant 0 : i32
    %c0_i32_1 = arith.constant 0 : i32
    return %c0_i32, %c0_i32_0, %arg1 : i32, i32, i32
  }
  func.func @transform_2(%arg0: i32, %arg1: i32) -> (i32, i32) {
    %c0_i32 = arith.constant 0 : i32
    %c0_i32_0 = arith.constant 0 : i32
    return %c0_i32, %arg1 : i32, i32
  }
  func.func @transform_3(%arg0: i32, %arg1: i32) -> (i32, i32) {
    %c0_i32 = arith.constant 0 : i32
    %c0_i32_0 = arith.constant 0 : i32
    return %c0_i32, %arg1 : i32, i32
  }
  func.func @transform_4(%arg0: i32, %arg1: i32) -> (i32, i32, i32) {
    %c0_i32 = arith.constant 0 : i32
    %c0_i32_0 = arith.constant 0 : i32
    return %arg0, %c0_i32, %arg1 : i32, i32, i32
  }
}

module attributes {stable_mosaic.version = 11 : i64} {
  func.func @_fc_heads_kernel(%arg0: i32, %arg1: i32, %arg2: memref<2x512xbf16, #tpu.memory_space<vmem>>, %arg3: memref<512x128xbf16, #tpu.memory_space<vmem>>, %arg4: memref<1x128xf32, #tpu.memory_space<vmem>>, %arg5: memref<128x128xf32, #tpu.memory_space<vmem>>, %arg6: memref<1x2x128xf32, #tpu.memory_space<vmem>>, %arg7: memref<2x128xf32, #tpu.memory_space<vmem>>) attributes {dimension_semantics = [#tpu.dimension_semantics<parallel>, #tpu.dimension_semantics<arbitrary>], iteration_bounds = array<i64: 1, 1>, scalar_prefetch = 0 : i64, scratch_operands = 1 : i64, tpu.core_type = #tpu.core_type<tc>, window_params = [{transform_indices = @transform_0, window_bounds = array<i64: 2, 512>}, {transform_indices = @transform_1, window_bounds = array<i64: 512, 128>}, {transform_indices = @transform_2, window_bounds = array<i64: 1, 128>}, {transform_indices = @transform_3, window_bounds = array<i64: 128, 128>}, {transform_indices = @transform_4, window_bounds = array<i64: 1, 2, 128>}]} {
    %c0_i32 = arith.constant 0 : i32
    %0 = arith.cmpi eq, %arg1, %c0_i32 : i32
    %1 = arith.extui %0 : i1 to i32
    %c0_i32_0 = arith.constant 0 : i32
    %2 = arith.cmpi ne, %1, %c0_i32_0 : i32
    scf.if %2 {
      %cst_10 = arith.constant 0.000000e+00 : f32
      %12 = vector.broadcast %cst_10 : f32 to vector<2x128xf32>
      %c0_11 = arith.constant 0 : index
      %c0_12 = arith.constant 0 : index
      %13 = vector.load %arg7[%c0_11, %c0_12] : memref<2x128xf32, #tpu.memory_space<vmem>>, vector<2x128xf32>
      tpu.vector_store %arg7[%c0_11, %c0_12], %12 {strides = array<i32>} : memref<2x128xf32, #tpu.memory_space<vmem>>, vector<2x128xf32>,
    } else {
    }
    %c0 = arith.constant 0 : index
    %c0_1 = arith.constant 0 : index
    %3 = vector.load %arg7[%c0, %c0_1] : memref<2x128xf32, #tpu.memory_space<vmem>>, vector<2x128xf32>
    %c0_2 = arith.constant 0 : index
    %c0_3 = arith.constant 0 : index
    %4 = vector.load %arg2[%c0_2, %c0_3] : memref<2x512xbf16, #tpu.memory_space<vmem>>, vector<2x512xbf16>
    %c0_4 = arith.constant 0 : index
    %c0_5 = arith.constant 0 : index
    %5 = vector.load %arg3[%c0_4, %c0_5] : memref<512x128xbf16, #tpu.memory_space<vmem>>, vector<512x128xbf16>
    %cst = arith.constant dense<0.000000e+00> : vector<2x128xf32>
    %6 = tpu.matmul %4, %5, %cst {dimension_numbers = #tpu.dot_dimension_numbers<[1], [0], [0], [1], [0, 0, 1, 1], [], []>} : vector<2x512xbf16>, vector<512x128xbf16>, vector<2x128xf32> -> vector<2x128xf32>
    %7 = arith.addf %3, %6 : vector<2x128xf32>
    %c0_6 = arith.constant 0 : index
    %c0_7 = arith.constant 0 : index
    %8 = vector.load %arg7[%c0_6, %c0_7] : memref<2x128xf32, #tpu.memory_space<vmem>>, vector<2x128xf32>
    tpu.vector_store %arg7[%c0_6, %c0_7], %7 {strides = array<i32>} : memref<2x128xf32, #tpu.memory_space<vmem>>, vector<2x128xf32>,
    %c0_i32_8 = arith.constant 0 : i32
    %9 = arith.cmpi eq, %arg1, %c0_i32_8 : i32
    %10 = arith.extui %9 : i1 to i32
    %c0_i32_9 = arith.constant 0 : i32
    %11 = arith.cmpi ne, %10, %c0_i32_9 : i32
    scf.if %11 {
      %c0_10 = arith.constant 0 : index
      %c0_11 = arith.constant 0 : index
      %12 = vector.load %arg7[%c0_10, %c0_11] : memref<2x128xf32, #tpu.memory_space<vmem>>, vector<2x128xf32>
      %c0_12 = arith.constant 0 : index
      %c0_13 = arith.constant 0 : index
      %13 = vector.load %arg4[%c0_12, %c0_13] : memref<1x128xf32, #tpu.memory_space<vmem>>, vector<1x128xf32>
      %14 = vector.broadcast %13 : vector<1x128xf32> to vector<2x128xf32>
      %15 = arith.addf %12, %14 : vector<2x128xf32>
      %cst_14 = arith.constant 0.000000e+00 : f32
      %16 = vector.broadcast %cst_14 : f32 to vector<2x128xf32>
      %17 = arith.cmpf oge, %15, %16 : vector<2x128xf32>
      %cst_15 = arith.constant 2.000000e-01 : f32
      %18 = vector.broadcast %cst_15 : f32 to vector<2x128xf32>
      %19 = arith.mulf %18, %15 : vector<2x128xf32>
      %20 = arith.select %17, %15, %19 : vector<2x128xi1>, vector<2x128xf32>
      %c0_16 = arith.constant 0 : index
      %c0_17 = arith.constant 0 : index
      %21 = vector.load %arg5[%c0_16, %c0_17] : memref<128x128xf32, #tpu.memory_space<vmem>>, vector<128x128xf32>
      %cst_18 = arith.constant dense<0.000000e+00> : vector<2x128xf32>
      %22 = tpu.matmul %20, %21, %cst_18 {dimension_numbers = #tpu.dot_dimension_numbers<[1], [0], [0], [1], [0, 0, 1, 1], [], []>} : vector<2x128xf32>, vector<128x128xf32>, vector<2x128xf32> -> vector<2x128xf32>
      %c0_19 = arith.constant 0 : index
      %c0_20 = arith.constant 0 : index
      %c0_21 = arith.constant 0 : index
      %23 = vector.load %arg6[%c0_19, %c0_20, %c0_21] : memref<1x2x128xf32, #tpu.memory_space<vmem>>, vector<1x2x128xf32>
      %24 = vector.shape_cast %23 : vector<1x2x128xf32> to vector<2x128xf32>
      %25 = vector.shape_cast %22 : vector<2x128xf32> to vector<1x2x128xf32>
      tpu.vector_store %arg6[%c0_19, %c0_20, %c0_21], %25 {strides = array<i32>} : memref<1x2x128xf32, #tpu.memory_space<vmem>>, vector<1x2x128xf32>,
    } else {
    }
    return
  }
  func.func @transform_0(%arg0: i32, %arg1: i32) -> (i32, i32) {
    %c0_i32 = arith.constant 0 : i32
    %c0_i32_0 = arith.constant 0 : i32
    return %c0_i32, %arg1 : i32, i32
  }
  func.func @transform_1(%arg0: i32, %arg1: i32) -> (i32, i32) {
    %c0_i32 = arith.constant 0 : i32
    return %arg1, %arg0 : i32, i32
  }
  func.func @transform_2(%arg0: i32, %arg1: i32) -> (i32, i32) {
    %c0_i32 = arith.constant 0 : i32
    %c0_i32_0 = arith.constant 0 : i32
    return %c0_i32, %arg0 : i32, i32
  }
  func.func @transform_3(%arg0: i32, %arg1: i32) -> (i32, i32) {
    %c0_i32 = arith.constant 0 : i32
    %c0_i32_0 = arith.constant 0 : i32
    return %arg0, %c0_i32 : i32, i32
  }
  func.func @transform_4(%arg0: i32, %arg1: i32) -> (i32, i32, i32) {
    %c0_i32 = arith.constant 0 : i32
    %c0_i32_0 = arith.constant 0 : i32
    %c0_i32_1 = arith.constant 0 : i32
    return %arg0, %c0_i32, %c0_i32_0 : i32, i32, i32
  }
}

</mosaic_0001>

<llo_original>
// kernel: discriminator_forward.4
$region0: #{discriminator_forward.4}
  #allocation0 [shape = 'u32[]', space=smem, size = 0x4, offset = 0x4, fixed_abs, tag = 'smem constant byte address 0x4 - core index']
  #allocation1 [shape = 'u32[144,128]{1,0:T(1,128)}', space=vmem, size = 0x12000, scoped, tag = 'internal scratch']
  #allocation2 [shape = 'f32[128,128]{1,0:T(8,128)}', space=vmem, size = 0x10000, scoped, tag = 'scratch operand']
  %s0 = inlined_call_operand.hbm [shape: bf16[2,9,9,128], index: 0, kind: input, shape index: {}]
  %s1 = inlined_call_operand.hbm [shape: bf16[4,128,128], index: 1, kind: input, shape index: {}]
  %s2 = inlined_call_operand.hbm [shape: f32[1,128], index: 2, kind: input, shape index: {}]
  %s3 = inlined_call_operand.hbm [shape: f32[1,128], index: 3, kind: input, shape index: {}]
  %s4 = inlined_call_operand.hbm [shape: bf16[2,64,128], index: 4, kind: output, shape index: {}]
  %s5 = sld [smem:[#allocation0]]
  $region42: #{discriminator_forward.4} parent=0
    _
  %s7 = ssub.s32 1, %s5
  %s8 = scalar_select 0, %s7, %s5
  $region1: #{discriminator_forward.4} parent=0
    #allocation3 [shape = 'u8[73728]{0}', space=vmem, size = 0x12000, scoped, tag = 'input window, operand 0, single buffered']
    #allocation4 [shape = 's32[1]{0}', space=sflag, size = 0x4, scoped, tag = 'scoped memory for discriminator_forward.4']
    #allocation5 [shape = 's32[1]{0}', space=sflag, size = 0x4, scoped, tag = 'scoped memory for discriminator_forward.4']
    #allocation6 [shape = 'u8[131072]{0}', space=vmem, size = 0x20000, scoped, tag = 'input window, operand 1, single buffered']
    #allocation7 [shape = 's32[1]{0}', space=sflag, size = 0x4, scoped, tag = 'scoped memory for discriminator_forward.4']
    #allocation8 [shape = 'u8[512]{0}', space=vmem, size = 0x400, scoped, tag = 'input window, operand 2, single buffered']
    #allocation9 [shape = 'u8[512]{0}', space=vmem, size = 0x400, scoped, tag = 'input window, operand 3, single buffered']
    #allocation10 [shape = 's32[1]{0}', space=sflag, size = 0x4, scoped, tag = 'scoped memory for discriminator_forward.4']
    #allocation11 [shape = 'u8[32768]{0}', space=vmem, size = 0x8000, scoped, tag = 'output window, operand 0, single buffered']
    %9 = vsyncpa [#allocation4], 0
    %10 = vsyncpa [#allocation7], 0
    %11 = vsyncpa [#allocation10], 0
    %12 = vsyncpa [#allocation5], 0
    // Predicated region
    $region2: #{discriminator_forward.4} parent=1 // pred_check
      _
    $region3: #{discriminator_forward.4} parent=1 // pred_check_branch
      %14 = sbr.rel (0) target = $region5
    $region4: #{discriminator_forward.4} parent=1 // pred_region
      %s16 = ssub.s32 2304, 2304
      %17 = vsyncadd [#allocation4], %s16
      %s18 = sshll.u32 [#allocation3], 4
      %s19 = int_to_ptr.vmem [resolvable:$true] %s18
      %24 = dma.hbm_to_vmem [thread:$0]  %s0, 2304, %s19, [#allocation4], 64, 64, 4
    $region5: #{discriminator_forward.4} parent=1 // pred_fallthru
      _
    // Predicated region
    $region6: #{discriminator_forward.4} parent=1 // pred_check
      _
    $region7: #{discriminator_forward.4} parent=1 // pred_check_branch
      %26 = sbr.rel (0) target = $region9
    $region8: #{discriminator_forward.4} parent=1 // pred_region
      %s28 = ssub.s32 4096, 4096
      %29 = vsyncadd [#allocation7], %s28
      %s30 = sshll.u32 [#allocation6], 4
      %s31 = int_to_ptr.vmem [resolvable:$true] %s30
      %36 = dma.hbm_to_vmem [thread:$0]  %s1, 4096, %s31, [#allocation7], 64, 64, 4
    $region9: #{discriminator_forward.4} parent=1 // pred_fallthru
      _
    // Predicated region
    $region10: #{discriminator_forward.4} parent=1 // pred_check
      _
    $region11: #{discriminator_forward.4} parent=1 // pred_check_branch
      %38 = sbr.rel (0) target = $region13
    $region12: #{discriminator_forward.4} parent=1 // pred_region
      %s40 = ssub.s32 16, 16
      %41 = vsyncadd [#allocation7], %s40
      %s43 = sshll.u32 [#allocation8], 4
      %s44 = int_to_ptr.vmem [resolvable:$true] %s43
      %46 = dma.hbm_to_vmem [thread:$0]  %s2, 16, %s44, [#allocation7]
    $region13: #{discriminator_forward.4} parent=1 // pred_fallthru
      _
    // Predicated region
    $region14: #{discriminator_forward.4} parent=1 // pred_check
      _
    $region15: #{discriminator_forward.4} parent=1 // pred_check_branch
      %48 = sbr.rel (0) target = $region17
    $region16: #{discriminator_forward.4} parent=1 // pred_region
      %s50 = ssub.s32 16, 16
      %51 = vsyncadd [#allocation10], %s50
      %s53 = sshll.u32 [#allocation9], 4
      %s54 = int_to_ptr.vmem [resolvable:$true] %s53
      %56 = dma.hbm_to_vmem [thread:$0]  %s3, 16, %s54, [#allocation10]
    $region17: #{discriminator_forward.4} parent=1 // pred_fallthru
      _
    // Predicated region
    $region18: #{discriminator_forward.4} parent=1 // pred_check
      _
    $region19: #{discriminator_forward.4} parent=1 // pred_check_branch
      %58 = sbr.rel (0) target = $region21
    $region20: #{discriminator_forward.4} parent=1 // pred_region
      %59 = dma.done [#allocation4], 2304
    $region21: #{discriminator_forward.4} parent=1 // pred_fallthru
      _
    // Predicated region
    $region22: #{discriminator_forward.4} parent=1 // pred_check
      _
    $region23: #{discriminator_forward.4} parent=1 // pred_check_branch
      %61 = sbr.rel (0) target = $region25
    $region24: #{discriminator_forward.4} parent=1 // pred_region
      %62 = dma.done [#allocation7], 4096
    $region25: #{discriminator_forward.4} parent=1 // pred_fallthru
      _
    // Predicated region
    $region26: #{discriminator_forward.4} parent=1 // pred_check
      _
    $region27: #{discriminator_forward.4} parent=1 // pred_check_branch
      %64 = sbr.rel (0) target = $region29
    $region28: #{discriminator_forward.4} parent=1 // pred_region
      %65 = dma.done [#allocation7], 16
    $region29: #{discriminator_forward.4} parent=1 // pred_fallthru
      _
    // Predicated region
    $region30: #{discriminator_forward.4} parent=1 // pred_check
      _
    $region31: #{discriminator_forward.4} parent=1 // pred_check_branch
      %67 = sbr.rel (0) target = $region33
    $region32: #{discriminator_forward.4} parent=1 // pred_region
      %68 = dma.done [#allocation10], 16
    $region33: #{discriminator_forward.4} parent=1 // pred_fallthru
      _
    %v70 = vld [vmem:[#allocation3] sm:$0xf]
    %v71 = vld [vmem:[#allocation3 + $0x8] sm:$0xf]
    %v72 = vld [vmem:[#allocation3 + $0x10] sm:$0xf]
    %v73 = vld [vmem:[#allocation3 + $0x18] sm:$0xf]
    %v74 = vld [vmem:[#allocation3 + $0x20] sm:$0xf]
    %v75 = vld [vmem:[#allocation3 + $0x28] sm:$0xf]
    %v76 = vld [vmem:[#allocation3 + $0x30] sm:$0xf]
    %v77 = vld [vmem:[#allocation3 + $0x38] sm:$0xf]
    %v78 = vld [vmem:[#allocation3 + $0x48] sm:$0xf]
    %v79 = vld [vmem:[#allocation3 + $0x50] sm:$0xf]
    %v80 = vld [vmem:[#allocation3 + $0x58] sm:$0xf]
    %v81 = vld [vmem:[#allocation3 + $0x60] sm:$0xf]
    %v82 = vld [vmem:[#allocation3 + $0x68] sm:$0xf]
    %v83 = vld [vmem:[#allocation3 + $0x70] sm:$0xf]
    %v84 = vld [vmem:[#allocation3 + $0x78] sm:$0xf]
    %v85 = vld [vmem:[#allocation3 + $0x80] sm:$0xf]
    %v86 = vld [vmem:[#allocation6] sm:$0xf]
    %v87 = vld [vmem:[#allocation6 + $0x4] sm:$0xf]
    %v88 = vld [vmem:[#allocation6 + $0x8] sm:$0xf]
    %v89 = vld [vmem:[#allocation6 + $0xc] sm:$0xf]
    %v90 = vld [vmem:[#allocation6 + $0x10] sm:$0xf]
    %v91 = vld [vmem:[#allocation6 + $0x14] sm:$0xf]
    %v92 = vld [vmem:[#allocation6 + $0x18] sm:$0xf]
    %v93 = vld [vmem:[#allocation6 + $0x1c] sm:$0xf]
    %v94 = vld [vmem:[#allocation6 + $0x20] sm:$0xf]
    %v95 = vld [vmem:[#allocation6 + $0x24] sm:$0xf]
    %v96 = vld [vmem:[#allocation6 + $0x28] sm:$0xf]
    %v97 = vld [vmem:[#allocation6 + $0x2c] sm:$0xf]
    %v98 = vld [vmem:[#allocation6 + $0x30] sm:$0xf]
    %v99 = vld [vmem:[#allocation6 + $0x34] sm:$0xf]
    %v100 = vld [vmem:[#allocation6 + $0x38] sm:$0xf]
    %v101 = vld [vmem:[#allocation6 + $0x3c] sm:$0xf]
    %v118 = vunpack.c.l.b16 %v70
    %v119 = vunpack.c.l.b16 %v71
    %v120 = vunpack.c.l.b16 %v72
    %v121 = vunpack.c.l.b16 %v73
    %v122 = vunpack.c.l.b16 %v74
    %v123 = vunpack.c.l.b16 %v75
    %v124 = vunpack.c.l.b16 %v76
    %v125 = vunpack.c.l.b16 %v77
    %v126 = vunpack.c.l.b16 %v78
    %v127 = vunpack.c.l.b16 %v79
    %v128 = vunpack.c.l.b16 %v80
    %v129 = vunpack.c.l.b16 %v81
    %v130 = vunpack.c.l.b16 %v82
    %v131 = vunpack.c.l.b16 %v83
    %v132 = vunpack.c.l.b16 %v84
    %v133 = vunpack.c.l.b16 %v85
    %v134 = vpack.c.b16 %v119, %v118
    %v135 = vpack.c.b16 %v121, %v120
    %v136 = vpack.c.b16 %v123, %v122
    %v137 = vpack.c.b16 %v125, %v124
    %v138 = vpack.c.b16 %v127, %v126
    %v139 = vpack.c.b16 %v129, %v128
    %v140 = vpack.c.b16 %v131, %v130
    %v141 = vpack.c.b16 %v133, %v132
    %v166 = vunpack.c.l.b16 %v86
    %v167 = vunpack.c.l.b16 %v87
    %v168 = vunpack.c.l.b16 %v88
    %v169 = vunpack.c.l.b16 %v89
    %v170 = vunpack.c.l.b16 %v90
    %v171 = vunpack.c.l.b16 %v91
    %v172 = vunpack.c.l.b16 %v92
    %v173 = vunpack.c.l.b16 %v93
    %v174 = vunpack.c.l.b16 %v94
    %v175 = vunpack.c.l.b16 %v95
    %v176 = vunpack.c.l.b16 %v96
    %v177 = vunpack.c.l.b16 %v97
    %v178 = vunpack.c.l.b16 %v98
    %v179 = vunpack.c.l.b16 %v99
    %v180 = vunpack.c.l.b16 %v100
    %v181 = vunpack.c.l.b16 %v101
    %v182 = vpack.c.b16 %v167, %v166
    %v183 = vpack.c.b16 %v169, %v168
    %v184 = vpack.c.b16 %v171, %v170
    %v185 = vpack.c.b16 %v173, %v172
    %v186 = vpack.c.b16 %v175, %v174
    %v187 = vpack.c.b16 %v177, %v176
    %v188 = vpack.c.b16 %v179, %v178
    %v189 = vpack.c.b16 %v181, %v180
    %198 = vmatprep.subr.bf16.mxu0 0
    %199 = vmatpush1.bf16.msra.mxu0 %v182
    %200 = vmatprep.subr.bf16.mxu0 0
    %201 = vmatpush1.bf16.msra.mxu0 %v183
    %202 = vmatprep.subr.bf16.mxu0 0
    %203 = vmatpush1.bf16.msra.mxu0 %v184
    %204 = vmatprep.subr.bf16.mxu0 0
    %205 = vmatpush1.bf16.msra.mxu0 %v185
    %206 = vmatprep.subr.bf16.mxu0 0
    %207 = vmatpush1.bf16.msra.mxu0 %v186
    %208 = vmatprep.subr.bf16.mxu0 0
    %209 = vmatpush1.bf16.msra.mxu0 %v187
    %210 = vmatprep.subr.bf16.mxu0 0
    %211 = vmatpush1.bf16.msra.mxu0 %v188
    %212 = vmatprep.subr.bf16.mxu0 0
    %213 = vmatpush1.bf16.msra.mxu0 %v189
    %214 = vmatprep.subr.bf16.mxu0 0
    %215 = vmatpush1.bf16.msra.mxu0 0
    %216 = vmatprep.subr.bf16.mxu0 0
    %217 = vmatpush1.bf16.msra.mxu0 0
    %218 = vmatprep.subr.bf16.mxu0 0
    %219 = vmatpush1.bf16.msra.mxu0 0
    %220 = vmatprep.subr.bf16.mxu0 0
    %221 = vmatpush1.bf16.msra.mxu0 0
    %222 = vmatprep.subr.bf16.mxu0 0
    %223 = vmatpush1.bf16.msra.mxu0 0
    %224 = vmatprep.subr.bf16.mxu0 0
    %225 = vmatpush1.bf16.msra.mxu0 0
    %226 = vmatprep.subr.bf16.mxu0 0
    %227 = vmatpush1.bf16.msra.mxu0 0
    %228 = vmatprep.subr.bf16.mxu0 0
    %229 = vmatpush1.bf16.msra.mxu0 0
    %230 = vmatprep.mubr.bf16.mxu0 0
    %231 = vmatmul.mubr.bf16.gmra.mrb[0].mxu0 %v134
    %v232 = vpop.f32.mrb[0].mxu0
    %v233 = vadd.f32 0.0, %v232
    %v234 = vpop.f32.mrb[0].mxu0
    %v235 = vpop.f32.mrb[0].mxu0
    %v236 = vadd.f32 0.0, %v235
    %v237 = vpop.f32.mrb[0].mxu0
    %238 = vmatprep.mubr.bf16.mxu0 0
    %239 = vmatmul.mubr.bf16.gmra.mrb[0].mxu0 %v135
    %v240 = vpop.f32.mrb[0].mxu0
    %v241 = vadd.f32 0.0, %v240
    %v242 = vpop.f32.mrb[0].mxu0
    %v243 = vpop.f32.mrb[0].mxu0
    %v244 = vadd.f32 0.0, %v243
    %v245 = vpop.f32.mrb[0].mxu0
    %246 = vmatprep.mubr.bf16.mxu0 0
    %247 = vmatmul.mubr.bf16.gmra.mrb[0].mxu0 %v136
    %v248 = vpop.f32.mrb[0].mxu0
    %v249 = vadd.f32 0.0, %v248
    %v250 = vpop.f32.mrb[0].mxu0
    %v251 = vpop.f32.mrb[0].mxu0
    %v252 = vadd.f32 0.0, %v251
    %v253 = vpop.f32.mrb[0].mxu0
    %254 = vmatprep.mubr.bf16.mxu0 0
    %255 = vmatmul.mubr.bf16.gmra.mrb[0].mxu0 %v137
    %v256 = vpop.f32.mrb[0].mxu0
    %v257 = vadd.f32 0.0, %v256
    %v258 = vpop.f32.mrb[0].mxu0
    %v259 = vpop.f32.mrb[0].mxu0
    %v260 = vadd.f32 0.0, %v259
    %v261 = vpop.f32.mrb[0].mxu0
    %262 = vmatprep.mubr.bf16.mxu0 0
    %263 = vmatmul.mubr.bf16.gmra.mrb[0].mxu0 %v138
    %v264 = vpop.f32.mrb[0].mxu0
    %v265 = vadd.f32 0.0, %v264
    %v266 = vpop.f32.mrb[0].mxu0
    %v267 = vpop.f32.mrb[0].mxu0
    %v268 = vadd.f32 0.0, %v267
    %v269 = vpop.f32.mrb[0].mxu0
    %270 = vmatprep.mubr.bf16.mxu0 0
    %271 = vmatmul.mubr.bf16.gmra.mrb[0].mxu0 %v139
    %v272 = vpop.f32.mrb[0].mxu0
    %v273 = vadd.f32 0.0, %v272
    %v274 = vpop.f32.mrb[0].mxu0
    %v275 = vpop.f32.mrb[0].mxu0
    %v276 = vadd.f32 0.0, %v275
    %v277 = vpop.f32.mrb[0].mxu0
    %278 = vmatprep.mubr.bf16.mxu0 0
    %279 = vmatmul.mubr.bf16.gmra.mrb[0].mxu0 %v140
    %v280 = vpop.f32.mrb[0].mxu0
    %v281 = vadd.f32 0.0, %v280
    %v282 = vpop.f32.mrb[0].mxu0
    %v283 = vpop.f32.mrb[0].mxu0
    %v284 = vadd.f32 0.0, %v283
    %v285 = vpop.f32.mrb[0].mxu0
    %286 = vmatprep.mubr.bf16.mxu0 0
    %287 = vmatmul.mubr.bf16.gmra.mrb[0].mxu0 %v141
    %v288 = vpop.f32.mrb[0].mxu0
    %v289 = vadd.f32 0.0, %v288
    %v290 = vpop.f32.mrb[0].mxu0
    %v291 = vpop.f32.mrb[0].mxu0
    %v292 = vadd.f32 0.0, %v291
    %v293 = vpop.f32.mrb[0].mxu0
    %294 = vdwg.mxu0
    %295 = vst [vmem:[#allocation2] sm:$0xff] %v233
    %296 = vst [vmem:[#allocation2 + $0x8] sm:$0xff] %v236
    %297 = vst [vmem:[#allocation2 + $0x10] sm:$0xff] %v241
    %298 = vst [vmem:[#allocation2 + $0x18] sm:$0xff] %v244
    %299 = vst [vmem:[#allocation2 + $0x20] sm:$0xff] %v249
    %300 = vst [vmem:[#allocation2 + $0x28] sm:$0xff] %v252
    %301 = vst [vmem:[#allocation2 + $0x30] sm:$0xff] %v257
    %302 = vst [vmem:[#allocation2 + $0x38] sm:$0xff] %v260
    %303 = vst [vmem:[#allocation2 + $0x40] sm:$0xff] %v265
    %304 = vst [vmem:[#allocation2 + $0x48] sm:$0xff] %v268
    %305 = vst [vmem:[#allocation2 + $0x50] sm:$0xff] %v273
    %306 = vst [vmem:[#allocation2 + $0x58] sm:$0xff] %v276
    %307 = vst [vmem:[#allocation2 + $0x60] sm:$0xff] %v281
    %308 = vst [vmem:[#allocation2 + $0x68] sm:$0xff] %v284
    %309 = vst [vmem:[#allocation2 + $0x70] sm:$0xff] %v289
    %310 = vst [vmem:[#allocation2 + $0x78] sm:$0xff] %v292
    %v311 = vld [vmem:[#allocation3] sm:$0xf]
    %v312 = vld [vmem:[#allocation3 + $0x4] sm:$0x1]
    %v313 = vld [vmem:[#allocation3 + $0x8] sm:$0xf]
    %v314 = vld [vmem:[#allocation3 + $0xc] sm:$0x1]
    %v315 = vld [vmem:[#allocation3 + $0x10] sm:$0xf]
    %v316 = vld [vmem:[#allocation3 + $0x14] sm:$0x1]
    %v317 = vld [vmem:[#allocation3 + $0x18] sm:$0xf]
    %v318 = vld [vmem:[#allocation3 + $0x1c] sm:$0x1]
    %v319 = vld [vmem:[#allocation3 + $0x20] sm:$0xf]
    %v320 = vld [vmem:[#allocation3 + $0x24] sm:$0x1]
    %v321 = vld [vmem:[#allocation3 + $0x28] sm:$0xf]
    %v322 = vld [vmem:[#allocation3 + $0x2c] sm:$0x1]
    %v323 = vld [vmem:[#allocation3 + $0x30] sm:$0xf]
    %v324 = vld [vmem:[#allocation3 + $0x34] sm:$0x1]
    %v325 = vld [vmem:[#allocation3 + $0x38] sm:$0xf]
    %v326 = vld [vmem:[#allocation3 + $0x3c] sm:$0x1]
    %v327 = vld [vmem:[#allocation3 + $0x48] sm:$0xf]
    %v328 = vld [vmem:[#allocation3 + $0x4c] sm:$0x1]
    %v329 = vld [vmem:[#allocation3 + $0x50] sm:$0xf]
    %v330 = vld [vmem:[#allocation3 + $0x54] sm:$0x1]
    %v331 = vld [vmem:[#allocation3 + $0x58] sm:$0xf]
    %v332 = vld [vmem:[#allocation3 + $0x5c] sm:$0x1]
    %v333 = vld [vmem:[#allocation3 + $0x60] sm:$0xf]
    %v334 = vld [vmem:[#allocation3 + $0x64] sm:$0x1]
    %v335 = vld [vmem:[#allocation3 + $0x68] sm:$0xf]
    %v336 = vld [vmem:[#allocation3 + $0x6c] sm:$0x1]
    %v337 = vld [vmem:[#allocation3 + $0x70] sm:$0xf]
    %v338 = vld [vmem:[#allocation3 + $0x74] sm:$0x1]
    %v339 = vld [vmem:[#allocation3 + $0x78] sm:$0xf]
    %v340 = vld [vmem:[#allocation3 + $0x7c] sm:$0x1]
    %v341 = vld [vmem:[#allocation3 + $0x80] sm:$0xf]
    %v342 = vld [vmem:[#allocation3 + $0x84] sm:$0x1]
    %vm343 = vsmask.f32 3328
    %vm344 = vsmask.f32 7440
    %vm345 = vmor %vm343, %vm344
    %v347 = vshrl.u32 %v311, 16
    %v349 = vrot.slane %v347, 4
    %v350 = vshll.u32 %v311, 16
    %v352 = vrot.slane %v350, 5
    %v353 = vor.u32 %v349, %v352
    %v354 = vrot.slane %v353, 4
    %v356 = vshll.u32 %v312, 16
    %v358 = vrot.slane %v356, 5
    %v359 = vsel %vm345, %v354, %v358
    %v361 = vshrl.u32 %v313, 16
    %v363 = vrot.slane %v361, 4
    %v364 = vshll.u32 %v313, 16
    %v366 = vrot.slane %v364, 5
    %v367 = vor.u32 %v363, %v366
    %v368 = vrot.slane %v367, 4
    %v370 = vshll.u32 %v314, 16
    %v372 = vrot.slane %v370, 5
    %v373 = vsel %vm345, %v368, %v372
    %v375 = vshrl.u32 %v315, 16
    %v377 = vrot.slane %v375, 4
    %v378 = vshll.u32 %v315, 16
    %v380 = vrot.slane %v378, 5
    %v381 = vor.u32 %v377, %v380
    %v382 = vrot.slane %v381, 4
    %v384 = vshll.u32 %v316, 16
    %v386 = vrot.slane %v384, 5
    %v387 = vsel %vm345, %v382, %v386
    %v389 = vshrl.u32 %v317, 16
    %v391 = vrot.slane %v389, 4
    %v392 = vshll.u32 %v317, 16
    %v394 = vrot.slane %v392, 5
    %v395 = vor.u32 %v391, %v394
    %v396 = vrot.slane %v395, 4
    %v398 = vshll.u32 %v318, 16
    %v400 = vrot.slane %v398, 5
    %v401 = vsel %vm345, %v396, %v400
    %v403 = vshrl.u32 %v319, 16
    %v405 = vrot.slane %v403, 4
    %v406 = vshll.u32 %v319, 16
    %v408 = vrot.slane %v406, 5
    %v409 = vor.u32 %v405, %v408
    %v410 = vrot.slane %v409, 4
    %v412 = vshll.u32 %v320, 16
    %v414 = vrot.slane %v412, 5
    %v415 = vsel %vm345, %v410, %v414
    %v417 = vshrl.u32 %v321, 16
    %v419 = vrot.slane %v417, 4
    %v420 = vshll.u32 %v321, 16
    %v422 = vrot.slane %v420, 5
    %v423 = vor.u32 %v419, %v422
    %v424 = vrot.slane %v423, 4
    %v426 = vshll.u32 %v322, 16
    %v428 = vrot.slane %v426, 5
    %v429 = vsel %vm345, %v424, %v428
    %v431 = vshrl.u32 %v323, 16
    %v433 = vrot.slane %v431, 4
    %v434 = vshll.u32 %v323, 16
    %v436 = vrot.slane %v434, 5
    %v437 = vor.u32 %v433, %v436
    %v438 = vrot.slane %v437, 4
    %v440 = vshll.u32 %v324, 16
    %v442 = vrot.slane %v440, 5
    %v443 = vsel %vm345, %v438, %v442
    %v445 = vshrl.u32 %v325, 16
    %v447 = vrot.slane %v445, 4
    %v448 = vshll.u32 %v325, 16
    %v450 = vrot.slane %v448, 5
    %v451 = vor.u32 %v447, %v450
    %v452 = vrot.slane %v451, 4
    %v454 = vshll.u32 %v326, 16
    %v456 = vrot.slane %v454, 5
    %v457 = vsel %vm345, %v452, %v456
    %v459 = vshrl.u32 %v327, 16
    %v461 = vrot.slane %v459, 4
    %v462 = vshll.u32 %v327, 16
    %v464 = vrot.slane %v462, 5
    %v465 = vor.u32 %v461, %v464
    %v466 = vrot.slane %v465, 4
    %v468 = vshll.u32 %v328, 16
    %v470 = vrot.slane %v468, 5
    %v471 = vsel %vm345, %v466, %v470
    %v473 = vshrl.u32 %v329, 16
    %v475 = vrot.slane %v473, 4
    %v476 = vshll.u32 %v329, 16
    %v478 = vrot.slane %v476, 5
    %v479 = vor.u32 %v475, %v478
    %v480 = vrot.slane %v479, 4
    %v482 = vshll.u32 %v330, 16
    %v484 = vrot.slane %v482, 5
    %v485 = vsel %vm345, %v480, %v484
    %v487 = vshrl.u32 %v331, 16
    %v489 = vrot.slane %v487, 4
    %v490 = vshll.u32 %v331, 16
    %v492 = vrot.slane %v490, 5
    %v493 = vor.u32 %v489, %v492
    %v494 = vrot.slane %v493, 4
    %v496 = vshll.u32 %v332, 16
    %v498 = vrot.slane %v496, 5
    %v499 = vsel %vm345, %v494, %v498
    %v501 = vshrl.u32 %v333, 16
    %v503 = vrot.slane %v501, 4
    %v504 = vshll.u32 %v333, 16
    %v506 = vrot.slane %v504, 5
    %v507 = vor.u32 %v503, %v506
    %v508 = vrot.slane %v507, 4
    %v510 = vshll.u32 %v334, 16
    %v512 = vrot.slane %v510, 5
    %v513 = vsel %vm345, %v508, %v512
    %v515 = vshrl.u32 %v335, 16
    %v517 = vrot.slane %v515, 4
    %v518 = vshll.u32 %v335, 16
    %v520 = vrot.slane %v518, 5
    %v521 = vor.u32 %v517, %v520
    %v522 = vrot.slane %v521, 4
    %v524 = vshll.u32 %v336, 16
    %v526 = vrot.slane %v524, 5
    %v527 = vsel %vm345, %v522, %v526
    %v529 = vshrl.u32 %v337, 16
    %v531 = vrot.slane %v529, 4
    %v532 = vshll.u32 %v337, 16
    %v534 = vrot.slane %v532, 5
    %v535 = vor.u32 %v531, %v534
    %v536 = vrot.slane %v535, 4
    %v538 = vshll.u32 %v338, 16
    %v540 = vrot.slane %v538, 5
    %v541 = vsel %vm345, %v536, %v540
    %v543 = vshrl.u32 %v339, 16
    %v545 = vrot.slane %v543, 4
    %v546 = vshll.u32 %v339, 16
    %v548 = vrot.slane %v546, 5
    %v549 = vor.u32 %v545, %v548
    %v550 = vrot.slane %v549, 4
    %v552 = vshll.u32 %v340, 16
    %v554 = vrot.slane %v552, 5
    %v555 = vsel %vm345, %v550, %v554
    %v557 = vshrl.u32 %v341, 16
    %v559 = vrot.slane %v557, 4
    %v560 = vshll.u32 %v341, 16
    %v562 = vrot.slane %v560, 5
    %v563 = vor.u32 %v559, %v562
    %v564 = vrot.slane %v563, 4
    %v566 = vshll.u32 %v342, 16
    %v568 = vrot.slane %v566, 5
    %v569 = vsel %vm345, %v564, %v568
    %s570 = scalar_lea.vmem [#allocation6], 64
    %v571 = vld [vmem:[%s570] sm:$0xf]
    %v572 = vld [vmem:[%s570 + $0x4] sm:$0xf]
    %v573 = vld [vmem:[%s570 + $0x8] sm:$0xf]
    %v574 = vld [vmem:[%s570 + $0xc] sm:$0xf]
    %v575 = vld [vmem:[%s570 + $0x10] sm:$0xf]
    %v576 = vld [vmem:[%s570 + $0x14] sm:$0xf]
    %v577 = vld [vmem:[%s570 + $0x18] sm:$0xf]
    %v578 = vld [vmem:[%s570 + $0x1c] sm:$0xf]
    %v579 = vld [vmem:[%s570 + $0x20] sm:$0xf]
    %v580 = vld [vmem:[%s570 + $0x24] sm:$0xf]
    %v581 = vld [vmem:[%s570 + $0x28] sm:$0xf]
    %v582 = vld [vmem:[%s570 + $0x2c] sm:$0xf]
    %v583 = vld [vmem:[%s570 + $0x30] sm:$0xf]
    %v584 = vld [vmem:[%s570 + $0x34] sm:$0xf]
    %v585 = vld [vmem:[%s570 + $0x38] sm:$0xf]
    %v586 = vld [vmem:[%s570 + $0x3c] sm:$0xf]
    %v587 = vunpack.c.l.b16 %v359
    %v588 = vunpack.c.l.b16 %v373
    %v589 = vunpack.c.l.b16 %v387
    %v590 = vunpack.c.l.b16 %v401
    %v591 = vunpack.c.l.b16 %v415
    %v592 = vunpack.c.l.b16 %v429
    %v593 = vunpack.c.l.b16 %v443
    %v594 = vunpack.c.l.b16 %v457
    %v595 = vunpack.c.l.b16 %v471
    %v596 = vunpack.c.l.b16 %v485
    %v597 = vunpack.c.l.b16 %v499
    %v598 = vunpack.c.l.b16 %v513
    %v599 = vunpack.c.l.b16 %v527
    %v600 = vunpack.c.l.b16 %v541
    %v601 = vunpack.c.l.b16 %v555
    %v602 = vunpack.c.l.b16 %v569
    %v603 = vpack.c.b16 %v588, %v587
    %v604 = vpack.c.b16 %v590, %v589
    %v605 = vpack.c.b16 %v592, %v591
    %v606 = vpack.c.b16 %v594, %v593
    %v607 = vpack.c.b16 %v596, %v595
    %v608 = vpack.c.b16 %v598, %v597
    %v609 = vpack.c.b16 %v600, %v599
    %v610 = vpack.c.b16 %v602, %v601
    %v635 = vunpack.c.l.b16 %v571
    %v636 = vunpack.c.l.b16 %v572
    %v637 = vunpack.c.l.b16 %v573
    %v638 = vunpack.c.l.b16 %v574
    %v639 = vunpack.c.l.b16 %v575
    %v640 = vunpack.c.l.b16 %v576
    %v641 = vunpack.c.l.b16 %v577
    %v642 = vunpack.c.l.b16 %v578
    %v643 = vunpack.c.l.b16 %v579
    %v644 = vunpack.c.l.b16 %v580
    %v645 = vunpack.c.l.b16 %v581
    %v646 = vunpack.c.l.b16 %v582
    %v647 = vunpack.c.l.b16 %v583
    %v648 = vunpack.c.l.b16 %v584
    %v649 = vunpack.c.l.b16 %v585
    %v650 = vunpack.c.l.b16 %v586
    %v651 = vpack.c.b16 %v636, %v635
    %v652 = vpack.c.b16 %v638, %v637
    %v653 = vpack.c.b16 %v640, %v639
    %v654 = vpack.c.b16 %v642, %v641
    %v655 = vpack.c.b16 %v644, %v643
    %v656 = vpack.c.b16 %v646, %v645
    %v657 = vpack.c.b16 %v648, %v647
    %v658 = vpack.c.b16 %v650, %v649
    %667 = vmatprep.subr.bf16.mxu0 0
    %668 = vmatpush1.bf16.msra.mxu0 %v651
    %669 = vmatprep.subr.bf16.mxu0 0
    %670 = vmatpush1.bf16.msra.mxu0 %v652
    %671 = vmatprep.subr.bf16.mxu0 0
    %672 = vmatpush1.bf16.msra.mxu0 %v653
    %673 = vmatprep.subr.bf16.mxu0 0
    %674 = vmatpush1.bf16.msra.mxu0 %v654
    %675 = vmatprep.subr.bf16.mxu0 0
    %676 = vmatpush1.bf16.msra.mxu0 %v655
    %677 = vmatprep.subr.bf16.mxu0 0
    %678 = vmatpush1.bf16.msra.mxu0 %v656
    %679 = vmatprep.subr.bf16.mxu0 0
    %680 = vmatpush1.bf16.msra.mxu0 %v657
    %681 = vmatprep.subr.bf16.mxu0 0
    %682 = vmatpush1.bf16.msra.mxu0 %v658
    %683 = vmatprep.subr.bf16.mxu0 0
    %684 = vmatpush1.bf16.msra.mxu0 0
    %685 = vmatprep.subr.bf16.mxu0 0
    %686 = vmatpush1.bf16.msra.mxu0 0
    %687 = vmatprep.subr.bf16.mxu0 0
    %688 = vmatpush1.bf16.msra.mxu0 0
    %689 = vmatprep.subr.bf16.mxu0 0
    %690 = vmatpush1.bf16.msra.mxu0 0
    %691 = vmatprep.subr.bf16.mxu0 0
    %692 = vmatpush1.bf16.msra.mxu0 0
    %693 = vmatprep.subr.bf16.mxu0 0
    %694 = vmatpush1.bf16.msra.mxu0 0
    %695 = vmatprep.subr.bf16.mxu0 0
    %696 = vmatpush1.bf16.msra.mxu0 0
    %697 = vmatprep.subr.bf16.mxu0 0
    %698 = vmatpush1.bf16.msra.mxu0 0
    %699 = vmatprep.mubr.bf16.mxu0 0
    %700 = vmatmul.mubr.bf16.gmra.mrb[0].mxu0 %v603
    %v701 = vpop.f32.mrb[0].mxu0
    %v702 = vadd.f32 0.0, %v701
    %v703 = vpop.f32.mrb[0].mxu0
    %v704 = vpop.f32.mrb[0].mxu0
    %v705 = vadd.f32 0.0, %v704
    %v706 = vpop.f32.mrb[0].mxu0
    %707 = vmatprep.mubr.bf16.mxu0 0
    %708 = vmatmul.mubr.bf16.gmra.mrb[0].mxu0 %v604
    %v709 = vpop.f32.mrb[0].mxu0
    %v710 = vadd.f32 0.0, %v709
    %v711 = vpop.f32.mrb[0].mxu0
    %v712 = vpop.f32.mrb[0].mxu0
    %v713 = vadd.f32 0.0, %v712
    %v714 = vpop.f32.mrb[0].mxu0
    %715 = vmatprep.mubr.bf16.mxu0 0
    %716 = vmatmul.mubr.bf16.gmra.mrb[0].mxu0 %v605
    %v717 = vpop.f32.mrb[0].mxu0
    %v718 = vadd.f32 0.0, %v717
    %v719 = vpop.f32.mrb[0].mxu0
    %v720 = vpop.f32.mrb[0].mxu0
    %v721 = vadd.f32 0.0, %v720
    %v722 = vpop.f32.mrb[0].mxu0
    %723 = vmatprep.mubr.bf16.mxu0 0
    %724 = vmatmul.mubr.bf16.gmra.mrb[0].mxu0 %v606
    %v725 = vpop.f32.mrb[0].mxu0
    %v726 = vadd.f32 0.0, %v725
    %v727 = vpop.f32.mrb[0].mxu0
    %v728 = vpop.f32.mrb[0].mxu0
    %v729 = vadd.f32 0.0, %v728
    %v730 = vpop.f32.mrb[0].mxu0
    %731 = vmatprep.mubr.bf16.mxu0 0
    %732 = vmatmul.mubr.bf16.gmra.mrb[0].mxu0 %v607
    %v733 = vpop.f32.mrb[0].mxu0
    %v734 = vadd.f32 0.0, %v733
    %v735 = vpop.f32.mrb[0].mxu0
    %v736 = vpop.f32.mrb[0].mxu0
    %v737 = vadd.f32 0.0, %v736
    %v738 = vpop.f32.mrb[0].mxu0
    %739 = vmatprep.mubr.bf16.mxu0 0
    %740 = vmatmul.mubr.bf16.gmra.mrb[0].mxu0 %v608
    %v741 = vpop.f32.mrb[0].mxu0
    %v742 = vadd.f32 0.0, %v741
    %v743 = vpop.f32.mrb[0].mxu0
    %v744 = vpop.f32.mrb[0].mxu0
    %v745 = vadd.f32 0.0, %v744
    %v746 = vpop.f32.mrb[0].mxu0
    %747 = vmatprep.mubr.bf16.mxu0 0
    %748 = vmatmul.mubr.bf16.gmra.mrb[0].mxu0 %v609
    %v749 = vpop.f32.mrb[0].mxu0
    %v750 = vadd.f32 0.0, %v749
    %v751 = vpop.f32.mrb[0].mxu0
    %v752 = vpop.f32.mrb[0].mxu0
    %v753 = vadd.f32 0.0, %v752
    %v754 = vpop.f32.mrb[0].mxu0
    %755 = vmatprep.mubr.bf16.mxu0 0
    %756 = vmatmul.mubr.bf16.gmra.mrb[0].mxu0 %v610
    %v757 = vpop.f32.mrb[0].mxu0
    %v758 = vadd.f32 0.0, %v757
    %v759 = vpop.f32.mrb[0].mxu0
    %v760 = vpop.f32.mrb[0].mxu0
    %v761 = vadd.f32 0.0, %v760
    %v762 = vpop.f32.mrb[0].mxu0
    %763 = vdwg.mxu0
    %v764 = vld [vmem:[#allocation2] sm:$0xff]
    %v765 = vld [vmem:[#allocation2 + $0x8] sm:$0xff]
    %v766 = vld [vmem:[#allocation2 + $0x10] sm:$0xff]
    %v767 = vld [vmem:[#allocation2 + $0x18] sm:$0xff]
    %v768 = vld [vmem:[#allocation2 + $0x20] sm:$0xff]
    %v769 = vld [vmem:[#allocation2 + $0x28] sm:$0xff]
    %v770 = vld [vmem:[#allocation2 + $0x30] sm:$0xff]
    %v771 = vld [vmem:[#allocation2 + $0x38] sm:$0xff]
    %v772 = vld [vmem:[#allocation2 + $0x40] sm:$0xff]
    %v773 = vld [vmem:[#allocation2 + $0x48] sm:$0xff]
    %v774 = vld [vmem:[#allocation2 + $0x50] sm:$0xff]
    %v775 = vld [vmem:[#allocation2 + $0x58] sm:$0xff]
    %v776 = vld [vmem:[#allocation2 + $0x60] sm:$0xff]
    %v777 = vld [vmem:[#allocation2 + $0x68] sm:$0xff]
    %v778 = vld [vmem:[#allocation2 + $0x70] sm:$0xff]
    %v779 = vld [vmem:[#allocation2 + $0x78] sm:$0xff]
    %v780 = vadd.f32 %v764, %v702
    %v781 = vadd.f32 %v765, %v705
    %v782 = vadd.f32 %v766, %v710
    %v783 = vadd.f32 %v767, %v713
    %v784 = vadd.f32 %v768, %v718
    %v785 = vadd.f32 %v769, %v721
    %v786 = vadd.f32 %v770, %v726
    %v787 = vadd.f32 %v771, %v729
    %v788 = vadd.f32 %v772, %v734
    %v789 = vadd.f32 %v773, %v737
    %v790 = vadd.f32 %v774, %v742
    %v791 = vadd.f32 %v775, %v745
    %v792 = vadd.f32 %v776, %v750
    %v793 = vadd.f32 %v777, %v753
    %v794 = vadd.f32 %v778, %v758
    %v795 = vadd.f32 %v779, %v761
    %796 = vst [vmem:[#allocation2] sm:$0xff] %v780
    %797 = vst [vmem:[#allocation2 + $0x8] sm:$0xff] %v781
    %798 = vst [vmem:[#allocation2 + $0x10] sm:$0xff] %v782
    %799 = vst [vmem:[#allocation2 + $0x18] sm:$0xff] %v783
    %800 = vst [vmem:[#allocation2 + $0x20] sm:$0xff] %v784
    %801 = vst [vmem:[#allocation2 + $0x28] sm:$0xff] %v785
    %802 = vst [vmem:[#allocation2 + $0x30] sm:$0xff] %v786
    %803 = vst [vmem:[#allocation2 + $0x38] sm:$0xff] %v787
    %804 = vst [vmem:[#allocation2 + $0x40] sm:$0xff] %v788
    %805 = vst [vmem:[#allocation2 + $0x48] sm:$0xff] %v789
    %806 = vst [vmem:[#allocation2 + $0x50] sm:$0xff] %v790
    %807 = vst [vmem:[#allocation2 + $0x58] sm:$0xff] %v791
    %808 = vst [vmem:[#allocation2 + $0x60] sm:$0xff] %v792
    %809 = vst [vmem:[#allocation2 + $0x68] sm:$0xff] %v793
    %810 = vst [vmem:[#allocation2 + $0x70] sm:$0xff] %v794
    %811 = vst [vmem:[#allocation2 + $0x78] sm:$0xff] %v795
    %s812 = scalar_lea.vmem [#allocation3], 8
    %v813 = vld [vmem:[%s812] sm:$0xf]
    %v814 = vld [vmem:[%s812 + $0x8] sm:$0xf]
    %v815 = vld [vmem:[%s812 + $0x10] sm:$0xf]
    %v816 = vld [vmem:[%s812 + $0x18] sm:$0xf]
    %v817 = vld [vmem:[%s812 + $0x20] sm:$0xf]
    %v818 = vld [vmem:[%s812 + $0x28] sm:$0xf]
    %v819 = vld [vmem:[%s812 + $0x30] sm:$0xf]
    %v820 = vld [vmem:[%s812 + $0x38] sm:$0xf]
    %v821 = vld [vmem:[%s812 + $0x48] sm:$0xf]
    %v822 = vld [vmem:[%s812 + $0x50] sm:$0xf]
    %v823 = vld [vmem:[%s812 + $0x58] sm:$0xf]
    %v824 = vld [vmem:[%s812 + $0x60] sm:$0xf]
    %v825 = vld [vmem:[%s812 + $0x68] sm:$0xf]
    %v826 = vld [vmem:[%s812 + $0x70] sm:$0xf]
    %v827 = vld [vmem:[%s812 + $0x78] sm:$0xf]
    %v828 = vld [vmem:[%s812 + $0x80] sm:$0xf]
    %s829 = scalar_lea.vmem [#allocation6], 128
    %v830 = vld [vmem:[%s829] sm:$0xf]
    %v831 = vld [vmem:[%s829 + $0x4] sm:$0xf]
    %v832 = vld [vmem:[%s829 + $0x8] sm:$0xf]
    %v833 = vld [vmem:[%s829 + $0xc] sm:$0xf]
    %v834 = vld [vmem:[%s829 + $0x10] sm:$0xf]
    %v835 = vld [vmem:[%s829 + $0x14] sm:$0xf]
    %v836 = vld [vmem:[%s829 + $0x18] sm:$0xf]
    %v837 = vld [vmem:[%s829 + $0x1c] sm:$0xf]
    %v838 = vld [vmem:[%s829 + $0x20] sm:$0xf]
    %v839 = vld [vmem:[%s829 + $0x24] sm:$0xf]
    %v840 = vld [vmem:[%s829 + $0x28] sm:$0xf]
    %v841 = vld [vmem:[%s829 + $0x2c] sm:$0xf]
    %v842 = vld [vmem:[%s829 + $0x30] sm:$0xf]
    %v843 = vld [vmem:[%s829 + $0x34] sm:$0xf]
    %v844 = vld [vmem:[%s829 + $0x38] sm:$0xf]
    %v845 = vld [vmem:[%s829 + $0x3c] sm:$0xf]
    %v862 = vunpack.c.l.b16 %v813
    %v863 = vunpack.c.l.b16 %v814
    %v864 = vunpack.c.l.b16 %v815
    %v865 = vunpack.c.l.b16 %v816
    %v866 = vunpack.c.l.b16 %v817
    %v867 = vunpack.c.l.b16 %v818
    %v868 = vunpack.c.l.b16 %v819
    %v869 = vunpack.c.l.b16 %v820
    %v870 = vunpack.c.l.b16 %v821
    %v871 = vunpack.c.l.b16 %v822
    %v872 = vunpack.c.l.b16 %v823
    %v873 = vunpack.c.l.b16 %v824
    %v874 = vunpack.c.l.b16 %v825
    %v875 = vunpack.c.l.b16 %v826
    %v876 = vunpack.c.l.b16 %v827
    %v877 = vunpack.c.l.b16 %v828
    %v878 = vpack.c.b16 %v863, %v862
    %v879 = vpack.c.b16 %v865, %v864
    %v880 = vpack.c.b16 %v867, %v866
    %v881 = vpack.c.b16 %v869, %v868
    %v882 = vpack.c.b16 %v871, %v870
    %v883 = vpack.c.b16 %v873, %v872
    %v884 = vpack.c.b16 %v875, %v874
    %v885 = vpack.c.b16 %v877, %v876
    %v910 = vunpack.c.l.b16 %v830
    %v911 = vunpack.c.l.b16 %v831
    %v912 = vunpack.c.l.b16 %v832
    %v913 = vunpack.c.l.b16 %v833
    %v914 = vunpack.c.l.b16 %v834
    %v915 = vunpack.c.l.b16 %v835
    %v916 = vunpack.c.l.b16 %v836
    %v917 = vunpack.c.l.b16 %v837
    %v918 = vunpack.c.l.b16 %v838
    %v919 = vunpack.c.l.b16 %v839
    %v920 = vunpack.c.l.b16 %v840
    %v921 = vunpack.c.l.b16 %v841
    %v922 = vunpack.c.l.b16 %v842
    %v923 = vunpack.c.l.b16 %v843
    %v924 = vunpack.c.l.b16 %v844
    %v925 = vunpack.c.l.b16 %v845
    %v926 = vpack.c.b16 %v911, %v910
    %v927 = vpack.c.b16 %v913, %v912
    %v928 = vpack.c.b16 %v915, %v914
    %v929 = vpack.c.b16 %v917, %v916
    %v930 = vpack.c.b16 %v919, %v918
    %v931 = vpack.c.b16 %v921, %v920
    %v932 = vpack.c.b16 %v923, %v922
    %v933 = vpack.c.b16 %v925, %v924
    %942 = vmatprep.subr.bf16.mxu0 0
    %943 = vmatpush1.bf16.msra.mxu0 %v926
    %944 = vmatprep.subr.bf16.mxu0 0
    %945 = vmatpush1.bf16.msra.mxu0 %v927
    %946 = vmatprep.subr.bf16.mxu0 0
    %947 = vmatpush1.bf16.msra.mxu0 %v928
    %948 = vmatprep.subr.bf16.mxu0 0
    %949 = vmatpush1.bf16.msra.mxu0 %v929
    %950 = vmatprep.subr.bf16.mxu0 0
    %951 = vmatpush1.bf16.msra.mxu0 %v930
    %952 = vmatprep.subr.bf16.mxu0 0
    %953 = vmatpush1.bf16.msra.mxu0 %v931
    %954 = vmatprep.subr.bf16.mxu0 0
    %955 = vmatpush1.bf16.msra.mxu0 %v932
    %956 = vmatprep.subr.bf16.mxu0 0
    %957 = vmatpush1.bf16.msra.mxu0 %v933
    %958 = vmatprep.subr.bf16.mxu0 0
    %959 = vmatpush1.bf16.msra.mxu0 0
    %960 = vmatprep.subr.bf16.mxu0 0
    %961 = vmatpush1.bf16.msra.mxu0 0
    %962 = vmatprep.subr.bf16.mxu0 0
    %963 = vmatpush1.bf16.msra.mxu0 0
    %964 = vmatprep.subr.bf16.mxu0 0
    %965 = vmatpush1.bf16.msra.mxu0 0
    %966 = vmatprep.subr.bf16.mxu0 0
    %967 = vmatpush1.bf16.msra.mxu0 0
    %968 = vmatprep.subr.bf16.mxu0 0
    %969 = vmatpush1.bf16.msra.mxu0 0
    %970 = vmatprep.subr.bf16.mxu0 0
    %971 = vmatpush1.bf16.msra.mxu0 0
    %972 = vmatprep.subr.bf16.mxu0 0
    %973 = vmatpush1.bf16.msra.mxu0 0
    %974 = vmatprep.mubr.bf16.mxu0 0
    %975 = vmatmul.mubr.bf16.gmra.mrb[0].mxu0 %v878
    %v976 = vpop.f32.mrb[0].mxu0
    %v977 = vadd.f32 0.0, %v976
    %v978 = vpop.f32.mrb[0].mxu0
    %v979 = vpop.f32.mrb[0].mxu0
    %v980 = vadd.f32 0.0, %v979
    %v981 = vpop.f32.mrb[0].mxu0
    %982 = vmatprep.mubr.bf16.mxu0 0
    %983 = vmatmul.mubr.bf16.gmra.mrb[0].mxu0 %v879
    %v984 = vpop.f32.mrb[0].mxu0
    %v985 = vadd.f32 0.0, %v984
    %v986 = vpop.f32.mrb[0].mxu0
    %v987 = vpop.f32.mrb[0].mxu0
    %v988 = vadd.f32 0.0, %v987
    %v989 = vpop.f32.mrb[0].mxu0
    %990 = vmatprep.mubr.bf16.mxu0 0
    %991 = vmatmul.mubr.bf16.gmra.mrb[0].mxu0 %v880
    %v992 = vpop.f32.mrb[0].mxu0
    %v993 = vadd.f32 0.0, %v992
    %v994 = vpop.f32.mrb[0].mxu0
    %v995 = vpop.f32.mrb[0].mxu0
    %v996 = vadd.f32 0.0, %v995
    %v997 = vpop.f32.mrb[0].mxu0
    %998 = vmatprep.mubr.bf16.mxu0 0
    %999 = vmatmul.mubr.bf16.gmra.mrb[0].mxu0 %v881
    %v1000 = vpop.f32.mrb[0].mxu0
    %v1001 = vadd.f32 0.0, %v1000
    %v1002 = vpop.f32.mrb[0].mxu0
    %v1003 = vpop.f32.mrb[0].mxu0
    %v1004 = vadd.f32 0.0, %v1003
    %v1005 = vpop.f32.mrb[0].mxu0
    %1006 = vmatprep.mubr.bf16.mxu0 0
    %1007 = vmatmul.mubr.bf16.gmra.mrb[0].mxu0 %v882
    %v1008 = vpop.f32.mrb[0].mxu0
    %v1009 = vadd.f32 0.0, %v1008
    %v1010 = vpop.f32.mrb[0].mxu0
    %v1011 = vpop.f32.mrb[0].mxu0
    %v1012 = vadd.f32 0.0, %v1011
    %v1013 = vpop.f32.mrb[0].mxu0
    %1014 = vmatprep.mubr.bf16.mxu0 0
    %1015 = vmatmul.mubr.bf16.gmra.mrb[0].mxu0 %v883
    %v1016 = vpop.f32.mrb[0].mxu0
    %v1017 = vadd.f32 0.0, %v1016
    %v1018 = vpop.f32.mrb[0].mxu0
    %v1019 = vpop.f32.mrb[0].mxu0
    %v1020 = vadd.f32 0.0, %v1019
    %v1021 = vpop.f32.mrb[0].mxu0
    %1022 = vmatprep.mubr.bf16.mxu0 0
    %1023 = vmatmul.mubr.bf16.gmra.mrb[0].mxu0 %v884
    %v1024 = vpop.f32.mrb[0].mxu0
    %v1025 = vadd.f32 0.0, %v1024
    %v1026 = vpop.f32.mrb[0].mxu0
    %v1027 = vpop.f32.mrb[0].mxu0
    %v1028 = vadd.f32 0.0, %v1027
    %v1029 = vpop.f32.mrb[0].mxu0
    %1030 = vmatprep.mubr.bf16.mxu0 0
    %1031 = vmatmul.mubr.bf16.gmra.mrb[0].mxu0 %v885
    %v1032 = vpop.f32.mrb[0].mxu0
    %v1033 = vadd.f32 0.0, %v1032
    %v1034 = vpop.f32.mrb[0].mxu0
    %v1035 = vpop.f32.mrb[0].mxu0
    %v1036 = vadd.f32 0.0, %v1035
    %v1037 = vpop.f32.mrb[0].mxu0
    %1038 = vdwg.mxu0
    %v1039 = vld [vmem:[#allocation2] sm:$0xff]
    %v1040 = vld [vmem:[#allocation2 + $0x8] sm:$0xff]
    %v1041 = vld [vmem:[#allocation2 + $0x10] sm:$0xff]
    %v1042 = vld [vmem:[#allocation2 + $0x18] sm:$0xff]
    %v1043 = vld [vmem:[#allocation2 + $0x20] sm:$0xff]
    %v1044 = vld [vmem:[#allocation2 + $0x28] sm:$0xff]
    %v1045 = vld [vmem:[#allocation2 + $0x30] sm:$0xff]
    %v1046 = vld [vmem:[#allocation2 + $0x38] sm:$0xff]
    %v1047 = vld [vmem:[#allocation2 + $0x40] sm:$0xff]
    %v1048 = vld [vmem:[#allocation2 + $0x48] sm:$0xff]
    %v1049 = vld [vmem:[#allocation2 + $0x50] sm:$0xff]
    %v1050 = vld [vmem:[#allocation2 + $0x58] sm:$0xff]
    %v1051 = vld [vmem:[#allocation2 + $0x60] sm:$0xff]
    %v1052 = vld [vmem:[#allocation2 + $0x68] sm:$0xff]
    %v1053 = vld [vmem:[#allocation2 + $0x70] sm:$0xff]
    %v1054 = vld [vmem:[#allocation2 + $0x78] sm:$0xff]
    %v1055 = vadd.f32 %v1039, %v977
    %v1056 = vadd.f32 %v1040, %v980
    %v1057 = vadd.f32 %v1041, %v985
    %v1058 = vadd.f32 %v1042, %v988
    %v1059 = vadd.f32 %v1043, %v993
    %v1060 = vadd.f32 %v1044, %v996
    %v1061 = vadd.f32 %v1045, %v1001
    %v1062 = vadd.f32 %v1046, %v1004
    %v1063 = vadd.f32 %v1047, %v1009
    %v1064 = vadd.f32 %v1048, %v1012
    %v1065 = vadd.f32 %v1049, %v1017
    %v1066 = vadd.f32 %v1050, %v1020
    %v1067 = vadd.f32 %v1051, %v1025
    %v1068 = vadd.f32 %v1052, %v1028
    %v1069 = vadd.f32 %v1053, %v1033
    %v1070 = vadd.f32 %v1054, %v1036
    %1071 = vst [vmem:[#allocation2] sm:$0xff] %v1055
    %1072 = vst [vmem:[#allocation2 + $0x8] sm:$0xff] %v1056
    %1073 = vst [vmem:[#allocation2 + $0x10] sm:$0xff] %v1057
    %1074 = vst [vmem:[#allocation2 + $0x18] sm:$0xff] %v1058
    %1075 = vst [vmem:[#allocation2 + $0x20] sm:$0xff] %v1059
    %1076 = vst [vmem:[#allocation2 + $0x28] sm:$0xff] %v1060
    %1077 = vst [vmem:[#allocation2 + $0x30] sm:$0xff] %v1061
    %1078 = vst [vmem:[#allocation2 + $0x38] sm:$0xff] %v1062
    %1079 = vst [vmem:[#allocation2 + $0x40] sm:$0xff] %v1063
    %1080 = vst [vmem:[#allocation2 + $0x48] sm:$0xff] %v1064
    %1081 = vst [vmem:[#allocation2 + $0x50] sm:$0xff] %v1065
    %1082 = vst [vmem:[#allocation2 + $0x58] sm:$0xff] %v1066
    %1083 = vst [vmem:[#allocation2 + $0x60] sm:$0xff] %v1067
    %1084 = vst [vmem:[#allocation2 + $0x68] sm:$0xff] %v1068
    %1085 = vst [vmem:[#allocation2 + $0x70] sm:$0xff] %v1069
    %1086 = vst [vmem:[#allocation2 + $0x78] sm:$0xff] %v1070
    %v1087 = vld [vmem:[%s812] sm:$0xf]
    %v1088 = vld [vmem:[%s812 + $0x4] sm:$0x1]
    %v1089 = vld [vmem:[%s812 + $0x8] sm:$0xf]
    %v1090 = vld [vmem:[%s812 + $0xc] sm:$0x1]
    %v1091 = vld [vmem:[%s812 + $0x10] sm:$0xf]
    %v1092 = vld [vmem:[%s812 + $0x14] sm:$0x1]
    %v1093 = vld [vmem:[%s812 + $0x18] sm:$0xf]
    %v1094 = vld [vmem:[%s812 + $0x1c] sm:$0x1]
    %v1095 = vld [vmem:[%s812 + $0x20] sm:$0xf]
    %v1096 = vld [vmem:[%s812 + $0x24] sm:$0x1]
    %v1097 = vld [vmem:[%s812 + $0x28] sm:$0xf]
    %v1098 = vld [vmem:[%s812 + $0x2c] sm:$0x1]
    %v1099 = vld [vmem:[%s812 + $0x30] sm:$0xf]
    %v1100 = vld [vmem:[%s812 + $0x34] sm:$0x1]
    %v1101 = vld [vmem:[%s812 + $0x38] sm:$0xf]
    %v1102 = vld [vmem:[%s812 + $0x3c] sm:$0x1]
    %v1103 = vld [vmem:[%s812 + $0x48] sm:$0xf]
    %v1104 = vld [vmem:[%s812 + $0x4c] sm:$0x1]
    %v1105 = vld [vmem:[%s812 + $0x50] sm:$0xf]
    %v1106 = vld [vmem:[%s812 + $0x54] sm:$0x1]
    %v1107 = vld [vmem:[%s812 + $0x58] sm:$0xf]
    %v1108 = vld [vmem:[%s812 + $0x5c] sm:$0x1]
    %v1109 = vld [vmem:[%s812 + $0x60] sm:$0xf]
    %v1110 = vld [vmem:[%s812 + $0x64] sm:$0x1]
    %v1111 = vld [vmem:[%s812 + $0x68] sm:$0xf]
    %v1112 = vld [vmem:[%s812 + $0x6c] sm:$0x1]
    %v1113 = vld [vmem:[%s812 + $0x70] sm:$0xf]
    %v1114 = vld [vmem:[%s812 + $0x74] sm:$0x1]
    %v1115 = vld [vmem:[%s812 + $0x78] sm:$0xf]
    %v1116 = vld [vmem:[%s812 + $0x7c] sm:$0x1]
    %v1117 = vld [vmem:[%s812 + $0x80] sm:$0xf]
    %v1118 = vld [vmem:[%s812 + $0x84] sm:$0x1]
    %v1120 = vshrl.u32 %v1087, 16
    %v1122 = vrot.slane %v1120, 4
    %v1123 = vshll.u32 %v1087, 16
    %v1125 = vrot.slane %v1123, 5
    %v1126 = vor.u32 %v1122, %v1125
    %v1127 = vrot.slane %v1126, 4
    %v1129 = vshll.u32 %v1088, 16
    %v1131 = vrot.slane %v1129, 5
    %v1132 = vsel %vm345, %v1127, %v1131
    %v1134 = vshrl.u32 %v1089, 16
    %v1136 = vrot.slane %v1134, 4
    %v1137 = vshll.u32 %v1089, 16
    %v1139 = vrot.slane %v1137, 5
    %v1140 = vor.u32 %v1136, %v1139
    %v1141 = vrot.slane %v1140, 4
    %v1143 = vshll.u32 %v1090, 16
    %v1145 = vrot.slane %v1143, 5
    %v1146 = vsel %vm345, %v1141, %v1145
    %v1148 = vshrl.u32 %v1091, 16
    %v1150 = vrot.slane %v1148, 4
    %v1151 = vshll.u32 %v1091, 16
    %v1153 = vrot.slane %v1151, 5
    %v1154 = vor.u32 %v1150, %v1153
    %v1155 = vrot.slane %v1154, 4
    %v1157 = vshll.u32 %v1092, 16
    %v1159 = vrot.slane %v1157, 5
    %v1160 = vsel %vm345, %v1155, %v1159
    %v1162 = vshrl.u32 %v1093, 16
    %v1164 = vrot.slane %v1162, 4
    %v1165 = vshll.u32 %v1093, 16
    %v1167 = vrot.slane %v1165, 5
    %v1168 = vor.u32 %v1164, %v1167
    %v1169 = vrot.slane %v1168, 4
    %v1171 = vshll.u32 %v1094, 16
    %v1173 = vrot.slane %v1171, 5
    %v1174 = vsel %vm345, %v1169, %v1173
    %v1176 = vshrl.u32 %v1095, 16
    %v1178 = vrot.slane %v1176, 4
    %v1179 = vshll.u32 %v1095, 16
    %v1181 = vrot.slane %v1179, 5
    %v1182 = vor.u32 %v1178, %v1181
    %v1183 = vrot.slane %v1182, 4
    %v1185 = vshll.u32 %v1096, 16
    %v1187 = vrot.slane %v1185, 5
    %v1188 = vsel %vm345, %v1183, %v1187
    %v1190 = vshrl.u32 %v1097, 16
    %v1192 = vrot.slane %v1190, 4
    %v1193 = vshll.u32 %v1097, 16
    %v1195 = vrot.slane %v1193, 5
    %v1196 = vor.u32 %v1192, %v1195
    %v1197 = vrot.slane %v1196, 4
    %v1199 = vshll.u32 %v1098, 16
    %v1201 = vrot.slane %v1199, 5
    %v1202 = vsel %vm345, %v1197, %v1201
    %v1204 = vshrl.u32 %v1099, 16
    %v1206 = vrot.slane %v1204, 4
    %v1207 = vshll.u32 %v1099, 16
    %v1209 = vrot.slane %v1207, 5
    %v1210 = vor.u32 %v1206, %v1209
    %v1211 = vrot.slane %v1210, 4
    %v1213 = vshll.u32 %v1100, 16
    %v1215 = vrot.slane %v1213, 5
    %v1216 = vsel %vm345, %v1211, %v1215
    %v1218 = vshrl.u32 %v1101, 16
    %v1220 = vrot.slane %v1218, 4
    %v1221 = vshll.u32 %v1101, 16
    %v1223 = vrot.slane %v1221, 5
    %v1224 = vor.u32 %v1220, %v1223
    %v1225 = vrot.slane %v1224, 4
    %v1227 = vshll.u32 %v1102, 16
    %v1229 = vrot.slane %v1227, 5
    %v1230 = vsel %vm345, %v1225, %v1229
    %v1232 = vshrl.u32 %v1103, 16
    %v1234 = vrot.slane %v1232, 4
    %v1235 = vshll.u32 %v1103, 16
    %v1237 = vrot.slane %v1235, 5
    %v1238 = vor.u32 %v1234, %v1237
    %v1239 = vrot.slane %v1238, 4
    %v1241 = vshll.u32 %v1104, 16
    %v1243 = vrot.slane %v1241, 5
    %v1244 = vsel %vm345, %v1239, %v1243
    %v1246 = vshrl.u32 %v1105, 16
    %v1248 = vrot.slane %v1246, 4
    %v1249 = vshll.u32 %v1105, 16
    %v1251 = vrot.slane %v1249, 5
    %v1252 = vor.u32 %v1248, %v1251
    %v1253 = vrot.slane %v1252, 4
    %v1255 = vshll.u32 %v1106, 16
    %v1257 = vrot.slane %v1255, 5
    %v1258 = vsel %vm345, %v1253, %v1257
    %v1260 = vshrl.u32 %v1107, 16
    %v1262 = vrot.slane %v1260, 4
    %v1263 = vshll.u32 %v1107, 16
    %v1265 = vrot.slane %v1263, 5
    %v1266 = vor.u32 %v1262, %v1265
    %v1267 = vrot.slane %v1266, 4
    %v1269 = vshll.u32 %v1108, 16
    %v1271 = vrot.slane %v1269, 5
    %v1272 = vsel %vm345, %v1267, %v1271
    %v1274 = vshrl.u32 %v1109, 16
    %v1276 = vrot.slane %v1274, 4
    %v1277 = vshll.u32 %v1109, 16
    %v1279 = vrot.slane %v1277, 5
    %v1280 = vor.u32 %v1276, %v1279
    %v1281 = vrot.slane %v1280, 4
    %v1283 = vshll.u32 %v1110, 16
    %v1285 = vrot.slane %v1283, 5
    %v1286 = vsel %vm345, %v1281, %v1285
    %v1288 = vshrl.u32 %v1111, 16
    %v1290 = vrot.slane %v1288, 4
    %v1291 = vshll.u32 %v1111, 16
    %v1293 = vrot.slane %v1291, 5
    %v1294 = vor.u32 %v1290, %v1293
    %v1295 = vrot.slane %v1294, 4
    %v1297 = vshll.u32 %v1112, 16
    %v1299 = vrot.slane %v1297, 5
    %v1300 = vsel %vm345, %v1295, %v1299
    %v1302 = vshrl.u32 %v1113, 16
    %v1304 = vrot.slane %v1302, 4
    %v1305 = vshll.u32 %v1113, 16
    %v1307 = vrot.slane %v1305, 5
    %v1308 = vor.u32 %v1304, %v1307
    %v1309 = vrot.slane %v1308, 4
    %v1311 = vshll.u32 %v1114, 16
    %v1313 = vrot.slane %v1311, 5
    %v1314 = vsel %vm345, %v1309, %v1313
    %v1316 = vshrl.u32 %v1115, 16
    %v1318 = vrot.slane %v1316, 4
    %v1319 = vshll.u32 %v1115, 16
    %v1321 = vrot.slane %v1319, 5
    %v1322 = vor.u32 %v1318, %v1321
    %v1323 = vrot.slane %v1322, 4
    %v1325 = vshll.u32 %v1116, 16
    %v1327 = vrot.slane %v1325, 5
    %v1328 = vsel %vm345, %v1323, %v1327
    %v1330 = vshrl.u32 %v1117, 16
    %v1332 = vrot.slane %v1330, 4
    %v1333 = vshll.u32 %v1117, 16
    %v1335 = vrot.slane %v1333, 5
    %v1336 = vor.u32 %v1332, %v1335
    %v1337 = vrot.slane %v1336, 4
    %v1339 = vshll.u32 %v1118, 16
    %v1341 = vrot.slane %v1339, 5
    %v1342 = vsel %vm345, %v1337, %v1341
    %s1343 = scalar_lea.vmem [#allocation6], 192
    %v1344 = vld [vmem:[%s1343] sm:$0xf]
    %v1345 = vld [vmem:[%s1343 + $0x4] sm:$0xf]
    %v1346 = vld [vmem:[%s1343 + $0x8] sm:$0xf]
    %v1347 = vld [vmem:[%s1343 + $0xc] sm:$0xf]
    %v1348 = vld [vmem:[%s1343 + $0x10] sm:$0xf]
    %v1349 = vld [vmem:[%s1343 + $0x14] sm:$0xf]
    %v1350 = vld [vmem:[%s1343 + $0x18] sm:$0xf]
    %v1351 = vld [vmem:[%s1343 + $0x1c] sm:$0xf]
    %v1352 = vld [vmem:[%s1343 + $0x20] sm:$0xf]
    %v1353 = vld [vmem:[%s1343 + $0x24] sm:$0xf]
    %v1354 = vld [vmem:[%s1343 + $0x28] sm:$0xf]
    %v1355 = vld [vmem:[%s1343 + $0x2c] sm:$0xf]
    %v1356 = vld [vmem:[%s1343 + $0x30] sm:$0xf]
    %v1357 = vld [vmem:[%s1343 + $0x34] sm:$0xf]
    %v1358 = vld [vmem:[%s1343 + $0x38] sm:$0xf]
    %v1359 = vld [vmem:[%s1343 + $0x3c] sm:$0xf]
    %v1360 = vunpack.c.l.b16 %v1132
    %v1361 = vunpack.c.l.b16 %v1146
    %v1362 = vunpack.c.l.b16 %v1160
    %v1363 = vunpack.c.l.b16 %v1174
    %v1364 = vunpack.c.l.b16 %v1188
    %v1365 = vunpack.c.l.b16 %v1202
    %v1366 = vunpack.c.l.b16 %v1216
    %v1367 = vunpack.c.l.b16 %v1230
    %v1368 = vunpack.c.l.b16 %v1244
    %v1369 = vunpack.c.l.b16 %v1258
    %v1370 = vunpack.c.l.b16 %v1272
    %v1371 = vunpack.c.l.b16 %v1286
    %v1372 = vunpack.c.l.b16 %v1300
    %v1373 = vunpack.c.l.b16 %v1314
    %v1374 = vunpack.c.l.b16 %v1328
    %v1375 = vunpack.c.l.b16 %v1342
    %v1376 = vpack.c.b16 %v1361, %v1360
    %v1377 = vpack.c.b16 %v1363, %v1362
    %v1378 = vpack.c.b16 %v1365, %v1364
    %v1379 = vpack.c.b16 %v1367, %v1366
    %v1380 = vpack.c.b16 %v1369, %v1368
    %v1381 = vpack.c.b16 %v1371, %v1370
    %v1382 = vpack.c.b16 %v1373, %v1372
    %v1383 = vpack.c.b16 %v1375, %v1374
    %v1408 = vunpack.c.l.b16 %v1344
    %v1409 = vunpack.c.l.b16 %v1345
    %v1410 = vunpack.c.l.b16 %v1346
    %v1411 = vunpack.c.l.b16 %v1347
    %v1412 = vunpack.c.l.b16 %v1348
    %v1413 = vunpack.c.l.b16 %v1349
    %v1414 = vunpack.c.l.b16 %v1350
    %v1415 = vunpack.c.l.b16 %v1351
    %v1416 = vunpack.c.l.b16 %v1352
    %v1417 = vunpack.c.l.b16 %v1353
    %v1418 = vunpack.c.l.b16 %v1354
    %v1419 = vunpack.c.l.b16 %v1355
    %v1420 = vunpack.c.l.b16 %v1356
    %v1421 = vunpack.c.l.b16 %v1357
    %v1422 = vunpack.c.l.b16 %v1358
    %v1423 = vunpack.c.l.b16 %v1359
    %v1424 = vpack.c.b16 %v1409, %v1408
    %v1425 = vpack.c.b16 %v1411, %v1410
    %v1426 = vpack.c.b16 %v1413, %v1412
    %v1427 = vpack.c.b16 %v1415, %v1414
    %v1428 = vpack.c.b16 %v1417, %v1416
    %v1429 = vpack.c.b16 %v1419, %v1418
    %v1430 = vpack.c.b16 %v1421, %v1420
    %v1431 = vpack.c.b16 %v1423, %v1422
    %1440 = vmatprep.subr.bf16.mxu0 0
    %1441 = vmatpush1.bf16.msra.mxu0 %v1424
    %1442 = vmatprep.subr.bf16.mxu0 0
    %1443 = vmatpush1.bf16.msra.mxu0 %v1425
    %1444 = vmatprep.subr.bf16.mxu0 0
    %1445 = vmatpush1.bf16.msra.mxu0 %v1426
    %1446 = vmatprep.subr.bf16.mxu0 0
    %1447 = vmatpush1.bf16.msra.mxu0 %v1427
    %1448 = vmatprep.subr.bf16.mxu0 0
    %1449 = vmatpush1.bf16.msra.mxu0 %v1428
    %1450 = vmatprep.subr.bf16.mxu0 0
    %1451 = vmatpush1.bf16.msra.mxu0 %v1429
    %1452 = vmatprep.subr.bf16.mxu0 0
    %1453 = vmatpush1.bf16.msra.mxu0 %v1430
    %1454 = vmatprep.subr.bf16.mxu0 0
    %1455 = vmatpush1.bf16.msra.mxu0 %v1431
    %1456 = vmatprep.subr.bf16.mxu0 0
    %1457 = vmatpush1.bf16.msra.mxu0 0
    %1458 = vmatprep.subr.bf16.mxu0 0
    %1459 = vmatpush1.bf16.msra.mxu0 0
    %1460 = vmatprep.subr.bf16.mxu0 0
    %1461 = vmatpush1.bf16.msra.mxu0 0
    %1462 = vmatprep.subr.bf16.mxu0 0
    %1463 = vmatpush1.bf16.msra.mxu0 0
    %1464 = vmatprep.subr.bf16.mxu0 0
    %1465 = vmatpush1.bf16.msra.mxu0 0
    %1466 = vmatprep.subr.bf16.mxu0 0
    %1467 = vmatpush1.bf16.msra.mxu0 0
    %1468 = vmatprep.subr.bf16.mxu0 0
    %1469 = vmatpush1.bf16.msra.mxu0 0
    %1470 = vmatprep.subr.bf16.mxu0 0
    %1471 = vmatpush1.bf16.msra.mxu0 0
    %1472 = vmatprep.mubr.bf16.mxu0 0
    %1473 = vmatmul.mubr.bf16.gmra.mrb[0].mxu0 %v1376
    %v1474 = vpop.f32.mrb[0].mxu0
    %v1475 = vadd.f32 0.0, %v1474
    %v1476 = vpop.f32.mrb[0].mxu0
    %v1477 = vpop.f32.mrb[0].mxu0
    %v1478 = vadd.f32 0.0, %v1477
    %v1479 = vpop.f32.mrb[0].mxu0
    %1480 = vmatprep.mubr.bf16.mxu0 0
    %1481 = vmatmul.mubr.bf16.gmra.mrb[0].mxu0 %v1377
    %v1482 = vpop.f32.mrb[0].mxu0
    %v1483 = vadd.f32 0.0, %v1482
    %v1484 = vpop.f32.mrb[0].mxu0
    %v1485 = vpop.f32.mrb[0].mxu0
    %v1486 = vadd.f32 0.0, %v1485
    %v1487 = vpop.f32.mrb[0].mxu0
    %1488 = vmatprep.mubr.bf16.mxu0 0
    %1489 = vmatmul.mubr.bf16.gmra.mrb[0].mxu0 %v1378
    %v1490 = vpop.f32.mrb[0].mxu0
    %v1491 = vadd.f32 0.0, %v1490
    %v1492 = vpop.f32.mrb[0].mxu0
    %v1493 = vpop.f32.mrb[0].mxu0
    %v1494 = vadd.f32 0.0, %v1493
    %v1495 = vpop.f32.mrb[0].mxu0
    %1496 = vmatprep.mubr.bf16.mxu0 0
    %1497 = vmatmul.mubr.bf16.gmra.mrb[0].mxu0 %v1379
    %v1498 = vpop.f32.mrb[0].mxu0
    %v1499 = vadd.f32 0.0, %v1498
    %v1500 = vpop.f32.mrb[0].mxu0
    %v1501 = vpop.f32.mrb[0].mxu0
    %v1502 = vadd.f32 0.0, %v1501
    %v1503 = vpop.f32.mrb[0].mxu0
    %1504 = vmatprep.mubr.bf16.mxu0 0
    %1505 = vmatmul.mubr.bf16.gmra.mrb[0].mxu0 %v1380
    %v1506 = vpop.f32.mrb[0].mxu0
    %v1507 = vadd.f32 0.0, %v1506
    %v1508 = vpop.f32.mrb[0].mxu0
    %v1509 = vpop.f32.mrb[0].mxu0
    %v1510 = vadd.f32 0.0, %v1509
    %v1511 = vpop.f32.mrb[0].mxu0
    %1512 = vmatprep.mubr.bf16.mxu0 0
    %1513 = vmatmul.mubr.bf16.gmra.mrb[0].mxu0 %v1381
    %v1514 = vpop.f32.mrb[0].mxu0
    %v1515 = vadd.f32 0.0, %v1514
    %v1516 = vpop.f32.mrb[0].mxu0
    %v1517 = vpop.f32.mrb[0].mxu0
    %v1518 = vadd.f32 0.0, %v1517
    %v1519 = vpop.f32.mrb[0].mxu0
    %1520 = vmatprep.mubr.bf16.mxu0 0
    %1521 = vmatmul.mubr.bf16.gmra.mrb[0].mxu0 %v1382
    %v1522 = vpop.f32.mrb[0].mxu0
    %v1523 = vadd.f32 0.0, %v1522
    %v1524 = vpop.f32.mrb[0].mxu0
    %v1525 = vpop.f32.mrb[0].mxu0
    %v1526 = vadd.f32 0.0, %v1525
    %v1527 = vpop.f32.mrb[0].mxu0
    %1528 = vmatprep.mubr.bf16.mxu0 0
    %1529 = vmatmul.mubr.bf16.gmra.mrb[0].mxu0 %v1383
    %v1530 = vpop.f32.mrb[0].mxu0
    %v1531 = vadd.f32 0.0, %v1530
    %v1532 = vpop.f32.mrb[0].mxu0
    %v1533 = vpop.f32.mrb[0].mxu0
    %v1534 = vadd.f32 0.0, %v1533
    %v1535 = vpop.f32.mrb[0].mxu0
    %1536 = vdwg.mxu0
    %v1537 = vld [vmem:[#allocation2] sm:$0xff]
    %v1538 = vld [vmem:[#allocation2 + $0x8] sm:$0xff]
    %v1539 = vld [vmem:[#allocation2 + $0x10] sm:$0xff]
    %v1540 = vld [vmem:[#allocation2 + $0x18] sm:$0xff]
    %v1541 = vld [vmem:[#allocation2 + $0x20] sm:$0xff]
    %v1542 = vld [vmem:[#allocation2 + $0x28] sm:$0xff]
    %v1543 = vld [vmem:[#allocation2 + $0x30] sm:$0xff]
    %v1544 = vld [vmem:[#allocation2 + $0x38] sm:$0xff]
    %v1545 = vld [vmem:[#allocation2 + $0x40] sm:$0xff]
    %v1546 = vld [vmem:[#allocation2 + $0x48] sm:$0xff]
    %v1547 = vld [vmem:[#allocation2 + $0x50] sm:$0xff]
    %v1548 = vld [vmem:[#allocation2 + $0x58] sm:$0xff]
    %v1549 = vld [vmem:[#allocation2 + $0x60] sm:$0xff]
    %v1550 = vld [vmem:[#allocation2 + $0x68] sm:$0xff]
    %v1551 = vld [vmem:[#allocation2 + $0x70] sm:$0xff]
    %v1552 = vld [vmem:[#allocation2 + $0x78] sm:$0xff]
    %v1553 = vadd.f32 %v1537, %v1475
    %v1554 = vadd.f32 %v1538, %v1478
    %v1555 = vadd.f32 %v1539, %v1483
    %v1556 = vadd.f32 %v1540, %v1486
    %v1557 = vadd.f32 %v1541, %v1491
    %v1558 = vadd.f32 %v1542, %v1494
    %v1559 = vadd.f32 %v1543, %v1499
    %v1560 = vadd.f32 %v1544, %v1502
    %v1561 = vadd.f32 %v1545, %v1507
    %v1562 = vadd.f32 %v1546, %v1510
    %v1563 = vadd.f32 %v1547, %v1515
    %v1564 = vadd.f32 %v1548, %v1518
    %v1565 = vadd.f32 %v1549, %v1523
    %v1566 = vadd.f32 %v1550, %v1526
    %v1567 = vadd.f32 %v1551, %v1531
    %v1568 = vadd.f32 %v1552, %v1534
    %1569 = vst [vmem:[#allocation2] sm:$0xff] %v1553
    %1570 = vst [vmem:[#allocation2 + $0x8] sm:$0xff] %v1554
    %1571 = vst [vmem:[#allocation2 + $0x10] sm:$0xff] %v1555
    %1572 = vst [vmem:[#allocation2 + $0x18] sm:$0xff] %v1556
    %1573 = vst [vmem:[#allocation2 + $0x20] sm:$0xff] %v1557
    %1574 = vst [vmem:[#allocation2 + $0x28] sm:$0xff] %v1558
    %1575 = vst [vmem:[#allocation2 + $0x30] sm:$0xff] %v1559
    %1576 = vst [vmem:[#allocation2 + $0x38] sm:$0xff] %v1560
    %1577 = vst [vmem:[#allocation2 + $0x40] sm:$0xff] %v1561
    %1578 = vst [vmem:[#allocation2 + $0x48] sm:$0xff] %v1562
    %1579 = vst [vmem:[#allocation2 + $0x50] sm:$0xff] %v1563
    %1580 = vst [vmem:[#allocation2 + $0x58] sm:$0xff] %v1564
    %1581 = vst [vmem:[#allocation2 + $0x60] sm:$0xff] %v1565
    %1582 = vst [vmem:[#allocation2 + $0x68] sm:$0xff] %v1566
    %1583 = vst [vmem:[#allocation2 + $0x70] sm:$0xff] %v1567
    %1584 = vst [vmem:[#allocation2 + $0x78] sm:$0xff] %v1568
    %v1585 = vld [vmem:[#allocation2] sm:$0xff]
    %v1586 = vld [vmem:[#allocation2 + $0x8] sm:$0xff]
    %v1587 = vld [vmem:[#allocation2 + $0x10] sm:$0xff]
    %v1588 = vld [vmem:[#allocation2 + $0x18] sm:$0xff]
    %v1589 = vld [vmem:[#allocation2 + $0x20] sm:$0xff]
    %v1590 = vld [vmem:[#allocation2 + $0x28] sm:$0xff]
    %v1591 = vld [vmem:[#allocation2 + $0x30] sm:$0xff]
    %v1592 = vld [vmem:[#allocation2 + $0x38] sm:$0xff]
    %v1593 = vld [vmem:[#allocation2 + $0x40] sm:$0xff]
    %v1594 = vld [vmem:[#allocation2 + $0x48] sm:$0xff]
    %v1595 = vld [vmem:[#allocation2 + $0x50] sm:$0xff]
    %v1596 = vld [vmem:[#allocation2 + $0x58] sm:$0xff]
    %v1597 = vld [vmem:[#allocation2 + $0x60] sm:$0xff]
    %v1598 = vld [vmem:[#allocation2 + $0x68] sm:$0xff]
    %v1599 = vld [vmem:[#allocation2 + $0x70] sm:$0xff]
    %v1600 = vld [vmem:[#allocation2 + $0x78] sm:$0xff]
    %v1601 = vadd.f32 %v1585, %v1586
    %v1602 = vadd.f32 %v1601, %v1587
    %v1603 = vadd.f32 %v1602, %v1588
    %v1604 = vadd.f32 %v1603, %v1589
    %v1605 = vadd.f32 %v1604, %v1590
    %v1606 = vadd.f32 %v1605, %v1591
    %v1607 = vadd.f32 %v1606, %v1592
    %v1608 = vrot.slane %v1607, 4
    %v1609 = vadd.f32 %v1607, %v1608
    %v1610 = vrot.slane %v1609, 2
    %v1611 = vadd.f32 %v1609, %v1610
    %v1612 = vrot.slane %v1611, 1
    %v1613 = vadd.f32 %v1611, %v1612
    %v1614 = vadd.f32 %v1593, %v1594
    %v1615 = vadd.f32 %v1614, %v1595
    %v1616 = vadd.f32 %v1615, %v1596
    %v1617 = vadd.f32 %v1616, %v1597
    %v1618 = vadd.f32 %v1617, %v1598
    %v1619 = vadd.f32 %v1618, %v1599
    %v1620 = vadd.f32 %v1619, %v1600
    %v1621 = vrot.slane %v1620, 4
    %v1622 = vadd.f32 %v1620, %v1621
    %v1623 = vrot.slane %v1622, 2
    %v1624 = vadd.f32 %v1622, %v1623
    %v1625 = vrot.slane %v1624, 1
    %v1626 = vadd.f32 %v1624, %v1625
    %v1627 = vrcp.pop 64.0
    %v1628 = vmul.f32 %v1613, %v1627
    %v1629 = vmul.f32 %v1626, %v1627
    %v1630 = vsub.f32 %v1585, %v1628
    %v1631 = vsub.f32 %v1586, %v1628
    %v1632 = vsub.f32 %v1587, %v1628
    %v1633 = vsub.f32 %v1588, %v1628
    %v1634 = vsub.f32 %v1589, %v1628
    %v1635 = vsub.f32 %v1590, %v1628
    %v1636 = vsub.f32 %v1591, %v1628
    %v1637 = vsub.f32 %v1592, %v1628
    %v1638 = vsub.f32 %v1593, %v1629
    %v1639 = vsub.f32 %v1594, %v1629
    %v1640 = vsub.f32 %v1595, %v1629
    %v1641 = vsub.f32 %v1596, %v1629
    %v1642 = vsub.f32 %v1597, %v1629
    %v1643 = vsub.f32 %v1598, %v1629
    %v1644 = vsub.f32 %v1599, %v1629
    %v1645 = vsub.f32 %v1600, %v1629
    %v1646 = vmul.f32 %v1630, %v1630
    %v1647 = vmul.f32 %v1631, %v1631
    %v1648 = vmul.f32 %v1632, %v1632
    %v1649 = vmul.f32 %v1633, %v1633
    %v1650 = vmul.f32 %v1634, %v1634
    %v1651 = vmul.f32 %v1635, %v1635
    %v1652 = vmul.f32 %v1636, %v1636
    %v1653 = vmul.f32 %v1637, %v1637
    %v1654 = vmul.f32 %v1638, %v1638
    %v1655 = vmul.f32 %v1639, %v1639
    %v1656 = vmul.f32 %v1640, %v1640
    %v1657 = vmul.f32 %v1641, %v1641
    %v1658 = vmul.f32 %v1642, %v1642
    %v1659 = vmul.f32 %v1643, %v1643
    %v1660 = vmul.f32 %v1644, %v1644
    %v1661 = vmul.f32 %v1645, %v1645
    %v1662 = vadd.f32 %v1646, %v1647
    %v1663 = vadd.f32 %v1662, %v1648
    %v1664 = vadd.f32 %v1663, %v1649
    %v1665 = vadd.f32 %v1664, %v1650
    %v1666 = vadd.f32 %v1665, %v1651
    %v1667 = vadd.f32 %v1666, %v1652
    %v1668 = vadd.f32 %v1667, %v1653
    %v1669 = vrot.slane %v1668, 4
    %v1670 = vadd.f32 %v1668, %v1669
    %v1671 = vrot.slane %v1670, 2
    %v1672 = vadd.f32 %v1670, %v1671
    %v1673 = vrot.slane %v1672, 1
    %v1674 = vadd.f32 %v1672, %v1673
    %v1675 = vadd.f32 %v1654, %v1655
    %v1676 = vadd.f32 %v1675, %v1656
    %v1677 = vadd.f32 %v1676, %v1657
    %v1678 = vadd.f32 %v1677, %v1658
    %v1679 = vadd.f32 %v1678, %v1659
    %v1680 = vadd.f32 %v1679, %v1660
    %v1681 = vadd.f32 %v1680, %v1661
    %v1682 = vrot.slane %v1681, 4
    %v1683 = vadd.f32 %v1681, %v1682
    %v1684 = vrot.slane %v1683, 2
    %v1685 = vadd.f32 %v1683, %v1684
    %v1686 = vrot.slane %v1685, 1
    %v1687 = vadd.f32 %v1685, %v1686
    %v1688 = vmul.f32 %v1674, %v1627
    %v1689 = vmul.f32 %v1687, %v1627
    %v1690 = vadd.f32 %v1688, 1e-05
    %v1691 = vadd.f32 %v1689, 1e-05
    %v1692 = vrsqrt.pop %v1690
    %v1693 = vrsqrt.pop %v1691
    %v1694 = vmul.f32 %v1630, %v1692
    %v1695 = vmul.f32 %v1631, %v1692
    %v1696 = vmul.f32 %v1632, %v1692
    %v1697 = vmul.f32 %v1633, %v1692
    %v1698 = vmul.f32 %v1634, %v1692
    %v1699 = vmul.f32 %v1635, %v1692
    %v1700 = vmul.f32 %v1636, %v1692
    %v1701 = vmul.f32 %v1637, %v1692
    %v1702 = vmul.f32 %v1638, %v1693
    %v1703 = vmul.f32 %v1639, %v1693
    %v1704 = vmul.f32 %v1640, %v1693
    %v1705 = vmul.f32 %v1641, %v1693
    %v1706 = vmul.f32 %v1642, %v1693
    %v1707 = vmul.f32 %v1643, %v1693
    %v1708 = vmul.f32 %v1644, %v1693
    %v1709 = vmul.f32 %v1645, %v1693
    %v1710 = vld [vmem:[#allocation8] sm:$0x1]
    %v1712 = vlaneseq
    %v1713 = vshrl.u32 %v1712, 7
    %v1714 = vsub.s32 0, %v1713
    %v1715 = vrot.slane %v1710, %v1714
    %v1717 = vmul.f32 %v1694, %v1715
    %v1718 = vmul.f32 %v1695, %v1715
    %v1719 = vmul.f32 %v1696, %v1715
    %v1720 = vmul.f32 %v1697, %v1715
    %v1721 = vmul.f32 %v1698, %v1715
    %v1722 = vmul.f32 %v1699, %v1715
    %v1723 = vmul.f32 %v1700, %v1715
    %v1724 = vmul.f32 %v1701, %v1715
    %v1725 = vmul.f32 %v1702, %v1715
    %v1726 = vmul.f32 %v1703, %v1715
    %v1727 = vmul.f32 %v1704, %v1715
    %v1728 = vmul.f32 %v1705, %v1715
    %v1729 = vmul.f32 %v1706, %v1715
    %v1730 = vmul.f32 %v1707, %v1715
    %v1731 = vmul.f32 %v1708, %v1715
    %v1732 = vmul.f32 %v1709, %v1715
    %v1733 = vld [vmem:[#allocation9] sm:$0x1]
    %v1735 = vlaneseq
    %v1736 = vshrl.u32 %v1735, 7
    %v1737 = vsub.s32 0, %v1736
    %v1738 = vrot.slane %v1733, %v1737
    %v1740 = vadd.f32 %v1717, %v1738
    %v1741 = vadd.f32 %v1718, %v1738
    %v1742 = vadd.f32 %v1719, %v1738
    %v1743 = vadd.f32 %v1720, %v1738
    %v1744 = vadd.f32 %v1721, %v1738
    %v1745 = vadd.f32 %v1722, %v1738
    %v1746 = vadd.f32 %v1723, %v1738
    %v1747 = vadd.f32 %v1724, %v1738
    %v1748 = vadd.f32 %v1725, %v1738
    %v1749 = vadd.f32 %v1726, %v1738
    %v1750 = vadd.f32 %v1727, %v1738
    %v1751 = vadd.f32 %v1728, %v1738
    %v1752 = vadd.f32 %v1729, %v1738
    %v1753 = vadd.f32 %v1730, %v1738
    %v1754 = vadd.f32 %v1731, %v1738
    %v1755 = vadd.f32 %v1732, %v1738
    %vm1756 = vcmp.ge.f32.partialorder %v1740, 0.0
    %vm1757 = vcmp.ge.f32.partialorder %v1741, 0.0
    %vm1758 = vcmp.ge.f32.partialorder %v1742, 0.0
    %vm1759 = vcmp.ge.f32.partialorder %v1743, 0.0
    %vm1760 = vcmp.ge.f32.partialorder %v1744, 0.0
    %vm1761 = vcmp.ge.f32.partialorder %v1745, 0.0
    %vm1762 = vcmp.ge.f32.partialorder %v1746, 0.0
    %vm1763 = vcmp.ge.f32.partialorder %v1747, 0.0
    %vm1764 = vcmp.ge.f32.partialorder %v1748, 0.0
    %vm1765 = vcmp.ge.f32.partialorder %v1749, 0.0
    %vm1766 = vcmp.ge.f32.partialorder %v1750, 0.0
    %vm1767 = vcmp.ge.f32.partialorder %v1751, 0.0
    %vm1768 = vcmp.ge.f32.partialorder %v1752, 0.0
    %vm1769 = vcmp.ge.f32.partialorder %v1753, 0.0
    %vm1770 = vcmp.ge.f32.partialorder %v1754, 0.0
    %vm1771 = vcmp.ge.f32.partialorder %v1755, 0.0
    %v1772 = vmul.f32 %v1740, 0.2
    %v1773 = vmul.f32 %v1741, 0.2
    %v1774 = vmul.f32 %v1742, 0.2
    %v1775 = vmul.f32 %v1743, 0.2
    %v1776 = vmul.f32 %v1744, 0.2
    %v1777 = vmul.f32 %v1745, 0.2
    %v1778 = vmul.f32 %v1746, 0.2
    %v1779 = vmul.f32 %v1747, 0.2
    %v1780 = vmul.f32 %v1748, 0.2
    %v1781 = vmul.f32 %v1749, 0.2
    %v1782 = vmul.f32 %v1750, 0.2
    %v1783 = vmul.f32 %v1751, 0.2
    %v1784 = vmul.f32 %v1752, 0.2
    %v1785 = vmul.f32 %v1753, 0.2
    %v1786 = vmul.f32 %v1754, 0.2
    %v1787 = vmul.f32 %v1755, 0.2
    %v1788 = vsel %vm1756, %v1740, %v1772
    %v1789 = vsel %vm1757, %v1741, %v1773
    %v1790 = vsel %vm1758, %v1742, %v1774
    %v1791 = vsel %vm1759, %v1743, %v1775
    %v1792 = vsel %vm1760, %v1744, %v1776
    %v1793 = vsel %vm1761, %v1745, %v1777
    %v1794 = vsel %vm1762, %v1746, %v1778
    %v1795 = vsel %vm1763, %v1747, %v1779
    %v1796 = vsel %vm1764, %v1748, %v1780
    %v1797 = vsel %vm1765, %v1749, %v1781
    %v1798 = vsel %vm1766, %v1750, %v1782
    %v1799 = vsel %vm1767, %v1751, %v1783
    %v1800 = vsel %vm1768, %v1752, %v1784
    %v1801 = vsel %vm1769, %v1753, %v1785
    %v1802 = vsel %vm1770, %v1754, %v1786
    %v1803 = vsel %vm1771, %v1755, %v1787
    %v1804 = vpack.c.bf16 %v1789, %v1788
    %v1805 = vpack.c.bf16 %v1791, %v1790
    %v1806 = vpack.c.bf16 %v1793, %v1792
    %v1807 = vpack.c.bf16 %v1795, %v1794
    %v1808 = vpack.c.bf16 %v1797, %v1796
    %v1809 = vpack.c.bf16 %v1799, %v1798
    %v1810 = vpack.c.bf16 %v1801, %v1800
    %v1811 = vpack.c.bf16 %v1803, %v1802
    %v1820 = vunpack.c.l.b16 %v1804
    %v1821 = vunpack.c.h.b16 %v1804
    %v1822 = vunpack.c.l.b16 %v1805
    %v1823 = vunpack.c.h.b16 %v1805
    %v1824 = vunpack.c.l.b16 %v1806
    %v1825 = vunpack.c.h.b16 %v1806
    %v1826 = vunpack.c.l.b16 %v1807
    %v1827 = vunpack.c.h.b16 %v1807
    %v1828 = vunpack.c.l.b16 %v1808
    %v1829 = vunpack.c.h.b16 %v1808
    %v1830 = vunpack.c.l.b16 %v1809
    %v1831 = vunpack.c.h.b16 %v1809
    %v1832 = vunpack.c.l.b16 %v1810
    %v1833 = vunpack.c.h.b16 %v1810
    %v1834 = vunpack.c.l.b16 %v1811
    %v1835 = vunpack.c.h.b16 %v1811
    %v1836 = vpack.c.b16 %v1820, %v1820
    %v1837 = vpack.c.b16 %v1821, %v1821
    %v1838 = vpack.c.b16 %v1822, %v1822
    %v1839 = vpack.c.b16 %v1823, %v1823
    %v1840 = vpack.c.b16 %v1824, %v1824
    %v1841 = vpack.c.b16 %v1825, %v1825
    %v1842 = vpack.c.b16 %v1826, %v1826
    %v1843 = vpack.c.b16 %v1827, %v1827
    %v1844 = vpack.c.b16 %v1828, %v1828
    %v1845 = vpack.c.b16 %v1829, %v1829
    %v1846 = vpack.c.b16 %v1830, %v1830
    %v1847 = vpack.c.b16 %v1831, %v1831
    %v1848 = vpack.c.b16 %v1832, %v1832
    %v1849 = vpack.c.b16 %v1833, %v1833
    %v1850 = vpack.c.b16 %v1834, %v1834
    %v1851 = vpack.c.b16 %v1835, %v1835
    %1868 = vst [vmem:[#allocation11] sm:$0xf] %v1836
    %1869 = vst [vmem:[#allocation11 + $0x4] sm:$0xf] %v1837
    %1870 = vst [vmem:[#allocation11 + $0x8] sm:$0xf] %v1838
    %1871 = vst [vmem:[#allocation11 + $0xc] sm:$0xf] %v1839
    %1872 = vst [vmem:[#allocation11 + $0x10] sm:$0xf] %v1840
    %1873 = vst [vmem:[#allocation11 + $0x14] sm:$0xf] %v1841
    %1874 = vst [vmem:[#allocation11 + $0x18] sm:$0xf] %v1842
    %1875 = vst [vmem:[#allocation11 + $0x1c] sm:$0xf] %v1843
    %1876 = vst [vmem:[#allocation11 + $0x20] sm:$0xf] %v1844
    %1877 = vst [vmem:[#allocation11 + $0x24] sm:$0xf] %v1845
    %1878 = vst [vmem:[#allocation11 + $0x28] sm:$0xf] %v1846
    %1879 = vst [vmem:[#allocation11 + $0x2c] sm:$0xf] %v1847
    %1880 = vst [vmem:[#allocation11 + $0x30] sm:$0xf] %v1848
    %1881 = vst [vmem:[#allocation11 + $0x34] sm:$0xf] %v1849
    %1882 = vst [vmem:[#allocation11 + $0x38] sm:$0xf] %v1850
    %1883 = vst [vmem:[#allocation11 + $0x3c] sm:$0xf] %v1851
    // Predicated region
    $region34: #{discriminator_forward.4} parent=1 // pred_check
      _
    $region35: #{discriminator_forward.4} parent=1 // pred_check_branch
      %1885 = sbr.rel (0) target = $region37
    $region36: #{discriminator_forward.4} parent=1 // pred_region
      %s1887 = ssub.s32 1024, 1024
      %1888 = vsyncadd [#allocation5], %s1887
      %s1889 = sshll.u32 [#allocation11], 4
      %s1890 = int_to_ptr.vmem [resolvable:$true] %s1889
      %1895 = dma.vmem_to_hbm [thread:$0]  %s1890, 1024, %s4, [#allocation5], 64, 64, 4
    $region37: #{discriminator_forward.4} parent=1 // pred_fallthru
      _
    // Predicated region
    $region38: #{discriminator_forward.4} parent=1 // pred_check
      _
    $region39: #{discriminator_forward.4} parent=1 // pred_check_branch
      %1897 = sbr.rel (0) target = $region41
    $region40: #{discriminator_forward.4} parent=1 // pred_region
      %1898 = dma.done [#allocation5], 1024
    $region41: #{discriminator_forward.4} parent=1 // pred_fallthru
      _
    %1899 = vsyncpa [#allocation4], 1
    %1900 = vsyncpa [#allocation7], 1
    %1901 = vsyncpa [#allocation10], 1
    %1902 = vsyncpa [#allocation5], 1

// kernel: discriminator_forward.7
$region0: #{discriminator_forward.7}
  #allocation0 [shape = 'u32[]', space=smem, size = 0x4, offset = 0x4, fixed_abs, tag = 'smem constant byte address 0x4 - core index']
  #allocation1 [shape = 'u32[144,128]{1,0:T(1,128)}', space=vmem, size = 0x12000, scoped, tag = 'internal scratch']
  #allocation2 [shape = 'f32[2,128]{1,0:T(2,128)}', space=vmem, size = 0x400, scoped, tag = 'scratch operand']
  %s0 = inlined_call_operand.hbm [shape: bf16[2,512], index: 0, kind: input, shape index: {}]
  %s1 = inlined_call_operand.hbm [shape: bf16[512,128], index: 1, kind: input, shape index: {}]
  %s2 = inlined_call_operand.hbm [shape: f32[1,128], index: 2, kind: input, shape index: {}]
  %s3 = inlined_call_operand.hbm [shape: f32[128,128], index: 3, kind: input, shape index: {}]
  %s4 = inlined_call_operand.hbm [shape: f32[1,2,128], index: 4, kind: output, shape index: {}]
  %s5 = sld [smem:[#allocation0]]
  $region50: #{discriminator_forward.7} parent=0
    _
  %s7 = ssub.s32 1, %s5
  %s8 = scalar_select 0, %s7, %s5
  $region1: #{discriminator_forward.7} parent=0
    #allocation3 [shape = 'u8[2048]{0}', space=vmem, size = 0x800, scoped, tag = 'input window, operand 0, single buffered']
    #allocation4 [shape = 's32[1]{0}', space=sflag, size = 0x4, scoped, tag = 'scoped memory for discriminator_forward.7']
    #allocation5 [shape = 's32[1]{0}', space=sflag, size = 0x4, scoped, tag = 'scoped memory for discriminator_forward.7']
    #allocation6 [shape = 'u8[131072]{0}', space=vmem, size = 0x20000, scoped, tag = 'input window, operand 1, single buffered']
    #allocation7 [shape = 's32[1]{0}', space=sflag, size = 0x4, scoped, tag = 'scoped memory for discriminator_forward.7']
    #allocation8 [shape = 'u8[512]{0}', space=vmem, size = 0x400, scoped, tag = 'input window, operand 2, single buffered']
    #allocation9 [shape = 'u8[65536]{0}', space=vmem, size = 0x10000, scoped, tag = 'input window, operand 3, single buffered']
    #allocation10 [shape = 's32[1]{0}', space=sflag, size = 0x4, scoped, tag = 'scoped memory for discriminator_forward.7']
    #allocation11 [shape = 'u8[1024]{0}', space=vmem, size = 0x400, scoped, tag = 'output window, operand 0, single buffered']
    %9 = vsyncpa [#allocation4], 0
    %10 = vsyncpa [#allocation7], 0
    %11 = vsyncpa [#allocation10], 0
    %12 = vsyncpa [#allocation5], 0
    // Predicated region
    $region2: #{discriminator_forward.7} parent=1 // pred_check
      _
    $region3: #{discriminator_forward.7} parent=1 // pred_check_branch
      %14 = sbr.rel (0) target = $region5
    $region4: #{discriminator_forward.7} parent=1 // pred_region
      %s16 = ssub.s32 64, 64
      %17 = vsyncadd [#allocation4], %s16
      %s19 = sshll.u32 [#allocation3], 4
      %s20 = int_to_ptr.vmem [resolvable:$true] %s19
      %22 = dma.hbm_to_vmem [thread:$0]  %s0, 64, %s20, [#allocation4]
    $region5: #{discriminator_forward.7} parent=1 // pred_fallthru
      _
    // Predicated region
    $region6: #{discriminator_forward.7} parent=1 // pred_check
      _
    $region7: #{discriminator_forward.7} parent=1 // pred_check_branch
      %24 = sbr.rel (0) target = $region9
    $region8: #{discriminator_forward.7} parent=1 // pred_region
      %s26 = ssub.s32 4096, 4096
      %27 = vsyncadd [#allocation7], %s26
      %s28 = sshll.u32 [#allocation6], 4
      %s29 = int_to_ptr.vmem [resolvable:$true] %s28
      %34 = dma.hbm_to_vmem [thread:$0]  %s1, 4096, %s29, [#allocation7], 64, 64, 4
    $region9: #{discriminator_forward.7} parent=1 // pred_fallthru
      _
    // Predicated region
    $region10: #{discriminator_forward.7} parent=1 // pred_check
      _
    $region11: #{discriminator_forward.7} parent=1 // pred_check_branch
      %36 = sbr.rel (0) target = $region13
    $region12: #{discriminator_forward.7} parent=1 // pred_region
      %s38 = ssub.s32 16, 16
      %39 = vsyncadd [#allocation7], %s38
      %s41 = sshll.u32 [#allocation8], 4
      %s42 = int_to_ptr.vmem [resolvable:$true] %s41
      %44 = dma.hbm_to_vmem [thread:$0]  %s2, 16, %s42, [#allocation7]
    $region13: #{discriminator_forward.7} parent=1 // pred_fallthru
      _
    // Predicated region
    $region14: #{discriminator_forward.7} parent=1 // pred_check
      _
    $region15: #{discriminator_forward.7} parent=1 // pred_check_branch
      %46 = sbr.rel (0) target = $region17
    $region16: #{discriminator_forward.7} parent=1 // pred_region
      %s48 = ssub.s32 2048, 2048
      %49 = vsyncadd [#allocation10], %s48
      %s50 = sshll.u32 [#allocation9], 4
      %s51 = int_to_ptr.vmem [resolvable:$true] %s50
      %56 = dma.hbm_to_vmem [thread:$0]  %s3, 2048, %s51, [#allocation10], 128, 128, 8
    $region17: #{discriminator_forward.7} parent=1 // pred_fallthru
      _
    // Predicated region
    $region18: #{discriminator_forward.7} parent=1 // pred_check
      _
    $region19: #{discriminator_forward.7} parent=1 // pred_check_branch
      %58 = sbr.rel (0) target = $region21
    $region20: #{discriminator_forward.7} parent=1 // pred_region
      %59 = dma.done [#allocation4], 64
    $region21: #{discriminator_forward.7} parent=1 // pred_fallthru
      _
    // Predicated region
    $region22: #{discriminator_forward.7} parent=1 // pred_check
      _
    $region23: #{discriminator_forward.7} parent=1 // pred_check_branch
      %61 = sbr.rel (0) target = $region25
    $region24: #{discriminator_forward.7} parent=1 // pred_region
      %62 = dma.done [#allocation7], 4096
    $region25: #{discriminator_forward.7} parent=1 // pred_fallthru
      _
    // Predicated region
    $region26: #{discriminator_forward.7} parent=1 // pred_check
      _
    $region27: #{discriminator_forward.7} parent=1 // pred_check_branch
      %64 = sbr.rel (0) target = $region29
    $region28: #{discriminator_forward.7} parent=1 // pred_region
      %65 = dma.done [#allocation7], 16
    $region29: #{discriminator_forward.7} parent=1 // pred_fallthru
      _
    // Predicated region
    $region30: #{discriminator_forward.7} parent=1 // pred_check
      _
    $region31: #{discriminator_forward.7} parent=1 // pred_check_branch
      %67 = sbr.rel (0) target = $region33
    $region32: #{discriminator_forward.7} parent=1 // pred_region
      %68 = dma.done [#allocation10], 2048
    $region33: #{discriminator_forward.7} parent=1 // pred_fallthru
      _
    %p70 = scmp.eq.s32.totalorder 0, 0
    // Predicated region
    $region34: #{discriminator_forward.7} parent=1 // pred_check
      %p71 = pneg %p70
    $region35: #{discriminator_forward.7} parent=1 // pred_check_branch
      %73 = sbr.rel (%p71) target = $region37
    $region36: #{discriminator_forward.7} parent=1 // pred_region
      %74 = vst [vmem:[#allocation2] sm:$0x3] 0.0
    $region37: #{discriminator_forward.7} parent=1 // pred_fallthru
      _
    %v75 = vld [vmem:[#allocation2] sm:$0x3]
    %v76 = vld [vmem:[#allocation3] sm:$0xf]
    %v77 = vld [vmem:[#allocation6] sm:$0xf]
    %v78 = vld [vmem:[#allocation6 + $0x4] sm:$0xf]
    %v79 = vld [vmem:[#allocation6 + $0x8] sm:$0xf]
    %v80 = vld [vmem:[#allocation6 + $0xc] sm:$0xf]
    %v81 = vld [vmem:[#allocation6 + $0x10] sm:$0xf]
    %v82 = vld [vmem:[#allocation6 + $0x14] sm:$0xf]
    %v83 = vld [vmem:[#allocation6 + $0x18] sm:$0xf]
    %v84 = vld [vmem:[#allocation6 + $0x1c] sm:$0xf]
    %v85 = vld [vmem:[#allocation6 + $0x20] sm:$0xf]
    %v86 = vld [vmem:[#allocation6 + $0x24] sm:$0xf]
    %v87 = vld [vmem:[#allocation6 + $0x28] sm:$0xf]
    %v88 = vld [vmem:[#allocation6 + $0x2c] sm:$0xf]
    %v89 = vld [vmem:[#allocation6 + $0x30] sm:$0xf]
    %v90 = vld [vmem:[#allocation6 + $0x34] sm:$0xf]
    %v91 = vld [vmem:[#allocation6 + $0x38] sm:$0xf]
    %v92 = vld [vmem:[#allocation6 + $0x3c] sm:$0xf]
    %v93 = vld [vmem:[#allocation6 + $0x40] sm:$0xf]
    %v94 = vld [vmem:[#allocation6 + $0x44] sm:$0xf]
    %v95 = vld [vmem:[#allocation6 + $0x48] sm:$0xf]
    %v96 = vld [vmem:[#allocation6 + $0x4c] sm:$0xf]
    %v97 = vld [vmem:[#allocation6 + $0x50] sm:$0xf]
    %v98 = vld [vmem:[#allocation6 + $0x54] sm:$0xf]
    %v99 = vld [vmem:[#allocation6 + $0x58] sm:$0xf]
    %v100 = vld [vmem:[#allocation6 + $0x5c] sm:$0xf]
    %v101 = vld [vmem:[#allocation6 + $0x60] sm:$0xf]
    %v102 = vld [vmem:[#allocation6 + $0x64] sm:$0xf]
    %v103 = vld [vmem:[#allocation6 + $0x68] sm:$0xf]
    %v104 = vld [vmem:[#allocation6 + $0x6c] sm:$0xf]
    %v105 = vld [vmem:[#allocation6 + $0x70] sm:$0xf]
    %v106 = vld [vmem:[#allocation6 + $0x74] sm:$0xf]
    %v107 = vld [vmem:[#allocation6 + $0x78] sm:$0xf]
    %v108 = vld [vmem:[#allocation6 + $0x7c] sm:$0xf]
    %v109 = vld [vmem:[#allocation6 + $0x80] sm:$0xf]
    %v110 = vld [vmem:[#allocation6 + $0x84] sm:$0xf]
    %v111 = vld [vmem:[#allocation6 + $0x88] sm:$0xf]
    %v112 = vld [vmem:[#allocation6 + $0x8c] sm:$0xf]
    %v113 = vld [vmem:[#allocation6 + $0x90] sm:$0xf]
    %v114 = vld [vmem:[#allocation6 + $0x94] sm:$0xf]
    %v115 = vld [vmem:[#allocation6 + $0x98] sm:$0xf]
    %v116 = vld [vmem:[#allocation6 + $0x9c] sm:$0xf]
    %v117 = vld [vmem:[#allocation6 + $0xa0] sm:$0xf]
    %v118 = vld [vmem:[#allocation6 + $0xa4] sm:$0xf]
    %v119 = vld [vmem:[#allocation6 + $0xa8] sm:$0xf]
    %v120 = vld [vmem:[#allocation6 + $0xac] sm:$0xf]
    %v121 = vld [vmem:[#allocation6 + $0xb0] sm:$0xf]
    %v122 = vld [vmem:[#allocation6 + $0xb4] sm:$0xf]
    %v123 = vld [vmem:[#allocation6 + $0xb8] sm:$0xf]
    %v124 = vld [vmem:[#allocation6 + $0xbc] sm:$0xf]
    %v125 = vld [vmem:[#allocation6 + $0xc0] sm:$0xf]
    %v126 = vld [vmem:[#allocation6 + $0xc4] sm:$0xf]
    %v127 = vld [vmem:[#allocation6 + $0xc8] sm:$0xf]
    %v128 = vld [vmem:[#allocation6 + $0xcc] sm:$0xf]
    %v129 = vld [vmem:[#allocation6 + $0xd0] sm:$0xf]
    %v130 = vld [vmem:[#allocation6 + $0xd4] sm:$0xf]
    %v131 = vld [vmem:[#allocation6 + $0xd8] sm:$0xf]
    %v132 = vld [vmem:[#allocation6 + $0xdc] sm:$0xf]
    %v133 = vld [vmem:[#allocation6 + $0xe0] sm:$0xf]
    %v134 = vld [vmem:[#allocation6 + $0xe4] sm:$0xf]
    %v135 = vld [vmem:[#allocation6 + $0xe8] sm:$0xf]
    %v136 = vld [vmem:[#allocation6 + $0xec] sm:$0xf]
    %v137 = vld [vmem:[#allocation6 + $0xf0] sm:$0xf]
    %v138 = vld [vmem:[#allocation6 + $0xf4] sm:$0xf]
    %v139 = vld [vmem:[#allocation6 + $0xf8] sm:$0xf]
    %v140 = vld [vmem:[#allocation6 + $0xfc] sm:$0xf]
    %v143 = vunpack.c.l.s4 1966171168
    %v144 = vunpack.c.0.s8 %v143
    %v145 = vlaneseq
    %v146 = vshrl.u32 %v145, 7
    %v147 = vsub.s32 %v144, %v146
    %v148 = vrot.slane %v76, %v147
    %v149 = vcombine.high %v148, %v148
    %v151 = vunpack.c.l.s4 1966171168
    %v152 = vunpack.c.0.s8 %v151
    %v153 = vlaneseq
    %v154 = vshrl.u32 %v153, 7
    %v155 = vsub.s32 %v152, %v154
    %v156 = vrot.slane %v148, %v155
    %v158 = vunpack.c.l.s4 1966171168
    %v159 = vunpack.c.0.s8 %v158
    %v160 = vlaneseq
    %v161 = vshrl.u32 %v160, 7
    %v162 = vsub.s32 %v159, %v161
    %v163 = vrot.slane %v149, %v162
    %v164 = vcombine.high %v156, %v156
    %v165 = vcombine.high %v163, %v163
    %v234 = vunpack.c.l.b16 %v77
    %v235 = vunpack.c.l.b16 %v78
    %v236 = vunpack.c.l.b16 %v79
    %v237 = vunpack.c.l.b16 %v80
    %v238 = vunpack.c.l.b16 %v81
    %v239 = vunpack.c.l.b16 %v82
    %v240 = vunpack.c.l.b16 %v83
    %v241 = vunpack.c.l.b16 %v84
    %v242 = vunpack.c.l.b16 %v85
    %v243 = vunpack.c.l.b16 %v86
    %v244 = vunpack.c.l.b16 %v87
    %v245 = vunpack.c.l.b16 %v88
    %v246 = vunpack.c.l.b16 %v89
    %v247 = vunpack.c.l.b16 %v90
    %v248 = vunpack.c.l.b16 %v91
    %v249 = vunpack.c.l.b16 %v92
    %v250 = vunpack.c.l.b16 %v93
    %v251 = vunpack.c.l.b16 %v94
    %v252 = vunpack.c.l.b16 %v95
    %v253 = vunpack.c.l.b16 %v96
    %v254 = vunpack.c.l.b16 %v97
    %v255 = vunpack.c.l.b16 %v98
    %v256 = vunpack.c.l.b16 %v99
    %v257 = vunpack.c.l.b16 %v100
    %v258 = vunpack.c.l.b16 %v101
    %v259 = vunpack.c.l.b16 %v102
    %v260 = vunpack.c.l.b16 %v103
    %v261 = vunpack.c.l.b16 %v104
    %v262 = vunpack.c.l.b16 %v105
    %v263 = vunpack.c.l.b16 %v106
    %v264 = vunpack.c.l.b16 %v107
    %v265 = vunpack.c.l.b16 %v108
    %v266 = vunpack.c.l.b16 %v109
    %v267 = vunpack.c.l.b16 %v110
    %v268 = vunpack.c.l.b16 %v111
    %v269 = vunpack.c.l.b16 %v112
    %v270 = vunpack.c.l.b16 %v113
    %v271 = vunpack.c.l.b16 %v114
    %v272 = vunpack.c.l.b16 %v115
    %v273 = vunpack.c.l.b16 %v116
    %v274 = vunpack.c.l.b16 %v117
    %v275 = vunpack.c.l.b16 %v118
    %v276 = vunpack.c.l.b16 %v119
    %v277 = vunpack.c.l.b16 %v120
    %v278 = vunpack.c.l.b16 %v121
    %v279 = vunpack.c.l.b16 %v122
    %v280 = vunpack.c.l.b16 %v123
    %v281 = vunpack.c.l.b16 %v124
    %v282 = vunpack.c.l.b16 %v125
    %v283 = vunpack.c.l.b16 %v126
    %v284 = vunpack.c.l.b16 %v127
    %v285 = vunpack.c.l.b16 %v128
    %v286 = vunpack.c.l.b16 %v129
    %v287 = vunpack.c.l.b16 %v130
    %v288 = vunpack.c.l.b16 %v131
    %v289 = vunpack.c.l.b16 %v132
    %v290 = vunpack.c.l.b16 %v133
    %v291 = vunpack.c.l.b16 %v134
    %v292 = vunpack.c.l.b16 %v135
    %v293 = vunpack.c.l.b16 %v136
    %v294 = vunpack.c.l.b16 %v137
    %v295 = vunpack.c.l.b16 %v138
    %v296 = vunpack.c.l.b16 %v139
    %v297 = vunpack.c.l.b16 %v140
    %v298 = vpack.c.b16 %v235, %v234
    %v299 = vpack.c.b16 %v237, %v236
    %v300 = vpack.c.b16 %v239, %v238
    %v301 = vpack.c.b16 %v241, %v240
    %v302 = vpack.c.b16 %v243, %v242
    %v303 = vpack.c.b16 %v245, %v244
    %v304 = vpack.c.b16 %v247, %v246
    %v305 = vpack.c.b16 %v249, %v248
    %v306 = vpack.c.b16 %v251, %v250
    %v307 = vpack.c.b16 %v253, %v252
    %v308 = vpack.c.b16 %v255, %v254
    %v309 = vpack.c.b16 %v257, %v256
    %v310 = vpack.c.b16 %v259, %v258
    %v311 = vpack.c.b16 %v261, %v260
    %v312 = vpack.c.b16 %v263, %v262
    %v313 = vpack.c.b16 %v265, %v264
    %v314 = vpack.c.b16 %v267, %v266
    %v315 = vpack.c.b16 %v269, %v268
    %v316 = vpack.c.b16 %v271, %v270
    %v317 = vpack.c.b16 %v273, %v272
    %v318 = vpack.c.b16 %v275, %v274
    %v319 = vpack.c.b16 %v277, %v276
    %v320 = vpack.c.b16 %v279, %v278
    %v321 = vpack.c.b16 %v281, %v280
    %v322 = vpack.c.b16 %v283, %v282
    %v323 = vpack.c.b16 %v285, %v284
    %v324 = vpack.c.b16 %v287, %v286
    %v325 = vpack.c.b16 %v289, %v288
    %v326 = vpack.c.b16 %v291, %v290
    %v327 = vpack.c.b16 %v293, %v292
    %v328 = vpack.c.b16 %v295, %v294
    %v329 = vpack.c.b16 %v297, %v296
    %362 = vmatprep.subr.bf16.mxu0 0
    %363 = vmatpush1.bf16.msra.mxu0 %v298
    %364 = vmatprep.subr.bf16.mxu0 0
    %365 = vmatpush1.bf16.msra.mxu0 %v299
    %366 = vmatprep.subr.bf16.mxu0 0
    %367 = vmatpush1.bf16.msra.mxu0 %v300
    %368 = vmatprep.subr.bf16.mxu0 0
    %369 = vmatpush1.bf16.msra.mxu0 %v301
    %370 = vmatprep.subr.bf16.mxu0 0
    %371 = vmatpush1.bf16.msra.mxu0 %v302
    %372 = vmatprep.subr.bf16.mxu0 0
    %373 = vmatpush1.bf16.msra.mxu0 %v303
    %374 = vmatprep.subr.bf16.mxu0 0
    %375 = vmatpush1.bf16.msra.mxu0 %v304
    %376 = vmatprep.subr.bf16.mxu0 0
    %377 = vmatpush1.bf16.msra.mxu0 %v305
    %378 = vmatprep.subr.bf16.mxu0 0
    %379 = vmatpush1.bf16.msra.mxu0 %v306
    %380 = vmatprep.subr.bf16.mxu0 0
    %381 = vmatpush1.bf16.msra.mxu0 %v307
    %382 = vmatprep.subr.bf16.mxu0 0
    %383 = vmatpush1.bf16.msra.mxu0 %v308
    %384 = vmatprep.subr.bf16.mxu0 0
    %385 = vmatpush1.bf16.msra.mxu0 %v309
    %386 = vmatprep.subr.bf16.mxu0 0
    %387 = vmatpush1.bf16.msra.mxu0 %v310
    %388 = vmatprep.subr.bf16.mxu0 0
    %389 = vmatpush1.bf16.msra.mxu0 %v311
    %390 = vmatprep.subr.bf16.mxu0 0
    %391 = vmatpush1.bf16.msra.mxu0 %v312
    %392 = vmatprep.subr.bf16.mxu0 0
    %393 = vmatpush1.bf16.msra.mxu0 %v313
    %394 = vmatprep.mubr.bf16.mxu0 %v163
    %395 = vmatmul.mubr.bf16.gmra.mrb[0].mxu0 %v156
    %v396 = vpop.f32.mrb[0].mxu0
    %v397 = vadd.f32 0.0, %v396
    %v398 = vpop.f32.mrb[0].mxu0
    %v399 = vpop.f32.mrb[0].mxu0
    %v400 = vpop.f32.mrb[0].mxu0
    %401 = vdwg.mxu0
    %402 = vmatprep.subr.bf16.mxu0 0
    %403 = vmatpush1.bf16.msra.mxu0 %v314
    %404 = vmatprep.subr.bf16.mxu0 0
    %405 = vmatpush1.bf16.msra.mxu0 %v315
    %406 = vmatprep.subr.bf16.mxu0 0
    %407 = vmatpush1.bf16.msra.mxu0 %v316
    %408 = vmatprep.subr.bf16.mxu0 0
    %409 = vmatpush1.bf16.msra.mxu0 %v317
    %410 = vmatprep.subr.bf16.mxu0 0
    %411 = vmatpush1.bf16.msra.mxu0 %v318
    %412 = vmatprep.subr.bf16.mxu0 0
    %413 = vmatpush1.bf16.msra.mxu0 %v319
    %414 = vmatprep.subr.bf16.mxu0 0
    %415 = vmatpush1.bf16.msra.mxu0 %v320
    %416 = vmatprep.subr.bf16.mxu0 0
    %417 = vmatpush1.bf16.msra.mxu0 %v321
    %418 = vmatprep.subr.bf16.mxu0 0
    %419 = vmatpush1.bf16.msra.mxu0 %v322
    %420 = vmatprep.subr.bf16.mxu0 0
    %421 = vmatpush1.bf16.msra.mxu0 %v323
    %422 = vmatprep.subr.bf16.mxu0 0
    %423 = vmatpush1.bf16.msra.mxu0 %v324
    %424 = vmatprep.subr.bf16.mxu0 0
    %425 = vmatpush1.bf16.msra.mxu0 %v325
    %426 = vmatprep.subr.bf16.mxu0 0
    %427 = vmatpush1.bf16.msra.mxu0 %v326
    %428 = vmatprep.subr.bf16.mxu0 0
    %429 = vmatpush1.bf16.msra.mxu0 %v327
    %430 = vmatprep.subr.bf16.mxu0 0
    %431 = vmatpush1.bf16.msra.mxu0 %v328
    %432 = vmatprep.subr.bf16.mxu0 0
    %433 = vmatpush1.bf16.msra.mxu0 %v329
    %434 = vmatprep.mubr.bf16.mxu0 %v165
    %435 = vmatmul.mubr.bf16.gmra.mrb[0].mxu0 %v164
    %v436 = vpop.f32.mrb[0].mxu0
    %v437 = vadd.f32 %v397, %v436
    %v438 = vpop.f32.mrb[0].mxu0
    %v439 = vpop.f32.mrb[0].mxu0
    %v440 = vpop.f32.mrb[0].mxu0
    %441 = vdwg.mxu0
    %v442 = vadd.f32 %v75, %v437
    %443 = vst [vmem:[#allocation2] sm:$0x3] %v442
    // Predicated region
    $region38: #{discriminator_forward.7} parent=1 // pred_check
      %p444 = pneg %p70
    $region39: #{discriminator_forward.7} parent=1 // pred_check_branch
      %446 = sbr.rel (%p444) target = $region41
    $region40: #{discriminator_forward.7} parent=1 // pred_region
      %v447 = vld [vmem:[#allocation2] sm:$0x3]
      %v448 = vld [vmem:[#allocation8] sm:$0x1]
      %v450 = vlaneseq
      %v451 = vshrl.u32 %v450, 7
      %v452 = vsub.s32 0, %v451
      %v453 = vrot.slane %v448, %v452
      %v455 = vadd.f32 %v447, %v453
      %vm456 = vcmp.ge.f32.partialorder %v455, 0.0
      %v457 = vmul.f32 %v455, 0.2
      %v458 = vsel %vm456, %v455, %v457
      %v459 = vld [vmem:[#allocation9] sm:$0xff]
      %v460 = vld [vmem:[#allocation9 + $0x8] sm:$0xff]
      %v461 = vld [vmem:[#allocation9 + $0x10] sm:$0xff]
      %v462 = vld [vmem:[#allocation9 + $0x18] sm:$0xff]
      %v463 = vld [vmem:[#allocation9 + $0x20] sm:$0xff]
      %v464 = vld [vmem:[#allocation9 + $0x28] sm:$0xff]
      %v465 = vld [vmem:[#allocation9 + $0x30] sm:$0xff]
      %v466 = vld [vmem:[#allocation9 + $0x38] sm:$0xff]
      %v467 = vld [vmem:[#allocation9 + $0x40] sm:$0xff]
      %v468 = vld [vmem:[#allocation9 + $0x48] sm:$0xff]
      %v469 = vld [vmem:[#allocation9 + $0x50] sm:$0xff]
      %v470 = vld [vmem:[#allocation9 + $0x58] sm:$0xff]
      %v471 = vld [vmem:[#allocation9 + $0x60] sm:$0xff]
      %v472 = vld [vmem:[#allocation9 + $0x68] sm:$0xff]
      %v473 = vld [vmem:[#allocation9 + $0x70] sm:$0xff]
      %v474 = vld [vmem:[#allocation9 + $0x78] sm:$0xff]
      %475 = vmatprep.subr.mxu0 0.0
      %476 = vmatpush1.msra.mxu0 %v459
      %477 = vmatprep.subr.mxu0 0.0
      %478 = vmatpush1.msra.mxu0 %v460
      %479 = vmatprep.subr.mxu0 0.0
      %480 = vmatpush1.msra.mxu0 %v461
      %481 = vmatprep.subr.mxu0 0.0
      %482 = vmatpush1.msra.mxu0 %v462
      %483 = vmatprep.subr.mxu0 0.0
      %484 = vmatpush1.msra.mxu0 %v463
      %485 = vmatprep.subr.mxu0 0.0
      %486 = vmatpush1.msra.mxu0 %v464
      %487 = vmatprep.subr.mxu0 0.0
      %488 = vmatpush1.msra.mxu0 %v465
      %489 = vmatprep.subr.mxu0 0.0
      %490 = vmatpush1.msra.mxu0 %v466
      %491 = vmatprep.subr.mxu0 0.0
      %492 = vmatpush1.msra.mxu0 %v467
      %493 = vmatprep.subr.mxu0 0.0
      %494 = vmatpush1.msra.mxu0 %v468
      %495 = vmatprep.subr.mxu0 0.0
      %496 = vmatpush1.msra.mxu0 %v469
      %497 = vmatprep.subr.mxu0 0.0
      %498 = vmatpush1.msra.mxu0 %v470
      %499 = vmatprep.subr.mxu0 0.0
      %500 = vmatpush1.msra.mxu0 %v471
      %501 = vmatprep.subr.mxu0 0.0
      %502 = vmatpush1.msra.mxu0 %v472
      %503 = vmatprep.subr.mxu0 0.0
      %504 = vmatpush1.msra.mxu0 %v473
      %505 = vmatprep.subr.mxu0 0.0
      %506 = vmatpush1.msra.mxu0 %v474
      %507 = vmatprep.subr.mxu0 0.0
      %508 = vmatpush1.msra.mxu0 0.0
      %509 = vmatprep.subr.mxu0 0.0
      %510 = vmatpush1.msra.mxu0 0.0
      %511 = vmatprep.subr.mxu0 0.0
      %512 = vmatpush1.msra.mxu0 0.0
      %513 = vmatprep.subr.mxu0 0.0
      %514 = vmatpush1.msra.mxu0 0.0
      %515 = vmatprep.subr.mxu0 0.0
      %516 = vmatpush1.msra.mxu0 0.0
      %517 = vmatprep.subr.mxu0 0.0
      %518 = vmatpush1.msra.mxu0 0.0
      %519 = vmatprep.subr.mxu0 0.0
      %520 = vmatpush1.msra.mxu0 0.0
      %521 = vmatprep.subr.mxu0 0.0
      %522 = vmatpush1.msra.mxu0 0.0
      %523 = vmatprep.subr.mxu0 0.0
      %524 = vmatpush1.msra.mxu0 0.0
      %525 = vmatprep.subr.mxu0 0.0
      %526 = vmatpush1.msra.mxu0 0.0
      %527 = vmatprep.subr.mxu0 0.0
      %528 = vmatpush1.msra.mxu0 0.0
      %529 = vmatprep.subr.mxu0 0.0
      %530 = vmatpush1.msra.mxu0 0.0
      %531 = vmatprep.subr.mxu0 0.0
      %532 = vmatpush1.msra.mxu0 0.0
      %533 = vmatprep.subr.mxu0 0.0
      %534 = vmatpush1.msra.mxu0 0.0
      %535 = vmatprep.subr.mxu0 0.0
      %536 = vmatpush1.msra.mxu0 0.0
      %537 = vmatprep.subr.mxu0 0.0
      %538 = vmatpush1.msra.mxu0 0.0
      %539 = vmatprep.mubr.f32.mxu0 0.0
      %540 = vmatmul.mubr.f32.gmra.mrb[0].mxu0 %v458
      %v541 = vpop.f32.mrb[0].mxu0
      %v542 = vadd.f32 0.0, %v541
      %v543 = vpop.f32.mrb[0].mxu0
      %544 = vdwg.mxu0
      %545 = vst [vmem:[#allocation11] sm:$0x3] %v542
    $region41: #{discriminator_forward.7} parent=1 // pred_fallthru
      _
    // Predicated region
    $region42: #{discriminator_forward.7} parent=1 // pred_check
      _
    $region43: #{discriminator_forward.7} parent=1 // pred_check_branch
      %547 = sbr.rel (0) target = $region45
    $region44: #{discriminator_forward.7} parent=1 // pred_region
      %s549 = ssub.s32 32, 32
      %550 = vsyncadd [#allocation5], %s549
      %s552 = sshll.u32 [#allocation11], 4
      %s553 = int_to_ptr.vmem [resolvable:$true] %s552
      %555 = dma.vmem_to_hbm [thread:$0]  %s553, 32, %s4, [#allocation5]
    $region45: #{discriminator_forward.7} parent=1 // pred_fallthru
      _
    // Predicated region
    $region46: #{discriminator_forward.7} parent=1 // pred_check
      _
    $region47: #{discriminator_forward.7} parent=1 // pred_check_branch
      %557 = sbr.rel (0) target = $region49
    $region48: #{discriminator_forward.7} parent=1 // pred_region
      %558 = dma.done [#allocation5], 32
    $region49: #{discriminator_forward.7} parent=1 // pred_fallthru
      _
    %559 = vsyncpa [#allocation4], 1
    %560 = vsyncpa [#allocation7], 1
    %561 = vsyncpa [#allocation10], 1
    %562 = vsyncpa [#allocation5], 1

// kernel: discriminator_forward.5
$region0: #{discriminator_forward.5}
  #allocation0 [shape = 'u32[]', space=smem, size = 0x4, offset = 0x4, fixed_abs, tag = 'smem constant byte address 0x4 - core index']
  #allocation1 [shape = 'u32[144,128]{1,0:T(1,128)}', space=vmem, size = 0x12000, scoped, tag = 'internal scratch']
  #allocation2 [shape = 'f32[32,128]{1,0:T(8,128)}', space=vmem, size = 0x4000, scoped, tag = 'scratch operand']
  %s0 = inlined_call_operand.hbm [shape: bf16[2,5,5,512], index: 0, kind: input, shape index: {}]
  %s1 = inlined_call_operand.hbm [shape: bf16[4,512,128], index: 1, kind: input, shape index: {}]
  %s2 = inlined_call_operand.hbm [shape: f32[1,128], index: 2, kind: input, shape index: {}]
  %s3 = inlined_call_operand.hbm [shape: f32[1,128], index: 3, kind: input, shape index: {}]
  %s4 = inlined_call_operand.hbm [shape: bf16[2,16,128], index: 4, kind: output, shape index: {}]
  %s5 = sld [smem:[#allocation0]]
  $region42: #{discriminator_forward.5} parent=0
    _
  %s7 = ssub.s32 1, %s5
  %s8 = scalar_select 0, %s7, %s5
  $region1: #{discriminator_forward.5} parent=0
    #allocation3 [shape = 'u8[81920]{0}', space=vmem, size = 0x14000, scoped, tag = 'input window, operand 0, single buffered']
    #allocation4 [shape = 's32[1]{0}', space=sflag, size = 0x4, scoped, tag = 'scoped memory for discriminator_forward.5']
    #allocation5 [shape = 's32[1]{0}', space=sflag, size = 0x4, scoped, tag = 'scoped memory for discriminator_forward.5']
    #allocation6 [shape = 'u8[524288]{0}', space=vmem, size = 0x80000, scoped, tag = 'input window, operand 1, single buffered']
    #allocation7 [shape = 's32[1]{0}', space=sflag, size = 0x4, scoped, tag = 'scoped memory for discriminator_forward.5']
    #allocation8 [shape = 'u8[512]{0}', space=vmem, size = 0x400, scoped, tag = 'input window, operand 2, single buffered']
    #allocation9 [shape = 'u8[512]{0}', space=vmem, size = 0x400, scoped, tag = 'input window, operand 3, single buffered']
    #allocation10 [shape = 's32[1]{0}', space=sflag, size = 0x4, scoped, tag = 'scoped memory for discriminator_forward.5']
    #allocation11 [shape = 'u8[8192]{0}', space=vmem, size = 0x2000, scoped, tag = 'output window, operand 0, single buffered']
    %9 = vsyncpa [#allocation4], 0
    %10 = vsyncpa [#allocation7], 0
    %11 = vsyncpa [#allocation10], 0
    %12 = vsyncpa [#allocation5], 0
    // Predicated region
    $region2: #{discriminator_forward.5} parent=1 // pred_check
      _
    $region3: #{discriminator_forward.5} parent=1 // pred_check_branch
      %14 = sbr.rel (0) target = $region5
    $region4: #{discriminator_forward.5} parent=1 // pred_region
      %s16 = ssub.s32 2560, 2560
      %17 = vsyncadd [#allocation4], %s16
      %s18 = sshll.u32 [#allocation3], 4
      %s19 = int_to_ptr.vmem [resolvable:$true] %s18
      %24 = dma.hbm_to_vmem [thread:$0]  %s0, 2560, %s19, [#allocation4], 256, 256, 16
    $region5: #{discriminator_forward.5} parent=1 // pred_fallthru
      _
    // Predicated region
    $region6: #{discriminator_forward.5} parent=1 // pred_check
      _
    $region7: #{discriminator_forward.5} parent=1 // pred_check_branch
      %26 = sbr.rel (0) target = $region9
    $region8: #{discriminator_forward.5} parent=1 // pred_region
      %s28 = ssub.s32 16384, 16384
      %29 = vsyncadd [#allocation7], %s28
      %s30 = sshll.u32 [#allocation6], 4
      %s31 = int_to_ptr.vmem [resolvable:$true] %s30
      %36 = dma.hbm_to_vmem [thread:$0]  %s1, 16384, %s31, [#allocation7], 64, 64, 4
    $region9: #{discriminator_forward.5} parent=1 // pred_fallthru
      _
    // Predicated region
    $region10: #{discriminator_forward.5} parent=1 // pred_check
      _
    $region11: #{discriminator_forward.5} parent=1 // pred_check_branch
      %38 = sbr.rel (0) target = $region13
    $region12: #{discriminator_forward.5} parent=1 // pred_region
      %s40 = ssub.s32 16, 16
      %41 = vsyncadd [#allocation7], %s40
      %s43 = sshll.u32 [#allocation8], 4
      %s44 = int_to_ptr.vmem [resolvable:$true] %s43
      %46 = dma.hbm_to_vmem [thread:$0]  %s2, 16, %s44, [#allocation7]
    $region13: #{discriminator_forward.5} parent=1 // pred_fallthru
      _
    // Predicated region
    $region14: #{discriminator_forward.5} parent=1 // pred_check
      _
    $region15: #{discriminator_forward.5} parent=1 // pred_check_branch
      %48 = sbr.rel (0) target = $region17
    $region16: #{discriminator_forward.5} parent=1 // pred_region
      %s50 = ssub.s32 16, 16
      %51 = vsyncadd [#allocation10], %s50
      %s53 = sshll.u32 [#allocation9], 4
      %s54 = int_to_ptr.vmem [resolvable:$true] %s53
      %56 = dma.hbm_to_vmem [thread:$0]  %s3, 16, %s54, [#allocation10]
    $region17: #{discriminator_forward.5} parent=1 // pred_fallthru
      _
    // Predicated region
    $region18: #{discriminator_forward.5} parent=1 // pred_check
      _
    $region19: #{discriminator_forward.5} parent=1 // pred_check_branch
      %58 = sbr.rel (0) target = $region21
    $region20: #{discriminator_forward.5} parent=1 // pred_region
      %59 = dma.done [#allocation4], 2560
    $region21: #{discriminator_forward.5} parent=1 // pred_fallthru
      _
    // Predicated region
    $region22: #{discriminator_forward.5} parent=1 // pred_check
      _
    $region23: #{discriminator_forward.5} parent=1 // pred_check_branch
      %61 = sbr.rel (0) target = $region25
    $region24: #{discriminator_forward.5} parent=1 // pred_region
      %62 = dma.done [#allocation7], 16384
    $region25: #{discriminator_forward.5} parent=1 // pred_fallthru
      _
    // Predicated region
    $region26: #{discriminator_forward.5} parent=1 // pred_check
      _
    $region27: #{discriminator_forward.5} parent=1 // pred_check_branch
      %64 = sbr.rel (0) target = $region29
    $region28: #{discriminator_forward.5} parent=1 // pred_region
      %65 = dma.done [#allocation7], 16
    $region29: #{discriminator_forward.5} parent=1 // pred_fallthru
      _
    // Predicated region
    $region30: #{discriminator_forward.5} parent=1 // pred_check
      _
    $region31: #{discriminator_forward.5} parent=1 // pred_check_branch
      %67 = sbr.rel (0) target = $region33
    $region32: #{discriminator_forward.5} parent=1 // pred_region
      %68 = dma.done [#allocation10], 16
    $region33: #{discriminator_forward.5} parent=1 // pred_fallthru
      _
    %v70 = vld [vmem:[#allocation3] sm:$0x33]
    %v71 = vld [vmem:[#allocation3 + $0x8] sm:$0x33]
    %v72 = vld [vmem:[#allocation3 + $0x10] sm:$0x33]
    %v73 = vld [vmem:[#allocation3 + $0x18] sm:$0x33]
    %v74 = vld [vmem:[#allocation3 + $0x20] sm:$0x33]
    %v75 = vld [vmem:[#allocation3 + $0x28] sm:$0x33]
    %v76 = vld [vmem:[#allocation3 + $0x30] sm:$0x33]
    %v77 = vld [vmem:[#allocation3 + $0x38] sm:$0x33]
    %v78 = vld [vmem:[#allocation3 + $0x50] sm:$0x33]
    %v79 = vld [vmem:[#allocation3 + $0x58] sm:$0x33]
    %v80 = vld [vmem:[#allocation3 + $0x60] sm:$0x33]
    %v81 = vld [vmem:[#allocation3 + $0x68] sm:$0x33]
    %v82 = vld [vmem:[#allocation3 + $0x70] sm:$0x33]
    %v83 = vld [vmem:[#allocation3 + $0x78] sm:$0x33]
    %v84 = vld [vmem:[#allocation3 + $0x80] sm:$0x33]
    %v85 = vld [vmem:[#allocation3 + $0x88] sm:$0x33]
    %v103 = vunpack.c.l.s4 1983009808
    %v104 = vunpack.c.0.s8 %v103
    %v105 = vlaneseq
    %v106 = vshrl.u32 %v105, 7
    %v107 = vsub.s32 %v104, %v106
    %v108 = vrot.slane %v70, %v107
    %v110 = vunpack.c.l.s4 1983009808
    %v111 = vunpack.c.0.s8 %v110
    %v112 = vlaneseq
    %v113 = vshrl.u32 %v112, 7
    %v114 = vsub.s32 %v111, %v113
    %v115 = vrot.slane %v71, %v114
    %v116 = vcombine.low %v108, %v115
    %v118 = vunpack.c.l.s4 1983009808
    %v119 = vunpack.c.0.s8 %v118
    %v120 = vlaneseq
    %v121 = vshrl.u32 %v120, 7
    %v122 = vsub.s32 %v119, %v121
    %v123 = vrot.slane %v72, %v122
    %v125 = vunpack.c.l.s4 1983009808
    %v126 = vunpack.c.0.s8 %v125
    %v127 = vlaneseq
    %v128 = vshrl.u32 %v127, 7
    %v129 = vsub.s32 %v126, %v128
    %v130 = vrot.slane %v73, %v129
    %v131 = vcombine.low %v123, %v130
    %v133 = vunpack.c.l.s4 1983009808
    %v134 = vunpack.c.0.s8 %v133
    %v135 = vlaneseq
    %v136 = vshrl.u32 %v135, 7
    %v137 = vsub.s32 %v134, %v136
    %v138 = vrot.slane %v74, %v137
    %v140 = vunpack.c.l.s4 1983009808
    %v141 = vunpack.c.0.s8 %v140
    %v142 = vlaneseq
    %v143 = vshrl.u32 %v142, 7
    %v144 = vsub.s32 %v141, %v143
    %v145 = vrot.slane %v75, %v144
    %v146 = vcombine.low %v138, %v145
    %v148 = vunpack.c.l.s4 1983009808
    %v149 = vunpack.c.0.s8 %v148
    %v150 = vlaneseq
    %v151 = vshrl.u32 %v150, 7
    %v152 = vsub.s32 %v149, %v151
    %v153 = vrot.slane %v76, %v152
    %v155 = vunpack.c.l.s4 1983009808
    %v156 = vunpack.c.0.s8 %v155
    %v157 = vlaneseq
    %v158 = vshrl.u32 %v157, 7
    %v159 = vsub.s32 %v156, %v158
    %v160 = vrot.slane %v77, %v159
    %v161 = vcombine.low %v153, %v160
    %v163 = vunpack.c.l.s4 1983009808
    %v164 = vunpack.c.0.s8 %v163
    %v165 = vlaneseq
    %v166 = vshrl.u32 %v165, 7
    %v167 = vsub.s32 %v164, %v166
    %v168 = vrot.slane %v78, %v167
    %v170 = vunpack.c.l.s4 1983009808
    %v171 = vunpack.c.0.s8 %v170
    %v172 = vlaneseq
    %v173 = vshrl.u32 %v172, 7
    %v174 = vsub.s32 %v171, %v173
    %v175 = vrot.slane %v79, %v174
    %v176 = vcombine.low %v168, %v175
    %v178 = vunpack.c.l.s4 1983009808
    %v179 = vunpack.c.0.s8 %v178
    %v180 = vlaneseq
    %v181 = vshrl.u32 %v180, 7
    %v182 = vsub.s32 %v179, %v181
    %v183 = vrot.slane %v80, %v182
    %v185 = vunpack.c.l.s4 1983009808
    %v186 = vunpack.c.0.s8 %v185
    %v187 = vlaneseq
    %v188 = vshrl.u32 %v187, 7
    %v189 = vsub.s32 %v186, %v188
    %v190 = vrot.slane %v81, %v189
    %v191 = vcombine.low %v183, %v190
    %v193 = vunpack.c.l.s4 1983009808
    %v194 = vunpack.c.0.s8 %v193
    %v195 = vlaneseq
    %v196 = vshrl.u32 %v195, 7
    %v197 = vsub.s32 %v194, %v196
    %v198 = vrot.slane %v82, %v197
    %v200 = vunpack.c.l.s4 1983009808
    %v201 = vunpack.c.0.s8 %v200
    %v202 = vlaneseq
    %v203 = vshrl.u32 %v202, 7
    %v204 = vsub.s32 %v201, %v203
    %v205 = vrot.slane %v83, %v204
    %v206 = vcombine.low %v198, %v205
    %v208 = vunpack.c.l.s4 1983009808
    %v209 = vunpack.c.0.s8 %v208
    %v210 = vlaneseq
    %v211 = vshrl.u32 %v210, 7
    %v212 = vsub.s32 %v209, %v211
    %v213 = vrot.slane %v84, %v212
    %v215 = vunpack.c.l.s4 1983009808
    %v216 = vunpack.c.0.s8 %v215
    %v217 = vlaneseq
    %v218 = vshrl.u32 %v217, 7
    %v219 = vsub.s32 %v216, %v218
    %v220 = vrot.slane %v85, %v219
    %v221 = vcombine.low %v213, %v220
    %v222 = vld [vmem:[#allocation6] sm:$0xf]
    %v223 = vld [vmem:[#allocation6 + $0x4] sm:$0xf]
    %v224 = vld [vmem:[#allocation6 + $0x8] sm:$0xf]
    %v225 = vld [vmem:[#allocation6 + $0xc] sm:$0xf]
    %v226 = vld [vmem:[#allocation6 + $0x10] sm:$0xf]
    %v227 = vld [vmem:[#allocation6 + $0x14] sm:$0xf]
    %v228 = vld [vmem:[#allocation6 + $0x18] sm:$0xf]
    %v229 = vld [vmem:[#allocation6 + $0x1c] sm:$0xf]
    %v230 = vld [vmem:[#allocation6 + $0x20] sm:$0xf]
    %v231 = vld [vmem:[#allocation6 + $0x24] sm:$0xf]
    %v232 = vld [vmem:[#allocation6 + $0x28] sm:$0xf]
    %v233 = vld [vmem:[#allocation6 + $0x2c] sm:$0xf]
    %v234 = vld [vmem:[#allocation6 + $0x30] sm:$0xf]
    %v235 = vld [vmem:[#allocation6 + $0x34] sm:$0xf]
    %v236 = vld [vmem:[#allocation6 + $0x38] sm:$0xf]
    %v237 = vld [vmem:[#allocation6 + $0x3c] sm:$0xf]
    %v238 = vld [vmem:[#allocation6 + $0x40] sm:$0xf]
    %v239 = vld [vmem:[#allocation6 + $0x44] sm:$0xf]
    %v240 = vld [vmem:[#allocation6 + $0x48] sm:$0xf]
    %v241 = vld [vmem:[#allocation6 + $0x4c] sm:$0xf]
    %v242 = vld [vmem:[#allocation6 + $0x50] sm:$0xf]
    %v243 = vld [vmem:[#allocation6 + $0x54] sm:$0xf]
    %v244 = vld [vmem:[#allocation6 + $0x58] sm:$0xf]
    %v245 = vld [vmem:[#allocation6 + $0x5c] sm:$0xf]
    %v246 = vld [vmem:[#allocation6 + $0x60] sm:$0xf]
    %v247 = vld [vmem:[#allocation6 + $0x64] sm:$0xf]
    %v248 = vld [vmem:[#allocation6 + $0x68] sm:$0xf]
    %v249 = vld [vmem:[#allocation6 + $0x6c] sm:$0xf]
    %v250 = vld [vmem:[#allocation6 + $0x70] sm:$0xf]
    %v251 = vld [vmem:[#allocation6 + $0x74] sm:$0xf]
    %v252 = vld [vmem:[#allocation6 + $0x78] sm:$0xf]
    %v253 = vld [vmem:[#allocation6 + $0x7c] sm:$0xf]
    %v254 = vld [vmem:[#allocation6 + $0x80] sm:$0xf]
    %v255 = vld [vmem:[#allocation6 + $0x84] sm:$0xf]
    %v256 = vld [vmem:[#allocation6 + $0x88] sm:$0xf]
    %v257 = vld [vmem:[#allocation6 + $0x8c] sm:$0xf]
    %v258 = vld [vmem:[#allocation6 + $0x90] sm:$0xf]
    %v259 = vld [vmem:[#allocation6 + $0x94] sm:$0xf]
    %v260 = vld [vmem:[#allocation6 + $0x98] sm:$0xf]
    %v261 = vld [vmem:[#allocation6 + $0x9c] sm:$0xf]
    %v262 = vld [vmem:[#allocation6 + $0xa0] sm:$0xf]
    %v263 = vld [vmem:[#allocation6 + $0xa4] sm:$0xf]
    %v264 = vld [vmem:[#allocation6 + $0xa8] sm:$0xf]
    %v265 = vld [vmem:[#allocation6 + $0xac] sm:$0xf]
    %v266 = vld [vmem:[#allocation6 + $0xb0] sm:$0xf]
    %v267 = vld [vmem:[#allocation6 + $0xb4] sm:$0xf]
    %v268 = vld [vmem:[#allocation6 + $0xb8] sm:$0xf]
    %v269 = vld [vmem:[#allocation6 + $0xbc] sm:$0xf]
    %v270 = vld [vmem:[#allocation6 + $0xc0] sm:$0xf]
    %v271 = vld [vmem:[#allocation6 + $0xc4] sm:$0xf]
    %v272 = vld [vmem:[#allocation6 + $0xc8] sm:$0xf]
    %v273 = vld [vmem:[#allocation6 + $0xcc] sm:$0xf]
    %v274 = vld [vmem:[#allocation6 + $0xd0] sm:$0xf]
    %v275 = vld [vmem:[#allocation6 + $0xd4] sm:$0xf]
    %v276 = vld [vmem:[#allocation6 + $0xd8] sm:$0xf]
    %v277 = vld [vmem:[#allocation6 + $0xdc] sm:$0xf]
    %v278 = vld [vmem:[#allocation6 + $0xe0] sm:$0xf]
    %v279 = vld [vmem:[#allocation6 + $0xe4] sm:$0xf]
    %v280 = vld [vmem:[#allocation6 + $0xe8] sm:$0xf]
    %v281 = vld [vmem:[#allocation6 + $0xec] sm:$0xf]
    %v282 = vld [vmem:[#allocation6 + $0xf0] sm:$0xf]
    %v283 = vld [vmem:[#allocation6 + $0xf4] sm:$0xf]
    %v284 = vld [vmem:[#allocation6 + $0xf8] sm:$0xf]
    %v285 = vld [vmem:[#allocation6 + $0xfc] sm:$0xf]
    %v286 = vcombine.low %v116, %v131
    %v287 = vcombine.high %v116, %v131
    %v288 = vcombine.low %v146, %v161
    %v289 = vcombine.high %v146, %v161
    %v291 = vunpack.c.l.s4 1983009808
    %v292 = vunpack.c.0.s8 %v291
    %v293 = vlaneseq
    %v294 = vshrl.u32 %v293, 7
    %v295 = vsub.s32 %v292, %v294
    %v296 = vrot.slane %v286, %v295
    %v298 = vunpack.c.l.s4 1983009808
    %v299 = vunpack.c.0.s8 %v298
    %v300 = vlaneseq
    %v301 = vshrl.u32 %v300, 7
    %v302 = vsub.s32 %v299, %v301
    %v303 = vrot.slane %v287, %v302
    %v305 = vunpack.c.l.s4 1983009808
    %v306 = vunpack.c.0.s8 %v305
    %v307 = vlaneseq
    %v308 = vshrl.u32 %v307, 7
    %v309 = vsub.s32 %v306, %v308
    %v310 = vrot.slane %v288, %v309
    %v312 = vunpack.c.l.s4 1983009808
    %v313 = vunpack.c.0.s8 %v312
    %v314 = vlaneseq
    %v315 = vshrl.u32 %v314, 7
    %v316 = vsub.s32 %v313, %v315
    %v317 = vrot.slane %v289, %v316
    %v318 = vcombine.low %v296, %v310
    %v319 = vcombine.high %v296, %v310
    %v320 = vcombine.low %v303, %v317
    %v321 = vcombine.high %v303, %v317
    %v322 = vcombine.low %v176, %v191
    %v323 = vcombine.high %v176, %v191
    %v324 = vcombine.low %v206, %v221
    %v325 = vcombine.high %v206, %v221
    %v327 = vunpack.c.l.s4 1983009808
    %v328 = vunpack.c.0.s8 %v327
    %v329 = vlaneseq
    %v330 = vshrl.u32 %v329, 7
    %v331 = vsub.s32 %v328, %v330
    %v332 = vrot.slane %v322, %v331
    %v334 = vunpack.c.l.s4 1983009808
    %v335 = vunpack.c.0.s8 %v334
    %v336 = vlaneseq
    %v337 = vshrl.u32 %v336, 7
    %v338 = vsub.s32 %v335, %v337
    %v339 = vrot.slane %v323, %v338
    %v341 = vunpack.c.l.s4 1983009808
    %v342 = vunpack.c.0.s8 %v341
    %v343 = vlaneseq
    %v344 = vshrl.u32 %v343, 7
    %v345 = vsub.s32 %v342, %v344
    %v346 = vrot.slane %v324, %v345
    %v348 = vunpack.c.l.s4 1983009808
    %v349 = vunpack.c.0.s8 %v348
    %v350 = vlaneseq
    %v351 = vshrl.u32 %v350, 7
    %v352 = vsub.s32 %v349, %v351
    %v353 = vrot.slane %v325, %v352
    %v354 = vcombine.low %v332, %v346
    %v355 = vcombine.high %v332, %v346
    %v356 = vcombine.low %v339, %v353
    %v357 = vcombine.high %v339, %v353
    %v430 = vunpack.c.l.b16 %v222
    %v431 = vunpack.c.l.b16 %v223
    %v432 = vunpack.c.l.b16 %v224
    %v433 = vunpack.c.l.b16 %v225
    %v434 = vunpack.c.l.b16 %v226
    %v435 = vunpack.c.l.b16 %v227
    %v436 = vunpack.c.l.b16 %v228
    %v437 = vunpack.c.l.b16 %v229
    %v438 = vunpack.c.l.b16 %v230
    %v439 = vunpack.c.l.b16 %v231
    %v440 = vunpack.c.l.b16 %v232
    %v441 = vunpack.c.l.b16 %v233
    %v442 = vunpack.c.l.b16 %v234
    %v443 = vunpack.c.l.b16 %v235
    %v444 = vunpack.c.l.b16 %v236
    %v445 = vunpack.c.l.b16 %v237
    %v446 = vunpack.c.l.b16 %v238
    %v447 = vunpack.c.l.b16 %v239
    %v448 = vunpack.c.l.b16 %v240
    %v449 = vunpack.c.l.b16 %v241
    %v450 = vunpack.c.l.b16 %v242
    %v451 = vunpack.c.l.b16 %v243
    %v452 = vunpack.c.l.b16 %v244
    %v453 = vunpack.c.l.b16 %v245
    %v454 = vunpack.c.l.b16 %v246
    %v455 = vunpack.c.l.b16 %v247
    %v456 = vunpack.c.l.b16 %v248
    %v457 = vunpack.c.l.b16 %v249
    %v458 = vunpack.c.l.b16 %v250
    %v459 = vunpack.c.l.b16 %v251
    %v460 = vunpack.c.l.b16 %v252
    %v461 = vunpack.c.l.b16 %v253
    %v462 = vunpack.c.l.b16 %v254
    %v463 = vunpack.c.l.b16 %v255
    %v464 = vunpack.c.l.b16 %v256
    %v465 = vunpack.c.l.b16 %v257
    %v466 = vunpack.c.l.b16 %v258
    %v467 = vunpack.c.l.b16 %v259
    %v468 = vunpack.c.l.b16 %v260
    %v469 = vunpack.c.l.b16 %v261
    %v470 = vunpack.c.l.b16 %v262
    %v471 = vunpack.c.l.b16 %v263
    %v472 = vunpack.c.l.b16 %v264
    %v473 = vunpack.c.l.b16 %v265
    %v474 = vunpack.c.l.b16 %v266
    %v475 = vunpack.c.l.b16 %v267
    %v476 = vunpack.c.l.b16 %v268
    %v477 = vunpack.c.l.b16 %v269
    %v478 = vunpack.c.l.b16 %v270
    %v479 = vunpack.c.l.b16 %v271
    %v480 = vunpack.c.l.b16 %v272
    %v481 = vunpack.c.l.b16 %v273
    %v482 = vunpack.c.l.b16 %v274
    %v483 = vunpack.c.l.b16 %v275
    %v484 = vunpack.c.l.b16 %v276
    %v485 = vunpack.c.l.b16 %v277
    %v486 = vunpack.c.l.b16 %v278
    %v487 = vunpack.c.l.b16 %v279
    %v488 = vunpack.c.l.b16 %v280
    %v489 = vunpack.c.l.b16 %v281
    %v490 = vunpack.c.l.b16 %v282
    %v491 = vunpack.c.l.b16 %v283
    %v492 = vunpack.c.l.b16 %v284
    %v493 = vunpack.c.l.b16 %v285
    %v494 = vpack.c.b16 %v431, %v430
    %v495 = vpack.c.b16 %v433, %v432
    %v496 = vpack.c.b16 %v435, %v434
    %v497 = vpack.c.b16 %v437, %v436
    %v498 = vpack.c.b16 %v439, %v438
    %v499 = vpack.c.b16 %v441, %v440
    %v500 = vpack.c.b16 %v443, %v442
    %v501 = vpack.c.b16 %v445, %v444
    %v502 = vpack.c.b16 %v447, %v446
    %v503 = vpack.c.b16 %v449, %v448
    %v504 = vpack.c.b16 %v451, %v450
    %v505 = vpack.c.b16 %v453, %v452
    %v506 = vpack.c.b16 %v455, %v454
    %v507 = vpack.c.b16 %v457, %v456
    %v508 = vpack.c.b16 %v459, %v458
    %v509 = vpack.c.b16 %v461, %v460
    %v510 = vpack.c.b16 %v463, %v462
    %v511 = vpack.c.b16 %v465, %v464
    %v512 = vpack.c.b16 %v467, %v466
    %v513 = vpack.c.b16 %v469, %v468
    %v514 = vpack.c.b16 %v471, %v470
    %v515 = vpack.c.b16 %v473, %v472
    %v516 = vpack.c.b16 %v475, %v474
    %v517 = vpack.c.b16 %v477, %v476
    %v518 = vpack.c.b16 %v479, %v478
    %v519 = vpack.c.b16 %v481, %v480
    %v520 = vpack.c.b16 %v483, %v482
    %v521 = vpack.c.b16 %v485, %v484
    %v522 = vpack.c.b16 %v487, %v486
    %v523 = vpack.c.b16 %v489, %v488
    %v524 = vpack.c.b16 %v491, %v490
    %v525 = vpack.c.b16 %v493, %v492
    %558 = vmatprep.subr.bf16.mxu0 0
    %559 = vmatpush1.bf16.msra.mxu0 %v494
    %560 = vmatprep.subr.bf16.mxu0 0
    %561 = vmatpush1.bf16.msra.mxu0 %v495
    %562 = vmatprep.subr.bf16.mxu0 0
    %563 = vmatpush1.bf16.msra.mxu0 %v496
    %564 = vmatprep.subr.bf16.mxu0 0
    %565 = vmatpush1.bf16.msra.mxu0 %v497
    %566 = vmatprep.subr.bf16.mxu0 0
    %567 = vmatpush1.bf16.msra.mxu0 %v498
    %568 = vmatprep.subr.bf16.mxu0 0
    %569 = vmatpush1.bf16.msra.mxu0 %v499
    %570 = vmatprep.subr.bf16.mxu0 0
    %571 = vmatpush1.bf16.msra.mxu0 %v500
    %572 = vmatprep.subr.bf16.mxu0 0
    %573 = vmatpush1.bf16.msra.mxu0 %v501
    %574 = vmatprep.subr.bf16.mxu0 0
    %575 = vmatpush1.bf16.msra.mxu0 %v502
    %576 = vmatprep.subr.bf16.mxu0 0
    %577 = vmatpush1.bf16.msra.mxu0 %v503
    %578 = vmatprep.subr.bf16.mxu0 0
    %579 = vmatpush1.bf16.msra.mxu0 %v504
    %580 = vmatprep.subr.bf16.mxu0 0
    %581 = vmatpush1.bf16.msra.mxu0 %v505
    %582 = vmatprep.subr.bf16.mxu0 0
    %583 = vmatpush1.bf16.msra.mxu0 %v506
    %584 = vmatprep.subr.bf16.mxu0 0
    %585 = vmatpush1.bf16.msra.mxu0 %v507
    %586 = vmatprep.subr.bf16.mxu0 0
    %587 = vmatpush1.bf16.msra.mxu0 %v508
    %588 = vmatprep.subr.bf16.mxu0 0
    %589 = vmatpush1.bf16.msra.mxu0 %v509
    %590 = vmatprep.mubr.bf16.mxu0 %v319
    %591 = vmatmul.mubr.bf16.gmra.mrb[0].mxu0 %v318
    %v592 = vpop.f32.mrb[0].mxu0
    %v593 = vadd.f32 0.0, %v592
    %v594 = vpop.f32.mrb[0].mxu0
    %v595 = vpop.f32.mrb[0].mxu0
    %v596 = vadd.f32 0.0, %v595
    %v597 = vpop.f32.mrb[0].mxu0
    %598 = vmatprep.mubr.bf16.mxu0 %v355
    %599 = vmatmul.mubr.bf16.gmra.mrb[0].mxu0 %v354
    %v600 = vpop.f32.mrb[0].mxu0
    %v601 = vadd.f32 0.0, %v600
    %v602 = vpop.f32.mrb[0].mxu0
    %v603 = vpop.f32.mrb[0].mxu0
    %v604 = vadd.f32 0.0, %v603
    %v605 = vpop.f32.mrb[0].mxu0
    %606 = vdwg.mxu0
    %607 = vmatprep.subr.bf16.mxu0 0
    %608 = vmatpush1.bf16.msra.mxu0 %v510
    %609 = vmatprep.subr.bf16.mxu0 0
    %610 = vmatpush1.bf16.msra.mxu0 %v511
    %611 = vmatprep.subr.bf16.mxu0 0
    %612 = vmatpush1.bf16.msra.mxu0 %v512
    %613 = vmatprep.subr.bf16.mxu0 0
    %614 = vmatpush1.bf16.msra.mxu0 %v513
    %615 = vmatprep.subr.bf16.mxu0 0
    %616 = vmatpush1.bf16.msra.mxu0 %v514
    %617 = vmatprep.subr.bf16.mxu0 0
    %618 = vmatpush1.bf16.msra.mxu0 %v515
    %619 = vmatprep.subr.bf16.mxu0 0
    %620 = vmatpush1.bf16.msra.mxu0 %v516
    %621 = vmatprep.subr.bf16.mxu0 0
    %622 = vmatpush1.bf16.msra.mxu0 %v517
    %623 = vmatprep.subr.bf16.mxu0 0
    %624 = vmatpush1.bf16.msra.mxu0 %v518
    %625 = vmatprep.subr.bf16.mxu0 0
    %626 = vmatpush1.bf16.msra.mxu0 %v519
    %627 = vmatprep.subr.bf16.mxu0 0
    %628 = vmatpush1.bf16.msra.mxu0 %v520
    %629 = vmatprep.subr.bf16.mxu0 0
    %630 = vmatpush1.bf16.msra.mxu0 %v521
    %631 = vmatprep.subr.bf16.mxu0 0
    %632 = vmatpush1.bf16.msra.mxu0 %v522
    %633 = vmatprep.subr.bf16.mxu0 0
    %634 = vmatpush1.bf16.msra.mxu0 %v523
    %635 = vmatprep.subr.bf16.mxu0 0
    %636 = vmatpush1.bf16.msra.mxu0 %v524
    %637 = vmatprep.subr.bf16.mxu0 0
    %638 = vmatpush1.bf16.msra.mxu0 %v525
    %639 = vmatprep.mubr.bf16.mxu0 %v321
    %640 = vmatmul.mubr.bf16.gmra.mrb[0].mxu0 %v320
    %v641 = vpop.f32.mrb[0].mxu0
    %v642 = vadd.f32 %v593, %v641
    %v643 = vpop.f32.mrb[0].mxu0
    %v644 = vpop.f32.mrb[0].mxu0
    %v645 = vadd.f32 %v596, %v644
    %v646 = vpop.f32.mrb[0].mxu0
    %647 = vmatprep.mubr.bf16.mxu0 %v357
    %648 = vmatmul.mubr.bf16.gmra.mrb[0].mxu0 %v356
    %v649 = vpop.f32.mrb[0].mxu0
    %v650 = vadd.f32 %v601, %v649
    %v651 = vpop.f32.mrb[0].mxu0
    %v652 = vpop.f32.mrb[0].mxu0
    %v653 = vadd.f32 %v604, %v652
    %v654 = vpop.f32.mrb[0].mxu0
    %655 = vdwg.mxu0
    %656 = vst [vmem:[#allocation2] sm:$0xff] %v642
    %657 = vst [vmem:[#allocation2 + $0x8] sm:$0xff] %v645
    %658 = vst [vmem:[#allocation2 + $0x10] sm:$0xff] %v650
    %659 = vst [vmem:[#allocation2 + $0x18] sm:$0xff] %v653
    %v660 = vld [vmem:[#allocation3] sm:$0x77]
    %v661 = vld [vmem:[#allocation3 + $0x8] sm:$0x77]
    %v662 = vld [vmem:[#allocation3 + $0x10] sm:$0x77]
    %v663 = vld [vmem:[#allocation3 + $0x18] sm:$0x77]
    %v664 = vld [vmem:[#allocation3 + $0x20] sm:$0x77]
    %v665 = vld [vmem:[#allocation3 + $0x28] sm:$0x77]
    %v666 = vld [vmem:[#allocation3 + $0x30] sm:$0x77]
    %v667 = vld [vmem:[#allocation3 + $0x38] sm:$0x77]
    %v668 = vld [vmem:[#allocation3 + $0x50] sm:$0x77]
    %v669 = vld [vmem:[#allocation3 + $0x58] sm:$0x77]
    %v670 = vld [vmem:[#allocation3 + $0x60] sm:$0x77]
    %v671 = vld [vmem:[#allocation3 + $0x68] sm:$0x77]
    %v672 = vld [vmem:[#allocation3 + $0x70] sm:$0x77]
    %v673 = vld [vmem:[#allocation3 + $0x78] sm:$0x77]
    %v674 = vld [vmem:[#allocation3 + $0x80] sm:$0x77]
    %v675 = vld [vmem:[#allocation3 + $0x88] sm:$0x77]
    %v693 = vunpack.c.l.s4 1983009808
    %v694 = vunpack.c.0.s8 %v693
    %v695 = vlaneseq
    %v696 = vshrl.u32 %v695, 7
    %v697 = vsub.s32 %v694, %v696
    %v698 = vrot.slane %v660, %v697
    %v700 = vunpack.c.l.s4 1983009808
    %v701 = vunpack.c.0.s8 %v700
    %v702 = vlaneseq
    %v703 = vshrl.u32 %v702, 7
    %v704 = vsub.s32 %v701, %v703
    %v705 = vrot.slane %v661, %v704
    %v706 = vcombine.low %v698, %v705
    %v707 = vcombine.high %v698, %v705
    %v709 = vunpack.c.l.s4 1983009808
    %v710 = vunpack.c.0.s8 %v709
    %v711 = vlaneseq
    %v712 = vshrl.u32 %v711, 7
    %v713 = vsub.s32 %v710, %v712
    %v714 = vrot.slane %v662, %v713
    %v716 = vunpack.c.l.s4 1983009808
    %v717 = vunpack.c.0.s8 %v716
    %v718 = vlaneseq
    %v719 = vshrl.u32 %v718, 7
    %v720 = vsub.s32 %v717, %v719
    %v721 = vrot.slane %v663, %v720
    %v722 = vcombine.low %v714, %v721
    %v723 = vcombine.high %v714, %v721
    %v725 = vunpack.c.l.s4 1983009808
    %v726 = vunpack.c.0.s8 %v725
    %v727 = vlaneseq
    %v728 = vshrl.u32 %v727, 7
    %v729 = vsub.s32 %v726, %v728
    %v730 = vrot.slane %v664, %v729
    %v732 = vunpack.c.l.s4 1983009808
    %v733 = vunpack.c.0.s8 %v732
    %v734 = vlaneseq
    %v735 = vshrl.u32 %v734, 7
    %v736 = vsub.s32 %v733, %v735
    %v737 = vrot.slane %v665, %v736
    %v738 = vcombine.low %v730, %v737
    %v739 = vcombine.high %v730, %v737
    %v741 = vunpack.c.l.s4 1983009808
    %v742 = vunpack.c.0.s8 %v741
    %v743 = vlaneseq
    %v744 = vshrl.u32 %v743, 7
    %v745 = vsub.s32 %v742, %v744
    %v746 = vrot.slane %v666, %v745
    %v748 = vunpack.c.l.s4 1983009808
    %v749 = vunpack.c.0.s8 %v748
    %v750 = vlaneseq
    %v751 = vshrl.u32 %v750, 7
    %v752 = vsub.s32 %v749, %v751
    %v753 = vrot.slane %v667, %v752
    %v754 = vcombine.low %v746, %v753
    %v755 = vcombine.high %v746, %v753
    %v757 = vunpack.c.l.s4 1983009808
    %v758 = vunpack.c.0.s8 %v757
    %v759 = vlaneseq
    %v760 = vshrl.u32 %v759, 7
    %v761 = vsub.s32 %v758, %v760
    %v762 = vrot.slane %v668, %v761
    %v764 = vunpack.c.l.s4 1983009808
    %v765 = vunpack.c.0.s8 %v764
    %v766 = vlaneseq
    %v767 = vshrl.u32 %v766, 7
    %v768 = vsub.s32 %v765, %v767
    %v769 = vrot.slane %v669, %v768
    %v770 = vcombine.low %v762, %v769
    %v771 = vcombine.high %v762, %v769
    %v773 = vunpack.c.l.s4 1983009808
    %v774 = vunpack.c.0.s8 %v773
    %v775 = vlaneseq
    %v776 = vshrl.u32 %v775, 7
    %v777 = vsub.s32 %v774, %v776
    %v778 = vrot.slane %v670, %v777
    %v780 = vunpack.c.l.s4 1983009808
    %v781 = vunpack.c.0.s8 %v780
    %v782 = vlaneseq
    %v783 = vshrl.u32 %v782, 7
    %v784 = vsub.s32 %v781, %v783
    %v785 = vrot.slane %v671, %v784
    %v786 = vcombine.low %v778, %v785
    %v787 = vcombine.high %v778, %v785
    %v789 = vunpack.c.l.s4 1983009808
    %v790 = vunpack.c.0.s8 %v789
    %v791 = vlaneseq
    %v792 = vshrl.u32 %v791, 7
    %v793 = vsub.s32 %v790, %v792
    %v794 = vrot.slane %v672, %v793
    %v796 = vunpack.c.l.s4 1983009808
    %v797 = vunpack.c.0.s8 %v796
    %v798 = vlaneseq
    %v799 = vshrl.u32 %v798, 7
    %v800 = vsub.s32 %v797, %v799
    %v801 = vrot.slane %v673, %v800
    %v802 = vcombine.low %v794, %v801
    %v803 = vcombine.high %v794, %v801
    %v805 = vunpack.c.l.s4 1983009808
    %v806 = vunpack.c.0.s8 %v805
    %v807 = vlaneseq
    %v808 = vshrl.u32 %v807, 7
    %v809 = vsub.s32 %v806, %v808
    %v810 = vrot.slane %v674, %v809
    %v812 = vunpack.c.l.s4 1983009808
    %v813 = vunpack.c.0.s8 %v812
    %v814 = vlaneseq
    %v815 = vshrl.u32 %v814, 7
    %v816 = vsub.s32 %v813, %v815
    %v817 = vrot.slane %v675, %v816
    %v818 = vcombine.low %v810, %v817
    %v819 = vcombine.high %v810, %v817
    %vm820 = vsmask.f32 1280
    %vm821 = vsmask.f32 3336
    %vm822 = vmor %vm820, %vm821
    %vm823 = vsmask.f32 5392
    %vm824 = vmor %vm822, %vm823
    %vm825 = vsmask.f32 7448
    %vm826 = vmor %vm824, %vm825
    %v828 = vshrl.u32 %v706, 16
    %v830 = vrot.slane %v828, 6
    %v831 = vshll.u32 %v706, 16
    %v833 = vrot.slane %v831, 7
    %v834 = vor.u32 %v830, %v833
    %v835 = vrot.slane %v834, 2
    %v837 = vshll.u32 %v707, 16
    %v839 = vrot.slane %v837, 7
    %v840 = vsel %vm826, %v835, %v839
    %v842 = vshrl.u32 %v722, 16
    %v844 = vrot.slane %v842, 6
    %v845 = vshll.u32 %v722, 16
    %v847 = vrot.slane %v845, 7
    %v848 = vor.u32 %v844, %v847
    %v849 = vrot.slane %v848, 2
    %v851 = vshll.u32 %v723, 16
    %v853 = vrot.slane %v851, 7
    %v854 = vsel %vm826, %v849, %v853
    %v856 = vshrl.u32 %v738, 16
    %v858 = vrot.slane %v856, 6
    %v859 = vshll.u32 %v738, 16
    %v861 = vrot.slane %v859, 7
    %v862 = vor.u32 %v858, %v861
    %v863 = vrot.slane %v862, 2
    %v865 = vshll.u32 %v739, 16
    %v867 = vrot.slane %v865, 7
    %v868 = vsel %vm826, %v863, %v867
    %v870 = vshrl.u32 %v754, 16
    %v872 = vrot.slane %v870, 6
    %v873 = vshll.u32 %v754, 16
    %v875 = vrot.slane %v873, 7
    %v876 = vor.u32 %v872, %v875
    %v877 = vrot.slane %v876, 2
    %v879 = vshll.u32 %v755, 16
    %v881 = vrot.slane %v879, 7
    %v882 = vsel %vm826, %v877, %v881
    %v884 = vshrl.u32 %v770, 16
    %v886 = vrot.slane %v884, 6
    %v887 = vshll.u32 %v770, 16
    %v889 = vrot.slane %v887, 7
    %v890 = vor.u32 %v886, %v889
    %v891 = vrot.slane %v890, 2
    %v893 = vshll.u32 %v771, 16
    %v895 = vrot.slane %v893, 7
    %v896 = vsel %vm826, %v891, %v895
    %v898 = vshrl.u32 %v786, 16
    %v900 = vrot.slane %v898, 6
    %v901 = vshll.u32 %v786, 16
    %v903 = vrot.slane %v901, 7
    %v904 = vor.u32 %v900, %v903
    %v905 = vrot.slane %v904, 2
    %v907 = vshll.u32 %v787, 16
    %v909 = vrot.slane %v907, 7
    %v910 = vsel %vm826, %v905, %v909
    %v912 = vshrl.u32 %v802, 16
    %v914 = vrot.slane %v912, 6
    %v915 = vshll.u32 %v802, 16
    %v917 = vrot.slane %v915, 7
    %v918 = vor.u32 %v914, %v917
    %v919 = vrot.slane %v918, 2
    %v921 = vshll.u32 %v803, 16
    %v923 = vrot.slane %v921, 7
    %v924 = vsel %vm826, %v919, %v923
    %v926 = vshrl.u32 %v818, 16
    %v928 = vrot.slane %v926, 6
    %v929 = vshll.u32 %v818, 16
    %v931 = vrot.slane %v929, 7
    %v932 = vor.u32 %v928, %v931
    %v933 = vrot.slane %v932, 2
    %v935 = vshll.u32 %v819, 16
    %v937 = vrot.slane %v935, 7
    %v938 = vsel %vm826, %v933, %v937
    %s939 = scalar_lea.vmem [#allocation6], 256
    %v940 = vld [vmem:[%s939] sm:$0xf]
    %v941 = vld [vmem:[%s939 + $0x4] sm:$0xf]
    %v942 = vld [vmem:[%s939 + $0x8] sm:$0xf]
    %v943 = vld [vmem:[%s939 + $0xc] sm:$0xf]
    %v944 = vld [vmem:[%s939 + $0x10] sm:$0xf]
    %v945 = vld [vmem:[%s939 + $0x14] sm:$0xf]
    %v946 = vld [vmem:[%s939 + $0x18] sm:$0xf]
    %v947 = vld [vmem:[%s939 + $0x1c] sm:$0xf]
    %v948 = vld [vmem:[%s939 + $0x20] sm:$0xf]
    %v949 = vld [vmem:[%s939 + $0x24] sm:$0xf]
    %v950 = vld [vmem:[%s939 + $0x28] sm:$0xf]
    %v951 = vld [vmem:[%s939 + $0x2c] sm:$0xf]
    %v952 = vld [vmem:[%s939 + $0x30] sm:$0xf]
    %v953 = vld [vmem:[%s939 + $0x34] sm:$0xf]
    %v954 = vld [vmem:[%s939 + $0x38] sm:$0xf]
    %v955 = vld [vmem:[%s939 + $0x3c] sm:$0xf]
    %v956 = vld [vmem:[%s939 + $0x40] sm:$0xf]
    %v957 = vld [vmem:[%s939 + $0x44] sm:$0xf]
    %v958 = vld [vmem:[%s939 + $0x48] sm:$0xf]
    %v959 = vld [vmem:[%s939 + $0x4c] sm:$0xf]
    %v960 = vld [vmem:[%s939 + $0x50] sm:$0xf]
    %v961 = vld [vmem:[%s939 + $0x54] sm:$0xf]
    %v962 = vld [vmem:[%s939 + $0x58] sm:$0xf]
    %v963 = vld [vmem:[%s939 + $0x5c] sm:$0xf]
    %v964 = vld [vmem:[%s939 + $0x60] sm:$0xf]
    %v965 = vld [vmem:[%s939 + $0x64] sm:$0xf]
    %v966 = vld [vmem:[%s939 + $0x68] sm:$0xf]
    %v967 = vld [vmem:[%s939 + $0x6c] sm:$0xf]
    %v968 = vld [vmem:[%s939 + $0x70] sm:$0xf]
    %v969 = vld [vmem:[%s939 + $0x74] sm:$0xf]
    %v970 = vld [vmem:[%s939 + $0x78] sm:$0xf]
    %v971 = vld [vmem:[%s939 + $0x7c] sm:$0xf]
    %v972 = vld [vmem:[%s939 + $0x80] sm:$0xf]
    %v973 = vld [vmem:[%s939 + $0x84] sm:$0xf]
    %v974 = vld [vmem:[%s939 + $0x88] sm:$0xf]
    %v975 = vld [vmem:[%s939 + $0x8c] sm:$0xf]
    %v976 = vld [vmem:[%s939 + $0x90] sm:$0xf]
    %v977 = vld [vmem:[%s939 + $0x94] sm:$0xf]
    %v978 = vld [vmem:[%s939 + $0x98] sm:$0xf]
    %v979 = vld [vmem:[%s939 + $0x9c] sm:$0xf]
    %v980 = vld [vmem:[%s939 + $0xa0] sm:$0xf]
    %v981 = vld [vmem:[%s939 + $0xa4] sm:$0xf]
    %v982 = vld [vmem:[%s939 + $0xa8] sm:$0xf]
    %v983 = vld [vmem:[%s939 + $0xac] sm:$0xf]
    %v984 = vld [vmem:[%s939 + $0xb0] sm:$0xf]
    %v985 = vld [vmem:[%s939 + $0xb4] sm:$0xf]
    %v986 = vld [vmem:[%s939 + $0xb8] sm:$0xf]
    %v987 = vld [vmem:[%s939 + $0xbc] sm:$0xf]
    %v988 = vld [vmem:[%s939 + $0xc0] sm:$0xf]
    %v989 = vld [vmem:[%s939 + $0xc4] sm:$0xf]
    %v990 = vld [vmem:[%s939 + $0xc8] sm:$0xf]
    %v991 = vld [vmem:[%s939 + $0xcc] sm:$0xf]
    %v992 = vld [vmem:[%s939 + $0xd0] sm:$0xf]
    %v993 = vld [vmem:[%s939 + $0xd4] sm:$0xf]
    %v994 = vld [vmem:[%s939 + $0xd8] sm:$0xf]
    %v995 = vld [vmem:[%s939 + $0xdc] sm:$0xf]
    %v996 = vld [vmem:[%s939 + $0xe0] sm:$0xf]
    %v997 = vld [vmem:[%s939 + $0xe4] sm:$0xf]
    %v998 = vld [vmem:[%s939 + $0xe8] sm:$0xf]
    %v999 = vld [vmem:[%s939 + $0xec] sm:$0xf]
    %v1000 = vld [vmem:[%s939 + $0xf0] sm:$0xf]
    %v1001 = vld [vmem:[%s939 + $0xf4] sm:$0xf]
    %v1002 = vld [vmem:[%s939 + $0xf8] sm:$0xf]
    %v1003 = vld [vmem:[%s939 + $0xfc] sm:$0xf]
    %v1004 = vcombine.low %v840, %v854
    %v1005 = vcombine.high %v840, %v854
    %v1006 = vcombine.low %v868, %v882
    %v1007 = vcombine.high %v868, %v882
    %v1009 = vunpack.c.l.s4 1983009808
    %v1010 = vunpack.c.0.s8 %v1009
    %v1011 = vlaneseq
    %v1012 = vshrl.u32 %v1011, 7
    %v1013 = vsub.s32 %v1010, %v1012
    %v1014 = vrot.slane %v1004, %v1013
    %v1016 = vunpack.c.l.s4 1983009808
    %v1017 = vunpack.c.0.s8 %v1016
    %v1018 = vlaneseq
    %v1019 = vshrl.u32 %v1018, 7
    %v1020 = vsub.s32 %v1017, %v1019
    %v1021 = vrot.slane %v1005, %v1020
    %v1023 = vunpack.c.l.s4 1983009808
    %v1024 = vunpack.c.0.s8 %v1023
    %v1025 = vlaneseq
    %v1026 = vshrl.u32 %v1025, 7
    %v1027 = vsub.s32 %v1024, %v1026
    %v1028 = vrot.slane %v1006, %v1027
    %v1030 = vunpack.c.l.s4 1983009808
    %v1031 = vunpack.c.0.s8 %v1030
    %v1032 = vlaneseq
    %v1033 = vshrl.u32 %v1032, 7
    %v1034 = vsub.s32 %v1031, %v1033
    %v1035 = vrot.slane %v1007, %v1034
    %v1036 = vcombine.low %v1014, %v1028
    %v1037 = vcombine.high %v1014, %v1028
    %v1038 = vcombine.low %v1021, %v1035
    %v1039 = vcombine.high %v1021, %v1035
    %v1040 = vcombine.low %v896, %v910
    %v1041 = vcombine.high %v896, %v910
    %v1042 = vcombine.low %v924, %v938
    %v1043 = vcombine.high %v924, %v938
    %v1045 = vunpack.c.l.s4 1983009808
    %v1046 = vunpack.c.0.s8 %v1045
    %v1047 = vlaneseq
    %v1048 = vshrl.u32 %v1047, 7
    %v1049 = vsub.s32 %v1046, %v1048
    %v1050 = vrot.slane %v1040, %v1049
    %v1052 = vunpack.c.l.s4 1983009808
    %v1053 = vunpack.c.0.s8 %v1052
    %v1054 = vlaneseq
    %v1055 = vshrl.u32 %v1054, 7
    %v1056 = vsub.s32 %v1053, %v1055
    %v1057 = vrot.slane %v1041, %v1056
    %v1059 = vunpack.c.l.s4 1983009808
    %v1060 = vunpack.c.0.s8 %v1059
    %v1061 = vlaneseq
    %v1062 = vshrl.u32 %v1061, 7
    %v1063 = vsub.s32 %v1060, %v1062
    %v1064 = vrot.slane %v1042, %v1063
    %v1066 = vunpack.c.l.s4 1983009808
    %v1067 = vunpack.c.0.s8 %v1066
    %v1068 = vlaneseq
    %v1069 = vshrl.u32 %v1068, 7
    %v1070 = vsub.s32 %v1067, %v1069
    %v1071 = vrot.slane %v1043, %v1070
    %v1072 = vcombine.low %v1050, %v1064
    %v1073 = vcombine.high %v1050, %v1064
    %v1074 = vcombine.low %v1057, %v1071
    %v1075 = vcombine.high %v1057, %v1071
    %v1148 = vunpack.c.l.b16 %v940
    %v1149 = vunpack.c.l.b16 %v941
    %v1150 = vunpack.c.l.b16 %v942
    %v1151 = vunpack.c.l.b16 %v943
    %v1152 = vunpack.c.l.b16 %v944
    %v1153 = vunpack.c.l.b16 %v945
    %v1154 = vunpack.c.l.b16 %v946
    %v1155 = vunpack.c.l.b16 %v947
    %v1156 = vunpack.c.l.b16 %v948
    %v1157 = vunpack.c.l.b16 %v949
    %v1158 = vunpack.c.l.b16 %v950
    %v1159 = vunpack.c.l.b16 %v951
    %v1160 = vunpack.c.l.b16 %v952
    %v1161 = vunpack.c.l.b16 %v953
    %v1162 = vunpack.c.l.b16 %v954
    %v1163 = vunpack.c.l.b16 %v955
    %v1164 = vunpack.c.l.b16 %v956
    %v1165 = vunpack.c.l.b16 %v957
    %v1166 = vunpack.c.l.b16 %v958
    %v1167 = vunpack.c.l.b16 %v959
    %v1168 = vunpack.c.l.b16 %v960
    %v1169 = vunpack.c.l.b16 %v961
    %v1170 = vunpack.c.l.b16 %v962
    %v1171 = vunpack.c.l.b16 %v963
    %v1172 = vunpack.c.l.b16 %v964
    %v1173 = vunpack.c.l.b16 %v965
    %v1174 = vunpack.c.l.b16 %v966
    %v1175 = vunpack.c.l.b16 %v967
    %v1176 = vunpack.c.l.b16 %v968
    %v1177 = vunpack.c.l.b16 %v969
    %v1178 = vunpack.c.l.b16 %v970
    %v1179 = vunpack.c.l.b16 %v971
    %v1180 = vunpack.c.l.b16 %v972
    %v1181 = vunpack.c.l.b16 %v973
    %v1182 = vunpack.c.l.b16 %v974
    %v1183 = vunpack.c.l.b16 %v975
    %v1184 = vunpack.c.l.b16 %v976
    %v1185 = vunpack.c.l.b16 %v977
    %v1186 = vunpack.c.l.b16 %v978
    %v1187 = vunpack.c.l.b16 %v979
    %v1188 = vunpack.c.l.b16 %v980
    %v1189 = vunpack.c.l.b16 %v981
    %v1190 = vunpack.c.l.b16 %v982
    %v1191 = vunpack.c.l.b16 %v983
    %v1192 = vunpack.c.l.b16 %v984
    %v1193 = vunpack.c.l.b16 %v985
    %v1194 = vunpack.c.l.b16 %v986
    %v1195 = vunpack.c.l.b16 %v987
    %v1196 = vunpack.c.l.b16 %v988
    %v1197 = vunpack.c.l.b16 %v989
    %v1198 = vunpack.c.l.b16 %v990
    %v1199 = vunpack.c.l.b16 %v991
    %v1200 = vunpack.c.l.b16 %v992
    %v1201 = vunpack.c.l.b16 %v993
    %v1202 = vunpack.c.l.b16 %v994
    %v1203 = vunpack.c.l.b16 %v995
    %v1204 = vunpack.c.l.b16 %v996
    %v1205 = vunpack.c.l.b16 %v997
    %v1206 = vunpack.c.l.b16 %v998
    %v1207 = vunpack.c.l.b16 %v999
    %v1208 = vunpack.c.l.b16 %v1000
    %v1209 = vunpack.c.l.b16 %v1001
    %v1210 = vunpack.c.l.b16 %v1002
    %v1211 = vunpack.c.l.b16 %v1003
    %v1212 = vpack.c.b16 %v1149, %v1148
    %v1213 = vpack.c.b16 %v1151, %v1150
    %v1214 = vpack.c.b16 %v1153, %v1152
    %v1215 = vpack.c.b16 %v1155, %v1154
    %v1216 = vpack.c.b16 %v1157, %v1156
    %v1217 = vpack.c.b16 %v1159, %v1158
    %v1218 = vpack.c.b16 %v1161, %v1160
    %v1219 = vpack.c.b16 %v1163, %v1162
    %v1220 = vpack.c.b16 %v1165, %v1164
    %v1221 = vpack.c.b16 %v1167, %v1166
    %v1222 = vpack.c.b16 %v1169, %v1168
    %v1223 = vpack.c.b16 %v1171, %v1170
    %v1224 = vpack.c.b16 %v1173, %v1172
    %v1225 = vpack.c.b16 %v1175, %v1174
    %v1226 = vpack.c.b16 %v1177, %v1176
    %v1227 = vpack.c.b16 %v1179, %v1178
    %v1228 = vpack.c.b16 %v1181, %v1180
    %v1229 = vpack.c.b16 %v1183, %v1182
    %v1230 = vpack.c.b16 %v1185, %v1184
    %v1231 = vpack.c.b16 %v1187, %v1186
    %v1232 = vpack.c.b16 %v1189, %v1188
    %v1233 = vpack.c.b16 %v1191, %v1190
    %v1234 = vpack.c.b16 %v1193, %v1192
    %v1235 = vpack.c.b16 %v1195, %v1194
    %v1236 = vpack.c.b16 %v1197, %v1196
    %v1237 = vpack.c.b16 %v1199, %v1198
    %v1238 = vpack.c.b16 %v1201, %v1200
    %v1239 = vpack.c.b16 %v1203, %v1202
    %v1240 = vpack.c.b16 %v1205, %v1204
    %v1241 = vpack.c.b16 %v1207, %v1206
    %v1242 = vpack.c.b16 %v1209, %v1208
    %v1243 = vpack.c.b16 %v1211, %v1210
    %1276 = vmatprep.subr.bf16.mxu0 0
    %1277 = vmatpush1.bf16.msra.mxu0 %v1212
    %1278 = vmatprep.subr.bf16.mxu0 0
    %1279 = vmatpush1.bf16.msra.mxu0 %v1213
    %1280 = vmatprep.subr.bf16.mxu0 0
    %1281 = vmatpush1.bf16.msra.mxu0 %v1214
    %1282 = vmatprep.subr.bf16.mxu0 0
    %1283 = vmatpush1.bf16.msra.mxu0 %v1215
    %1284 = vmatprep.subr.bf16.mxu0 0
    %1285 = vmatpush1.bf16.msra.mxu0 %v1216
    %1286 = vmatprep.subr.bf16.mxu0 0
    %1287 = vmatpush1.bf16.msra.mxu0 %v1217
    %1288 = vmatprep.subr.bf16.mxu0 0
    %1289 = vmatpush1.bf16.msra.mxu0 %v1218
    %1290 = vmatprep.subr.bf16.mxu0 0
    %1291 = vmatpush1.bf16.msra.mxu0 %v1219
    %1292 = vmatprep.subr.bf16.mxu0 0
    %1293 = vmatpush1.bf16.msra.mxu0 %v1220
    %1294 = vmatprep.subr.bf16.mxu0 0
    %1295 = vmatpush1.bf16.msra.mxu0 %v1221
    %1296 = vmatprep.subr.bf16.mxu0 0
    %1297 = vmatpush1.bf16.msra.mxu0 %v1222
    %1298 = vmatprep.subr.bf16.mxu0 0
    %1299 = vmatpush1.bf16.msra.mxu0 %v1223
    %1300 = vmatprep.subr.bf16.mxu0 0
    %1301 = vmatpush1.bf16.msra.mxu0 %v1224
    %1302 = vmatprep.subr.bf16.mxu0 0
    %1303 = vmatpush1.bf16.msra.mxu0 %v1225
    %1304 = vmatprep.subr.bf16.mxu0 0
    %1305 = vmatpush1.bf16.msra.mxu0 %v1226
    %1306 = vmatprep.subr.bf16.mxu0 0
    %1307 = vmatpush1.bf16.msra.mxu0 %v1227
    %1308 = vmatprep.mubr.bf16.mxu0 %v1037
    %1309 = vmatmul.mubr.bf16.gmra.mrb[0].mxu0 %v1036
    %v1310 = vpop.f32.mrb[0].mxu0
    %v1311 = vadd.f32 0.0, %v1310
    %v1312 = vpop.f32.mrb[0].mxu0
    %v1313 = vpop.f32.mrb[0].mxu0
    %v1314 = vadd.f32 0.0, %v1313
    %v1315 = vpop.f32.mrb[0].mxu0
    %1316 = vmatprep.mubr.bf16.mxu0 %v1073
    %1317 = vmatmul.mubr.bf16.gmra.mrb[0].mxu0 %v1072
    %v1318 = vpop.f32.mrb[0].mxu0
    %v1319 = vadd.f32 0.0, %v1318
    %v1320 = vpop.f32.mrb[0].mxu0
    %v1321 = vpop.f32.mrb[0].mxu0
    %v1322 = vadd.f32 0.0, %v1321
    %v1323 = vpop.f32.mrb[0].mxu0
    %1324 = vdwg.mxu0
    %1325 = vmatprep.subr.bf16.mxu0 0
    %1326 = vmatpush1.bf16.msra.mxu0 %v1228
    %1327 = vmatprep.subr.bf16.mxu0 0
    %1328 = vmatpush1.bf16.msra.mxu0 %v1229
    %1329 = vmatprep.subr.bf16.mxu0 0
    %1330 = vmatpush1.bf16.msra.mxu0 %v1230
    %1331 = vmatprep.subr.bf16.mxu0 0
    %1332 = vmatpush1.bf16.msra.mxu0 %v1231
    %1333 = vmatprep.subr.bf16.mxu0 0
    %1334 = vmatpush1.bf16.msra.mxu0 %v1232
    %1335 = vmatprep.subr.bf16.mxu0 0
    %1336 = vmatpush1.bf16.msra.mxu0 %v1233
    %1337 = vmatprep.subr.bf16.mxu0 0
    %1338 = vmatpush1.bf16.msra.mxu0 %v1234
    %1339 = vmatprep.subr.bf16.mxu0 0
    %1340 = vmatpush1.bf16.msra.mxu0 %v1235
    %1341 = vmatprep.subr.bf16.mxu0 0
    %1342 = vmatpush1.bf16.msra.mxu0 %v1236
    %1343 = vmatprep.subr.bf16.mxu0 0
    %1344 = vmatpush1.bf16.msra.mxu0 %v1237
    %1345 = vmatprep.subr.bf16.mxu0 0
    %1346 = vmatpush1.bf16.msra.mxu0 %v1238
    %1347 = vmatprep.subr.bf16.mxu0 0
    %1348 = vmatpush1.bf16.msra.mxu0 %v1239
    %1349 = vmatprep.subr.bf16.mxu0 0
    %1350 = vmatpush1.bf16.msra.mxu0 %v1240
    %1351 = vmatprep.subr.bf16.mxu0 0
    %1352 = vmatpush1.bf16.msra.mxu0 %v1241
    %1353 = vmatprep.subr.bf16.mxu0 0
    %1354 = vmatpush1.bf16.msra.mxu0 %v1242
    %1355 = vmatprep.subr.bf16.mxu0 0
    %1356 = vmatpush1.bf16.msra.mxu0 %v1243
    %1357 = vmatprep.mubr.bf16.mxu0 %v1039
    %1358 = vmatmul.mubr.bf16.gmra.mrb[0].mxu0 %v1038
    %v1359 = vpop.f32.mrb[0].mxu0
    %v1360 = vadd.f32 %v1311, %v1359
    %v1361 = vpop.f32.mrb[0].mxu0
    %v1362 = vpop.f32.mrb[0].mxu0
    %v1363 = vadd.f32 %v1314, %v1362
    %v1364 = vpop.f32.mrb[0].mxu0
    %1365 = vmatprep.mubr.bf16.mxu0 %v1075
    %1366 = vmatmul.mubr.bf16.gmra.mrb[0].mxu0 %v1074
    %v1367 = vpop.f32.mrb[0].mxu0
    %v1368 = vadd.f32 %v1319, %v1367
    %v1369 = vpop.f32.mrb[0].mxu0
    %v1370 = vpop.f32.mrb[0].mxu0
    %v1371 = vadd.f32 %v1322, %v1370
    %v1372 = vpop.f32.mrb[0].mxu0
    %1373 = vdwg.mxu0
    %v1374 = vld [vmem:[#allocation2] sm:$0xff]
    %v1375 = vld [vmem:[#allocation2 + $0x8] sm:$0xff]
    %v1376 = vld [vmem:[#allocation2 + $0x10] sm:$0xff]
    %v1377 = vld [vmem:[#allocation2 + $0x18] sm:$0xff]
    %v1378 = vadd.f32 %v1374, %v1360
    %v1379 = vadd.f32 %v1375, %v1363
    %v1380 = vadd.f32 %v1376, %v1368
    %v1381 = vadd.f32 %v1377, %v1371
    %1382 = vst [vmem:[#allocation2] sm:$0xff] %v1378
    %1383 = vst [vmem:[#allocation2 + $0x8] sm:$0xff] %v1379
    %1384 = vst [vmem:[#allocation2 + $0x10] sm:$0xff] %v1380
    %1385 = vst [vmem:[#allocation2 + $0x18] sm:$0xff] %v1381
    %s1386 = scalar_lea.vmem [#allocation3], 16
    %v1387 = vld [vmem:[%s1386] sm:$0x33]
    %v1388 = vld [vmem:[%s1386 + $0x8] sm:$0x33]
    %v1389 = vld [vmem:[%s1386 + $0x10] sm:$0x33]
    %v1390 = vld [vmem:[%s1386 + $0x18] sm:$0x33]
    %v1391 = vld [vmem:[%s1386 + $0x20] sm:$0x33]
    %v1392 = vld [vmem:[%s1386 + $0x28] sm:$0x33]
    %v1393 = vld [vmem:[%s1386 + $0x30] sm:$0x33]
    %v1394 = vld [vmem:[%s1386 + $0x38] sm:$0x33]
    %v1395 = vld [vmem:[%s1386 + $0x50] sm:$0x33]
    %v1396 = vld [vmem:[%s1386 + $0x58] sm:$0x33]
    %v1397 = vld [vmem:[%s1386 + $0x60] sm:$0x33]
    %v1398 = vld [vmem:[%s1386 + $0x68] sm:$0x33]
    %v1399 = vld [vmem:[%s1386 + $0x70] sm:$0x33]
    %v1400 = vld [vmem:[%s1386 + $0x78] sm:$0x33]
    %v1401 = vld [vmem:[%s1386 + $0x80] sm:$0x33]
    %v1402 = vld [vmem:[%s1386 + $0x88] sm:$0x33]
    %v1420 = vunpack.c.l.s4 1983009808
    %v1421 = vunpack.c.0.s8 %v1420
    %v1422 = vlaneseq
    %v1423 = vshrl.u32 %v1422, 7
    %v1424 = vsub.s32 %v1421, %v1423
    %v1425 = vrot.slane %v1387, %v1424
    %v1427 = vunpack.c.l.s4 1983009808
    %v1428 = vunpack.c.0.s8 %v1427
    %v1429 = vlaneseq
    %v1430 = vshrl.u32 %v1429, 7
    %v1431 = vsub.s32 %v1428, %v1430
    %v1432 = vrot.slane %v1388, %v1431
    %v1433 = vcombine.low %v1425, %v1432
    %v1435 = vunpack.c.l.s4 1983009808
    %v1436 = vunpack.c.0.s8 %v1435
    %v1437 = vlaneseq
    %v1438 = vshrl.u32 %v1437, 7
    %v1439 = vsub.s32 %v1436, %v1438
    %v1440 = vrot.slane %v1389, %v1439
    %v1442 = vunpack.c.l.s4 1983009808
    %v1443 = vunpack.c.0.s8 %v1442
    %v1444 = vlaneseq
    %v1445 = vshrl.u32 %v1444, 7
    %v1446 = vsub.s32 %v1443, %v1445
    %v1447 = vrot.slane %v1390, %v1446
    %v1448 = vcombine.low %v1440, %v1447
    %v1450 = vunpack.c.l.s4 1983009808
    %v1451 = vunpack.c.0.s8 %v1450
    %v1452 = vlaneseq
    %v1453 = vshrl.u32 %v1452, 7
    %v1454 = vsub.s32 %v1451, %v1453
    %v1455 = vrot.slane %v1391, %v1454
    %v1457 = vunpack.c.l.s4 1983009808
    %v1458 = vunpack.c.0.s8 %v1457
    %v1459 = vlaneseq
    %v1460 = vshrl.u32 %v1459, 7
    %v1461 = vsub.s32 %v1458, %v1460
    %v1462 = vrot.slane %v1392, %v1461
    %v1463 = vcombine.low %v1455, %v1462
    %v1465 = vunpack.c.l.s4 1983009808
    %v1466 = vunpack.c.0.s8 %v1465
    %v1467 = vlaneseq
    %v1468 = vshrl.u32 %v1467, 7
    %v1469 = vsub.s32 %v1466, %v1468
    %v1470 = vrot.slane %v1393, %v1469
    %v1472 = vunpack.c.l.s4 1983009808
    %v1473 = vunpack.c.0.s8 %v1472
    %v1474 = vlaneseq
    %v1475 = vshrl.u32 %v1474, 7
    %v1476 = vsub.s32 %v1473, %v1475
    %v1477 = vrot.slane %v1394, %v1476
    %v1478 = vcombine.low %v1470, %v1477
    %v1480 = vunpack.c.l.s4 1983009808
    %v1481 = vunpack.c.0.s8 %v1480
    %v1482 = vlaneseq
    %v1483 = vshrl.u32 %v1482, 7
    %v1484 = vsub.s32 %v1481, %v1483
    %v1485 = vrot.slane %v1395, %v1484
    %v1487 = vunpack.c.l.s4 1983009808
    %v1488 = vunpack.c.0.s8 %v1487
    %v1489 = vlaneseq
    %v1490 = vshrl.u32 %v1489, 7
    %v1491 = vsub.s32 %v1488, %v1490
    %v1492 = vrot.slane %v1396, %v1491
    %v1493 = vcombine.low %v1485, %v1492
    %v1495 = vunpack.c.l.s4 1983009808
    %v1496 = vunpack.c.0.s8 %v1495
    %v1497 = vlaneseq
    %v1498 = vshrl.u32 %v1497, 7
    %v1499 = vsub.s32 %v1496, %v1498
    %v1500 = vrot.slane %v1397, %v1499
    %v1502 = vunpack.c.l.s4 1983009808
    %v1503 = vunpack.c.0.s8 %v1502
    %v1504 = vlaneseq
    %v1505 = vshrl.u32 %v1504, 7
    %v1506 = vsub.s32 %v1503, %v1505
    %v1507 = vrot.slane %v1398, %v1506
    %v1508 = vcombine.low %v1500, %v1507
    %v1510 = vunpack.c.l.s4 1983009808
    %v1511 = vunpack.c.0.s8 %v1510
    %v1512 = vlaneseq
    %v1513 = vshrl.u32 %v1512, 7
    %v1514 = vsub.s32 %v1511, %v1513
    %v1515 = vrot.slane %v1399, %v1514
    %v1517 = vunpack.c.l.s4 1983009808
    %v1518 = vunpack.c.0.s8 %v1517
    %v1519 = vlaneseq
    %v1520 = vshrl.u32 %v1519, 7
    %v1521 = vsub.s32 %v1518, %v1520
    %v1522 = vrot.slane %v1400, %v1521
    %v1523 = vcombine.low %v1515, %v1522
    %v1525 = vunpack.c.l.s4 1983009808
    %v1526 = vunpack.c.0.s8 %v1525
    %v1527 = vlaneseq
    %v1528 = vshrl.u32 %v1527, 7
    %v1529 = vsub.s32 %v1526, %v1528
    %v1530 = vrot.slane %v1401, %v1529
    %v1532 = vunpack.c.l.s4 1983009808
    %v1533 = vunpack.c.0.s8 %v1532
    %v1534 = vlaneseq
    %v1535 = vshrl.u32 %v1534, 7
    %v1536 = vsub.s32 %v1533, %v1535
    %v1537 = vrot.slane %v1402, %v1536
    %v1538 = vcombine.low %v1530, %v1537
    %s1539 = scalar_lea.vmem [#allocation6], 512
    %v1540 = vld [vmem:[%s1539] sm:$0xf]
    %v1541 = vld [vmem:[%s1539 + $0x4] sm:$0xf]
    %v1542 = vld [vmem:[%s1539 + $0x8] sm:$0xf]
    %v1543 = vld [vmem:[%s1539 + $0xc] sm:$0xf]
    %v1544 = vld [vmem:[%s1539 + $0x10] sm:$0xf]
    %v1545 = vld [vmem:[%s1539 + $0x14] sm:$0xf]
    %v1546 = vld [vmem:[%s1539 + $0x18] sm:$0xf]
    %v1547 = vld [vmem:[%s1539 + $0x1c] sm:$0xf]
    %v1548 = vld [vmem:[%s1539 + $0x20] sm:$0xf]
    %v1549 = vld [vmem:[%s1539 + $0x24] sm:$0xf]
    %v1550 = vld [vmem:[%s1539 + $0x28] sm:$0xf]
    %v1551 = vld [vmem:[%s1539 + $0x2c] sm:$0xf]
    %v1552 = vld [vmem:[%s1539 + $0x30] sm:$0xf]
    %v1553 = vld [vmem:[%s1539 + $0x34] sm:$0xf]
    %v1554 = vld [vmem:[%s1539 + $0x38] sm:$0xf]
    %v1555 = vld [vmem:[%s1539 + $0x3c] sm:$0xf]
    %v1556 = vld [vmem:[%s1539 + $0x40] sm:$0xf]
    %v1557 = vld [vmem:[%s1539 + $0x44] sm:$0xf]
    %v1558 = vld [vmem:[%s1539 + $0x48] sm:$0xf]
    %v1559 = vld [vmem:[%s1539 + $0x4c] sm:$0xf]
    %v1560 = vld [vmem:[%s1539 + $0x50] sm:$0xf]
    %v1561 = vld [vmem:[%s1539 + $0x54] sm:$0xf]
    %v1562 = vld [vmem:[%s1539 + $0x58] sm:$0xf]
    %v1563 = vld [vmem:[%s1539 + $0x5c] sm:$0xf]
    %v1564 = vld [vmem:[%s1539 + $0x60] sm:$0xf]
    %v1565 = vld [vmem:[%s1539 + $0x64] sm:$0xf]
    %v1566 = vld [vmem:[%s1539 + $0x68] sm:$0xf]
    %v1567 = vld [vmem:[%s1539 + $0x6c] sm:$0xf]
    %v1568 = vld [vmem:[%s1539 + $0x70] sm:$0xf]
    %v1569 = vld [vmem:[%s1539 + $0x74] sm:$0xf]
    %v1570 = vld [vmem:[%s1539 + $0x78] sm:$0xf]
    %v1571 = vld [vmem:[%s1539 + $0x7c] sm:$0xf]
    %v1572 = vld [vmem:[%s1539 + $0x80] sm:$0xf]
    %v1573 = vld [vmem:[%s1539 + $0x84] sm:$0xf]
    %v1574 = vld [vmem:[%s1539 + $0x88] sm:$0xf]
    %v1575 = vld [vmem:[%s1539 + $0x8c] sm:$0xf]
    %v1576 = vld [vmem:[%s1539 + $0x90] sm:$0xf]
    %v1577 = vld [vmem:[%s1539 + $0x94] sm:$0xf]
    %v1578 = vld [vmem:[%s1539 + $0x98] sm:$0xf]
    %v1579 = vld [vmem:[%s1539 + $0x9c] sm:$0xf]
    %v1580 = vld [vmem:[%s1539 + $0xa0] sm:$0xf]
    %v1581 = vld [vmem:[%s1539 + $0xa4] sm:$0xf]
    %v1582 = vld [vmem:[%s1539 + $0xa8] sm:$0xf]
    %v1583 = vld [vmem:[%s1539 + $0xac] sm:$0xf]
    %v1584 = vld [vmem:[%s1539 + $0xb0] sm:$0xf]
    %v1585 = vld [vmem:[%s1539 + $0xb4] sm:$0xf]
    %v1586 = vld [vmem:[%s1539 + $0xb8] sm:$0xf]
    %v1587 = vld [vmem:[%s1539 + $0xbc] sm:$0xf]
    %v1588 = vld [vmem:[%s1539 + $0xc0] sm:$0xf]
    %v1589 = vld [vmem:[%s1539 + $0xc4] sm:$0xf]
    %v1590 = vld [vmem:[%s1539 + $0xc8] sm:$0xf]
    %v1591 = vld [vmem:[%s1539 + $0xcc] sm:$0xf]
    %v1592 = vld [vmem:[%s1539 + $0xd0] sm:$0xf]
    %v1593 = vld [vmem:[%s1539 + $0xd4] sm:$0xf]
    %v1594 = vld [vmem:[%s1539 + $0xd8] sm:$0xf]
    %v1595 = vld [vmem:[%s1539 + $0xdc] sm:$0xf]
    %v1596 = vld [vmem:[%s1539 + $0xe0] sm:$0xf]
    %v1597 = vld [vmem:[%s1539 + $0xe4] sm:$0xf]
    %v1598 = vld [vmem:[%s1539 + $0xe8] sm:$0xf]
    %v1599 = vld [vmem:[%s1539 + $0xec] sm:$0xf]
    %v1600 = vld [vmem:[%s1539 + $0xf0] sm:$0xf]
    %v1601 = vld [vmem:[%s1539 + $0xf4] sm:$0xf]
    %v1602 = vld [vmem:[%s1539 + $0xf8] sm:$0xf]
    %v1603 = vld [vmem:[%s1539 + $0xfc] sm:$0xf]
    %v1604 = vcombine.low %v1433, %v1448
    %v1605 = vcombine.high %v1433, %v1448
    %v1606 = vcombine.low %v1463, %v1478
    %v1607 = vcombine.high %v1463, %v1478
    %v1609 = vunpack.c.l.s4 1983009808
    %v1610 = vunpack.c.0.s8 %v1609
    %v1611 = vlaneseq
    %v1612 = vshrl.u32 %v1611, 7
    %v1613 = vsub.s32 %v1610, %v1612
    %v1614 = vrot.slane %v1604, %v1613
    %v1616 = vunpack.c.l.s4 1983009808
    %v1617 = vunpack.c.0.s8 %v1616
    %v1618 = vlaneseq
    %v1619 = vshrl.u32 %v1618, 7
    %v1620 = vsub.s32 %v1617, %v1619
    %v1621 = vrot.slane %v1605, %v1620
    %v1623 = vunpack.c.l.s4 1983009808
    %v1624 = vunpack.c.0.s8 %v1623
    %v1625 = vlaneseq
    %v1626 = vshrl.u32 %v1625, 7
    %v1627 = vsub.s32 %v1624, %v1626
    %v1628 = vrot.slane %v1606, %v1627
    %v1630 = vunpack.c.l.s4 1983009808
    %v1631 = vunpack.c.0.s8 %v1630
    %v1632 = vlaneseq
    %v1633 = vshrl.u32 %v1632, 7
    %v1634 = vsub.s32 %v1631, %v1633
    %v1635 = vrot.slane %v1607, %v1634
    %v1636 = vcombine.low %v1614, %v1628
    %v1637 = vcombine.high %v1614, %v1628
    %v1638 = vcombine.low %v1621, %v1635
    %v1639 = vcombine.high %v1621, %v1635
    %v1640 = vcombine.low %v1493, %v1508
    %v1641 = vcombine.high %v1493, %v1508
    %v1642 = vcombine.low %v1523, %v1538
    %v1643 = vcombine.high %v1523, %v1538
    %v1645 = vunpack.c.l.s4 1983009808
    %v1646 = vunpack.c.0.s8 %v1645
    %v1647 = vlaneseq
    %v1648 = vshrl.u32 %v1647, 7
    %v1649 = vsub.s32 %v1646, %v1648
    %v1650 = vrot.slane %v1640, %v1649
    %v1652 = vunpack.c.l.s4 1983009808
    %v1653 = vunpack.c.0.s8 %v1652
    %v1654 = vlaneseq
    %v1655 = vshrl.u32 %v1654, 7
    %v1656 = vsub.s32 %v1653, %v1655
    %v1657 = vrot.slane %v1641, %v1656
    %v1659 = vunpack.c.l.s4 1983009808
    %v1660 = vunpack.c.0.s8 %v1659
    %v1661 = vlaneseq
    %v1662 = vshrl.u32 %v1661, 7
    %v1663 = vsub.s32 %v1660, %v1662
    %v1664 = vrot.slane %v1642, %v1663
    %v1666 = vunpack.c.l.s4 1983009808
    %v1667 = vunpack.c.0.s8 %v1666
    %v1668 = vlaneseq
    %v1669 = vshrl.u32 %v1668, 7
    %v1670 = vsub.s32 %v1667, %v1669
    %v1671 = vrot.slane %v1643, %v1670
    %v1672 = vcombine.low %v1650, %v1664
    %v1673 = vcombine.high %v1650, %v1664
    %v1674 = vcombine.low %v1657, %v1671
    %v1675 = vcombine.high %v1657, %v1671
    %v1748 = vunpack.c.l.b16 %v1540
    %v1749 = vunpack.c.l.b16 %v1541
    %v1750 = vunpack.c.l.b16 %v1542
    %v1751 = vunpack.c.l.b16 %v1543
    %v1752 = vunpack.c.l.b16 %v1544
    %v1753 = vunpack.c.l.b16 %v1545
    %v1754 = vunpack.c.l.b16 %v1546
    %v1755 = vunpack.c.l.b16 %v1547
    %v1756 = vunpack.c.l.b16 %v1548
    %v1757 = vunpack.c.l.b16 %v1549
    %v1758 = vunpack.c.l.b16 %v1550
    %v1759 = vunpack.c.l.b16 %v1551
    %v1760 = vunpack.c.l.b16 %v1552
    %v1761 = vunpack.c.l.b16 %v1553
    %v1762 = vunpack.c.l.b16 %v1554
    %v1763 = vunpack.c.l.b16 %v1555
    %v1764 = vunpack.c.l.b16 %v1556
    %v1765 = vunpack.c.l.b16 %v1557
    %v1766 = vunpack.c.l.b16 %v1558
    %v1767 = vunpack.c.l.b16 %v1559
    %v1768 = vunpack.c.l.b16 %v1560
    %v1769 = vunpack.c.l.b16 %v1561
    %v1770 = vunpack.c.l.b16 %v1562
    %v1771 = vunpack.c.l.b16 %v1563
    %v1772 = vunpack.c.l.b16 %v1564
    %v1773 = vunpack.c.l.b16 %v1565
    %v1774 = vunpack.c.l.b16 %v1566
    %v1775 = vunpack.c.l.b16 %v1567
    %v1776 = vunpack.c.l.b16 %v1568
    %v1777 = vunpack.c.l.b16 %v1569
    %v1778 = vunpack.c.l.b16 %v1570
    %v1779 = vunpack.c.l.b16 %v1571
    %v1780 = vunpack.c.l.b16 %v1572
    %v1781 = vunpack.c.l.b16 %v1573
    %v1782 = vunpack.c.l.b16 %v1574
    %v1783 = vunpack.c.l.b16 %v1575
    %v1784 = vunpack.c.l.b16 %v1576
    %v1785 = vunpack.c.l.b16 %v1577
    %v1786 = vunpack.c.l.b16 %v1578
    %v1787 = vunpack.c.l.b16 %v1579
    %v1788 = vunpack.c.l.b16 %v1580
    %v1789 = vunpack.c.l.b16 %v1581
    %v1790 = vunpack.c.l.b16 %v1582
    %v1791 = vunpack.c.l.b16 %v1583
    %v1792 = vunpack.c.l.b16 %v1584
    %v1793 = vunpack.c.l.b16 %v1585
    %v1794 = vunpack.c.l.b16 %v1586
    %v1795 = vunpack.c.l.b16 %v1587
    %v1796 = vunpack.c.l.b16 %v1588
    %v1797 = vunpack.c.l.b16 %v1589
    %v1798 = vunpack.c.l.b16 %v1590
    %v1799 = vunpack.c.l.b16 %v1591
    %v1800 = vunpack.c.l.b16 %v1592
    %v1801 = vunpack.c.l.b16 %v1593
    %v1802 = vunpack.c.l.b16 %v1594
    %v1803 = vunpack.c.l.b16 %v1595
    %v1804 = vunpack.c.l.b16 %v1596
    %v1805 = vunpack.c.l.b16 %v1597
    %v1806 = vunpack.c.l.b16 %v1598
    %v1807 = vunpack.c.l.b16 %v1599
    %v1808 = vunpack.c.l.b16 %v1600
    %v1809 = vunpack.c.l.b16 %v1601
    %v1810 = vunpack.c.l.b16 %v1602
    %v1811 = vunpack.c.l.b16 %v1603
    %v1812 = vpack.c.b16 %v1749, %v1748
    %v1813 = vpack.c.b16 %v1751, %v1750
    %v1814 = vpack.c.b16 %v1753, %v1752
    %v1815 = vpack.c.b16 %v1755, %v1754
    %v1816 = vpack.c.b16 %v1757, %v1756
    %v1817 = vpack.c.b16 %v1759, %v1758
    %v1818 = vpack.c.b16 %v1761, %v1760
    %v1819 = vpack.c.b16 %v1763, %v1762
    %v1820 = vpack.c.b16 %v1765, %v1764
    %v1821 = vpack.c.b16 %v1767, %v1766
    %v1822 = vpack.c.b16 %v1769, %v1768
    %v1823 = vpack.c.b16 %v1771, %v1770
    %v1824 = vpack.c.b16 %v1773, %v1772
    %v1825 = vpack.c.b16 %v1775, %v1774
    %v1826 = vpack.c.b16 %v1777, %v1776
    %v1827 = vpack.c.b16 %v1779, %v1778
    %v1828 = vpack.c.b16 %v1781, %v1780
    %v1829 = vpack.c.b16 %v1783, %v1782
    %v1830 = vpack.c.b16 %v1785, %v1784
    %v1831 = vpack.c.b16 %v1787, %v1786
    %v1832 = vpack.c.b16 %v1789, %v1788
    %v1833 = vpack.c.b16 %v1791, %v1790
    %v1834 = vpack.c.b16 %v1793, %v1792
    %v1835 = vpack.c.b16 %v1795, %v1794
    %v1836 = vpack.c.b16 %v1797, %v1796
    %v1837 = vpack.c.b16 %v1799, %v1798
    %v1838 = vpack.c.b16 %v1801, %v1800
    %v1839 = vpack.c.b16 %v1803, %v1802
    %v1840 = vpack.c.b16 %v1805, %v1804
    %v1841 = vpack.c.b16 %v1807, %v1806
    %v1842 = vpack.c.b16 %v1809, %v1808
    %v1843 = vpack.c.b16 %v1811, %v1810
    %1876 = vmatprep.subr.bf16.mxu0 0
    %1877 = vmatpush1.bf16.msra.mxu0 %v1812
    %1878 = vmatprep.subr.bf16.mxu0 0
    %1879 = vmatpush1.bf16.msra.mxu0 %v1813
    %1880 = vmatprep.subr.bf16.mxu0 0
    %1881 = vmatpush1.bf16.msra.mxu0 %v1814
    %1882 = vmatprep.subr.bf16.mxu0 0
    %1883 = vmatpush1.bf16.msra.mxu0 %v1815
    %1884 = vmatprep.subr.bf16.mxu0 0
    %1885 = vmatpush1.bf16.msra.mxu0 %v1816
    %1886 = vmatprep.subr.bf16.mxu0 0
    %1887 = vmatpush1.bf16.msra.mxu0 %v1817
    %1888 = vmatprep.subr.bf16.mxu0 0
    %1889 = vmatpush1.bf16.msra.mxu0 %v1818
    %1890 = vmatprep.subr.bf16.mxu0 0
    %1891 = vmatpush1.bf16.msra.mxu0 %v1819
    %1892 = vmatprep.subr.bf16.mxu0 0
    %1893 = vmatpush1.bf16.msra.mxu0 %v1820
    %1894 = vmatprep.subr.bf16.mxu0 0
    %1895 = vmatpush1.bf16.msra.mxu0 %v1821
    %1896 = vmatprep.subr.bf16.mxu0 0
    %1897 = vmatpush1.bf16.msra.mxu0 %v1822
    %1898 = vmatprep.subr.bf16.mxu0 0
    %1899 = vmatpush1.bf16.msra.mxu0 %v1823
    %1900 = vmatprep.subr.bf16.mxu0 0
    %1901 = vmatpush1.bf16.msra.mxu0 %v1824
    %1902 = vmatprep.subr.bf16.mxu0 0
    %1903 = vmatpush1.bf16.msra.mxu0 %v1825
    %1904 = vmatprep.subr.bf16.mxu0 0
    %1905 = vmatpush1.bf16.msra.mxu0 %v1826
    %1906 = vmatprep.subr.bf16.mxu0 0
    %1907 = vmatpush1.bf16.msra.mxu0 %v1827
    %1908 = vmatprep.mubr.bf16.mxu0 %v1637
    %1909 = vmatmul.mubr.bf16.gmra.mrb[0].mxu0 %v1636
    %v1910 = vpop.f32.mrb[0].mxu0
    %v1911 = vadd.f32 0.0, %v1910
    %v1912 = vpop.f32.mrb[0].mxu0
    %v1913 = vpop.f32.mrb[0].mxu0
    %v1914 = vadd.f32 0.0, %v1913
    %v1915 = vpop.f32.mrb[0].mxu0
    %1916 = vmatprep.mubr.bf16.mxu0 %v1673
    %1917 = vmatmul.mubr.bf16.gmra.mrb[0].mxu0 %v1672
    %v1918 = vpop.f32.mrb[0].mxu0
    %v1919 = vadd.f32 0.0, %v1918
    %v1920 = vpop.f32.mrb[0].mxu0
    %v1921 = vpop.f32.mrb[0].mxu0
    %v1922 = vadd.f32 0.0, %v1921
    %v1923 = vpop.f32.mrb[0].mxu0
    %1924 = vdwg.mxu0
    %1925 = vmatprep.subr.bf16.mxu0 0
    %1926 = vmatpush1.bf16.msra.mxu0 %v1828
    %1927 = vmatprep.subr.bf16.mxu0 0
    %1928 = vmatpush1.bf16.msra.mxu0 %v1829
    %1929 = vmatprep.subr.bf16.mxu0 0
    %1930 = vmatpush1.bf16.msra.mxu0 %v1830
    %1931 = vmatprep.subr.bf16.mxu0 0
    %1932 = vmatpush1.bf16.msra.mxu0 %v1831
    %1933 = vmatprep.subr.bf16.mxu0 0
    %1934 = vmatpush1.bf16.msra.mxu0 %v1832
    %1935 = vmatprep.subr.bf16.mxu0 0
    %1936 = vmatpush1.bf16.msra.mxu0 %v1833
    %1937 = vmatprep.subr.bf16.mxu0 0
    %1938 = vmatpush1.bf16.msra.mxu0 %v1834
    %1939 = vmatprep.subr.bf16.mxu0 0
    %1940 = vmatpush1.bf16.msra.mxu0 %v1835
    %1941 = vmatprep.subr.bf16.mxu0 0
    %1942 = vmatpush1.bf16.msra.mxu0 %v1836
    %1943 = vmatprep.subr.bf16.mxu0 0
    %1944 = vmatpush1.bf16.msra.mxu0 %v1837
    %1945 = vmatprep.subr.bf16.mxu0 0
    %1946 = vmatpush1.bf16.msra.mxu0 %v1838
    %1947 = vmatprep.subr.bf16.mxu0 0
    %1948 = vmatpush1.bf16.msra.mxu0 %v1839
    %1949 = vmatprep.subr.bf16.mxu0 0
    %1950 = vmatpush1.bf16.msra.mxu0 %v1840
    %1951 = vmatprep.subr.bf16.mxu0 0
    %1952 = vmatpush1.bf16.msra.mxu0 %v1841
    %1953 = vmatprep.subr.bf16.mxu0 0
    %1954 = vmatpush1.bf16.msra.mxu0 %v1842
    %1955 = vmatprep.subr.bf16.mxu0 0
    %1956 = vmatpush1.bf16.msra.mxu0 %v1843
    %1957 = vmatprep.mubr.bf16.mxu0 %v1639
    %1958 = vmatmul.mubr.bf16.gmra.mrb[0].mxu0 %v1638
    %v1959 = vpop.f32.mrb[0].mxu0
    %v1960 = vadd.f32 %v1911, %v1959
    %v1961 = vpop.f32.mrb[0].mxu0
    %v1962 = vpop.f32.mrb[0].mxu0
    %v1963 = vadd.f32 %v1914, %v1962
    %v1964 = vpop.f32.mrb[0].mxu0
    %1965 = vmatprep.mubr.bf16.mxu0 %v1675
    %1966 = vmatmul.mubr.bf16.gmra.mrb[0].mxu0 %v1674
    %v1967 = vpop.f32.mrb[0].mxu0
    %v1968 = vadd.f32 %v1919, %v1967
    %v1969 = vpop.f32.mrb[0].mxu0
    %v1970 = vpop.f32.mrb[0].mxu0
    %v1971 = vadd.f32 %v1922, %v1970
    %v1972 = vpop.f32.mrb[0].mxu0
    %1973 = vdwg.mxu0
    %v1974 = vld [vmem:[#allocation2] sm:$0xff]
    %v1975 = vld [vmem:[#allocation2 + $0x8] sm:$0xff]
    %v1976 = vld [vmem:[#allocation2 + $0x10] sm:$0xff]
    %v1977 = vld [vmem:[#allocation2 + $0x18] sm:$0xff]
    %v1978 = vadd.f32 %v1974, %v1960
    %v1979 = vadd.f32 %v1975, %v1963
    %v1980 = vadd.f32 %v1976, %v1968
    %v1981 = vadd.f32 %v1977, %v1971
    %1982 = vst [vmem:[#allocation2] sm:$0xff] %v1978
    %1983 = vst [vmem:[#allocation2 + $0x8] sm:$0xff] %v1979
    %1984 = vst [vmem:[#allocation2 + $0x10] sm:$0xff] %v1980
    %1985 = vst [vmem:[#allocation2 + $0x18] sm:$0xff] %v1981
    %v1986 = vld [vmem:[%s1386] sm:$0x77]
    %v1987 = vld [vmem:[%s1386 + $0x8] sm:$0x77]
    %v1988 = vld [vmem:[%s1386 + $0x10] sm:$0x77]
    %v1989 = vld [vmem:[%s1386 + $0x18] sm:$0x77]
    %v1990 = vld [vmem:[%s1386 + $0x20] sm:$0x77]
    %v1991 = vld [vmem:[%s1386 + $0x28] sm:$0x77]
    %v1992 = vld [vmem:[%s1386 + $0x30] sm:$0x77]
    %v1993 = vld [vmem:[%s1386 + $0x38] sm:$0x77]
    %v1994 = vld [vmem:[%s1386 + $0x50] sm:$0x77]
    %v1995 = vld [vmem:[%s1386 + $0x58] sm:$0x77]
    %v1996 = vld [vmem:[%s1386 + $0x60] sm:$0x77]
    %v1997 = vld [vmem:[%s1386 + $0x68] sm:$0x77]
    %v1998 = vld [vmem:[%s1386 + $0x70] sm:$0x77]
    %v1999 = vld [vmem:[%s1386 + $0x78] sm:$0x77]
    %v2000 = vld [vmem:[%s1386 + $0x80] sm:$0x77]
    %v2001 = vld [vmem:[%s1386 + $0x88] sm:$0x77]
    %v2019 = vunpack.c.l.s4 1983009808
    %v2020 = vunpack.c.0.s8 %v2019
    %v2021 = vlaneseq
    %v2022 = vshrl.u32 %v2021, 7
    %v2023 = vsub.s32 %v2020, %v2022
    %v2024 = vrot.slane %v1986, %v2023
    %v2026 = vunpack.c.l.s4 1983009808
    %v2027 = vunpack.c.0.s8 %v2026
    %v2028 = vlaneseq
    %v2029 = vshrl.u32 %v2028, 7
    %v2030 = vsub.s32 %v2027, %v2029
    %v2031 = vrot.slane %v1987, %v2030
    %v2032 = vcombine.low %v2024, %v2031
    %v2033 = vcombine.high %v2024, %v2031
    %v2035 = vunpack.c.l.s4 1983009808
    %v2036 = vunpack.c.0.s8 %v2035
    %v2037 = vlaneseq
    %v2038 = vshrl.u32 %v2037, 7
    %v2039 = vsub.s32 %v2036, %v2038
    %v2040 = vrot.slane %v1988, %v2039
    %v2042 = vunpack.c.l.s4 1983009808
    %v2043 = vunpack.c.0.s8 %v2042
    %v2044 = vlaneseq
    %v2045 = vshrl.u32 %v2044, 7
    %v2046 = vsub.s32 %v2043, %v2045
    %v2047 = vrot.slane %v1989, %v2046
    %v2048 = vcombine.low %v2040, %v2047
    %v2049 = vcombine.high %v2040, %v2047
    %v2051 = vunpack.c.l.s4 1983009808
    %v2052 = vunpack.c.0.s8 %v2051
    %v2053 = vlaneseq
    %v2054 = vshrl.u32 %v2053, 7
    %v2055 = vsub.s32 %v2052, %v2054
    %v2056 = vrot.slane %v1990, %v2055
    %v2058 = vunpack.c.l.s4 1983009808
    %v2059 = vunpack.c.0.s8 %v2058
    %v2060 = vlaneseq
    %v2061 = vshrl.u32 %v2060, 7
    %v2062 = vsub.s32 %v2059, %v2061
    %v2063 = vrot.slane %v1991, %v2062
    %v2064 = vcombine.low %v2056, %v2063
    %v2065 = vcombine.high %v2056, %v2063
    %v2067 = vunpack.c.l.s4 1983009808
    %v2068 = vunpack.c.0.s8 %v2067
    %v2069 = vlaneseq
    %v2070 = vshrl.u32 %v2069, 7
    %v2071 = vsub.s32 %v2068, %v2070
    %v2072 = vrot.slane %v1992, %v2071
    %v2074 = vunpack.c.l.s4 1983009808
    %v2075 = vunpack.c.0.s8 %v2074
    %v2076 = vlaneseq
    %v2077 = vshrl.u32 %v2076, 7
    %v2078 = vsub.s32 %v2075, %v2077
    %v2079 = vrot.slane %v1993, %v2078
    %v2080 = vcombine.low %v2072, %v2079
    %v2081 = vcombine.high %v2072, %v2079
    %v2083 = vunpack.c.l.s4 1983009808
    %v2084 = vunpack.c.0.s8 %v2083
    %v2085 = vlaneseq
    %v2086 = vshrl.u32 %v2085, 7
    %v2087 = vsub.s32 %v2084, %v2086
    %v2088 = vrot.slane %v1994, %v2087
    %v2090 = vunpack.c.l.s4 1983009808
    %v2091 = vunpack.c.0.s8 %v2090
    %v2092 = vlaneseq
    %v2093 = vshrl.u32 %v2092, 7
    %v2094 = vsub.s32 %v2091, %v2093
    %v2095 = vrot.slane %v1995, %v2094
    %v2096 = vcombine.low %v2088, %v2095
    %v2097 = vcombine.high %v2088, %v2095
    %v2099 = vunpack.c.l.s4 1983009808
    %v2100 = vunpack.c.0.s8 %v2099
    %v2101 = vlaneseq
    %v2102 = vshrl.u32 %v2101, 7
    %v2103 = vsub.s32 %v2100, %v2102
    %v2104 = vrot.slane %v1996, %v2103
    %v2106 = vunpack.c.l.s4 1983009808
    %v2107 = vunpack.c.0.s8 %v2106
    %v2108 = vlaneseq
    %v2109 = vshrl.u32 %v2108, 7
    %v2110 = vsub.s32 %v2107, %v2109
    %v2111 = vrot.slane %v1997, %v2110
    %v2112 = vcombine.low %v2104, %v2111
    %v2113 = vcombine.high %v2104, %v2111
    %v2115 = vunpack.c.l.s4 1983009808
    %v2116 = vunpack.c.0.s8 %v2115
    %v2117 = vlaneseq
    %v2118 = vshrl.u32 %v2117, 7
    %v2119 = vsub.s32 %v2116, %v2118
    %v2120 = vrot.slane %v1998, %v2119
    %v2122 = vunpack.c.l.s4 1983009808
    %v2123 = vunpack.c.0.s8 %v2122
    %v2124 = vlaneseq
    %v2125 = vshrl.u32 %v2124, 7
    %v2126 = vsub.s32 %v2123, %v2125
    %v2127 = vrot.slane %v1999, %v2126
    %v2128 = vcombine.low %v2120, %v2127
    %v2129 = vcombine.high %v2120, %v2127
    %v2131 = vunpack.c.l.s4 1983009808
    %v2132 = vunpack.c.0.s8 %v2131
    %v2133 = vlaneseq
    %v2134 = vshrl.u32 %v2133, 7
    %v2135 = vsub.s32 %v2132, %v2134
    %v2136 = vrot.slane %v2000, %v2135
    %v2138 = vunpack.c.l.s4 1983009808
    %v2139 = vunpack.c.0.s8 %v2138
    %v2140 = vlaneseq
    %v2141 = vshrl.u32 %v2140, 7
    %v2142 = vsub.s32 %v2139, %v2141
    %v2143 = vrot.slane %v2001, %v2142
    %v2144 = vcombine.low %v2136, %v2143
    %v2145 = vcombine.high %v2136, %v2143
    %v2147 = vshrl.u32 %v2032, 16
    %v2149 = vrot.slane %v2147, 6
    %v2150 = vshll.u32 %v2032, 16
    %v2152 = vrot.slane %v2150, 7
    %v2153 = vor.u32 %v2149, %v2152
    %v2154 = vrot.slane %v2153, 2
    %v2156 = vshll.u32 %v2033, 16
    %v2158 = vrot.slane %v2156, 7
    %v2159 = vsel %vm826, %v2154, %v2158
    %v2161 = vshrl.u32 %v2048, 16
    %v2163 = vrot.slane %v2161, 6
    %v2164 = vshll.u32 %v2048, 16
    %v2166 = vrot.slane %v2164, 7
    %v2167 = vor.u32 %v2163, %v2166
    %v2168 = vrot.slane %v2167, 2
    %v2170 = vshll.u32 %v2049, 16
    %v2172 = vrot.slane %v2170, 7
    %v2173 = vsel %vm826, %v2168, %v2172
    %v2175 = vshrl.u32 %v2064, 16
    %v2177 = vrot.slane %v2175, 6
    %v2178 = vshll.u32 %v2064, 16
    %v2180 = vrot.slane %v2178, 7
    %v2181 = vor.u32 %v2177, %v2180
    %v2182 = vrot.slane %v2181, 2
    %v2184 = vshll.u32 %v2065, 16
    %v2186 = vrot.slane %v2184, 7
    %v2187 = vsel %vm826, %v2182, %v2186
    %v2189 = vshrl.u32 %v2080, 16
    %v2191 = vrot.slane %v2189, 6
    %v2192 = vshll.u32 %v2080, 16
    %v2194 = vrot.slane %v2192, 7
    %v2195 = vor.u32 %v2191, %v2194
    %v2196 = vrot.slane %v2195, 2
    %v2198 = vshll.u32 %v2081, 16
    %v2200 = vrot.slane %v2198, 7
    %v2201 = vsel %vm826, %v2196, %v2200
    %v2203 = vshrl.u32 %v2096, 16
    %v2205 = vrot.slane %v2203, 6
    %v2206 = vshll.u32 %v2096, 16
    %v2208 = vrot.slane %v2206, 7
    %v2209 = vor.u32 %v2205, %v2208
    %v2210 = vrot.slane %v2209, 2
    %v2212 = vshll.u32 %v2097, 16
    %v2214 = vrot.slane %v2212, 7
    %v2215 = vsel %vm826, %v2210, %v2214
    %v2217 = vshrl.u32 %v2112, 16
    %v2219 = vrot.slane %v2217, 6
    %v2220 = vshll.u32 %v2112, 16
    %v2222 = vrot.slane %v2220, 7
    %v2223 = vor.u32 %v2219, %v2222
    %v2224 = vrot.slane %v2223, 2
    %v2226 = vshll.u32 %v2113, 16
    %v2228 = vrot.slane %v2226, 7
    %v2229 = vsel %vm826, %v2224, %v2228
    %v2231 = vshrl.u32 %v2128, 16
    %v2233 = vrot.slane %v2231, 6
    %v2234 = vshll.u32 %v2128, 16
    %v2236 = vrot.slane %v2234, 7
    %v2237 = vor.u32 %v2233, %v2236
    %v2238 = vrot.slane %v2237, 2
    %v2240 = vshll.u32 %v2129, 16
    %v2242 = vrot.slane %v2240, 7
    %v2243 = vsel %vm826, %v2238, %v2242
    %v2245 = vshrl.u32 %v2144, 16
    %v2247 = vrot.slane %v2245, 6
    %v2248 = vshll.u32 %v2144, 16
    %v2250 = vrot.slane %v2248, 7
    %v2251 = vor.u32 %v2247, %v2250
    %v2252 = vrot.slane %v2251, 2
    %v2254 = vshll.u32 %v2145, 16
    %v2256 = vrot.slane %v2254, 7
    %v2257 = vsel %vm826, %v2252, %v2256
    %s2258 = scalar_lea.vmem [#allocation6], 768
    %v2259 = vld [vmem:[%s2258] sm:$0xf]
    %v2260 = vld [vmem:[%s2258 + $0x4] sm:$0xf]
    %v2261 = vld [vmem:[%s2258 + $0x8] sm:$0xf]
    %v2262 = vld [vmem:[%s2258 + $0xc] sm:$0xf]
    %v2263 = vld [vmem:[%s2258 + $0x10] sm:$0xf]
    %v2264 = vld [vmem:[%s2258 + $0x14] sm:$0xf]
    %v2265 = vld [vmem:[%s2258 + $0x18] sm:$0xf]
    %v2266 = vld [vmem:[%s2258 + $0x1c] sm:$0xf]
    %v2267 = vld [vmem:[%s2258 + $0x20] sm:$0xf]
    %v2268 = vld [vmem:[%s2258 + $0x24] sm:$0xf]
    %v2269 = vld [vmem:[%s2258 + $0x28] sm:$0xf]
    %v2270 = vld [vmem:[%s2258 + $0x2c] sm:$0xf]
    %v2271 = vld [vmem:[%s2258 + $0x30] sm:$0xf]
    %v2272 = vld [vmem:[%s2258 + $0x34] sm:$0xf]
    %v2273 = vld [vmem:[%s2258 + $0x38] sm:$0xf]
    %v2274 = vld [vmem:[%s2258 + $0x3c] sm:$0xf]
    %v2275 = vld [vmem:[%s2258 + $0x40] sm:$0xf]
    %v2276 = vld [vmem:[%s2258 + $0x44] sm:$0xf]
    %v2277 = vld [vmem:[%s2258 + $0x48] sm:$0xf]
    %v2278 = vld [vmem:[%s2258 + $0x4c] sm:$0xf]
    %v2279 = vld [vmem:[%s2258 + $0x50] sm:$0xf]
    %v2280 = vld [vmem:[%s2258 + $0x54] sm:$0xf]
    %v2281 = vld [vmem:[%s2258 + $0x58] sm:$0xf]
    %v2282 = vld [vmem:[%s2258 + $0x5c] sm:$0xf]
    %v2283 = vld [vmem:[%s2258 + $0x60] sm:$0xf]
    %v2284 = vld [vmem:[%s2258 + $0x64] sm:$0xf]
    %v2285 = vld [vmem:[%s2258 + $0x68] sm:$0xf]
    %v2286 = vld [vmem:[%s2258 + $0x6c] sm:$0xf]
    %v2287 = vld [vmem:[%s2258 + $0x70] sm:$0xf]
    %v2288 = vld [vmem:[%s2258 + $0x74] sm:$0xf]
    %v2289 = vld [vmem:[%s2258 + $0x78] sm:$0xf]
    %v2290 = vld [vmem:[%s2258 + $0x7c] sm:$0xf]
    %v2291 = vld [vmem:[%s2258 + $0x80] sm:$0xf]
    %v2292 = vld [vmem:[%s2258 + $0x84] sm:$0xf]
    %v2293 = vld [vmem:[%s2258 + $0x88] sm:$0xf]
    %v2294 = vld [vmem:[%s2258 + $0x8c] sm:$0xf]
    %v2295 = vld [vmem:[%s2258 + $0x90] sm:$0xf]
    %v2296 = vld [vmem:[%s2258 + $0x94] sm:$0xf]
    %v2297 = vld [vmem:[%s2258 + $0x98] sm:$0xf]
    %v2298 = vld [vmem:[%s2258 + $0x9c] sm:$0xf]
    %v2299 = vld [vmem:[%s2258 + $0xa0] sm:$0xf]
    %v2300 = vld [vmem:[%s2258 + $0xa4] sm:$0xf]
    %v2301 = vld [vmem:[%s2258 + $0xa8] sm:$0xf]
    %v2302 = vld [vmem:[%s2258 + $0xac] sm:$0xf]
    %v2303 = vld [vmem:[%s2258 + $0xb0] sm:$0xf]
    %v2304 = vld [vmem:[%s2258 + $0xb4] sm:$0xf]
    %v2305 = vld [vmem:[%s2258 + $0xb8] sm:$0xf]
    %v2306 = vld [vmem:[%s2258 + $0xbc] sm:$0xf]
    %v2307 = vld [vmem:[%s2258 + $0xc0] sm:$0xf]
    %v2308 = vld [vmem:[%s2258 + $0xc4] sm:$0xf]
    %v2309 = vld [vmem:[%s2258 + $0xc8] sm:$0xf]
    %v2310 = vld [vmem:[%s2258 + $0xcc] sm:$0xf]
    %v2311 = vld [vmem:[%s2258 + $0xd0] sm:$0xf]
    %v2312 = vld [vmem:[%s2258 + $0xd4] sm:$0xf]
    %v2313 = vld [vmem:[%s2258 + $0xd8] sm:$0xf]
    %v2314 = vld [vmem:[%s2258 + $0xdc] sm:$0xf]
    %v2315 = vld [vmem:[%s2258 + $0xe0] sm:$0xf]
    %v2316 = vld [vmem:[%s2258 + $0xe4] sm:$0xf]
    %v2317 = vld [vmem:[%s2258 + $0xe8] sm:$0xf]
    %v2318 = vld [vmem:[%s2258 + $0xec] sm:$0xf]
    %v2319 = vld [vmem:[%s2258 + $0xf0] sm:$0xf]
    %v2320 = vld [vmem:[%s2258 + $0xf4] sm:$0xf]
    %v2321 = vld [vmem:[%s2258 + $0xf8] sm:$0xf]
    %v2322 = vld [vmem:[%s2258 + $0xfc] sm:$0xf]
    %v2323 = vcombine.low %v2159, %v2173
    %v2324 = vcombine.high %v2159, %v2173
    %v2325 = vcombine.low %v2187, %v2201
    %v2326 = vcombine.high %v2187, %v2201
    %v2328 = vunpack.c.l.s4 1983009808
    %v2329 = vunpack.c.0.s8 %v2328
    %v2330 = vlaneseq
    %v2331 = vshrl.u32 %v2330, 7
    %v2332 = vsub.s32 %v2329, %v2331
    %v2333 = vrot.slane %v2323, %v2332
    %v2335 = vunpack.c.l.s4 1983009808
    %v2336 = vunpack.c.0.s8 %v2335
    %v2337 = vlaneseq
    %v2338 = vshrl.u32 %v2337, 7
    %v2339 = vsub.s32 %v2336, %v2338
    %v2340 = vrot.slane %v2324, %v2339
    %v2342 = vunpack.c.l.s4 1983009808
    %v2343 = vunpack.c.0.s8 %v2342
    %v2344 = vlaneseq
    %v2345 = vshrl.u32 %v2344, 7
    %v2346 = vsub.s32 %v2343, %v2345
    %v2347 = vrot.slane %v2325, %v2346
    %v2349 = vunpack.c.l.s4 1983009808
    %v2350 = vunpack.c.0.s8 %v2349
    %v2351 = vlaneseq
    %v2352 = vshrl.u32 %v2351, 7
    %v2353 = vsub.s32 %v2350, %v2352
    %v2354 = vrot.slane %v2326, %v2353
    %v2355 = vcombine.low %v2333, %v2347
    %v2356 = vcombine.high %v2333, %v2347
    %v2357 = vcombine.low %v2340, %v2354
    %v2358 = vcombine.high %v2340, %v2354
    %v2359 = vcombine.low %v2215, %v2229
    %v2360 = vcombine.high %v2215, %v2229
    %v2361 = vcombine.low %v2243, %v2257
    %v2362 = vcombine.high %v2243, %v2257
    %v2364 = vunpack.c.l.s4 1983009808
    %v2365 = vunpack.c.0.s8 %v2364
    %v2366 = vlaneseq
    %v2367 = vshrl.u32 %v2366, 7
    %v2368 = vsub.s32 %v2365, %v2367
    %v2369 = vrot.slane %v2359, %v2368
    %v2371 = vunpack.c.l.s4 1983009808
    %v2372 = vunpack.c.0.s8 %v2371
    %v2373 = vlaneseq
    %v2374 = vshrl.u32 %v2373, 7
    %v2375 = vsub.s32 %v2372, %v2374
    %v2376 = vrot.slane %v2360, %v2375
    %v2378 = vunpack.c.l.s4 1983009808
    %v2379 = vunpack.c.0.s8 %v2378
    %v2380 = vlaneseq
    %v2381 = vshrl.u32 %v2380, 7
    %v2382 = vsub.s32 %v2379, %v2381
    %v2383 = vrot.slane %v2361, %v2382
    %v2385 = vunpack.c.l.s4 1983009808
    %v2386 = vunpack.c.0.s8 %v2385
    %v2387 = vlaneseq
    %v2388 = vshrl.u32 %v2387, 7
    %v2389 = vsub.s32 %v2386, %v2388
    %v2390 = vrot.slane %v2362, %v2389
    %v2391 = vcombine.low %v2369, %v2383
    %v2392 = vcombine.high %v2369, %v2383
    %v2393 = vcombine.low %v2376, %v2390
    %v2394 = vcombine.high %v2376, %v2390
    %v2467 = vunpack.c.l.b16 %v2259
    %v2468 = vunpack.c.l.b16 %v2260
    %v2469 = vunpack.c.l.b16 %v2261
    %v2470 = vunpack.c.l.b16 %v2262
    %v2471 = vunpack.c.l.b16 %v2263
    %v2472 = vunpack.c.l.b16 %v2264
    %v2473 = vunpack.c.l.b16 %v2265
    %v2474 = vunpack.c.l.b16 %v2266
    %v2475 = vunpack.c.l.b16 %v2267
    %v2476 = vunpack.c.l.b16 %v2268
    %v2477 = vunpack.c.l.b16 %v2269
    %v2478 = vunpack.c.l.b16 %v2270
    %v2479 = vunpack.c.l.b16 %v2271
    %v2480 = vunpack.c.l.b16 %v2272
    %v2481 = vunpack.c.l.b16 %v2273
    %v2482 = vunpack.c.l.b16 %v2274
    %v2483 = vunpack.c.l.b16 %v2275
    %v2484 = vunpack.c.l.b16 %v2276
    %v2485 = vunpack.c.l.b16 %v2277
    %v2486 = vunpack.c.l.b16 %v2278
    %v2487 = vunpack.c.l.b16 %v2279
    %v2488 = vunpack.c.l.b16 %v2280
    %v2489 = vunpack.c.l.b16 %v2281
    %v2490 = vunpack.c.l.b16 %v2282
    %v2491 = vunpack.c.l.b16 %v2283
    %v2492 = vunpack.c.l.b16 %v2284
    %v2493 = vunpack.c.l.b16 %v2285
    %v2494 = vunpack.c.l.b16 %v2286
    %v2495 = vunpack.c.l.b16 %v2287
    %v2496 = vunpack.c.l.b16 %v2288
    %v2497 = vunpack.c.l.b16 %v2289
    %v2498 = vunpack.c.l.b16 %v2290
    %v2499 = vunpack.c.l.b16 %v2291
    %v2500 = vunpack.c.l.b16 %v2292
    %v2501 = vunpack.c.l.b16 %v2293
    %v2502 = vunpack.c.l.b16 %v2294
    %v2503 = vunpack.c.l.b16 %v2295
    %v2504 = vunpack.c.l.b16 %v2296
    %v2505 = vunpack.c.l.b16 %v2297
    %v2506 = vunpack.c.l.b16 %v2298
    %v2507 = vunpack.c.l.b16 %v2299
    %v2508 = vunpack.c.l.b16 %v2300
    %v2509 = vunpack.c.l.b16 %v2301
    %v2510 = vunpack.c.l.b16 %v2302
    %v2511 = vunpack.c.l.b16 %v2303
    %v2512 = vunpack.c.l.b16 %v2304
    %v2513 = vunpack.c.l.b16 %v2305
    %v2514 = vunpack.c.l.b16 %v2306
    %v2515 = vunpack.c.l.b16 %v2307
    %v2516 = vunpack.c.l.b16 %v2308
    %v2517 = vunpack.c.l.b16 %v2309
    %v2518 = vunpack.c.l.b16 %v2310
    %v2519 = vunpack.c.l.b16 %v2311
    %v2520 = vunpack.c.l.b16 %v2312
    %v2521 = vunpack.c.l.b16 %v2313
    %v2522 = vunpack.c.l.b16 %v2314
    %v2523 = vunpack.c.l.b16 %v2315
    %v2524 = vunpack.c.l.b16 %v2316
    %v2525 = vunpack.c.l.b16 %v2317
    %v2526 = vunpack.c.l.b16 %v2318
    %v2527 = vunpack.c.l.b16 %v2319
    %v2528 = vunpack.c.l.b16 %v2320
    %v2529 = vunpack.c.l.b16 %v2321
    %v2530 = vunpack.c.l.b16 %v2322
    %v2531 = vpack.c.b16 %v2468, %v2467
    %v2532 = vpack.c.b16 %v2470, %v2469
    %v2533 = vpack.c.b16 %v2472, %v2471
    %v2534 = vpack.c.b16 %v2474, %v2473
    %v2535 = vpack.c.b16 %v2476, %v2475
    %v2536 = vpack.c.b16 %v2478, %v2477
    %v2537 = vpack.c.b16 %v2480, %v2479
    %v2538 = vpack.c.b16 %v2482, %v2481
    %v2539 = vpack.c.b16 %v2484, %v2483
    %v2540 = vpack.c.b16 %v2486, %v2485
    %v2541 = vpack.c.b16 %v2488, %v2487
    %v2542 = vpack.c.b16 %v2490, %v2489
    %v2543 = vpack.c.b16 %v2492, %v2491
    %v2544 = vpack.c.b16 %v2494, %v2493
    %v2545 = vpack.c.b16 %v2496, %v2495
    %v2546 = vpack.c.b16 %v2498, %v2497
    %v2547 = vpack.c.b16 %v2500, %v2499
    %v2548 = vpack.c.b16 %v2502, %v2501
    %v2549 = vpack.c.b16 %v2504, %v2503
    %v2550 = vpack.c.b16 %v2506, %v2505
    %v2551 = vpack.c.b16 %v2508, %v2507
    %v2552 = vpack.c.b16 %v2510, %v2509
    %v2553 = vpack.c.b16 %v2512, %v2511
    %v2554 = vpack.c.b16 %v2514, %v2513
    %v2555 = vpack.c.b16 %v2516, %v2515
    %v2556 = vpack.c.b16 %v2518, %v2517
    %v2557 = vpack.c.b16 %v2520, %v2519
    %v2558 = vpack.c.b16 %v2522, %v2521
    %v2559 = vpack.c.b16 %v2524, %v2523
    %v2560 = vpack.c.b16 %v2526, %v2525
    %v2561 = vpack.c.b16 %v2528, %v2527
    %v2562 = vpack.c.b16 %v2530, %v2529
    %2595 = vmatprep.subr.bf16.mxu0 0
    %2596 = vmatpush1.bf16.msra.mxu0 %v2531
    %2597 = vmatprep.subr.bf16.mxu0 0
    %2598 = vmatpush1.bf16.msra.mxu0 %v2532
    %2599 = vmatprep.subr.bf16.mxu0 0
    %2600 = vmatpush1.bf16.msra.mxu0 %v2533
    %2601 = vmatprep.subr.bf16.mxu0 0
    %2602 = vmatpush1.bf16.msra.mxu0 %v2534
    %2603 = vmatprep.subr.bf16.mxu0 0
    %2604 = vmatpush1.bf16.msra.mxu0 %v2535
    %2605 = vmatprep.subr.bf16.mxu0 0
    %2606 = vmatpush1.bf16.msra.mxu0 %v2536
    %2607 = vmatprep.subr.bf16.mxu0 0
    %2608 = vmatpush1.bf16.msra.mxu0 %v2537
    %2609 = vmatprep.subr.bf16.mxu0 0
    %2610 = vmatpush1.bf16.msra.mxu0 %v2538
    %2611 = vmatprep.subr.bf16.mxu0 0
    %2612 = vmatpush1.bf16.msra.mxu0 %v2539
    %2613 = vmatprep.subr.bf16.mxu0 0
    %2614 = vmatpush1.bf16.msra.mxu0 %v2540
    %2615 = vmatprep.subr.bf16.mxu0 0
    %2616 = vmatpush1.bf16.msra.mxu0 %v2541
    %2617 = vmatprep.subr.bf16.mxu0 0
    %2618 = vmatpush1.bf16.msra.mxu0 %v2542
    %2619 = vmatprep.subr.bf16.mxu0 0
    %2620 = vmatpush1.bf16.msra.mxu0 %v2543
    %2621 = vmatprep.subr.bf16.mxu0 0
    %2622 = vmatpush1.bf16.msra.mxu0 %v2544
    %2623 = vmatprep.subr.bf16.mxu0 0
    %2624 = vmatpush1.bf16.msra.mxu0 %v2545
    %2625 = vmatprep.subr.bf16.mxu0 0
    %2626 = vmatpush1.bf16.msra.mxu0 %v2546
    %2627 = vmatprep.mubr.bf16.mxu0 %v2356
    %2628 = vmatmul.mubr.bf16.gmra.mrb[0].mxu0 %v2355
    %v2629 = vpop.f32.mrb[0].mxu0
    %v2630 = vadd.f32 0.0, %v2629
    %v2631 = vpop.f32.mrb[0].mxu0
    %v2632 = vpop.f32.mrb[0].mxu0
    %v2633 = vadd.f32 0.0, %v2632
    %v2634 = vpop.f32.mrb[0].mxu0
    %2635 = vmatprep.mubr.bf16.mxu0 %v2392
    %2636 = vmatmul.mubr.bf16.gmra.mrb[0].mxu0 %v2391
    %v2637 = vpop.f32.mrb[0].mxu0
    %v2638 = vadd.f32 0.0, %v2637
    %v2639 = vpop.f32.mrb[0].mxu0
    %v2640 = vpop.f32.mrb[0].mxu0
    %v2641 = vadd.f32 0.0, %v2640
    %v2642 = vpop.f32.mrb[0].mxu0
    %2643 = vdwg.mxu0
    %2644 = vmatprep.subr.bf16.mxu0 0
    %2645 = vmatpush1.bf16.msra.mxu0 %v2547
    %2646 = vmatprep.subr.bf16.mxu0 0
    %2647 = vmatpush1.bf16.msra.mxu0 %v2548
    %2648 = vmatprep.subr.bf16.mxu0 0
    %2649 = vmatpush1.bf16.msra.mxu0 %v2549
    %2650 = vmatprep.subr.bf16.mxu0 0
    %2651 = vmatpush1.bf16.msra.mxu0 %v2550
    %2652 = vmatprep.subr.bf16.mxu0 0
    %2653 = vmatpush1.bf16.msra.mxu0 %v2551
    %2654 = vmatprep.subr.bf16.mxu0 0
    %2655 = vmatpush1.bf16.msra.mxu0 %v2552
    %2656 = vmatprep.subr.bf16.mxu0 0
    %2657 = vmatpush1.bf16.msra.mxu0 %v2553
    %2658 = vmatprep.subr.bf16.mxu0 0
    %2659 = vmatpush1.bf16.msra.mxu0 %v2554
    %2660 = vmatprep.subr.bf16.mxu0 0
    %2661 = vmatpush1.bf16.msra.mxu0 %v2555
    %2662 = vmatprep.subr.bf16.mxu0 0
    %2663 = vmatpush1.bf16.msra.mxu0 %v2556
    %2664 = vmatprep.subr.bf16.mxu0 0
    %2665 = vmatpush1.bf16.msra.mxu0 %v2557
    %2666 = vmatprep.subr.bf16.mxu0 0
    %2667 = vmatpush1.bf16.msra.mxu0 %v2558
    %2668 = vmatprep.subr.bf16.mxu0 0
    %2669 = vmatpush1.bf16.msra.mxu0 %v2559
    %2670 = vmatprep.subr.bf16.mxu0 0
    %2671 = vmatpush1.bf16.msra.mxu0 %v2560
    %2672 = vmatprep.subr.bf16.mxu0 0
    %2673 = vmatpush1.bf16.msra.mxu0 %v2561
    %2674 = vmatprep.subr.bf16.mxu0 0
    %2675 = vmatpush1.bf16.msra.mxu0 %v2562
    %2676 = vmatprep.mubr.bf16.mxu0 %v2358
    %2677 = vmatmul.mubr.bf16.gmra.mrb[0].mxu0 %v2357
    %v2678 = vpop.f32.mrb[0].mxu0
    %v2679 = vadd.f32 %v2630, %v2678
    %v2680 = vpop.f32.mrb[0].mxu0
    %v2681 = vpop.f32.mrb[0].mxu0
    %v2682 = vadd.f32 %v2633, %v2681
    %v2683 = vpop.f32.mrb[0].mxu0
    %2684 = vmatprep.mubr.bf16.mxu0 %v2394
    %2685 = vmatmul.mubr.bf16.gmra.mrb[0].mxu0 %v2393
    %v2686 = vpop.f32.mrb[0].mxu0
    %v2687 = vadd.f32 %v2638, %v2686
    %v2688 = vpop.f32.mrb[0].mxu0
    %v2689 = vpop.f32.mrb[0].mxu0
    %v2690 = vadd.f32 %v2641, %v2689
    %v2691 = vpop.f32.mrb[0].mxu0
    %2692 = vdwg.mxu0
    %v2693 = vld [vmem:[#allocation2] sm:$0xff]
    %v2694 = vld [vmem:[#allocation2 + $0x8] sm:$0xff]
    %v2695 = vld [vmem:[#allocation2 + $0x10] sm:$0xff]
    %v2696 = vld [vmem:[#allocation2 + $0x18] sm:$0xff]
    %v2697 = vadd.f32 %v2693, %v2679
    %v2698 = vadd.f32 %v2694, %v2682
    %v2699 = vadd.f32 %v2695, %v2687
    %v2700 = vadd.f32 %v2696, %v2690
    %2701 = vst [vmem:[#allocation2] sm:$0xff] %v2697
    %2702 = vst [vmem:[#allocation2 + $0x8] sm:$0xff] %v2698
    %2703 = vst [vmem:[#allocation2 + $0x10] sm:$0xff] %v2699
    %2704 = vst [vmem:[#allocation2 + $0x18] sm:$0xff] %v2700
    %v2705 = vld [vmem:[#allocation2] sm:$0xff]
    %v2706 = vld [vmem:[#allocation2 + $0x8] sm:$0xff]
    %v2707 = vld [vmem:[#allocation2 + $0x10] sm:$0xff]
    %v2708 = vld [vmem:[#allocation2 + $0x18] sm:$0xff]
    %v2709 = vadd.f32 %v2705, %v2706
    %v2710 = vrot.slane %v2709, 4
    %v2711 = vadd.f32 %v2709, %v2710
    %v2712 = vrot.slane %v2711, 2
    %v2713 = vadd.f32 %v2711, %v2712
    %v2714 = vrot.slane %v2713, 1
    %v2715 = vadd.f32 %v2713, %v2714
    %v2716 = vadd.f32 %v2707, %v2708
    %v2717 = vrot.slane %v2716, 4
    %v2718 = vadd.f32 %v2716, %v2717
    %v2719 = vrot.slane %v2718, 2
    %v2720 = vadd.f32 %v2718, %v2719
    %v2721 = vrot.slane %v2720, 1
    %v2722 = vadd.f32 %v2720, %v2721
    %v2723 = vrcp.pop 16.0
    %v2724 = vmul.f32 %v2715, %v2723
    %v2725 = vmul.f32 %v2722, %v2723
    %v2726 = vsub.f32 %v2705, %v2724
    %v2727 = vsub.f32 %v2706, %v2724
    %v2728 = vsub.f32 %v2707, %v2725
    %v2729 = vsub.f32 %v2708, %v2725
    %v2730 = vmul.f32 %v2726, %v2726
    %v2731 = vmul.f32 %v2727, %v2727
    %v2732 = vmul.f32 %v2728, %v2728
    %v2733 = vmul.f32 %v2729, %v2729
    %v2734 = vadd.f32 %v2730, %v2731
    %v2735 = vrot.slane %v2734, 4
    %v2736 = vadd.f32 %v2734, %v2735
    %v2737 = vrot.slane %v2736, 2
    %v2738 = vadd.f32 %v2736, %v2737
    %v2739 = vrot.slane %v2738, 1
    %v2740 = vadd.f32 %v2738, %v2739
    %v2741 = vadd.f32 %v2732, %v2733
    %v2742 = vrot.slane %v2741, 4
    %v2743 = vadd.f32 %v2741, %v2742
    %v2744 = vrot.slane %v2743, 2
    %v2745 = vadd.f32 %v2743, %v2744
    %v2746 = vrot.slane %v2745, 1
    %v2747 = vadd.f32 %v2745, %v2746
    %v2748 = vmul.f32 %v2740, %v2723
    %v2749 = vmul.f32 %v2747, %v2723
    %v2750 = vadd.f32 %v2748, 1e-05
    %v2751 = vadd.f32 %v2749, 1e-05
    %v2752 = vrsqrt.pop %v2750
    %v2753 = vrsqrt.pop %v2751
    %v2754 = vmul.f32 %v2726, %v2752
    %v2755 = vmul.f32 %v2727, %v2752
    %v2756 = vmul.f32 %v2728, %v2753
    %v2757 = vmul.f32 %v2729, %v2753
    %v2758 = vld [vmem:[#allocation8] sm:$0x1]
    %v2760 = vlaneseq
    %v2761 = vshrl.u32 %v2760, 7
    %v2762 = vsub.s32 0, %v2761
    %v2763 = vrot.slane %v2758, %v2762
    %v2765 = vmul.f32 %v2754, %v2763
    %v2766 = vmul.f32 %v2755, %v2763
    %v2767 = vmul.f32 %v2756, %v2763
    %v2768 = vmul.f32 %v2757, %v2763
    %v2769 = vld [vmem:[#allocation9] sm:$0x1]
    %v2771 = vlaneseq
    %v2772 = vshrl.u32 %v2771, 7
    %v2773 = vsub.s32 0, %v2772
    %v2774 = vrot.slane %v2769, %v2773
    %v2776 = vadd.f32 %v2765, %v2774
    %v2777 = vadd.f32 %v2766, %v2774
    %v2778 = vadd.f32 %v2767, %v2774
    %v2779 = vadd.f32 %v2768, %v2774
    %vm2780 = vcmp.ge.f32.partialorder %v2776, 0.0
    %vm2781 = vcmp.ge.f32.partialorder %v2777, 0.0
    %vm2782 = vcmp.ge.f32.partialorder %v2778, 0.0
    %vm2783 = vcmp.ge.f32.partialorder %v2779, 0.0
    %v2784 = vmul.f32 %v2776, 0.2
    %v2785 = vmul.f32 %v2777, 0.2
    %v2786 = vmul.f32 %v2778, 0.2
    %v2787 = vmul.f32 %v2779, 0.2
    %v2788 = vsel %vm2780, %v2776, %v2784
    %v2789 = vsel %vm2781, %v2777, %v2785
    %v2790 = vsel %vm2782, %v2778, %v2786
    %v2791 = vsel %vm2783, %v2779, %v2787
    %v2792 = vpack.c.bf16 %v2789, %v2788
    %v2793 = vpack.c.bf16 %v2791, %v2790
    %v2796 = vunpack.c.l.b16 %v2792
    %v2797 = vunpack.c.h.b16 %v2792
    %v2798 = vunpack.c.l.b16 %v2793
    %v2799 = vunpack.c.h.b16 %v2793
    %v2800 = vpack.c.b16 %v2796, %v2796
    %v2801 = vpack.c.b16 %v2797, %v2797
    %v2802 = vpack.c.b16 %v2798, %v2798
    %v2803 = vpack.c.b16 %v2799, %v2799
    %2808 = vst [vmem:[#allocation11] sm:$0xf] %v2800
    %2809 = vst [vmem:[#allocation11 + $0x4] sm:$0xf] %v2801
    %2810 = vst [vmem:[#allocation11 + $0x8] sm:$0xf] %v2802
    %2811 = vst [vmem:[#allocation11 + $0xc] sm:$0xf] %v2803
    // Predicated region
    $region34: #{discriminator_forward.5} parent=1 // pred_check
      _
    $region35: #{discriminator_forward.5} parent=1 // pred_check_branch
      %2813 = sbr.rel (0) target = $region37
    $region36: #{discriminator_forward.5} parent=1 // pred_region
      %s2815 = ssub.s32 256, 256
      %2816 = vsyncadd [#allocation5], %s2815
      %s2817 = sshll.u32 [#allocation11], 4
      %s2818 = int_to_ptr.vmem [resolvable:$true] %s2817
      %2823 = dma.vmem_to_hbm [thread:$0]  %s2818, 256, %s4, [#allocation5], 64, 64, 4
    $region37: #{discriminator_forward.5} parent=1 // pred_fallthru
      _
    // Predicated region
    $region38: #{discriminator_forward.5} parent=1 // pred_check
      _
    $region39: #{discriminator_forward.5} parent=1 // pred_check_branch
      %2825 = sbr.rel (0) target = $region41
    $region40: #{discriminator_forward.5} parent=1 // pred_region
      %2826 = dma.done [#allocation5], 256
    $region41: #{discriminator_forward.5} parent=1 // pred_fallthru
      _
    %2827 = vsyncpa [#allocation4], 1
    %2828 = vsyncpa [#allocation7], 1
    %2829 = vsyncpa [#allocation10], 1
    %2830 = vsyncpa [#allocation5], 1

// kernel: discriminator_forward.6
$region0: #{discriminator_forward.6}
  #allocation0 [shape = 'u32[]', space=smem, size = 0x4, offset = 0x4, fixed_abs, tag = 'smem constant byte address 0x4 - core index']
  #allocation1 [shape = 'u32[144,128]{1,0:T(1,128)}', space=vmem, size = 0x12000, scoped, tag = 'internal scratch']
  #allocation2 [shape = 'f32[8,128]{1,0:T(8,128)}', space=vmem, size = 0x1000, scoped, tag = 'scratch operand']
  %s0 = inlined_call_operand.hbm [shape: bf16[2,3,3,512], index: 0, kind: input, shape index: {}]
  %s1 = inlined_call_operand.hbm [shape: bf16[4,512,128], index: 1, kind: input, shape index: {}]
  %s2 = inlined_call_operand.hbm [shape: f32[1,128], index: 2, kind: input, shape index: {}]
  %s3 = inlined_call_operand.hbm [shape: f32[1,128], index: 3, kind: input, shape index: {}]
  %s4 = inlined_call_operand.hbm [shape: bf16[2,4,128], index: 4, kind: output, shape index: {}]
  %s5 = sld [smem:[#allocation0]]
  $region42: #{discriminator_forward.6} parent=0
    _
  %s7 = ssub.s32 1, %s5
  %s8 = scalar_select 0, %s7, %s5
  $region1: #{discriminator_forward.6} parent=0
    #allocation3 [shape = 'u8[24576]{0}', space=vmem, size = 0x6000, scoped, tag = 'input window, operand 0, single buffered']
    #allocation4 [shape = 's32[1]{0}', space=sflag, size = 0x4, scoped, tag = 'scoped memory for discriminator_forward.6']
    #allocation5 [shape = 's32[1]{0}', space=sflag, size = 0x4, scoped, tag = 'scoped memory for discriminator_forward.6']
    #allocation6 [shape = 'u8[524288]{0}', space=vmem, size = 0x80000, scoped, tag = 'input window, operand 1, single buffered']
    #allocation7 [shape = 's32[1]{0}', space=sflag, size = 0x4, scoped, tag = 'scoped memory for discriminator_forward.6']
    #allocation8 [shape = 'u8[512]{0}', space=vmem, size = 0x400, scoped, tag = 'input window, operand 2, single buffered']
    #allocation9 [shape = 'u8[512]{0}', space=vmem, size = 0x400, scoped, tag = 'input window, operand 3, single buffered']
    #allocation10 [shape = 's32[1]{0}', space=sflag, size = 0x4, scoped, tag = 'scoped memory for discriminator_forward.6']
    #allocation11 [shape = 'u8[2048]{0}', space=vmem, size = 0x800, scoped, tag = 'output window, operand 0, single buffered']
    %9 = vsyncpa [#allocation4], 0
    %10 = vsyncpa [#allocation7], 0
    %11 = vsyncpa [#allocation10], 0
    %12 = vsyncpa [#allocation5], 0
    // Predicated region
    $region2: #{discriminator_forward.6} parent=1 // pred_check
      _
    $region3: #{discriminator_forward.6} parent=1 // pred_check_branch
      %14 = sbr.rel (0) target = $region5
    $region4: #{discriminator_forward.6} parent=1 // pred_region
      %s16 = ssub.s32 768, 768
      %17 = vsyncadd [#allocation4], %s16
      %s18 = sshll.u32 [#allocation3], 4
      %s19 = int_to_ptr.vmem [resolvable:$true] %s18
      %24 = dma.hbm_to_vmem [thread:$0]  %s0, 768, %s19, [#allocation4], 128, 128, 8
    $region5: #{discriminator_forward.6} parent=1 // pred_fallthru
      _
    // Predicated region
    $region6: #{discriminator_forward.6} parent=1 // pred_check
      _
    $region7: #{discriminator_forward.6} parent=1 // pred_check_branch
      %26 = sbr.rel (0) target = $region9
    $region8: #{discriminator_forward.6} parent=1 // pred_region
      %s28 = ssub.s32 16384, 16384
      %29 = vsyncadd [#allocation7], %s28
      %s30 = sshll.u32 [#allocation6], 4
      %s31 = int_to_ptr.vmem [resolvable:$true] %s30
      %36 = dma.hbm_to_vmem [thread:$0]  %s1, 16384, %s31, [#allocation7], 64, 64, 4
    $region9: #{discriminator_forward.6} parent=1 // pred_fallthru
      _
    // Predicated region
    $region10: #{discriminator_forward.6} parent=1 // pred_check
      _
    $region11: #{discriminator_forward.6} parent=1 // pred_check_branch
      %38 = sbr.rel (0) target = $region13
    $region12: #{discriminator_forward.6} parent=1 // pred_region
      %s40 = ssub.s32 16, 16
      %41 = vsyncadd [#allocation7], %s40
      %s43 = sshll.u32 [#allocation8], 4
      %s44 = int_to_ptr.vmem [resolvable:$true] %s43
      %46 = dma.hbm_to_vmem [thread:$0]  %s2, 16, %s44, [#allocation7]
    $region13: #{discriminator_forward.6} parent=1 // pred_fallthru
      _
    // Predicated region
    $region14: #{discriminator_forward.6} parent=1 // pred_check
      _
    $region15: #{discriminator_forward.6} parent=1 // pred_check_branch
      %48 = sbr.rel (0) target = $region17
    $region16: #{discriminator_forward.6} parent=1 // pred_region
      %s50 = ssub.s32 16, 16
      %51 = vsyncadd [#allocation10], %s50
      %s53 = sshll.u32 [#allocation9], 4
      %s54 = int_to_ptr.vmem [resolvable:$true] %s53
      %56 = dma.hbm_to_vmem [thread:$0]  %s3, 16, %s54, [#allocation10]
    $region17: #{discriminator_forward.6} parent=1 // pred_fallthru
      _
    // Predicated region
    $region18: #{discriminator_forward.6} parent=1 // pred_check
      _
    $region19: #{discriminator_forward.6} parent=1 // pred_check_branch
      %58 = sbr.rel (0) target = $region21
    $region20: #{discriminator_forward.6} parent=1 // pred_region
      %59 = dma.done [#allocation4], 768
    $region21: #{discriminator_forward.6} parent=1 // pred_fallthru
      _
    // Predicated region
    $region22: #{discriminator_forward.6} parent=1 // pred_check
      _
    $region23: #{discriminator_forward.6} parent=1 // pred_check_branch
      %61 = sbr.rel (0) target = $region25
    $region24: #{discriminator_forward.6} parent=1 // pred_region
      %62 = dma.done [#allocation7], 16384
    $region25: #{discriminator_forward.6} parent=1 // pred_fallthru
      _
    // Predicated region
    $region26: #{discriminator_forward.6} parent=1 // pred_check
      _
    $region27: #{discriminator_forward.6} parent=1 // pred_check_branch
      %64 = sbr.rel (0) target = $region29
    $region28: #{discriminator_forward.6} parent=1 // pred_region
      %65 = dma.done [#allocation7], 16
    $region29: #{discriminator_forward.6} parent=1 // pred_fallthru
      _
    // Predicated region
    $region30: #{discriminator_forward.6} parent=1 // pred_check
      _
    $region31: #{discriminator_forward.6} parent=1 // pred_check_branch
      %67 = sbr.rel (0) target = $region33
    $region32: #{discriminator_forward.6} parent=1 // pred_region
      %68 = dma.done [#allocation10], 16
    $region33: #{discriminator_forward.6} parent=1 // pred_fallthru
      _
    %v70 = vld [vmem:[#allocation3] sm:$0x55]
    %v71 = vld [vmem:[#allocation3 + $0x8] sm:$0x55]
    %v72 = vld [vmem:[#allocation3 + $0x18] sm:$0x55]
    %v73 = vld [vmem:[#allocation3 + $0x20] sm:$0x55]
    %v79 = vunpack.c.l.s4 1966171168
    %v80 = vunpack.c.0.s8 %v79
    %v81 = vlaneseq
    %v82 = vshrl.u32 %v81, 7
    %v83 = vsub.s32 %v80, %v82
    %v84 = vrot.slane %v70, %v83
    %v86 = vunpack.c.l.s4 1966171168
    %v87 = vunpack.c.0.s8 %v86
    %v88 = vlaneseq
    %v89 = vshrl.u32 %v88, 7
    %v90 = vsub.s32 %v87, %v89
    %v91 = vrot.slane %v71, %v90
    %v93 = vunpack.c.l.s4 1966171168
    %v94 = vunpack.c.0.s8 %v93
    %v95 = vlaneseq
    %v96 = vshrl.u32 %v95, 7
    %v97 = vsub.s32 %v94, %v96
    %v98 = vrot.slane %v72, %v97
    %v100 = vunpack.c.l.s4 1966171168
    %v101 = vunpack.c.0.s8 %v100
    %v102 = vlaneseq
    %v103 = vshrl.u32 %v102, 7
    %v104 = vsub.s32 %v101, %v103
    %v105 = vrot.slane %v73, %v104
    %v106 = vld [vmem:[#allocation6] sm:$0xf]
    %v107 = vld [vmem:[#allocation6 + $0x4] sm:$0xf]
    %v108 = vld [vmem:[#allocation6 + $0x8] sm:$0xf]
    %v109 = vld [vmem:[#allocation6 + $0xc] sm:$0xf]
    %v110 = vld [vmem:[#allocation6 + $0x10] sm:$0xf]
    %v111 = vld [vmem:[#allocation6 + $0x14] sm:$0xf]
    %v112 = vld [vmem:[#allocation6 + $0x18] sm:$0xf]
    %v113 = vld [vmem:[#allocation6 + $0x1c] sm:$0xf]
    %v114 = vld [vmem:[#allocation6 + $0x20] sm:$0xf]
    %v115 = vld [vmem:[#allocation6 + $0x24] sm:$0xf]
    %v116 = vld [vmem:[#allocation6 + $0x28] sm:$0xf]
    %v117 = vld [vmem:[#allocation6 + $0x2c] sm:$0xf]
    %v118 = vld [vmem:[#allocation6 + $0x30] sm:$0xf]
    %v119 = vld [vmem:[#allocation6 + $0x34] sm:$0xf]
    %v120 = vld [vmem:[#allocation6 + $0x38] sm:$0xf]
    %v121 = vld [vmem:[#allocation6 + $0x3c] sm:$0xf]
    %v122 = vld [vmem:[#allocation6 + $0x40] sm:$0xf]
    %v123 = vld [vmem:[#allocation6 + $0x44] sm:$0xf]
    %v124 = vld [vmem:[#allocation6 + $0x48] sm:$0xf]
    %v125 = vld [vmem:[#allocation6 + $0x4c] sm:$0xf]
    %v126 = vld [vmem:[#allocation6 + $0x50] sm:$0xf]
    %v127 = vld [vmem:[#allocation6 + $0x54] sm:$0xf]
    %v128 = vld [vmem:[#allocation6 + $0x58] sm:$0xf]
    %v129 = vld [vmem:[#allocation6 + $0x5c] sm:$0xf]
    %v130 = vld [vmem:[#allocation6 + $0x60] sm:$0xf]
    %v131 = vld [vmem:[#allocation6 + $0x64] sm:$0xf]
    %v132 = vld [vmem:[#allocation6 + $0x68] sm:$0xf]
    %v133 = vld [vmem:[#allocation6 + $0x6c] sm:$0xf]
    %v134 = vld [vmem:[#allocation6 + $0x70] sm:$0xf]
    %v135 = vld [vmem:[#allocation6 + $0x74] sm:$0xf]
    %v136 = vld [vmem:[#allocation6 + $0x78] sm:$0xf]
    %v137 = vld [vmem:[#allocation6 + $0x7c] sm:$0xf]
    %v138 = vld [vmem:[#allocation6 + $0x80] sm:$0xf]
    %v139 = vld [vmem:[#allocation6 + $0x84] sm:$0xf]
    %v140 = vld [vmem:[#allocation6 + $0x88] sm:$0xf]
    %v141 = vld [vmem:[#allocation6 + $0x8c] sm:$0xf]
    %v142 = vld [vmem:[#allocation6 + $0x90] sm:$0xf]
    %v143 = vld [vmem:[#allocation6 + $0x94] sm:$0xf]
    %v144 = vld [vmem:[#allocation6 + $0x98] sm:$0xf]
    %v145 = vld [vmem:[#allocation6 + $0x9c] sm:$0xf]
    %v146 = vld [vmem:[#allocation6 + $0xa0] sm:$0xf]
    %v147 = vld [vmem:[#allocation6 + $0xa4] sm:$0xf]
    %v148 = vld [vmem:[#allocation6 + $0xa8] sm:$0xf]
    %v149 = vld [vmem:[#allocation6 + $0xac] sm:$0xf]
    %v150 = vld [vmem:[#allocation6 + $0xb0] sm:$0xf]
    %v151 = vld [vmem:[#allocation6 + $0xb4] sm:$0xf]
    %v152 = vld [vmem:[#allocation6 + $0xb8] sm:$0xf]
    %v153 = vld [vmem:[#allocation6 + $0xbc] sm:$0xf]
    %v154 = vld [vmem:[#allocation6 + $0xc0] sm:$0xf]
    %v155 = vld [vmem:[#allocation6 + $0xc4] sm:$0xf]
    %v156 = vld [vmem:[#allocation6 + $0xc8] sm:$0xf]
    %v157 = vld [vmem:[#allocation6 + $0xcc] sm:$0xf]
    %v158 = vld [vmem:[#allocation6 + $0xd0] sm:$0xf]
    %v159 = vld [vmem:[#allocation6 + $0xd4] sm:$0xf]
    %v160 = vld [vmem:[#allocation6 + $0xd8] sm:$0xf]
    %v161 = vld [vmem:[#allocation6 + $0xdc] sm:$0xf]
    %v162 = vld [vmem:[#allocation6 + $0xe0] sm:$0xf]
    %v163 = vld [vmem:[#allocation6 + $0xe4] sm:$0xf]
    %v164 = vld [vmem:[#allocation6 + $0xe8] sm:$0xf]
    %v165 = vld [vmem:[#allocation6 + $0xec] sm:$0xf]
    %v166 = vld [vmem:[#allocation6 + $0xf0] sm:$0xf]
    %v167 = vld [vmem:[#allocation6 + $0xf4] sm:$0xf]
    %v168 = vld [vmem:[#allocation6 + $0xf8] sm:$0xf]
    %v169 = vld [vmem:[#allocation6 + $0xfc] sm:$0xf]
    %v170 = vcombine.low %v84, %v91
    %v171 = vcombine.low %v98, %v105
    %v173 = vunpack.c.l.s4 1966171168
    %v174 = vunpack.c.0.s8 %v173
    %v175 = vlaneseq
    %v176 = vshrl.u32 %v175, 7
    %v177 = vsub.s32 %v174, %v176
    %v178 = vrot.slane %v170, %v177
    %v180 = vunpack.c.l.s4 1966171168
    %v181 = vunpack.c.0.s8 %v180
    %v182 = vlaneseq
    %v183 = vshrl.u32 %v182, 7
    %v184 = vsub.s32 %v181, %v183
    %v185 = vrot.slane %v171, %v184
    %v186 = vcombine.low %v178, %v185
    %v187 = vcombine.high %v178, %v185
    %v189 = vunpack.c.l.s4 1966171168
    %v190 = vunpack.c.0.s8 %v189
    %v191 = vlaneseq
    %v192 = vshrl.u32 %v191, 7
    %v193 = vsub.s32 %v190, %v192
    %v194 = vrot.slane %v186, %v193
    %v196 = vunpack.c.l.s4 1966171168
    %v197 = vunpack.c.0.s8 %v196
    %v198 = vlaneseq
    %v199 = vshrl.u32 %v198, 7
    %v200 = vsub.s32 %v197, %v199
    %v201 = vrot.slane %v187, %v200
    %v202 = vcombine.high %v194, %v194
    %v203 = vcombine.high %v201, %v201
    %v272 = vunpack.c.l.b16 %v106
    %v273 = vunpack.c.l.b16 %v107
    %v274 = vunpack.c.l.b16 %v108
    %v275 = vunpack.c.l.b16 %v109
    %v276 = vunpack.c.l.b16 %v110
    %v277 = vunpack.c.l.b16 %v111
    %v278 = vunpack.c.l.b16 %v112
    %v279 = vunpack.c.l.b16 %v113
    %v280 = vunpack.c.l.b16 %v114
    %v281 = vunpack.c.l.b16 %v115
    %v282 = vunpack.c.l.b16 %v116
    %v283 = vunpack.c.l.b16 %v117
    %v284 = vunpack.c.l.b16 %v118
    %v285 = vunpack.c.l.b16 %v119
    %v286 = vunpack.c.l.b16 %v120
    %v287 = vunpack.c.l.b16 %v121
    %v288 = vunpack.c.l.b16 %v122
    %v289 = vunpack.c.l.b16 %v123
    %v290 = vunpack.c.l.b16 %v124
    %v291 = vunpack.c.l.b16 %v125
    %v292 = vunpack.c.l.b16 %v126
    %v293 = vunpack.c.l.b16 %v127
    %v294 = vunpack.c.l.b16 %v128
    %v295 = vunpack.c.l.b16 %v129
    %v296 = vunpack.c.l.b16 %v130
    %v297 = vunpack.c.l.b16 %v131
    %v298 = vunpack.c.l.b16 %v132
    %v299 = vunpack.c.l.b16 %v133
    %v300 = vunpack.c.l.b16 %v134
    %v301 = vunpack.c.l.b16 %v135
    %v302 = vunpack.c.l.b16 %v136
    %v303 = vunpack.c.l.b16 %v137
    %v304 = vunpack.c.l.b16 %v138
    %v305 = vunpack.c.l.b16 %v139
    %v306 = vunpack.c.l.b16 %v140
    %v307 = vunpack.c.l.b16 %v141
    %v308 = vunpack.c.l.b16 %v142
    %v309 = vunpack.c.l.b16 %v143
    %v310 = vunpack.c.l.b16 %v144
    %v311 = vunpack.c.l.b16 %v145
    %v312 = vunpack.c.l.b16 %v146
    %v313 = vunpack.c.l.b16 %v147
    %v314 = vunpack.c.l.b16 %v148
    %v315 = vunpack.c.l.b16 %v149
    %v316 = vunpack.c.l.b16 %v150
    %v317 = vunpack.c.l.b16 %v151
    %v318 = vunpack.c.l.b16 %v152
    %v319 = vunpack.c.l.b16 %v153
    %v320 = vunpack.c.l.b16 %v154
    %v321 = vunpack.c.l.b16 %v155
    %v322 = vunpack.c.l.b16 %v156
    %v323 = vunpack.c.l.b16 %v157
    %v324 = vunpack.c.l.b16 %v158
    %v325 = vunpack.c.l.b16 %v159
    %v326 = vunpack.c.l.b16 %v160
    %v327 = vunpack.c.l.b16 %v161
    %v328 = vunpack.c.l.b16 %v162
    %v329 = vunpack.c.l.b16 %v163
    %v330 = vunpack.c.l.b16 %v164
    %v331 = vunpack.c.l.b16 %v165
    %v332 = vunpack.c.l.b16 %v166
    %v333 = vunpack.c.l.b16 %v167
    %v334 = vunpack.c.l.b16 %v168
    %v335 = vunpack.c.l.b16 %v169
    %v336 = vpack.c.b16 %v273, %v272
    %v337 = vpack.c.b16 %v275, %v274
    %v338 = vpack.c.b16 %v277, %v276
    %v339 = vpack.c.b16 %v279, %v278
    %v340 = vpack.c.b16 %v281, %v280
    %v341 = vpack.c.b16 %v283, %v282
    %v342 = vpack.c.b16 %v285, %v284
    %v343 = vpack.c.b16 %v287, %v286
    %v344 = vpack.c.b16 %v289, %v288
    %v345 = vpack.c.b16 %v291, %v290
    %v346 = vpack.c.b16 %v293, %v292
    %v347 = vpack.c.b16 %v295, %v294
    %v348 = vpack.c.b16 %v297, %v296
    %v349 = vpack.c.b16 %v299, %v298
    %v350 = vpack.c.b16 %v301, %v300
    %v351 = vpack.c.b16 %v303, %v302
    %v352 = vpack.c.b16 %v305, %v304
    %v353 = vpack.c.b16 %v307, %v306
    %v354 = vpack.c.b16 %v309, %v308
    %v355 = vpack.c.b16 %v311, %v310
    %v356 = vpack.c.b16 %v313, %v312
    %v357 = vpack.c.b16 %v315, %v314
    %v358 = vpack.c.b16 %v317, %v316
    %v359 = vpack.c.b16 %v319, %v318
    %v360 = vpack.c.b16 %v321, %v320
    %v361 = vpack.c.b16 %v323, %v322
    %v362 = vpack.c.b16 %v325, %v324
    %v363 = vpack.c.b16 %v327, %v326
    %v364 = vpack.c.b16 %v329, %v328
    %v365 = vpack.c.b16 %v331, %v330
    %v366 = vpack.c.b16 %v333, %v332
    %v367 = vpack.c.b16 %v335, %v334
    %400 = vmatprep.subr.bf16.mxu0 0
    %401 = vmatpush1.bf16.msra.mxu0 %v336
    %402 = vmatprep.subr.bf16.mxu0 0
    %403 = vmatpush1.bf16.msra.mxu0 %v337
    %404 = vmatprep.subr.bf16.mxu0 0
    %405 = vmatpush1.bf16.msra.mxu0 %v338
    %406 = vmatprep.subr.bf16.mxu0 0
    %407 = vmatpush1.bf16.msra.mxu0 %v339
    %408 = vmatprep.subr.bf16.mxu0 0
    %409 = vmatpush1.bf16.msra.mxu0 %v340
    %410 = vmatprep.subr.bf16.mxu0 0
    %411 = vmatpush1.bf16.msra.mxu0 %v341
    %412 = vmatprep.subr.bf16.mxu0 0
    %413 = vmatpush1.bf16.msra.mxu0 %v342
    %414 = vmatprep.subr.bf16.mxu0 0
    %415 = vmatpush1.bf16.msra.mxu0 %v343
    %416 = vmatprep.subr.bf16.mxu0 0
    %417 = vmatpush1.bf16.msra.mxu0 %v344
    %418 = vmatprep.subr.bf16.mxu0 0
    %419 = vmatpush1.bf16.msra.mxu0 %v345
    %420 = vmatprep.subr.bf16.mxu0 0
    %421 = vmatpush1.bf16.msra.mxu0 %v346
    %422 = vmatprep.subr.bf16.mxu0 0
    %423 = vmatpush1.bf16.msra.mxu0 %v347
    %424 = vmatprep.subr.bf16.mxu0 0
    %425 = vmatpush1.bf16.msra.mxu0 %v348
    %426 = vmatprep.subr.bf16.mxu0 0
    %427 = vmatpush1.bf16.msra.mxu0 %v349
    %428 = vmatprep.subr.bf16.mxu0 0
    %429 = vmatpush1.bf16.msra.mxu0 %v350
    %430 = vmatprep.subr.bf16.mxu0 0
    %431 = vmatpush1.bf16.msra.mxu0 %v351
    %432 = vmatprep.mubr.bf16.mxu0 %v201
    %433 = vmatmul.mubr.bf16.gmra.mrb[0].mxu0 %v194
    %v434 = vpop.f32.mrb[0].mxu0
    %v435 = vadd.f32 0.0, %v434
    %v436 = vpop.f32.mrb[0].mxu0
    %v437 = vpop.f32.mrb[0].mxu0
    %v438 = vpop.f32.mrb[0].mxu0
    %439 = vdwg.mxu0
    %440 = vmatprep.subr.bf16.mxu0 0
    %441 = vmatpush1.bf16.msra.mxu0 %v352
    %442 = vmatprep.subr.bf16.mxu0 0
    %443 = vmatpush1.bf16.msra.mxu0 %v353
    %444 = vmatprep.subr.bf16.mxu0 0
    %445 = vmatpush1.bf16.msra.mxu0 %v354
    %446 = vmatprep.subr.bf16.mxu0 0
    %447 = vmatpush1.bf16.msra.mxu0 %v355
    %448 = vmatprep.subr.bf16.mxu0 0
    %449 = vmatpush1.bf16.msra.mxu0 %v356
    %450 = vmatprep.subr.bf16.mxu0 0
    %451 = vmatpush1.bf16.msra.mxu0 %v357
    %452 = vmatprep.subr.bf16.mxu0 0
    %453 = vmatpush1.bf16.msra.mxu0 %v358
    %454 = vmatprep.subr.bf16.mxu0 0
    %455 = vmatpush1.bf16.msra.mxu0 %v359
    %456 = vmatprep.subr.bf16.mxu0 0
    %457 = vmatpush1.bf16.msra.mxu0 %v360
    %458 = vmatprep.subr.bf16.mxu0 0
    %459 = vmatpush1.bf16.msra.mxu0 %v361
    %460 = vmatprep.subr.bf16.mxu0 0
    %461 = vmatpush1.bf16.msra.mxu0 %v362
    %462 = vmatprep.subr.bf16.mxu0 0
    %463 = vmatpush1.bf16.msra.mxu0 %v363
    %464 = vmatprep.subr.bf16.mxu0 0
    %465 = vmatpush1.bf16.msra.mxu0 %v364
    %466 = vmatprep.subr.bf16.mxu0 0
    %467 = vmatpush1.bf16.msra.mxu0 %v365
    %468 = vmatprep.subr.bf16.mxu0 0
    %469 = vmatpush1.bf16.msra.mxu0 %v366
    %470 = vmatprep.subr.bf16.mxu0 0
    %471 = vmatpush1.bf16.msra.mxu0 %v367
    %472 = vmatprep.mubr.bf16.mxu0 %v203
    %473 = vmatmul.mubr.bf16.gmra.mrb[0].mxu0 %v202
    %v474 = vpop.f32.mrb[0].mxu0
    %v475 = vadd.f32 %v435, %v474
    %v476 = vpop.f32.mrb[0].mxu0
    %v477 = vpop.f32.mrb[0].mxu0
    %v478 = vpop.f32.mrb[0].mxu0
    %479 = vdwg.mxu0
    %480 = vst [vmem:[#allocation2] sm:$0xff] %v475
    %v481 = vld [vmem:[#allocation3] sm:$0xff]
    %v482 = vld [vmem:[#allocation3 + $0x8] sm:$0xff]
    %v483 = vld [vmem:[#allocation3 + $0x18] sm:$0xff]
    %v484 = vld [vmem:[#allocation3 + $0x20] sm:$0xff]
    %v490 = vunpack.c.l.s4 1966171168
    %v491 = vunpack.c.0.s8 %v490
    %v492 = vlaneseq
    %v493 = vshrl.u32 %v492, 7
    %v494 = vsub.s32 %v491, %v493
    %v495 = vrot.slane %v481, %v494
    %v496 = vcombine.high %v495, %v495
    %v498 = vunpack.c.l.s4 1966171168
    %v499 = vunpack.c.0.s8 %v498
    %v500 = vlaneseq
    %v501 = vshrl.u32 %v500, 7
    %v502 = vsub.s32 %v499, %v501
    %v503 = vrot.slane %v482, %v502
    %v504 = vcombine.high %v503, %v503
    %v506 = vunpack.c.l.s4 1966171168
    %v507 = vunpack.c.0.s8 %v506
    %v508 = vlaneseq
    %v509 = vshrl.u32 %v508, 7
    %v510 = vsub.s32 %v507, %v509
    %v511 = vrot.slane %v483, %v510
    %v512 = vcombine.high %v511, %v511
    %v514 = vunpack.c.l.s4 1966171168
    %v515 = vunpack.c.0.s8 %v514
    %v516 = vlaneseq
    %v517 = vshrl.u32 %v516, 7
    %v518 = vsub.s32 %v515, %v517
    %v519 = vrot.slane %v484, %v518
    %v520 = vcombine.high %v519, %v519
    %vm521 = vsmask.f32 256
    %vm522 = vsmask.f32 1284
    %vm523 = vmor %vm521, %vm522
    %vm524 = vsmask.f32 2312
    %vm525 = vmor %vm523, %vm524
    %vm526 = vsmask.f32 3340
    %vm527 = vmor %vm525, %vm526
    %vm528 = vsmask.f32 4368
    %vm529 = vmor %vm527, %vm528
    %vm530 = vsmask.f32 5396
    %vm531 = vmor %vm529, %vm530
    %vm532 = vsmask.f32 6424
    %vm533 = vmor %vm531, %vm532
    %vm534 = vsmask.f32 7452
    %vm535 = vmor %vm533, %vm534
    %v537 = vshrl.u32 %v495, 16
    %v539 = vrot.slane %v537, 7
    %v540 = vrot.slane %v539, 1
    %v542 = vshll.u32 %v496, 16
    %v544 = vsel %vm535, %v540, %v542
    %v546 = vshrl.u32 %v503, 16
    %v548 = vrot.slane %v546, 7
    %v549 = vrot.slane %v548, 1
    %v551 = vshll.u32 %v504, 16
    %v553 = vsel %vm535, %v549, %v551
    %v555 = vshrl.u32 %v511, 16
    %v557 = vrot.slane %v555, 7
    %v558 = vrot.slane %v557, 1
    %v560 = vshll.u32 %v512, 16
    %v562 = vsel %vm535, %v558, %v560
    %v564 = vshrl.u32 %v519, 16
    %v566 = vrot.slane %v564, 7
    %v567 = vrot.slane %v566, 1
    %v569 = vshll.u32 %v520, 16
    %v571 = vsel %vm535, %v567, %v569
    %s572 = scalar_lea.vmem [#allocation6], 256
    %v573 = vld [vmem:[%s572] sm:$0xf]
    %v574 = vld [vmem:[%s572 + $0x4] sm:$0xf]
    %v575 = vld [vmem:[%s572 + $0x8] sm:$0xf]
    %v576 = vld [vmem:[%s572 + $0xc] sm:$0xf]
    %v577 = vld [vmem:[%s572 + $0x10] sm:$0xf]
    %v578 = vld [vmem:[%s572 + $0x14] sm:$0xf]
    %v579 = vld [vmem:[%s572 + $0x18] sm:$0xf]
    %v580 = vld [vmem:[%s572 + $0x1c] sm:$0xf]
    %v581 = vld [vmem:[%s572 + $0x20] sm:$0xf]
    %v582 = vld [vmem:[%s572 + $0x24] sm:$0xf]
    %v583 = vld [vmem:[%s572 + $0x28] sm:$0xf]
    %v584 = vld [vmem:[%s572 + $0x2c] sm:$0xf]
    %v585 = vld [vmem:[%s572 + $0x30] sm:$0xf]
    %v586 = vld [vmem:[%s572 + $0x34] sm:$0xf]
    %v587 = vld [vmem:[%s572 + $0x38] sm:$0xf]
    %v588 = vld [vmem:[%s572 + $0x3c] sm:$0xf]
    %v589 = vld [vmem:[%s572 + $0x40] sm:$0xf]
    %v590 = vld [vmem:[%s572 + $0x44] sm:$0xf]
    %v591 = vld [vmem:[%s572 + $0x48] sm:$0xf]
    %v592 = vld [vmem:[%s572 + $0x4c] sm:$0xf]
    %v593 = vld [vmem:[%s572 + $0x50] sm:$0xf]
    %v594 = vld [vmem:[%s572 + $0x54] sm:$0xf]
    %v595 = vld [vmem:[%s572 + $0x58] sm:$0xf]
    %v596 = vld [vmem:[%s572 + $0x5c] sm:$0xf]
    %v597 = vld [vmem:[%s572 + $0x60] sm:$0xf]
    %v598 = vld [vmem:[%s572 + $0x64] sm:$0xf]
    %v599 = vld [vmem:[%s572 + $0x68] sm:$0xf]
    %v600 = vld [vmem:[%s572 + $0x6c] sm:$0xf]
    %v601 = vld [vmem:[%s572 + $0x70] sm:$0xf]
    %v602 = vld [vmem:[%s572 + $0x74] sm:$0xf]
    %v603 = vld [vmem:[%s572 + $0x78] sm:$0xf]
    %v604 = vld [vmem:[%s572 + $0x7c] sm:$0xf]
    %v605 = vld [vmem:[%s572 + $0x80] sm:$0xf]
    %v606 = vld [vmem:[%s572 + $0x84] sm:$0xf]
    %v607 = vld [vmem:[%s572 + $0x88] sm:$0xf]
    %v608 = vld [vmem:[%s572 + $0x8c] sm:$0xf]
    %v609 = vld [vmem:[%s572 + $0x90] sm:$0xf]
    %v610 = vld [vmem:[%s572 + $0x94] sm:$0xf]
    %v611 = vld [vmem:[%s572 + $0x98] sm:$0xf]
    %v612 = vld [vmem:[%s572 + $0x9c] sm:$0xf]
    %v613 = vld [vmem:[%s572 + $0xa0] sm:$0xf]
    %v614 = vld [vmem:[%s572 + $0xa4] sm:$0xf]
    %v615 = vld [vmem:[%s572 + $0xa8] sm:$0xf]
    %v616 = vld [vmem:[%s572 + $0xac] sm:$0xf]
    %v617 = vld [vmem:[%s572 + $0xb0] sm:$0xf]
    %v618 = vld [vmem:[%s572 + $0xb4] sm:$0xf]
    %v619 = vld [vmem:[%s572 + $0xb8] sm:$0xf]
    %v620 = vld [vmem:[%s572 + $0xbc] sm:$0xf]
    %v621 = vld [vmem:[%s572 + $0xc0] sm:$0xf]
    %v622 = vld [vmem:[%s572 + $0xc4] sm:$0xf]
    %v623 = vld [vmem:[%s572 + $0xc8] sm:$0xf]
    %v624 = vld [vmem:[%s572 + $0xcc] sm:$0xf]
    %v625 = vld [vmem:[%s572 + $0xd0] sm:$0xf]
    %v626 = vld [vmem:[%s572 + $0xd4] sm:$0xf]
    %v627 = vld [vmem:[%s572 + $0xd8] sm:$0xf]
    %v628 = vld [vmem:[%s572 + $0xdc] sm:$0xf]
    %v629 = vld [vmem:[%s572 + $0xe0] sm:$0xf]
    %v630 = vld [vmem:[%s572 + $0xe4] sm:$0xf]
    %v631 = vld [vmem:[%s572 + $0xe8] sm:$0xf]
    %v632 = vld [vmem:[%s572 + $0xec] sm:$0xf]
    %v633 = vld [vmem:[%s572 + $0xf0] sm:$0xf]
    %v634 = vld [vmem:[%s572 + $0xf4] sm:$0xf]
    %v635 = vld [vmem:[%s572 + $0xf8] sm:$0xf]
    %v636 = vld [vmem:[%s572 + $0xfc] sm:$0xf]
    %v637 = vcombine.low %v544, %v553
    %v638 = vcombine.low %v562, %v571
    %v640 = vunpack.c.l.s4 1966171168
    %v641 = vunpack.c.0.s8 %v640
    %v642 = vlaneseq
    %v643 = vshrl.u32 %v642, 7
    %v644 = vsub.s32 %v641, %v643
    %v645 = vrot.slane %v637, %v644
    %v647 = vunpack.c.l.s4 1966171168
    %v648 = vunpack.c.0.s8 %v647
    %v649 = vlaneseq
    %v650 = vshrl.u32 %v649, 7
    %v651 = vsub.s32 %v648, %v650
    %v652 = vrot.slane %v638, %v651
    %v653 = vcombine.low %v645, %v652
    %v654 = vcombine.high %v645, %v652
    %v656 = vunpack.c.l.s4 1966171168
    %v657 = vunpack.c.0.s8 %v656
    %v658 = vlaneseq
    %v659 = vshrl.u32 %v658, 7
    %v660 = vsub.s32 %v657, %v659
    %v661 = vrot.slane %v653, %v660
    %v663 = vunpack.c.l.s4 1966171168
    %v664 = vunpack.c.0.s8 %v663
    %v665 = vlaneseq
    %v666 = vshrl.u32 %v665, 7
    %v667 = vsub.s32 %v664, %v666
    %v668 = vrot.slane %v654, %v667
    %v669 = vcombine.high %v661, %v661
    %v670 = vcombine.high %v668, %v668
    %v739 = vunpack.c.l.b16 %v573
    %v740 = vunpack.c.l.b16 %v574
    %v741 = vunpack.c.l.b16 %v575
    %v742 = vunpack.c.l.b16 %v576
    %v743 = vunpack.c.l.b16 %v577
    %v744 = vunpack.c.l.b16 %v578
    %v745 = vunpack.c.l.b16 %v579
    %v746 = vunpack.c.l.b16 %v580
    %v747 = vunpack.c.l.b16 %v581
    %v748 = vunpack.c.l.b16 %v582
    %v749 = vunpack.c.l.b16 %v583
    %v750 = vunpack.c.l.b16 %v584
    %v751 = vunpack.c.l.b16 %v585
    %v752 = vunpack.c.l.b16 %v586
    %v753 = vunpack.c.l.b16 %v587
    %v754 = vunpack.c.l.b16 %v588
    %v755 = vunpack.c.l.b16 %v589
    %v756 = vunpack.c.l.b16 %v590
    %v757 = vunpack.c.l.b16 %v591
    %v758 = vunpack.c.l.b16 %v592
    %v759 = vunpack.c.l.b16 %v593
    %v760 = vunpack.c.l.b16 %v594
    %v761 = vunpack.c.l.b16 %v595
    %v762 = vunpack.c.l.b16 %v596
    %v763 = vunpack.c.l.b16 %v597
    %v764 = vunpack.c.l.b16 %v598
    %v765 = vunpack.c.l.b16 %v599
    %v766 = vunpack.c.l.b16 %v600
    %v767 = vunpack.c.l.b16 %v601
    %v768 = vunpack.c.l.b16 %v602
    %v769 = vunpack.c.l.b16 %v603
    %v770 = vunpack.c.l.b16 %v604
    %v771 = vunpack.c.l.b16 %v605
    %v772 = vunpack.c.l.b16 %v606
    %v773 = vunpack.c.l.b16 %v607
    %v774 = vunpack.c.l.b16 %v608
    %v775 = vunpack.c.l.b16 %v609
    %v776 = vunpack.c.l.b16 %v610
    %v777 = vunpack.c.l.b16 %v611
    %v778 = vunpack.c.l.b16 %v612
    %v779 = vunpack.c.l.b16 %v613
    %v780 = vunpack.c.l.b16 %v614
    %v781 = vunpack.c.l.b16 %v615
    %v782 = vunpack.c.l.b16 %v616
    %v783 = vunpack.c.l.b16 %v617
    %v784 = vunpack.c.l.b16 %v618
    %v785 = vunpack.c.l.b16 %v619
    %v786 = vunpack.c.l.b16 %v620
    %v787 = vunpack.c.l.b16 %v621
    %v788 = vunpack.c.l.b16 %v622
    %v789 = vunpack.c.l.b16 %v623
    %v790 = vunpack.c.l.b16 %v624
    %v791 = vunpack.c.l.b16 %v625
    %v792 = vunpack.c.l.b16 %v626
    %v793 = vunpack.c.l.b16 %v627
    %v794 = vunpack.c.l.b16 %v628
    %v795 = vunpack.c.l.b16 %v629
    %v796 = vunpack.c.l.b16 %v630
    %v797 = vunpack.c.l.b16 %v631
    %v798 = vunpack.c.l.b16 %v632
    %v799 = vunpack.c.l.b16 %v633
    %v800 = vunpack.c.l.b16 %v634
    %v801 = vunpack.c.l.b16 %v635
    %v802 = vunpack.c.l.b16 %v636
    %v803 = vpack.c.b16 %v740, %v739
    %v804 = vpack.c.b16 %v742, %v741
    %v805 = vpack.c.b16 %v744, %v743
    %v806 = vpack.c.b16 %v746, %v745
    %v807 = vpack.c.b16 %v748, %v747
    %v808 = vpack.c.b16 %v750, %v749
    %v809 = vpack.c.b16 %v752, %v751
    %v810 = vpack.c.b16 %v754, %v753
    %v811 = vpack.c.b16 %v756, %v755
    %v812 = vpack.c.b16 %v758, %v757
    %v813 = vpack.c.b16 %v760, %v759
    %v814 = vpack.c.b16 %v762, %v761
    %v815 = vpack.c.b16 %v764, %v763
    %v816 = vpack.c.b16 %v766, %v765
    %v817 = vpack.c.b16 %v768, %v767
    %v818 = vpack.c.b16 %v770, %v769
    %v819 = vpack.c.b16 %v772, %v771
    %v820 = vpack.c.b16 %v774, %v773
    %v821 = vpack.c.b16 %v776, %v775
    %v822 = vpack.c.b16 %v778, %v777
    %v823 = vpack.c.b16 %v780, %v779
    %v824 = vpack.c.b16 %v782, %v781
    %v825 = vpack.c.b16 %v784, %v783
    %v826 = vpack.c.b16 %v786, %v785
    %v827 = vpack.c.b16 %v788, %v787
    %v828 = vpack.c.b16 %v790, %v789
    %v829 = vpack.c.b16 %v792, %v791
    %v830 = vpack.c.b16 %v794, %v793
    %v831 = vpack.c.b16 %v796, %v795
    %v832 = vpack.c.b16 %v798, %v797
    %v833 = vpack.c.b16 %v800, %v799
    %v834 = vpack.c.b16 %v802, %v801
    %867 = vmatprep.subr.bf16.mxu0 0
    %868 = vmatpush1.bf16.msra.mxu0 %v803
    %869 = vmatprep.subr.bf16.mxu0 0
    %870 = vmatpush1.bf16.msra.mxu0 %v804
    %871 = vmatprep.subr.bf16.mxu0 0
    %872 = vmatpush1.bf16.msra.mxu0 %v805
    %873 = vmatprep.subr.bf16.mxu0 0
    %874 = vmatpush1.bf16.msra.mxu0 %v806
    %875 = vmatprep.subr.bf16.mxu0 0
    %876 = vmatpush1.bf16.msra.mxu0 %v807
    %877 = vmatprep.subr.bf16.mxu0 0
    %878 = vmatpush1.bf16.msra.mxu0 %v808
    %879 = vmatprep.subr.bf16.mxu0 0
    %880 = vmatpush1.bf16.msra.mxu0 %v809
    %881 = vmatprep.subr.bf16.mxu0 0
    %882 = vmatpush1.bf16.msra.mxu0 %v810
    %883 = vmatprep.subr.bf16.mxu0 0
    %884 = vmatpush1.bf16.msra.mxu0 %v811
    %885 = vmatprep.subr.bf16.mxu0 0
    %886 = vmatpush1.bf16.msra.mxu0 %v812
    %887 = vmatprep.subr.bf16.mxu0 0
    %888 = vmatpush1.bf16.msra.mxu0 %v813
    %889 = vmatprep.subr.bf16.mxu0 0
    %890 = vmatpush1.bf16.msra.mxu0 %v814
    %891 = vmatprep.subr.bf16.mxu0 0
    %892 = vmatpush1.bf16.msra.mxu0 %v815
    %893 = vmatprep.subr.bf16.mxu0 0
    %894 = vmatpush1.bf16.msra.mxu0 %v816
    %895 = vmatprep.subr.bf16.mxu0 0
    %896 = vmatpush1.bf16.msra.mxu0 %v817
    %897 = vmatprep.subr.bf16.mxu0 0
    %898 = vmatpush1.bf16.msra.mxu0 %v818
    %899 = vmatprep.mubr.bf16.mxu0 %v668
    %900 = vmatmul.mubr.bf16.gmra.mrb[0].mxu0 %v661
    %v901 = vpop.f32.mrb[0].mxu0
    %v902 = vadd.f32 0.0, %v901
    %v903 = vpop.f32.mrb[0].mxu0
    %v904 = vpop.f32.mrb[0].mxu0
    %v905 = vpop.f32.mrb[0].mxu0
    %906 = vdwg.mxu0
    %907 = vmatprep.subr.bf16.mxu0 0
    %908 = vmatpush1.bf16.msra.mxu0 %v819
    %909 = vmatprep.subr.bf16.mxu0 0
    %910 = vmatpush1.bf16.msra.mxu0 %v820
    %911 = vmatprep.subr.bf16.mxu0 0
    %912 = vmatpush1.bf16.msra.mxu0 %v821
    %913 = vmatprep.subr.bf16.mxu0 0
    %914 = vmatpush1.bf16.msra.mxu0 %v822
    %915 = vmatprep.subr.bf16.mxu0 0
    %916 = vmatpush1.bf16.msra.mxu0 %v823
    %917 = vmatprep.subr.bf16.mxu0 0
    %918 = vmatpush1.bf16.msra.mxu0 %v824
    %919 = vmatprep.subr.bf16.mxu0 0
    %920 = vmatpush1.bf16.msra.mxu0 %v825
    %921 = vmatprep.subr.bf16.mxu0 0
    %922 = vmatpush1.bf16.msra.mxu0 %v826
    %923 = vmatprep.subr.bf16.mxu0 0
    %924 = vmatpush1.bf16.msra.mxu0 %v827
    %925 = vmatprep.subr.bf16.mxu0 0
    %926 = vmatpush1.bf16.msra.mxu0 %v828
    %927 = vmatprep.subr.bf16.mxu0 0
    %928 = vmatpush1.bf16.msra.mxu0 %v829
    %929 = vmatprep.subr.bf16.mxu0 0
    %930 = vmatpush1.bf16.msra.mxu0 %v830
    %931 = vmatprep.subr.bf16.mxu0 0
    %932 = vmatpush1.bf16.msra.mxu0 %v831
    %933 = vmatprep.subr.bf16.mxu0 0
    %934 = vmatpush1.bf16.msra.mxu0 %v832
    %935 = vmatprep.subr.bf16.mxu0 0
    %936 = vmatpush1.bf16.msra.mxu0 %v833
    %937 = vmatprep.subr.bf16.mxu0 0
    %938 = vmatpush1.bf16.msra.mxu0 %v834
    %939 = vmatprep.mubr.bf16.mxu0 %v670
    %940 = vmatmul.mubr.bf16.gmra.mrb[0].mxu0 %v669
    %v941 = vpop.f32.mrb[0].mxu0
    %v942 = vadd.f32 %v902, %v941
    %v943 = vpop.f32.mrb[0].mxu0
    %v944 = vpop.f32.mrb[0].mxu0
    %v945 = vpop.f32.mrb[0].mxu0
    %946 = vdwg.mxu0
    %v947 = vld [vmem:[#allocation2] sm:$0xff]
    %v948 = vadd.f32 %v947, %v942
    %949 = vst [vmem:[#allocation2] sm:$0xff] %v948
    %s950 = scalar_lea.vmem [#allocation3], 8
    %v951 = vld [vmem:[%s950] sm:$0x55]
    %v952 = vld [vmem:[%s950 + $0x8] sm:$0x55]
    %v953 = vld [vmem:[%s950 + $0x18] sm:$0x55]
    %v954 = vld [vmem:[%s950 + $0x20] sm:$0x55]
    %v960 = vunpack.c.l.s4 1966171168
    %v961 = vunpack.c.0.s8 %v960
    %v962 = vlaneseq
    %v963 = vshrl.u32 %v962, 7
    %v964 = vsub.s32 %v961, %v963
    %v965 = vrot.slane %v951, %v964
    %v967 = vunpack.c.l.s4 1966171168
    %v968 = vunpack.c.0.s8 %v967
    %v969 = vlaneseq
    %v970 = vshrl.u32 %v969, 7
    %v971 = vsub.s32 %v968, %v970
    %v972 = vrot.slane %v952, %v971
    %v974 = vunpack.c.l.s4 1966171168
    %v975 = vunpack.c.0.s8 %v974
    %v976 = vlaneseq
    %v977 = vshrl.u32 %v976, 7
    %v978 = vsub.s32 %v975, %v977
    %v979 = vrot.slane %v953, %v978
    %v981 = vunpack.c.l.s4 1966171168
    %v982 = vunpack.c.0.s8 %v981
    %v983 = vlaneseq
    %v984 = vshrl.u32 %v983, 7
    %v985 = vsub.s32 %v982, %v984
    %v986 = vrot.slane %v954, %v985
    %s987 = scalar_lea.vmem [#allocation6], 512
    %v988 = vld [vmem:[%s987] sm:$0xf]
    %v989 = vld [vmem:[%s987 + $0x4] sm:$0xf]
    %v990 = vld [vmem:[%s987 + $0x8] sm:$0xf]
    %v991 = vld [vmem:[%s987 + $0xc] sm:$0xf]
    %v992 = vld [vmem:[%s987 + $0x10] sm:$0xf]
    %v993 = vld [vmem:[%s987 + $0x14] sm:$0xf]
    %v994 = vld [vmem:[%s987 + $0x18] sm:$0xf]
    %v995 = vld [vmem:[%s987 + $0x1c] sm:$0xf]
    %v996 = vld [vmem:[%s987 + $0x20] sm:$0xf]
    %v997 = vld [vmem:[%s987 + $0x24] sm:$0xf]
    %v998 = vld [vmem:[%s987 + $0x28] sm:$0xf]
    %v999 = vld [vmem:[%s987 + $0x2c] sm:$0xf]
    %v1000 = vld [vmem:[%s987 + $0x30] sm:$0xf]
    %v1001 = vld [vmem:[%s987 + $0x34] sm:$0xf]
    %v1002 = vld [vmem:[%s987 + $0x38] sm:$0xf]
    %v1003 = vld [vmem:[%s987 + $0x3c] sm:$0xf]
    %v1004 = vld [vmem:[%s987 + $0x40] sm:$0xf]
    %v1005 = vld [vmem:[%s987 + $0x44] sm:$0xf]
    %v1006 = vld [vmem:[%s987 + $0x48] sm:$0xf]
    %v1007 = vld [vmem:[%s987 + $0x4c] sm:$0xf]
    %v1008 = vld [vmem:[%s987 + $0x50] sm:$0xf]
    %v1009 = vld [vmem:[%s987 + $0x54] sm:$0xf]
    %v1010 = vld [vmem:[%s987 + $0x58] sm:$0xf]
    %v1011 = vld [vmem:[%s987 + $0x5c] sm:$0xf]
    %v1012 = vld [vmem:[%s987 + $0x60] sm:$0xf]
    %v1013 = vld [vmem:[%s987 + $0x64] sm:$0xf]
    %v1014 = vld [vmem:[%s987 + $0x68] sm:$0xf]
    %v1015 = vld [vmem:[%s987 + $0x6c] sm:$0xf]
    %v1016 = vld [vmem:[%s987 + $0x70] sm:$0xf]
    %v1017 = vld [vmem:[%s987 + $0x74] sm:$0xf]
    %v1018 = vld [vmem:[%s987 + $0x78] sm:$0xf]
    %v1019 = vld [vmem:[%s987 + $0x7c] sm:$0xf]
    %v1020 = vld [vmem:[%s987 + $0x80] sm:$0xf]
    %v1021 = vld [vmem:[%s987 + $0x84] sm:$0xf]
    %v1022 = vld [vmem:[%s987 + $0x88] sm:$0xf]
    %v1023 = vld [vmem:[%s987 + $0x8c] sm:$0xf]
    %v1024 = vld [vmem:[%s987 + $0x90] sm:$0xf]
    %v1025 = vld [vmem:[%s987 + $0x94] sm:$0xf]
    %v1026 = vld [vmem:[%s987 + $0x98] sm:$0xf]
    %v1027 = vld [vmem:[%s987 + $0x9c] sm:$0xf]
    %v1028 = vld [vmem:[%s987 + $0xa0] sm:$0xf]
    %v1029 = vld [vmem:[%s987 + $0xa4] sm:$0xf]
    %v1030 = vld [vmem:[%s987 + $0xa8] sm:$0xf]
    %v1031 = vld [vmem:[%s987 + $0xac] sm:$0xf]
    %v1032 = vld [vmem:[%s987 + $0xb0] sm:$0xf]
    %v1033 = vld [vmem:[%s987 + $0xb4] sm:$0xf]
    %v1034 = vld [vmem:[%s987 + $0xb8] sm:$0xf]
    %v1035 = vld [vmem:[%s987 + $0xbc] sm:$0xf]
    %v1036 = vld [vmem:[%s987 + $0xc0] sm:$0xf]
    %v1037 = vld [vmem:[%s987 + $0xc4] sm:$0xf]
    %v1038 = vld [vmem:[%s987 + $0xc8] sm:$0xf]
    %v1039 = vld [vmem:[%s987 + $0xcc] sm:$0xf]
    %v1040 = vld [vmem:[%s987 + $0xd0] sm:$0xf]
    %v1041 = vld [vmem:[%s987 + $0xd4] sm:$0xf]
    %v1042 = vld [vmem:[%s987 + $0xd8] sm:$0xf]
    %v1043 = vld [vmem:[%s987 + $0xdc] sm:$0xf]
    %v1044 = vld [vmem:[%s987 + $0xe0] sm:$0xf]
    %v1045 = vld [vmem:[%s987 + $0xe4] sm:$0xf]
    %v1046 = vld [vmem:[%s987 + $0xe8] sm:$0xf]
    %v1047 = vld [vmem:[%s987 + $0xec] sm:$0xf]
    %v1048 = vld [vmem:[%s987 + $0xf0] sm:$0xf]
    %v1049 = vld [vmem:[%s987 + $0xf4] sm:$0xf]
    %v1050 = vld [vmem:[%s987 + $0xf8] sm:$0xf]
    %v1051 = vld [vmem:[%s987 + $0xfc] sm:$0xf]
    %v1052 = vcombine.low %v965, %v972
    %v1053 = vcombine.low %v979, %v986
    %v1055 = vunpack.c.l.s4 1966171168
    %v1056 = vunpack.c.0.s8 %v1055
    %v1057 = vlaneseq
    %v1058 = vshrl.u32 %v1057, 7
    %v1059 = vsub.s32 %v1056, %v1058
    %v1060 = vrot.slane %v1052, %v1059
    %v1062 = vunpack.c.l.s4 1966171168
    %v1063 = vunpack.c.0.s8 %v1062
    %v1064 = vlaneseq
    %v1065 = vshrl.u32 %v1064, 7
    %v1066 = vsub.s32 %v1063, %v1065
    %v1067 = vrot.slane %v1053, %v1066
    %v1068 = vcombine.low %v1060, %v1067
    %v1069 = vcombine.high %v1060, %v1067
    %v1071 = vunpack.c.l.s4 1966171168
    %v1072 = vunpack.c.0.s8 %v1071
    %v1073 = vlaneseq
    %v1074 = vshrl.u32 %v1073, 7
    %v1075 = vsub.s32 %v1072, %v1074
    %v1076 = vrot.slane %v1068, %v1075
    %v1078 = vunpack.c.l.s4 1966171168
    %v1079 = vunpack.c.0.s8 %v1078
    %v1080 = vlaneseq
    %v1081 = vshrl.u32 %v1080, 7
    %v1082 = vsub.s32 %v1079, %v1081
    %v1083 = vrot.slane %v1069, %v1082
    %v1084 = vcombine.high %v1076, %v1076
    %v1085 = vcombine.high %v1083, %v1083
    %v1154 = vunpack.c.l.b16 %v988
    %v1155 = vunpack.c.l.b16 %v989
    %v1156 = vunpack.c.l.b16 %v990
    %v1157 = vunpack.c.l.b16 %v991
    %v1158 = vunpack.c.l.b16 %v992
    %v1159 = vunpack.c.l.b16 %v993
    %v1160 = vunpack.c.l.b16 %v994
    %v1161 = vunpack.c.l.b16 %v995
    %v1162 = vunpack.c.l.b16 %v996
    %v1163 = vunpack.c.l.b16 %v997
    %v1164 = vunpack.c.l.b16 %v998
    %v1165 = vunpack.c.l.b16 %v999
    %v1166 = vunpack.c.l.b16 %v1000
    %v1167 = vunpack.c.l.b16 %v1001
    %v1168 = vunpack.c.l.b16 %v1002
    %v1169 = vunpack.c.l.b16 %v1003
    %v1170 = vunpack.c.l.b16 %v1004
    %v1171 = vunpack.c.l.b16 %v1005
    %v1172 = vunpack.c.l.b16 %v1006
    %v1173 = vunpack.c.l.b16 %v1007
    %v1174 = vunpack.c.l.b16 %v1008
    %v1175 = vunpack.c.l.b16 %v1009
    %v1176 = vunpack.c.l.b16 %v1010
    %v1177 = vunpack.c.l.b16 %v1011
    %v1178 = vunpack.c.l.b16 %v1012
    %v1179 = vunpack.c.l.b16 %v1013
    %v1180 = vunpack.c.l.b16 %v1014
    %v1181 = vunpack.c.l.b16 %v1015
    %v1182 = vunpack.c.l.b16 %v1016
    %v1183 = vunpack.c.l.b16 %v1017
    %v1184 = vunpack.c.l.b16 %v1018
    %v1185 = vunpack.c.l.b16 %v1019
    %v1186 = vunpack.c.l.b16 %v1020
    %v1187 = vunpack.c.l.b16 %v1021
    %v1188 = vunpack.c.l.b16 %v1022
    %v1189 = vunpack.c.l.b16 %v1023
    %v1190 = vunpack.c.l.b16 %v1024
    %v1191 = vunpack.c.l.b16 %v1025
    %v1192 = vunpack.c.l.b16 %v1026
    %v1193 = vunpack.c.l.b16 %v1027
    %v1194 = vunpack.c.l.b16 %v1028
    %v1195 = vunpack.c.l.b16 %v1029
    %v1196 = vunpack.c.l.b16 %v1030
    %v1197 = vunpack.c.l.b16 %v1031
    %v1198 = vunpack.c.l.b16 %v1032
    %v1199 = vunpack.c.l.b16 %v1033
    %v1200 = vunpack.c.l.b16 %v1034
    %v1201 = vunpack.c.l.b16 %v1035
    %v1202 = vunpack.c.l.b16 %v1036
    %v1203 = vunpack.c.l.b16 %v1037
    %v1204 = vunpack.c.l.b16 %v1038
    %v1205 = vunpack.c.l.b16 %v1039
    %v1206 = vunpack.c.l.b16 %v1040
    %v1207 = vunpack.c.l.b16 %v1041
    %v1208 = vunpack.c.l.b16 %v1042
    %v1209 = vunpack.c.l.b16 %v1043
    %v1210 = vunpack.c.l.b16 %v1044
    %v1211 = vunpack.c.l.b16 %v1045
    %v1212 = vunpack.c.l.b16 %v1046
    %v1213 = vunpack.c.l.b16 %v1047
    %v1214 = vunpack.c.l.b16 %v1048
    %v1215 = vunpack.c.l.b16 %v1049
    %v1216 = vunpack.c.l.b16 %v1050
    %v1217 = vunpack.c.l.b16 %v1051
    %v1218 = vpack.c.b16 %v1155, %v1154
    %v1219 = vpack.c.b16 %v1157, %v1156
    %v1220 = vpack.c.b16 %v1159, %v1158
    %v1221 = vpack.c.b16 %v1161, %v1160
    %v1222 = vpack.c.b16 %v1163, %v1162
    %v1223 = vpack.c.b16 %v1165, %v1164
    %v1224 = vpack.c.b16 %v1167, %v1166
    %v1225 = vpack.c.b16 %v1169, %v1168
    %v1226 = vpack.c.b16 %v1171, %v1170
    %v1227 = vpack.c.b16 %v1173, %v1172
    %v1228 = vpack.c.b16 %v1175, %v1174
    %v1229 = vpack.c.b16 %v1177, %v1176
    %v1230 = vpack.c.b16 %v1179, %v1178
    %v1231 = vpack.c.b16 %v1181, %v1180
    %v1232 = vpack.c.b16 %v1183, %v1182
    %v1233 = vpack.c.b16 %v1185, %v1184
    %v1234 = vpack.c.b16 %v1187, %v1186
    %v1235 = vpack.c.b16 %v1189, %v1188
    %v1236 = vpack.c.b16 %v1191, %v1190
    %v1237 = vpack.c.b16 %v1193, %v1192
    %v1238 = vpack.c.b16 %v1195, %v1194
    %v1239 = vpack.c.b16 %v1197, %v1196
    %v1240 = vpack.c.b16 %v1199, %v1198
    %v1241 = vpack.c.b16 %v1201, %v1200
    %v1242 = vpack.c.b16 %v1203, %v1202
    %v1243 = vpack.c.b16 %v1205, %v1204
    %v1244 = vpack.c.b16 %v1207, %v1206
    %v1245 = vpack.c.b16 %v1209, %v1208
    %v1246 = vpack.c.b16 %v1211, %v1210
    %v1247 = vpack.c.b16 %v1213, %v1212
    %v1248 = vpack.c.b16 %v1215, %v1214
    %v1249 = vpack.c.b16 %v1217, %v1216
    %1282 = vmatprep.subr.bf16.mxu0 0
    %1283 = vmatpush1.bf16.msra.mxu0 %v1218
    %1284 = vmatprep.subr.bf16.mxu0 0
    %1285 = vmatpush1.bf16.msra.mxu0 %v1219
    %1286 = vmatprep.subr.bf16.mxu0 0
    %1287 = vmatpush1.bf16.msra.mxu0 %v1220
    %1288 = vmatprep.subr.bf16.mxu0 0
    %1289 = vmatpush1.bf16.msra.mxu0 %v1221
    %1290 = vmatprep.subr.bf16.mxu0 0
    %1291 = vmatpush1.bf16.msra.mxu0 %v1222
    %1292 = vmatprep.subr.bf16.mxu0 0
    %1293 = vmatpush1.bf16.msra.mxu0 %v1223
    %1294 = vmatprep.subr.bf16.mxu0 0
    %1295 = vmatpush1.bf16.msra.mxu0 %v1224
    %1296 = vmatprep.subr.bf16.mxu0 0
    %1297 = vmatpush1.bf16.msra.mxu0 %v1225
    %1298 = vmatprep.subr.bf16.mxu0 0
    %1299 = vmatpush1.bf16.msra.mxu0 %v1226
    %1300 = vmatprep.subr.bf16.mxu0 0
    %1301 = vmatpush1.bf16.msra.mxu0 %v1227
    %1302 = vmatprep.subr.bf16.mxu0 0
    %1303 = vmatpush1.bf16.msra.mxu0 %v1228
    %1304 = vmatprep.subr.bf16.mxu0 0
    %1305 = vmatpush1.bf16.msra.mxu0 %v1229
    %1306 = vmatprep.subr.bf16.mxu0 0
    %1307 = vmatpush1.bf16.msra.mxu0 %v1230
    %1308 = vmatprep.subr.bf16.mxu0 0
    %1309 = vmatpush1.bf16.msra.mxu0 %v1231
    %1310 = vmatprep.subr.bf16.mxu0 0
    %1311 = vmatpush1.bf16.msra.mxu0 %v1232
    %1312 = vmatprep.subr.bf16.mxu0 0
    %1313 = vmatpush1.bf16.msra.mxu0 %v1233
    %1314 = vmatprep.mubr.bf16.mxu0 %v1083
    %1315 = vmatmul.mubr.bf16.gmra.mrb[0].mxu0 %v1076
    %v1316 = vpop.f32.mrb[0].mxu0
    %v1317 = vadd.f32 0.0, %v1316
    %v1318 = vpop.f32.mrb[0].mxu0
    %v1319 = vpop.f32.mrb[0].mxu0
    %v1320 = vpop.f32.mrb[0].mxu0
    %1321 = vdwg.mxu0
    %1322 = vmatprep.subr.bf16.mxu0 0
    %1323 = vmatpush1.bf16.msra.mxu0 %v1234
    %1324 = vmatprep.subr.bf16.mxu0 0
    %1325 = vmatpush1.bf16.msra.mxu0 %v1235
    %1326 = vmatprep.subr.bf16.mxu0 0
    %1327 = vmatpush1.bf16.msra.mxu0 %v1236
    %1328 = vmatprep.subr.bf16.mxu0 0
    %1329 = vmatpush1.bf16.msra.mxu0 %v1237
    %1330 = vmatprep.subr.bf16.mxu0 0
    %1331 = vmatpush1.bf16.msra.mxu0 %v1238
    %1332 = vmatprep.subr.bf16.mxu0 0
    %1333 = vmatpush1.bf16.msra.mxu0 %v1239
    %1334 = vmatprep.subr.bf16.mxu0 0
    %1335 = vmatpush1.bf16.msra.mxu0 %v1240
    %1336 = vmatprep.subr.bf16.mxu0 0
    %1337 = vmatpush1.bf16.msra.mxu0 %v1241
    %1338 = vmatprep.subr.bf16.mxu0 0
    %1339 = vmatpush1.bf16.msra.mxu0 %v1242
    %1340 = vmatprep.subr.bf16.mxu0 0
    %1341 = vmatpush1.bf16.msra.mxu0 %v1243
    %1342 = vmatprep.subr.bf16.mxu0 0
    %1343 = vmatpush1.bf16.msra.mxu0 %v1244
    %1344 = vmatprep.subr.bf16.mxu0 0
    %1345 = vmatpush1.bf16.msra.mxu0 %v1245
    %1346 = vmatprep.subr.bf16.mxu0 0
    %1347 = vmatpush1.bf16.msra.mxu0 %v1246
    %1348 = vmatprep.subr.bf16.mxu0 0
    %1349 = vmatpush1.bf16.msra.mxu0 %v1247
    %1350 = vmatprep.subr.bf16.mxu0 0
    %1351 = vmatpush1.bf16.msra.mxu0 %v1248
    %1352 = vmatprep.subr.bf16.mxu0 0
    %1353 = vmatpush1.bf16.msra.mxu0 %v1249
    %1354 = vmatprep.mubr.bf16.mxu0 %v1085
    %1355 = vmatmul.mubr.bf16.gmra.mrb[0].mxu0 %v1084
    %v1356 = vpop.f32.mrb[0].mxu0
    %v1357 = vadd.f32 %v1317, %v1356
    %v1358 = vpop.f32.mrb[0].mxu0
    %v1359 = vpop.f32.mrb[0].mxu0
    %v1360 = vpop.f32.mrb[0].mxu0
    %1361 = vdwg.mxu0
    %v1362 = vld [vmem:[#allocation2] sm:$0xff]
    %v1363 = vadd.f32 %v1362, %v1357
    %1364 = vst [vmem:[#allocation2] sm:$0xff] %v1363
    %v1365 = vld [vmem:[%s950] sm:$0xff]
    %v1366 = vld [vmem:[%s950 + $0x8] sm:$0xff]
    %v1367 = vld [vmem:[%s950 + $0x18] sm:$0xff]
    %v1368 = vld [vmem:[%s950 + $0x20] sm:$0xff]
    %v1374 = vunpack.c.l.s4 1966171168
    %v1375 = vunpack.c.0.s8 %v1374
    %v1376 = vlaneseq
    %v1377 = vshrl.u32 %v1376, 7
    %v1378 = vsub.s32 %v1375, %v1377
    %v1379 = vrot.slane %v1365, %v1378
    %v1380 = vcombine.high %v1379, %v1379
    %v1382 = vunpack.c.l.s4 1966171168
    %v1383 = vunpack.c.0.s8 %v1382
    %v1384 = vlaneseq
    %v1385 = vshrl.u32 %v1384, 7
    %v1386 = vsub.s32 %v1383, %v1385
    %v1387 = vrot.slane %v1366, %v1386
    %v1388 = vcombine.high %v1387, %v1387
    %v1390 = vunpack.c.l.s4 1966171168
    %v1391 = vunpack.c.0.s8 %v1390
    %v1392 = vlaneseq
    %v1393 = vshrl.u32 %v1392, 7
    %v1394 = vsub.s32 %v1391, %v1393
    %v1395 = vrot.slane %v1367, %v1394
    %v1396 = vcombine.high %v1395, %v1395
    %v1398 = vunpack.c.l.s4 1966171168
    %v1399 = vunpack.c.0.s8 %v1398
    %v1400 = vlaneseq
    %v1401 = vshrl.u32 %v1400, 7
    %v1402 = vsub.s32 %v1399, %v1401
    %v1403 = vrot.slane %v1368, %v1402
    %v1404 = vcombine.high %v1403, %v1403
    %v1406 = vshrl.u32 %v1379, 16
    %v1408 = vrot.slane %v1406, 7
    %v1409 = vrot.slane %v1408, 1
    %v1411 = vshll.u32 %v1380, 16
    %v1413 = vsel %vm535, %v1409, %v1411
    %v1415 = vshrl.u32 %v1387, 16
    %v1417 = vrot.slane %v1415, 7
    %v1418 = vrot.slane %v1417, 1
    %v1420 = vshll.u32 %v1388, 16
    %v1422 = vsel %vm535, %v1418, %v1420
    %v1424 = vshrl.u32 %v1395, 16
    %v1426 = vrot.slane %v1424, 7
    %v1427 = vrot.slane %v1426, 1
    %v1429 = vshll.u32 %v1396, 16
    %v1431 = vsel %vm535, %v1427, %v1429
    %v1433 = vshrl.u32 %v1403, 16
    %v1435 = vrot.slane %v1433, 7
    %v1436 = vrot.slane %v1435, 1
    %v1438 = vshll.u32 %v1404, 16
    %v1440 = vsel %vm535, %v1436, %v1438
    %s1441 = scalar_lea.vmem [#allocation6], 768
    %v1442 = vld [vmem:[%s1441] sm:$0xf]
    %v1443 = vld [vmem:[%s1441 + $0x4] sm:$0xf]
    %v1444 = vld [vmem:[%s1441 + $0x8] sm:$0xf]
    %v1445 = vld [vmem:[%s1441 + $0xc] sm:$0xf]
    %v1446 = vld [vmem:[%s1441 + $0x10] sm:$0xf]
    %v1447 = vld [vmem:[%s1441 + $0x14] sm:$0xf]
    %v1448 = vld [vmem:[%s1441 + $0x18] sm:$0xf]
    %v1449 = vld [vmem:[%s1441 + $0x1c] sm:$0xf]
    %v1450 = vld [vmem:[%s1441 + $0x20] sm:$0xf]
    %v1451 = vld [vmem:[%s1441 + $0x24] sm:$0xf]
    %v1452 = vld [vmem:[%s1441 + $0x28] sm:$0xf]
    %v1453 = vld [vmem:[%s1441 + $0x2c] sm:$0xf]
    %v1454 = vld [vmem:[%s1441 + $0x30] sm:$0xf]
    %v1455 = vld [vmem:[%s1441 + $0x34] sm:$0xf]
    %v1456 = vld [vmem:[%s1441 + $0x38] sm:$0xf]
    %v1457 = vld [vmem:[%s1441 + $0x3c] sm:$0xf]
    %v1458 = vld [vmem:[%s1441 + $0x40] sm:$0xf]
    %v1459 = vld [vmem:[%s1441 + $0x44] sm:$0xf]
    %v1460 = vld [vmem:[%s1441 + $0x48] sm:$0xf]
    %v1461 = vld [vmem:[%s1441 + $0x4c] sm:$0xf]
    %v1462 = vld [vmem:[%s1441 + $0x50] sm:$0xf]
    %v1463 = vld [vmem:[%s1441 + $0x54] sm:$0xf]
    %v1464 = vld [vmem:[%s1441 + $0x58] sm:$0xf]
    %v1465 = vld [vmem:[%s1441 + $0x5c] sm:$0xf]
    %v1466 = vld [vmem:[%s1441 + $0x60] sm:$0xf]
    %v1467 = vld [vmem:[%s1441 + $0x64] sm:$0xf]
    %v1468 = vld [vmem:[%s1441 + $0x68] sm:$0xf]
    %v1469 = vld [vmem:[%s1441 + $0x6c] sm:$0xf]
    %v1470 = vld [vmem:[%s1441 + $0x70] sm:$0xf]
    %v1471 = vld [vmem:[%s1441 + $0x74] sm:$0xf]
    %v1472 = vld [vmem:[%s1441 + $0x78] sm:$0xf]
    %v1473 = vld [vmem:[%s1441 + $0x7c] sm:$0xf]
    %v1474 = vld [vmem:[%s1441 + $0x80] sm:$0xf]
    %v1475 = vld [vmem:[%s1441 + $0x84] sm:$0xf]
    %v1476 = vld [vmem:[%s1441 + $0x88] sm:$0xf]
    %v1477 = vld [vmem:[%s1441 + $0x8c] sm:$0xf]
    %v1478 = vld [vmem:[%s1441 + $0x90] sm:$0xf]
    %v1479 = vld [vmem:[%s1441 + $0x94] sm:$0xf]
    %v1480 = vld [vmem:[%s1441 + $0x98] sm:$0xf]
    %v1481 = vld [vmem:[%s1441 + $0x9c] sm:$0xf]
    %v1482 = vld [vmem:[%s1441 + $0xa0] sm:$0xf]
    %v1483 = vld [vmem:[%s1441 + $0xa4] sm:$0xf]
    %v1484 = vld [vmem:[%s1441 + $0xa8] sm:$0xf]
    %v1485 = vld [vmem:[%s1441 + $0xac] sm:$0xf]
    %v1486 = vld [vmem:[%s1441 + $0xb0] sm:$0xf]
    %v1487 = vld [vmem:[%s1441 + $0xb4] sm:$0xf]
    %v1488 = vld [vmem:[%s1441 + $0xb8] sm:$0xf]
    %v1489 = vld [vmem:[%s1441 + $0xbc] sm:$0xf]
    %v1490 = vld [vmem:[%s1441 + $0xc0] sm:$0xf]
    %v1491 = vld [vmem:[%s1441 + $0xc4] sm:$0xf]
    %v1492 = vld [vmem:[%s1441 + $0xc8] sm:$0xf]
    %v1493 = vld [vmem:[%s1441 + $0xcc] sm:$0xf]
    %v1494 = vld [vmem:[%s1441 + $0xd0] sm:$0xf]
    %v1495 = vld [vmem:[%s1441 + $0xd4] sm:$0xf]
    %v1496 = vld [vmem:[%s1441 + $0xd8] sm:$0xf]
    %v1497 = vld [vmem:[%s1441 + $0xdc] sm:$0xf]
    %v1498 = vld [vmem:[%s1441 + $0xe0] sm:$0xf]
    %v1499 = vld [vmem:[%s1441 + $0xe4] sm:$0xf]
    %v1500 = vld [vmem:[%s1441 + $0xe8] sm:$0xf]
    %v1501 = vld [vmem:[%s1441 + $0xec] sm:$0xf]
    %v1502 = vld [vmem:[%s1441 + $0xf0] sm:$0xf]
    %v1503 = vld [vmem:[%s1441 + $0xf4] sm:$0xf]
    %v1504 = vld [vmem:[%s1441 + $0xf8] sm:$0xf]
    %v1505 = vld [vmem:[%s1441 + $0xfc] sm:$0xf]
    %v1506 = vcombine.low %v1413, %v1422
    %v1507 = vcombine.low %v1431, %v1440
    %v1509 = vunpack.c.l.s4 1966171168
    %v1510 = vunpack.c.0.s8 %v1509
    %v1511 = vlaneseq
    %v1512 = vshrl.u32 %v1511, 7
    %v1513 = vsub.s32 %v1510, %v1512
    %v1514 = vrot.slane %v1506, %v1513
    %v1516 = vunpack.c.l.s4 1966171168
    %v1517 = vunpack.c.0.s8 %v1516
    %v1518 = vlaneseq
    %v1519 = vshrl.u32 %v1518, 7
    %v1520 = vsub.s32 %v1517, %v1519
    %v1521 = vrot.slane %v1507, %v1520
    %v1522 = vcombine.low %v1514, %v1521
    %v1523 = vcombine.high %v1514, %v1521
    %v1525 = vunpack.c.l.s4 1966171168
    %v1526 = vunpack.c.0.s8 %v1525
    %v1527 = vlaneseq
    %v1528 = vshrl.u32 %v1527, 7
    %v1529 = vsub.s32 %v1526, %v1528
    %v1530 = vrot.slane %v1522, %v1529
    %v1532 = vunpack.c.l.s4 1966171168
    %v1533 = vunpack.c.0.s8 %v1532
    %v1534 = vlaneseq
    %v1535 = vshrl.u32 %v1534, 7
    %v1536 = vsub.s32 %v1533, %v1535
    %v1537 = vrot.slane %v1523, %v1536
    %v1538 = vcombine.high %v1530, %v1530
    %v1539 = vcombine.high %v1537, %v1537
    %v1608 = vunpack.c.l.b16 %v1442
    %v1609 = vunpack.c.l.b16 %v1443
    %v1610 = vunpack.c.l.b16 %v1444
    %v1611 = vunpack.c.l.b16 %v1445
    %v1612 = vunpack.c.l.b16 %v1446
    %v1613 = vunpack.c.l.b16 %v1447
    %v1614 = vunpack.c.l.b16 %v1448
    %v1615 = vunpack.c.l.b16 %v1449
    %v1616 = vunpack.c.l.b16 %v1450
    %v1617 = vunpack.c.l.b16 %v1451
    %v1618 = vunpack.c.l.b16 %v1452
    %v1619 = vunpack.c.l.b16 %v1453
    %v1620 = vunpack.c.l.b16 %v1454
    %v1621 = vunpack.c.l.b16 %v1455
    %v1622 = vunpack.c.l.b16 %v1456
    %v1623 = vunpack.c.l.b16 %v1457
    %v1624 = vunpack.c.l.b16 %v1458
    %v1625 = vunpack.c.l.b16 %v1459
    %v1626 = vunpack.c.l.b16 %v1460
    %v1627 = vunpack.c.l.b16 %v1461
    %v1628 = vunpack.c.l.b16 %v1462
    %v1629 = vunpack.c.l.b16 %v1463
    %v1630 = vunpack.c.l.b16 %v1464
    %v1631 = vunpack.c.l.b16 %v1465
    %v1632 = vunpack.c.l.b16 %v1466
    %v1633 = vunpack.c.l.b16 %v1467
    %v1634 = vunpack.c.l.b16 %v1468
    %v1635 = vunpack.c.l.b16 %v1469
    %v1636 = vunpack.c.l.b16 %v1470
    %v1637 = vunpack.c.l.b16 %v1471
    %v1638 = vunpack.c.l.b16 %v1472
    %v1639 = vunpack.c.l.b16 %v1473
    %v1640 = vunpack.c.l.b16 %v1474
    %v1641 = vunpack.c.l.b16 %v1475
    %v1642 = vunpack.c.l.b16 %v1476
    %v1643 = vunpack.c.l.b16 %v1477
    %v1644 = vunpack.c.l.b16 %v1478
    %v1645 = vunpack.c.l.b16 %v1479
    %v1646 = vunpack.c.l.b16 %v1480
    %v1647 = vunpack.c.l.b16 %v1481
    %v1648 = vunpack.c.l.b16 %v1482
    %v1649 = vunpack.c.l.b16 %v1483
    %v1650 = vunpack.c.l.b16 %v1484
    %v1651 = vunpack.c.l.b16 %v1485
    %v1652 = vunpack.c.l.b16 %v1486
    %v1653 = vunpack.c.l.b16 %v1487
    %v1654 = vunpack.c.l.b16 %v1488
    %v1655 = vunpack.c.l.b16 %v1489
    %v1656 = vunpack.c.l.b16 %v1490
    %v1657 = vunpack.c.l.b16 %v1491
    %v1658 = vunpack.c.l.b16 %v1492
    %v1659 = vunpack.c.l.b16 %v1493
    %v1660 = vunpack.c.l.b16 %v1494
    %v1661 = vunpack.c.l.b16 %v1495
    %v1662 = vunpack.c.l.b16 %v1496
    %v1663 = vunpack.c.l.b16 %v1497
    %v1664 = vunpack.c.l.b16 %v1498
    %v1665 = vunpack.c.l.b16 %v1499
    %v1666 = vunpack.c.l.b16 %v1500
    %v1667 = vunpack.c.l.b16 %v1501
    %v1668 = vunpack.c.l.b16 %v1502
    %v1669 = vunpack.c.l.b16 %v1503
    %v1670 = vunpack.c.l.b16 %v1504
    %v1671 = vunpack.c.l.b16 %v1505
    %v1672 = vpack.c.b16 %v1609, %v1608
    %v1673 = vpack.c.b16 %v1611, %v1610
    %v1674 = vpack.c.b16 %v1613, %v1612
    %v1675 = vpack.c.b16 %v1615, %v1614
    %v1676 = vpack.c.b16 %v1617, %v1616
    %v1677 = vpack.c.b16 %v1619, %v1618
    %v1678 = vpack.c.b16 %v1621, %v1620
    %v1679 = vpack.c.b16 %v1623, %v1622
    %v1680 = vpack.c.b16 %v1625, %v1624
    %v1681 = vpack.c.b16 %v1627, %v1626
    %v1682 = vpack.c.b16 %v1629, %v1628
    %v1683 = vpack.c.b16 %v1631, %v1630
    %v1684 = vpack.c.b16 %v1633, %v1632
    %v1685 = vpack.c.b16 %v1635, %v1634
    %v1686 = vpack.c.b16 %v1637, %v1636
    %v1687 = vpack.c.b16 %v1639, %v1638
    %v1688 = vpack.c.b16 %v1641, %v1640
    %v1689 = vpack.c.b16 %v1643, %v1642
    %v1690 = vpack.c.b16 %v1645, %v1644
    %v1691 = vpack.c.b16 %v1647, %v1646
    %v1692 = vpack.c.b16 %v1649, %v1648
    %v1693 = vpack.c.b16 %v1651, %v1650
    %v1694 = vpack.c.b16 %v1653, %v1652
    %v1695 = vpack.c.b16 %v1655, %v1654
    %v1696 = vpack.c.b16 %v1657, %v1656
    %v1697 = vpack.c.b16 %v1659, %v1658
    %v1698 = vpack.c.b16 %v1661, %v1660
    %v1699 = vpack.c.b16 %v1663, %v1662
    %v1700 = vpack.c.b16 %v1665, %v1664
    %v1701 = vpack.c.b16 %v1667, %v1666
    %v1702 = vpack.c.b16 %v1669, %v1668
    %v1703 = vpack.c.b16 %v1671, %v1670
    %1736 = vmatprep.subr.bf16.mxu0 0
    %1737 = vmatpush1.bf16.msra.mxu0 %v1672
    %1738 = vmatprep.subr.bf16.mxu0 0
    %1739 = vmatpush1.bf16.msra.mxu0 %v1673
    %1740 = vmatprep.subr.bf16.mxu0 0
    %1741 = vmatpush1.bf16.msra.mxu0 %v1674
    %1742 = vmatprep.subr.bf16.mxu0 0
    %1743 = vmatpush1.bf16.msra.mxu0 %v1675
    %1744 = vmatprep.subr.bf16.mxu0 0
    %1745 = vmatpush1.bf16.msra.mxu0 %v1676
    %1746 = vmatprep.subr.bf16.mxu0 0
    %1747 = vmatpush1.bf16.msra.mxu0 %v1677
    %1748 = vmatprep.subr.bf16.mxu0 0
    %1749 = vmatpush1.bf16.msra.mxu0 %v1678
    %1750 = vmatprep.subr.bf16.mxu0 0
    %1751 = vmatpush1.bf16.msra.mxu0 %v1679
    %1752 = vmatprep.subr.bf16.mxu0 0
    %1753 = vmatpush1.bf16.msra.mxu0 %v1680
    %1754 = vmatprep.subr.bf16.mxu0 0
    %1755 = vmatpush1.bf16.msra.mxu0 %v1681
    %1756 = vmatprep.subr.bf16.mxu0 0
    %1757 = vmatpush1.bf16.msra.mxu0 %v1682
    %1758 = vmatprep.subr.bf16.mxu0 0
    %1759 = vmatpush1.bf16.msra.mxu0 %v1683
    %1760 = vmatprep.subr.bf16.mxu0 0
    %1761 = vmatpush1.bf16.msra.mxu0 %v1684
    %1762 = vmatprep.subr.bf16.mxu0 0
    %1763 = vmatpush1.bf16.msra.mxu0 %v1685
    %1764 = vmatprep.subr.bf16.mxu0 0
    %1765 = vmatpush1.bf16.msra.mxu0 %v1686
    %1766 = vmatprep.subr.bf16.mxu0 0
    %1767 = vmatpush1.bf16.msra.mxu0 %v1687
    %1768 = vmatprep.mubr.bf16.mxu0 %v1537
    %1769 = vmatmul.mubr.bf16.gmra.mrb[0].mxu0 %v1530
    %v1770 = vpop.f32.mrb[0].mxu0
    %v1771 = vadd.f32 0.0, %v1770
    %v1772 = vpop.f32.mrb[0].mxu0
    %v1773 = vpop.f32.mrb[0].mxu0
    %v1774 = vpop.f32.mrb[0].mxu0
    %1775 = vdwg.mxu0
    %1776 = vmatprep.subr.bf16.mxu0 0
    %1777 = vmatpush1.bf16.msra.mxu0 %v1688
    %1778 = vmatprep.subr.bf16.mxu0 0
    %1779 = vmatpush1.bf16.msra.mxu0 %v1689
    %1780 = vmatprep.subr.bf16.mxu0 0
    %1781 = vmatpush1.bf16.msra.mxu0 %v1690
    %1782 = vmatprep.subr.bf16.mxu0 0
    %1783 = vmatpush1.bf16.msra.mxu0 %v1691
    %1784 = vmatprep.subr.bf16.mxu0 0
    %1785 = vmatpush1.bf16.msra.mxu0 %v1692
    %1786 = vmatprep.subr.bf16.mxu0 0
    %1787 = vmatpush1.bf16.msra.mxu0 %v1693
    %1788 = vmatprep.subr.bf16.mxu0 0
    %1789 = vmatpush1.bf16.msra.mxu0 %v1694
    %1790 = vmatprep.subr.bf16.mxu0 0
    %1791 = vmatpush1.bf16.msra.mxu0 %v1695
    %1792 = vmatprep.subr.bf16.mxu0 0
    %1793 = vmatpush1.bf16.msra.mxu0 %v1696
    %1794 = vmatprep.subr.bf16.mxu0 0
    %1795 = vmatpush1.bf16.msra.mxu0 %v1697
    %1796 = vmatprep.subr.bf16.mxu0 0
    %1797 = vmatpush1.bf16.msra.mxu0 %v1698
    %1798 = vmatprep.subr.bf16.mxu0 0
    %1799 = vmatpush1.bf16.msra.mxu0 %v1699
    %1800 = vmatprep.subr.bf16.mxu0 0
    %1801 = vmatpush1.bf16.msra.mxu0 %v1700
    %1802 = vmatprep.subr.bf16.mxu0 0
    %1803 = vmatpush1.bf16.msra.mxu0 %v1701
    %1804 = vmatprep.subr.bf16.mxu0 0
    %1805 = vmatpush1.bf16.msra.mxu0 %v1702
    %1806 = vmatprep.subr.bf16.mxu0 0
    %1807 = vmatpush1.bf16.msra.mxu0 %v1703
    %1808 = vmatprep.mubr.bf16.mxu0 %v1539
    %1809 = vmatmul.mubr.bf16.gmra.mrb[0].mxu0 %v1538
    %v1810 = vpop.f32.mrb[0].mxu0
    %v1811 = vadd.f32 %v1771, %v1810
    %v1812 = vpop.f32.mrb[0].mxu0
    %v1813 = vpop.f32.mrb[0].mxu0
    %v1814 = vpop.f32.mrb[0].mxu0
    %1815 = vdwg.mxu0
    %v1816 = vld [vmem:[#allocation2] sm:$0xff]
    %v1817 = vadd.f32 %v1816, %v1811
    %1818 = vst [vmem:[#allocation2] sm:$0xff] %v1817
    %v1819 = vld [vmem:[#allocation2] sm:$0xff]
    %v1821 = vcombine.high %v1819, %v1819
    %vm1823 = vcmask 1043456
    %v1824 = vsel %vm1823, %v1819, 0.0
    %v1825 = vrot.slane %v1824, 4
    %v1826 = vadd.f32 %v1824, %v1825
    %v1827 = vrot.slane %v1826, 2
    %v1828 = vadd.f32 %v1826, %v1827
    %v1829 = vrot.slane %v1828, 1
    %v1830 = vadd.f32 %v1828, %v1829
    %v1831 = vsel %vm1823, %v1821, 0.0
    %v1832 = vrot.slane %v1831, 4
    %v1833 = vadd.f32 %v1831, %v1832
    %v1834 = vrot.slane %v1833, 2
    %v1835 = vadd.f32 %v1833, %v1834
    %v1836 = vrot.slane %v1835, 1
    %v1837 = vadd.f32 %v1835, %v1836
    %v1838 = vrcp.pop 4.0
    %v1839 = vmul.f32 %v1830, %v1838
    %v1840 = vmul.f32 %v1837, %v1838
    %v1841 = vsub.f32 %v1819, %v1839
    %v1842 = vsub.f32 %v1821, %v1840
    %v1843 = vmul.f32 %v1841, %v1841
    %v1844 = vmul.f32 %v1842, %v1842
    %v1845 = vsel %vm1823, %v1843, 0.0
    %v1846 = vrot.slane %v1845, 4
    %v1847 = vadd.f32 %v1845, %v1846
    %v1848 = vrot.slane %v1847, 2
    %v1849 = vadd.f32 %v1847, %v1848
    %v1850 = vrot.slane %v1849, 1
    %v1851 = vadd.f32 %v1849, %v1850
    %v1852 = vsel %vm1823, %v1844, 0.0
    %v1853 = vrot.slane %v1852, 4
    %v1854 = vadd.f32 %v1852, %v1853
    %v1855 = vrot.slane %v1854, 2
    %v1856 = vadd.f32 %v1854, %v1855
    %v1857 = vrot.slane %v1856, 1
    %v1858 = vadd.f32 %v1856, %v1857
    %v1859 = vmul.f32 %v1851, %v1838
    %v1860 = vmul.f32 %v1858, %v1838
    %v1861 = vadd.f32 %v1859, 1e-05
    %v1862 = vadd.f32 %v1860, 1e-05
    %v1863 = vrsqrt.pop %v1861
    %v1864 = vrsqrt.pop %v1862
    %v1865 = vmul.f32 %v1841, %v1863
    %v1866 = vmul.f32 %v1842, %v1864
    %v1867 = vld [vmem:[#allocation8] sm:$0x1]
    %v1869 = vlaneseq
    %v1870 = vshrl.u32 %v1869, 7
    %v1871 = vsub.s32 0, %v1870
    %v1872 = vrot.slane %v1867, %v1871
    %v1874 = vmul.f32 %v1865, %v1872
    %v1875 = vmul.f32 %v1866, %v1872
    %v1876 = vld [vmem:[#allocation9] sm:$0x1]
    %v1878 = vlaneseq
    %v1879 = vshrl.u32 %v1878, 7
    %v1880 = vsub.s32 0, %v1879
    %v1881 = vrot.slane %v1876, %v1880
    %v1883 = vadd.f32 %v1874, %v1881
    %v1884 = vadd.f32 %v1875, %v1881
    %vm1885 = vcmp.ge.f32.partialorder %v1883, 0.0
    %vm1886 = vcmp.ge.f32.partialorder %v1884, 0.0
    %v1887 = vmul.f32 %v1883, 0.2
    %v1888 = vmul.f32 %v1884, 0.2
    %v1889 = vsel %vm1885, %v1883, %v1887
    %v1890 = vsel %vm1886, %v1884, %v1888
    %v1891 = vpack.c.bf16 %v1889, %v1889
    %v1892 = vpack.c.bf16 %v1890, %v1890
    %1893 = vst [vmem:[#allocation11] sm:$0x3] %v1891
    %1894 = vst [vmem:[#allocation11 + $0x2] sm:$0x3] %v1892
    // Predicated region
    $region34: #{discriminator_forward.6} parent=1 // pred_check
      _
    $region35: #{discriminator_forward.6} parent=1 // pred_check_branch
      %1896 = sbr.rel (0) target = $region37
    $region36: #{discriminator_forward.6} parent=1 // pred_region
      %s1898 = ssub.s32 64, 64
      %1899 = vsyncadd [#allocation5], %s1898
      %s1900 = sshll.u32 [#allocation11], 4
      %s1901 = int_to_ptr.vmem [resolvable:$true] %s1900
      %1906 = dma.vmem_to_hbm [thread:$0]  %s1901, 64, %s4, [#allocation5], 32, 32, 2
    $region37: #{discriminator_forward.6} parent=1 // pred_fallthru
      _
    // Predicated region
    $region38: #{discriminator_forward.6} parent=1 // pred_check
      _
    $region39: #{discriminator_forward.6} parent=1 // pred_check_branch
      %1908 = sbr.rel (0) target = $region41
    $region40: #{discriminator_forward.6} parent=1 // pred_region
      %1909 = dma.done [#allocation5], 64
    $region41: #{discriminator_forward.6} parent=1 // pred_fallthru
      _
    %1910 = vsyncpa [#allocation4], 1
    %1911 = vsyncpa [#allocation7], 1
    %1912 = vsyncpa [#allocation10], 1
    %1913 = vsyncpa [#allocation5], 1

</llo_original>
